<compile_context>
chip_gen: v7x
topology: tpu7x:2x2x1
jax: 0.10.0
libtpu: 0.0.40
codegen_flags: <defaults>
</compile_context>

<pallas_src>
import jax
import jax.numpy as jnp
import numpy as np
from jax.experimental import pallas as pl
from jax.experimental.pallas import tpu as pltpu


# ---------------------------------------------------------------------------
# Fused Pallas kernel (one batch tile per grid step)
# ---------------------------------------------------------------------------

def _snet_fused_kernel(x4_ref, w1_ref, sh1_ref, w2_ref, sh2_ref, wf_ref,
                       bf_ref, o_ref):
    # x4_ref : (T, 7, 7, 16) f32   space-to-depth input x4[n,a,b,u*4+v]=x[n,4a+u,4b+v]
    # w1_ref : (25, 16)      f32   conv1 weight (kh*5+kw, cout), BN1 scale folded in
    # sh1_ref: (1, 16)       f32   conv1 bias + BN1 shift
    # w2_ref : (400, 32)     bf16  conv2 weight ((kh*5+kw)*16+cin, cout), BN2 scale folded
    # sh2_ref: (1, 32)       f32   conv2 bias + BN2 shift
    # wf_ref : (32, 128)     f32   fc weight, zero-padded to 128 output columns
    # bf_ref : (1, 128)      f32   fc bias, zero-padded
    # o_ref  : (T, 128)      f32   logits (first num_classes columns valid)
    T = x4_ref.shape[0]
    x4 = x4_ref[...]                       # (T, 7, 7, 16)
    w1 = w1_ref[...]                       # (25, 16)
    sh1 = sh1_ref[...]                     # (1, 16)

    # --- conv1 (5x5, stride 2, cin=1) + bn1 + relu --------------------------
    # slices[(th, tw)][n, a, b, 0] == x[n, 4a+th, 4b+tw]   for a, b in [0, 6)
    slices = {}
    for th in range(7):
        for tw in range(7):
            uv = (th % 4) * 4 + (tw % 4)
            slices[(th, tw)] = x4[:, th // 4:th // 4 + 6,
                                  tw // 4:tw // 4 + 6, uv:uv + 1]   # (T,6,6,1)

    # Output kept as four parity grids y1p[rh][rw][n, a, b, c] = y1[n, 2a+rh, 2b+rw, c]
    # so conv2's stride-2 patch extraction below needs only unit-stride slices.
    y1p = [[None, None], [None, None]]
    for rh in range(2):
        for rw in range(2):
            acc = jnp.zeros((T, 6, 6, 16), jnp.float32)
            for kh in range(5):
                for kw in range(5):
                    k = kh * 5 + kw
                    # (T,6,6,1) * (1,16) -> (T,6,6,16)   broadcast FMA on the VPU
                    acc = acc + slices[(2 * rh + kh, 2 * rw + kw)] * w1[k:k + 1, :]
            y1p[rh][rw] = jnp.maximum(acc + sh1, 0.0)               # f32 epilogue

    # --- conv2 (5x5, stride 2, 16 -> 32) + bn2 + relu : im2col matmul (MXU) --
    pieces = []
    for kh in range(5):
        rh, dh = kh % 2, kh // 2
        for kw in range(5):
            rw, dw = kw % 2, kw // 2
            pieces.append(y1p[rh][rw][:, dh:dh + 4, dw:dw + 4, :])  # (T,4,4,16)
    p2 = jnp.concatenate(pieces, axis=3)                    # (T, 4, 4, 400)
    p2 = p2.reshape(T * 16, 400).astype(jnp.bfloat16)       # rows = (n, oh2, ow2)
    y2 = jnp.dot(p2, w2_ref[...], preferred_element_type=jnp.float32)   # (T*16, 32)
    y2 = jnp.maximum(y2 + sh2_ref[...], 0.0)                # f32 epilogue

    # --- adaptive avg pool (1,1) + fc ----------------------------------------
    pooled = jnp.sum(y2.reshape(T, 16, 32), axis=1) * (1.0 / 16.0)       # (T, 32)
    out = jnp.dot(pooled, wf_ref[...], preferred_element_type=jnp.float32)
    o_ref[...] = out + bf_ref[...]                          # lane-dense (T, 128) store


# ---------------------------------------------------------------------------
# Wrapper: parameter folding, space-to-depth, pallas_call
# ---------------------------------------------------------------------------

def _fold_params(params, eps=1e-5):
    s1 = params["g1"] / jnp.sqrt(params["v1"] + eps)                        # (16,)
    sh1 = ((params["b1"] - params["m1"]) * s1 + params["be1"]).reshape(1, 16)
    w1f = (jnp.transpose(params["w1"][:, 0], (1, 2, 0)).reshape(25, 16)
           * s1[None, :]).astype(jnp.float32)                              # (25, 16)

    s2 = params["g2"] / jnp.sqrt(params["v2"] + eps)                        # (32,)
    sh2 = ((params["b2"] - params["m2"]) * s2 + params["be2"]).reshape(1, 32)
    w2f = (jnp.transpose(params["w2"], (2, 3, 1, 0)).reshape(400, 32)
           * s2[None, :]).astype(jnp.bfloat16)                             # (400, 32)

    nc = params["wf"].shape[0]
    assert nc <= 128
    wf = jnp.zeros((32, 128), jnp.float32).at[:, :nc].set(params["wf"].T)
    bf = jnp.zeros((1, 128), jnp.float32).at[0, :nc].set(params["bf"])
    return w1f, sh1, w2f, sh2, wf, bf, nc


def snet_mnist_forward(x, params, tile_n=8):
    """Forward pass.  x: (N,1,28,28) or (N,28,28) float."""
    if x.ndim == 3:
        x = x[:, None, :, :]
    N, C, H, W = x.shape
    assert C == 1 and H == 28 and W == 28, "SNetMNIST expects (N, 1, 28, 28) input"

    x = x[:, 0].astype(jnp.float32)                              # (N, 28, 28)
    # space-to-depth (factor 4): x4[n, a, b, u*4+v] = x[n, 4a+u, 4b+v]
    x4 = x.reshape(N, 7, 4, 7, 4).transpose(0, 1, 3, 2, 4).reshape(N, 7, 7, 16)

    w1f, sh1, w2f, sh2, wf, bf, nc = _fold_params(params)

    T = min(tile_n, N)
    n_pad = (-N) % T
    if n_pad:
        x4 = jnp.pad(x4, ((0, n_pad), (0, 0), (0, 0), (0, 0)))
    Np = N + n_pad

    out = pl.pallas_call(
        _snet_fused_kernel,
        out_shape=jax.ShapeDtypeStruct((Np, 128), jnp.float32),
        grid_spec=pltpu.PrefetchScalarGridSpec(
            num_scalar_prefetch=0,
            grid=(Np // T,),
            in_specs=[
                pl.BlockSpec((T, 7, 7, 16), lambda i: (i, 0, 0, 0)),
                pl.BlockSpec((25, 16), lambda i: (0, 0)),
                pl.BlockSpec((1, 16), lambda i: (0, 0)),
                pl.BlockSpec((400, 32), lambda i: (0, 0)),
                pl.BlockSpec((1, 32), lambda i: (0, 0)),
                pl.BlockSpec((32, 128), lambda i: (0, 0)),
                pl.BlockSpec((1, 128), lambda i: (0, 0)),
            ],
            out_specs=pl.BlockSpec((T, 128), lambda i: (i, 0)),
        ),
        compiler_params=pltpu.CompilerParams(
            dimension_semantics=("parallel",),          # 2x TC on v7x, no-op elsewhere
            vmem_limit_bytes=32 * 1024 * 1024,
        ),
    )(x4, w1f, sh1, w2f, sh2, wf, bf)

    return out[:N, :nc]


# ---------------------------------------------------------------------------
# Parameter init + pure-JAX reference for verification
# ---------------------------------------------------------------------------

def init_params(key, num_classes=10):
    ks = jax.random.split(key, 12)
    p = {}
    p["w1"] = jax.random.normal(ks[0], (16, 1, 5, 5), jnp.float32) * 0.1
    p["b1"] = jax.random.normal(ks[1], (16,), jnp.float32) * 0.1
    p["g1"] = 1.0 + 0.1 * jax.random.normal(ks[2], (16,), jnp.float32)
    p["be1"] = 0.1 * jax.random.normal(ks[3], (16,), jnp.float32)
    p["m1"] = 0.1 * jax.random.normal(ks[4], (16,), jnp.float32)
    p["v1"] = jax.random.uniform(ks[5], (16,), jnp.float32, 0.5, 1.5)
    p["w2"] = jax.random.normal(ks[6], (32, 16, 5, 5), jnp.float32) * 0.05
    p["b2"] = jax.random.normal(ks[7], (32,), jnp.float32) * 0.1
    p["g2"] = 1.0 + 0.1 * jax.random.normal(ks[8], (32,), jnp.float32)
    p["be2"] = 0.1 * jax.random.normal(ks[9], (32,), jnp.float32)
    p["m2"] = 0.1 * jax.random.normal(ks[10], (32,), jnp.float32)
    p["v2"] = jax.random.uniform(ks[11], (32,), jnp.float32, 0.5, 1.5)
    kf1, kf2 = jax.random.split(jax.random.fold_in(key, 99))
    p["wf"] = jax.random.normal(kf1, (num_classes, 32), jnp.float32) * 0.1
    p["bf"] = jax.random.normal(kf2, (num_classes,), jnp.float32) * 0.1
    return p


def _ref_forward(x, params, eps=1e-5):
    if x.ndim == 3:
        x = x[:, None, :, :]

    def conv(h, w, b, stride):
        y = jax.lax.conv_general_dilated(
            h, w, (stride, stride), "VALID",
            dimension_numbers=("NCHW", "OIHW", "NCHW"))
        return y + b[None, :, None, None]

    def bn(h, g, be, m, v):
        return (h - m[None, :, None, None]) / jnp.sqrt(v + eps)[None, :, None, None] \
            * g[None, :, None, None] + be[None, :, None, None]

    h = jax.nn.relu(bn(conv(x, params["w1"], params["b1"], 2),
                       params["g1"], params["be1"], params["m1"], params["v1"]))
    h = jax.nn.relu(bn(conv(h, params["w2"], params["b2"], 2),
                       params["g2"], params["be2"], params["m2"], params["v2"]))
    h = jnp.mean(h, axis=(2, 3))
    return h @ params["wf"].T + params["bf"][None, :]


# ---------------------------------------------------------------------------

if __name__ == "__main__":
    key = jax.random.PRNGKey(0)
    kx, kp = jax.random.split(key)

    # MNIST-like input, small batch: NCHW (2, 1, 28, 28)
    x = jax.random.normal(kx, (2, 1, 28, 28), jnp.float32)
    params = init_params(kp, num_classes=10)

    fwd = jax.jit(snet_mnist_forward)
    out = jax.block_until_ready(fwd(x, params))
    assert out.shape == (2, 10), out.shape

    ref = jax.block_until_ready(_ref_forward(x, params))
    np.testing.assert_allclose(np.asarray(out), np.asarray(ref),
                               rtol=3e-2, atol=3e-2)

    print("KERNEL_OK")
</pallas_src>

<mosaic_0001>
module attributes {stable_mosaic.version = 11 : i64} {
  func.func @_snet_fused_kernel(%arg0: i32, %arg1: memref<2x7x7x16xf32, #tpu.memory_space<vmem>>, %arg2: memref<25x16xf32, #tpu.memory_space<vmem>>, %arg3: memref<1x16xf32, #tpu.memory_space<vmem>>, %arg4: memref<400x32xbf16, #tpu.memory_space<vmem>>, %arg5: memref<1x32xf32, #tpu.memory_space<vmem>>, %arg6: memref<32x128xf32, #tpu.memory_space<vmem>>, %arg7: memref<1x128xf32, #tpu.memory_space<vmem>>, %arg8: memref<2x128xf32, #tpu.memory_space<vmem>>) attributes {dimension_semantics = [#tpu.dimension_semantics<parallel>], iteration_bounds = array<i64: 1>, scalar_prefetch = 0 : i64, scratch_operands = 0 : i64, tpu.core_type = #tpu.core_type<tc>, window_params = [{transform_indices = @transform_0, window_bounds = array<i64: 2, 7, 7, 16>}, {pipeline_mode = #tpu.pipeline_mode<synchronous>, transform_indices = @transform_1, window_bounds = array<i64: 25, 16>}, {pipeline_mode = #tpu.pipeline_mode<synchronous>, transform_indices = @transform_2, window_bounds = array<i64: 1, 16>}, {pipeline_mode = #tpu.pipeline_mode<synchronous>, transform_indices = @transform_3, window_bounds = array<i64: 400, 32>}, {pipeline_mode = #tpu.pipeline_mode<synchronous>, transform_indices = @transform_4, window_bounds = array<i64: 1, 32>}, {pipeline_mode = #tpu.pipeline_mode<synchronous>, transform_indices = @transform_5, window_bounds = array<i64: 32, 128>}, {pipeline_mode = #tpu.pipeline_mode<synchronous>, transform_indices = @transform_6, window_bounds = array<i64: 1, 128>}, {transform_indices = @transform_7, window_bounds = array<i64: 2, 128>}]} {
    %c0 = arith.constant 0 : index
    %c0_0 = arith.constant 0 : index
    %c0_1 = arith.constant 0 : index
    %c0_2 = arith.constant 0 : index
    %0 = vector.load %arg1[%c0, %c0_0, %c0_1, %c0_2] : memref<2x7x7x16xf32, #tpu.memory_space<vmem>>, vector<2x7x7x16xf32>
    %c0_3 = arith.constant 0 : index
    %c0_4 = arith.constant 0 : index
    %1 = vector.load %arg2[%c0_3, %c0_4] : memref<25x16xf32, #tpu.memory_space<vmem>>, vector<25x16xf32>
    %c0_5 = arith.constant 0 : index
    %c0_6 = arith.constant 0 : index
    %2 = vector.load %arg3[%c0_5, %c0_6] : memref<1x16xf32, #tpu.memory_space<vmem>>, vector<1x16xf32>
    %3 = vector.extract_strided_slice %0 {offsets = [0, 0, 0, 0], sizes = [2, 6, 6, 1], strides = [1, 1, 1, 1]} : vector<2x7x7x16xf32> to vector<2x6x6x1xf32>
    %4 = vector.extract_strided_slice %0 {offsets = [0, 0, 0, 1], sizes = [2, 6, 6, 1], strides = [1, 1, 1, 1]} : vector<2x7x7x16xf32> to vector<2x6x6x1xf32>
    %5 = vector.extract_strided_slice %0 {offsets = [0, 0, 0, 2], sizes = [2, 6, 6, 1], strides = [1, 1, 1, 1]} : vector<2x7x7x16xf32> to vector<2x6x6x1xf32>
    %6 = vector.extract_strided_slice %0 {offsets = [0, 0, 0, 3], sizes = [2, 6, 6, 1], strides = [1, 1, 1, 1]} : vector<2x7x7x16xf32> to vector<2x6x6x1xf32>
    %7 = vector.extract_strided_slice %0 {offsets = [0, 0, 1, 0], sizes = [2, 6, 6, 1], strides = [1, 1, 1, 1]} : vector<2x7x7x16xf32> to vector<2x6x6x1xf32>
    %8 = vector.extract_strided_slice %0 {offsets = [0, 0, 1, 1], sizes = [2, 6, 6, 1], strides = [1, 1, 1, 1]} : vector<2x7x7x16xf32> to vector<2x6x6x1xf32>
    %9 = vector.extract_strided_slice %0 {offsets = [0, 0, 1, 2], sizes = [2, 6, 6, 1], strides = [1, 1, 1, 1]} : vector<2x7x7x16xf32> to vector<2x6x6x1xf32>
    %10 = vector.extract_strided_slice %0 {offsets = [0, 0, 0, 4], sizes = [2, 6, 6, 1], strides = [1, 1, 1, 1]} : vector<2x7x7x16xf32> to vector<2x6x6x1xf32>
    %11 = vector.extract_strided_slice %0 {offsets = [0, 0, 0, 5], sizes = [2, 6, 6, 1], strides = [1, 1, 1, 1]} : vector<2x7x7x16xf32> to vector<2x6x6x1xf32>
    %12 = vector.extract_strided_slice %0 {offsets = [0, 0, 0, 6], sizes = [2, 6, 6, 1], strides = [1, 1, 1, 1]} : vector<2x7x7x16xf32> to vector<2x6x6x1xf32>
    %13 = vector.extract_strided_slice %0 {offsets = [0, 0, 0, 7], sizes = [2, 6, 6, 1], strides = [1, 1, 1, 1]} : vector<2x7x7x16xf32> to vector<2x6x6x1xf32>
    %14 = vector.extract_strided_slice %0 {offsets = [0, 0, 1, 4], sizes = [2, 6, 6, 1], strides = [1, 1, 1, 1]} : vector<2x7x7x16xf32> to vector<2x6x6x1xf32>
    %15 = vector.extract_strided_slice %0 {offsets = [0, 0, 1, 5], sizes = [2, 6, 6, 1], strides = [1, 1, 1, 1]} : vector<2x7x7x16xf32> to vector<2x6x6x1xf32>
    %16 = vector.extract_strided_slice %0 {offsets = [0, 0, 1, 6], sizes = [2, 6, 6, 1], strides = [1, 1, 1, 1]} : vector<2x7x7x16xf32> to vector<2x6x6x1xf32>
    %17 = vector.extract_strided_slice %0 {offsets = [0, 0, 0, 8], sizes = [2, 6, 6, 1], strides = [1, 1, 1, 1]} : vector<2x7x7x16xf32> to vector<2x6x6x1xf32>
    %18 = vector.extract_strided_slice %0 {offsets = [0, 0, 0, 9], sizes = [2, 6, 6, 1], strides = [1, 1, 1, 1]} : vector<2x7x7x16xf32> to vector<2x6x6x1xf32>
    %19 = vector.extract_strided_slice %0 {offsets = [0, 0, 0, 10], sizes = [2, 6, 6, 1], strides = [1, 1, 1, 1]} : vector<2x7x7x16xf32> to vector<2x6x6x1xf32>
    %20 = vector.extract_strided_slice %0 {offsets = [0, 0, 0, 11], sizes = [2, 6, 6, 1], strides = [1, 1, 1, 1]} : vector<2x7x7x16xf32> to vector<2x6x6x1xf32>
    %21 = vector.extract_strided_slice %0 {offsets = [0, 0, 1, 8], sizes = [2, 6, 6, 1], strides = [1, 1, 1, 1]} : vector<2x7x7x16xf32> to vector<2x6x6x1xf32>
    %22 = vector.extract_strided_slice %0 {offsets = [0, 0, 1, 9], sizes = [2, 6, 6, 1], strides = [1, 1, 1, 1]} : vector<2x7x7x16xf32> to vector<2x6x6x1xf32>
    %23 = vector.extract_strided_slice %0 {offsets = [0, 0, 1, 10], sizes = [2, 6, 6, 1], strides = [1, 1, 1, 1]} : vector<2x7x7x16xf32> to vector<2x6x6x1xf32>
    %24 = vector.extract_strided_slice %0 {offsets = [0, 0, 0, 12], sizes = [2, 6, 6, 1], strides = [1, 1, 1, 1]} : vector<2x7x7x16xf32> to vector<2x6x6x1xf32>
    %25 = vector.extract_strided_slice %0 {offsets = [0, 0, 0, 13], sizes = [2, 6, 6, 1], strides = [1, 1, 1, 1]} : vector<2x7x7x16xf32> to vector<2x6x6x1xf32>
    %26 = vector.extract_strided_slice %0 {offsets = [0, 0, 0, 14], sizes = [2, 6, 6, 1], strides = [1, 1, 1, 1]} : vector<2x7x7x16xf32> to vector<2x6x6x1xf32>
    %27 = vector.extract_strided_slice %0 {offsets = [0, 0, 0, 15], sizes = [2, 6, 6, 1], strides = [1, 1, 1, 1]} : vector<2x7x7x16xf32> to vector<2x6x6x1xf32>
    %28 = vector.extract_strided_slice %0 {offsets = [0, 0, 1, 12], sizes = [2, 6, 6, 1], strides = [1, 1, 1, 1]} : vector<2x7x7x16xf32> to vector<2x6x6x1xf32>
    %29 = vector.extract_strided_slice %0 {offsets = [0, 0, 1, 13], sizes = [2, 6, 6, 1], strides = [1, 1, 1, 1]} : vector<2x7x7x16xf32> to vector<2x6x6x1xf32>
    %30 = vector.extract_strided_slice %0 {offsets = [0, 0, 1, 14], sizes = [2, 6, 6, 1], strides = [1, 1, 1, 1]} : vector<2x7x7x16xf32> to vector<2x6x6x1xf32>
    %31 = vector.extract_strided_slice %0 {offsets = [0, 1, 0, 0], sizes = [2, 6, 6, 1], strides = [1, 1, 1, 1]} : vector<2x7x7x16xf32> to vector<2x6x6x1xf32>
    %32 = vector.extract_strided_slice %0 {offsets = [0, 1, 0, 1], sizes = [2, 6, 6, 1], strides = [1, 1, 1, 1]} : vector<2x7x7x16xf32> to vector<2x6x6x1xf32>
    %33 = vector.extract_strided_slice %0 {offsets = [0, 1, 0, 2], sizes = [2, 6, 6, 1], strides = [1, 1, 1, 1]} : vector<2x7x7x16xf32> to vector<2x6x6x1xf32>
    %34 = vector.extract_strided_slice %0 {offsets = [0, 1, 0, 3], sizes = [2, 6, 6, 1], strides = [1, 1, 1, 1]} : vector<2x7x7x16xf32> to vector<2x6x6x1xf32>
    %35 = vector.extract_strided_slice %0 {offsets = [0, 1, 1, 0], sizes = [2, 6, 6, 1], strides = [1, 1, 1, 1]} : vector<2x7x7x16xf32> to vector<2x6x6x1xf32>
    %36 = vector.extract_strided_slice %0 {offsets = [0, 1, 1, 1], sizes = [2, 6, 6, 1], strides = [1, 1, 1, 1]} : vector<2x7x7x16xf32> to vector<2x6x6x1xf32>
    %37 = vector.extract_strided_slice %0 {offsets = [0, 1, 1, 2], sizes = [2, 6, 6, 1], strides = [1, 1, 1, 1]} : vector<2x7x7x16xf32> to vector<2x6x6x1xf32>
    %38 = vector.extract_strided_slice %0 {offsets = [0, 1, 0, 4], sizes = [2, 6, 6, 1], strides = [1, 1, 1, 1]} : vector<2x7x7x16xf32> to vector<2x6x6x1xf32>
    %39 = vector.extract_strided_slice %0 {offsets = [0, 1, 0, 5], sizes = [2, 6, 6, 1], strides = [1, 1, 1, 1]} : vector<2x7x7x16xf32> to vector<2x6x6x1xf32>
    %40 = vector.extract_strided_slice %0 {offsets = [0, 1, 0, 6], sizes = [2, 6, 6, 1], strides = [1, 1, 1, 1]} : vector<2x7x7x16xf32> to vector<2x6x6x1xf32>
    %41 = vector.extract_strided_slice %0 {offsets = [0, 1, 0, 7], sizes = [2, 6, 6, 1], strides = [1, 1, 1, 1]} : vector<2x7x7x16xf32> to vector<2x6x6x1xf32>
    %42 = vector.extract_strided_slice %0 {offsets = [0, 1, 1, 4], sizes = [2, 6, 6, 1], strides = [1, 1, 1, 1]} : vector<2x7x7x16xf32> to vector<2x6x6x1xf32>
    %43 = vector.extract_strided_slice %0 {offsets = [0, 1, 1, 5], sizes = [2, 6, 6, 1], strides = [1, 1, 1, 1]} : vector<2x7x7x16xf32> to vector<2x6x6x1xf32>
    %44 = vector.extract_strided_slice %0 {offsets = [0, 1, 1, 6], sizes = [2, 6, 6, 1], strides = [1, 1, 1, 1]} : vector<2x7x7x16xf32> to vector<2x6x6x1xf32>
    %45 = vector.extract_strided_slice %0 {offsets = [0, 1, 0, 8], sizes = [2, 6, 6, 1], strides = [1, 1, 1, 1]} : vector<2x7x7x16xf32> to vector<2x6x6x1xf32>
    %46 = vector.extract_strided_slice %0 {offsets = [0, 1, 0, 9], sizes = [2, 6, 6, 1], strides = [1, 1, 1, 1]} : vector<2x7x7x16xf32> to vector<2x6x6x1xf32>
    %47 = vector.extract_strided_slice %0 {offsets = [0, 1, 0, 10], sizes = [2, 6, 6, 1], strides = [1, 1, 1, 1]} : vector<2x7x7x16xf32> to vector<2x6x6x1xf32>
    %48 = vector.extract_strided_slice %0 {offsets = [0, 1, 0, 11], sizes = [2, 6, 6, 1], strides = [1, 1, 1, 1]} : vector<2x7x7x16xf32> to vector<2x6x6x1xf32>
    %49 = vector.extract_strided_slice %0 {offsets = [0, 1, 1, 8], sizes = [2, 6, 6, 1], strides = [1, 1, 1, 1]} : vector<2x7x7x16xf32> to vector<2x6x6x1xf32>
    %50 = vector.extract_strided_slice %0 {offsets = [0, 1, 1, 9], sizes = [2, 6, 6, 1], strides = [1, 1, 1, 1]} : vector<2x7x7x16xf32> to vector<2x6x6x1xf32>
    %51 = vector.extract_strided_slice %0 {offsets = [0, 1, 1, 10], sizes = [2, 6, 6, 1], strides = [1, 1, 1, 1]} : vector<2x7x7x16xf32> to vector<2x6x6x1xf32>
    %cst = arith.constant 0.000000e+00 : f32
    %52 = vector.broadcast %cst : f32 to vector<2x6x6x16xf32>
    %53 = vector.extract_strided_slice %1 {offsets = [0, 0], sizes = [1, 16], strides = [1, 1]} : vector<25x16xf32> to vector<1x16xf32>
    %54 = vector.shape_cast %53 : vector<1x16xf32> to vector<1x1x1x16xf32>
    %55 = vector.broadcast %3 : vector<2x6x6x1xf32> to vector<2x6x6x16xf32>
    %56 = vector.broadcast %54 : vector<1x1x1x16xf32> to vector<2x6x6x16xf32>
    %57 = arith.mulf %55, %56 : vector<2x6x6x16xf32>
    %58 = arith.addf %52, %57 : vector<2x6x6x16xf32>
    %59 = vector.extract_strided_slice %1 {offsets = [1, 0], sizes = [1, 16], strides = [1, 1]} : vector<25x16xf32> to vector<1x16xf32>
    %60 = vector.shape_cast %59 : vector<1x16xf32> to vector<1x1x1x16xf32>
    %61 = vector.broadcast %4 : vector<2x6x6x1xf32> to vector<2x6x6x16xf32>
    %62 = vector.broadcast %60 : vector<1x1x1x16xf32> to vector<2x6x6x16xf32>
    %63 = arith.mulf %61, %62 : vector<2x6x6x16xf32>
    %64 = arith.addf %58, %63 : vector<2x6x6x16xf32>
    %65 = vector.extract_strided_slice %1 {offsets = [2, 0], sizes = [1, 16], strides = [1, 1]} : vector<25x16xf32> to vector<1x16xf32>
    %66 = vector.shape_cast %65 : vector<1x16xf32> to vector<1x1x1x16xf32>
    %67 = vector.broadcast %5 : vector<2x6x6x1xf32> to vector<2x6x6x16xf32>
    %68 = vector.broadcast %66 : vector<1x1x1x16xf32> to vector<2x6x6x16xf32>
    %69 = arith.mulf %67, %68 : vector<2x6x6x16xf32>
    %70 = arith.addf %64, %69 : vector<2x6x6x16xf32>
    %71 = vector.extract_strided_slice %1 {offsets = [3, 0], sizes = [1, 16], strides = [1, 1]} : vector<25x16xf32> to vector<1x16xf32>
    %72 = vector.shape_cast %71 : vector<1x16xf32> to vector<1x1x1x16xf32>
    %73 = vector.broadcast %6 : vector<2x6x6x1xf32> to vector<2x6x6x16xf32>
    %74 = vector.broadcast %72 : vector<1x1x1x16xf32> to vector<2x6x6x16xf32>
    %75 = arith.mulf %73, %74 : vector<2x6x6x16xf32>
    %76 = arith.addf %70, %75 : vector<2x6x6x16xf32>
    %77 = vector.extract_strided_slice %1 {offsets = [4, 0], sizes = [1, 16], strides = [1, 1]} : vector<25x16xf32> to vector<1x16xf32>
    %78 = vector.shape_cast %77 : vector<1x16xf32> to vector<1x1x1x16xf32>
    %79 = vector.broadcast %7 : vector<2x6x6x1xf32> to vector<2x6x6x16xf32>
    %80 = vector.broadcast %78 : vector<1x1x1x16xf32> to vector<2x6x6x16xf32>
    %81 = arith.mulf %79, %80 : vector<2x6x6x16xf32>
    %82 = arith.addf %76, %81 : vector<2x6x6x16xf32>
    %83 = vector.extract_strided_slice %1 {offsets = [5, 0], sizes = [1, 16], strides = [1, 1]} : vector<25x16xf32> to vector<1x16xf32>
    %84 = vector.shape_cast %83 : vector<1x16xf32> to vector<1x1x1x16xf32>
    %85 = vector.broadcast %10 : vector<2x6x6x1xf32> to vector<2x6x6x16xf32>
    %86 = vector.broadcast %84 : vector<1x1x1x16xf32> to vector<2x6x6x16xf32>
    %87 = arith.mulf %85, %86 : vector<2x6x6x16xf32>
    %88 = arith.addf %82, %87 : vector<2x6x6x16xf32>
    %89 = vector.extract_strided_slice %1 {offsets = [6, 0], sizes = [1, 16], strides = [1, 1]} : vector<25x16xf32> to vector<1x16xf32>
    %90 = vector.shape_cast %89 : vector<1x16xf32> to vector<1x1x1x16xf32>
    %91 = vector.broadcast %11 : vector<2x6x6x1xf32> to vector<2x6x6x16xf32>
    %92 = vector.broadcast %90 : vector<1x1x1x16xf32> to vector<2x6x6x16xf32>
    %93 = arith.mulf %91, %92 : vector<2x6x6x16xf32>
    %94 = arith.addf %88, %93 : vector<2x6x6x16xf32>
    %95 = vector.extract_strided_slice %1 {offsets = [7, 0], sizes = [1, 16], strides = [1, 1]} : vector<25x16xf32> to vector<1x16xf32>
    %96 = vector.shape_cast %95 : vector<1x16xf32> to vector<1x1x1x16xf32>
    %97 = vector.broadcast %12 : vector<2x6x6x1xf32> to vector<2x6x6x16xf32>
    %98 = vector.broadcast %96 : vector<1x1x1x16xf32> to vector<2x6x6x16xf32>
    %99 = arith.mulf %97, %98 : vector<2x6x6x16xf32>
    %100 = arith.addf %94, %99 : vector<2x6x6x16xf32>
    %101 = vector.extract_strided_slice %1 {offsets = [8, 0], sizes = [1, 16], strides = [1, 1]} : vector<25x16xf32> to vector<1x16xf32>
    %102 = vector.shape_cast %101 : vector<1x16xf32> to vector<1x1x1x16xf32>
    %103 = vector.broadcast %13 : vector<2x6x6x1xf32> to vector<2x6x6x16xf32>
    %104 = vector.broadcast %102 : vector<1x1x1x16xf32> to vector<2x6x6x16xf32>
    %105 = arith.mulf %103, %104 : vector<2x6x6x16xf32>
    %106 = arith.addf %100, %105 : vector<2x6x6x16xf32>
    %107 = vector.extract_strided_slice %1 {offsets = [9, 0], sizes = [1, 16], strides = [1, 1]} : vector<25x16xf32> to vector<1x16xf32>
    %108 = vector.shape_cast %107 : vector<1x16xf32> to vector<1x1x1x16xf32>
    %109 = vector.broadcast %14 : vector<2x6x6x1xf32> to vector<2x6x6x16xf32>
    %110 = vector.broadcast %108 : vector<1x1x1x16xf32> to vector<2x6x6x16xf32>
    %111 = arith.mulf %109, %110 : vector<2x6x6x16xf32>
    %112 = arith.addf %106, %111 : vector<2x6x6x16xf32>
    %113 = vector.extract_strided_slice %1 {offsets = [10, 0], sizes = [1, 16], strides = [1, 1]} : vector<25x16xf32> to vector<1x16xf32>
    %114 = vector.shape_cast %113 : vector<1x16xf32> to vector<1x1x1x16xf32>
    %115 = vector.broadcast %17 : vector<2x6x6x1xf32> to vector<2x6x6x16xf32>
    %116 = vector.broadcast %114 : vector<1x1x1x16xf32> to vector<2x6x6x16xf32>
    %117 = arith.mulf %115, %116 : vector<2x6x6x16xf32>
    %118 = arith.addf %112, %117 : vector<2x6x6x16xf32>
    %119 = vector.extract_strided_slice %1 {offsets = [11, 0], sizes = [1, 16], strides = [1, 1]} : vector<25x16xf32> to vector<1x16xf32>
    %120 = vector.shape_cast %119 : vector<1x16xf32> to vector<1x1x1x16xf32>
    %121 = vector.broadcast %18 : vector<2x6x6x1xf32> to vector<2x6x6x16xf32>
    %122 = vector.broadcast %120 : vector<1x1x1x16xf32> to vector<2x6x6x16xf32>
    %123 = arith.mulf %121, %122 : vector<2x6x6x16xf32>
    %124 = arith.addf %118, %123 : vector<2x6x6x16xf32>
    %125 = vector.extract_strided_slice %1 {offsets = [12, 0], sizes = [1, 16], strides = [1, 1]} : vector<25x16xf32> to vector<1x16xf32>
    %126 = vector.shape_cast %125 : vector<1x16xf32> to vector<1x1x1x16xf32>
    %127 = vector.broadcast %19 : vector<2x6x6x1xf32> to vector<2x6x6x16xf32>
    %128 = vector.broadcast %126 : vector<1x1x1x16xf32> to vector<2x6x6x16xf32>
    %129 = arith.mulf %127, %128 : vector<2x6x6x16xf32>
    %130 = arith.addf %124, %129 : vector<2x6x6x16xf32>
    %131 = vector.extract_strided_slice %1 {offsets = [13, 0], sizes = [1, 16], strides = [1, 1]} : vector<25x16xf32> to vector<1x16xf32>
    %132 = vector.shape_cast %131 : vector<1x16xf32> to vector<1x1x1x16xf32>
    %133 = vector.broadcast %20 : vector<2x6x6x1xf32> to vector<2x6x6x16xf32>
    %134 = vector.broadcast %132 : vector<1x1x1x16xf32> to vector<2x6x6x16xf32>
    %135 = arith.mulf %133, %134 : vector<2x6x6x16xf32>
    %136 = arith.addf %130, %135 : vector<2x6x6x16xf32>
    %137 = vector.extract_strided_slice %1 {offsets = [14, 0], sizes = [1, 16], strides = [1, 1]} : vector<25x16xf32> to vector<1x16xf32>
    %138 = vector.shape_cast %137 : vector<1x16xf32> to vector<1x1x1x16xf32>
    %139 = vector.broadcast %21 : vector<2x6x6x1xf32> to vector<2x6x6x16xf32>
    %140 = vector.broadcast %138 : vector<1x1x1x16xf32> to vector<2x6x6x16xf32>
    %141 = arith.mulf %139, %140 : vector<2x6x6x16xf32>
    %142 = arith.addf %136, %141 : vector<2x6x6x16xf32>
    %143 = vector.extract_strided_slice %1 {offsets = [15, 0], sizes = [1, 16], strides = [1, 1]} : vector<25x16xf32> to vector<1x16xf32>
    %144 = vector.shape_cast %143 : vector<1x16xf32> to vector<1x1x1x16xf32>
    %145 = vector.broadcast %24 : vector<2x6x6x1xf32> to vector<2x6x6x16xf32>
    %146 = vector.broadcast %144 : vector<1x1x1x16xf32> to vector<2x6x6x16xf32>
    %147 = arith.mulf %145, %146 : vector<2x6x6x16xf32>
    %148 = arith.addf %142, %147 : vector<2x6x6x16xf32>
    %149 = vector.extract_strided_slice %1 {offsets = [16, 0], sizes = [1, 16], strides = [1, 1]} : vector<25x16xf32> to vector<1x16xf32>
    %150 = vector.shape_cast %149 : vector<1x16xf32> to vector<1x1x1x16xf32>
    %151 = vector.broadcast %25 : vector<2x6x6x1xf32> to vector<2x6x6x16xf32>
    %152 = vector.broadcast %150 : vector<1x1x1x16xf32> to vector<2x6x6x16xf32>
    %153 = arith.mulf %151, %152 : vector<2x6x6x16xf32>
    %154 = arith.addf %148, %153 : vector<2x6x6x16xf32>
    %155 = vector.extract_strided_slice %1 {offsets = [17, 0], sizes = [1, 16], strides = [1, 1]} : vector<25x16xf32> to vector<1x16xf32>
    %156 = vector.shape_cast %155 : vector<1x16xf32> to vector<1x1x1x16xf32>
    %157 = vector.broadcast %26 : vector<2x6x6x1xf32> to vector<2x6x6x16xf32>
    %158 = vector.broadcast %156 : vector<1x1x1x16xf32> to vector<2x6x6x16xf32>
    %159 = arith.mulf %157, %158 : vector<2x6x6x16xf32>
    %160 = arith.addf %154, %159 : vector<2x6x6x16xf32>
    %161 = vector.extract_strided_slice %1 {offsets = [18, 0], sizes = [1, 16], strides = [1, 1]} : vector<25x16xf32> to vector<1x16xf32>
    %162 = vector.shape_cast %161 : vector<1x16xf32> to vector<1x1x1x16xf32>
    %163 = vector.broadcast %27 : vector<2x6x6x1xf32> to vector<2x6x6x16xf32>
    %164 = vector.broadcast %162 : vector<1x1x1x16xf32> to vector<2x6x6x16xf32>
    %165 = arith.mulf %163, %164 : vector<2x6x6x16xf32>
    %166 = arith.addf %160, %165 : vector<2x6x6x16xf32>
    %167 = vector.extract_strided_slice %1 {offsets = [19, 0], sizes = [1, 16], strides = [1, 1]} : vector<25x16xf32> to vector<1x16xf32>
    %168 = vector.shape_cast %167 : vector<1x16xf32> to vector<1x1x1x16xf32>
    %169 = vector.broadcast %28 : vector<2x6x6x1xf32> to vector<2x6x6x16xf32>
    %170 = vector.broadcast %168 : vector<1x1x1x16xf32> to vector<2x6x6x16xf32>
    %171 = arith.mulf %169, %170 : vector<2x6x6x16xf32>
    %172 = arith.addf %166, %171 : vector<2x6x6x16xf32>
    %173 = vector.extract_strided_slice %1 {offsets = [20, 0], sizes = [1, 16], strides = [1, 1]} : vector<25x16xf32> to vector<1x16xf32>
    %174 = vector.shape_cast %173 : vector<1x16xf32> to vector<1x1x1x16xf32>
    %175 = vector.broadcast %31 : vector<2x6x6x1xf32> to vector<2x6x6x16xf32>
    %176 = vector.broadcast %174 : vector<1x1x1x16xf32> to vector<2x6x6x16xf32>
    %177 = arith.mulf %175, %176 : vector<2x6x6x16xf32>
    %178 = arith.addf %172, %177 : vector<2x6x6x16xf32>
    %179 = vector.extract_strided_slice %1 {offsets = [21, 0], sizes = [1, 16], strides = [1, 1]} : vector<25x16xf32> to vector<1x16xf32>
    %180 = vector.shape_cast %179 : vector<1x16xf32> to vector<1x1x1x16xf32>
    %181 = vector.broadcast %32 : vector<2x6x6x1xf32> to vector<2x6x6x16xf32>
    %182 = vector.broadcast %180 : vector<1x1x1x16xf32> to vector<2x6x6x16xf32>
    %183 = arith.mulf %181, %182 : vector<2x6x6x16xf32>
    %184 = arith.addf %178, %183 : vector<2x6x6x16xf32>
    %185 = vector.extract_strided_slice %1 {offsets = [22, 0], sizes = [1, 16], strides = [1, 1]} : vector<25x16xf32> to vector<1x16xf32>
    %186 = vector.shape_cast %185 : vector<1x16xf32> to vector<1x1x1x16xf32>
    %187 = vector.broadcast %33 : vector<2x6x6x1xf32> to vector<2x6x6x16xf32>
    %188 = vector.broadcast %186 : vector<1x1x1x16xf32> to vector<2x6x6x16xf32>
    %189 = arith.mulf %187, %188 : vector<2x6x6x16xf32>
    %190 = arith.addf %184, %189 : vector<2x6x6x16xf32>
    %191 = vector.extract_strided_slice %1 {offsets = [23, 0], sizes = [1, 16], strides = [1, 1]} : vector<25x16xf32> to vector<1x16xf32>
    %192 = vector.shape_cast %191 : vector<1x16xf32> to vector<1x1x1x16xf32>
    %193 = vector.broadcast %34 : vector<2x6x6x1xf32> to vector<2x6x6x16xf32>
    %194 = vector.broadcast %192 : vector<1x1x1x16xf32> to vector<2x6x6x16xf32>
    %195 = arith.mulf %193, %194 : vector<2x6x6x16xf32>
    %196 = arith.addf %190, %195 : vector<2x6x6x16xf32>
    %197 = vector.extract_strided_slice %1 {offsets = [24, 0], sizes = [1, 16], strides = [1, 1]} : vector<25x16xf32> to vector<1x16xf32>
    %198 = vector.shape_cast %197 : vector<1x16xf32> to vector<1x1x1x16xf32>
    %199 = vector.broadcast %35 : vector<2x6x6x1xf32> to vector<2x6x6x16xf32>
    %200 = vector.broadcast %198 : vector<1x1x1x16xf32> to vector<2x6x6x16xf32>
    %201 = arith.mulf %199, %200 : vector<2x6x6x16xf32>
    %202 = arith.addf %196, %201 : vector<2x6x6x16xf32>
    %203 = vector.shape_cast %2 : vector<1x16xf32> to vector<1x1x1x16xf32>
    %204 = vector.broadcast %203 : vector<1x1x1x16xf32> to vector<2x6x6x16xf32>
    %205 = arith.addf %202, %204 : vector<2x6x6x16xf32>
    %cst_7 = arith.constant 0.000000e+00 : f32
    %206 = vector.broadcast %cst_7 : f32 to vector<2x6x6x16xf32>
    %207 = arith.maximumf %205, %206 : vector<2x6x6x16xf32>
    %cst_8 = arith.constant 0.000000e+00 : f32
    %208 = vector.broadcast %cst_8 : f32 to vector<2x6x6x16xf32>
    %209 = vector.extract_strided_slice %1 {offsets = [0, 0], sizes = [1, 16], strides = [1, 1]} : vector<25x16xf32> to vector<1x16xf32>
    %210 = vector.shape_cast %209 : vector<1x16xf32> to vector<1x1x1x16xf32>
    %211 = vector.broadcast %5 : vector<2x6x6x1xf32> to vector<2x6x6x16xf32>
    %212 = vector.broadcast %210 : vector<1x1x1x16xf32> to vector<2x6x6x16xf32>
    %213 = arith.mulf %211, %212 : vector<2x6x6x16xf32>
    %214 = arith.addf %208, %213 : vector<2x6x6x16xf32>
    %215 = vector.extract_strided_slice %1 {offsets = [1, 0], sizes = [1, 16], strides = [1, 1]} : vector<25x16xf32> to vector<1x16xf32>
    %216 = vector.shape_cast %215 : vector<1x16xf32> to vector<1x1x1x16xf32>
    %217 = vector.broadcast %6 : vector<2x6x6x1xf32> to vector<2x6x6x16xf32>
    %218 = vector.broadcast %216 : vector<1x1x1x16xf32> to vector<2x6x6x16xf32>
    %219 = arith.mulf %217, %218 : vector<2x6x6x16xf32>
    %220 = arith.addf %214, %219 : vector<2x6x6x16xf32>
    %221 = vector.extract_strided_slice %1 {offsets = [2, 0], sizes = [1, 16], strides = [1, 1]} : vector<25x16xf32> to vector<1x16xf32>
    %222 = vector.shape_cast %221 : vector<1x16xf32> to vector<1x1x1x16xf32>
    %223 = vector.broadcast %7 : vector<2x6x6x1xf32> to vector<2x6x6x16xf32>
    %224 = vector.broadcast %222 : vector<1x1x1x16xf32> to vector<2x6x6x16xf32>
    %225 = arith.mulf %223, %224 : vector<2x6x6x16xf32>
    %226 = arith.addf %220, %225 : vector<2x6x6x16xf32>
    %227 = vector.extract_strided_slice %1 {offsets = [3, 0], sizes = [1, 16], strides = [1, 1]} : vector<25x16xf32> to vector<1x16xf32>
    %228 = vector.shape_cast %227 : vector<1x16xf32> to vector<1x1x1x16xf32>
    %229 = vector.broadcast %8 : vector<2x6x6x1xf32> to vector<2x6x6x16xf32>
    %230 = vector.broadcast %228 : vector<1x1x1x16xf32> to vector<2x6x6x16xf32>
    %231 = arith.mulf %229, %230 : vector<2x6x6x16xf32>
    %232 = arith.addf %226, %231 : vector<2x6x6x16xf32>
    %233 = vector.extract_strided_slice %1 {offsets = [4, 0], sizes = [1, 16], strides = [1, 1]} : vector<25x16xf32> to vector<1x16xf32>
    %234 = vector.shape_cast %233 : vector<1x16xf32> to vector<1x1x1x16xf32>
    %235 = vector.broadcast %9 : vector<2x6x6x1xf32> to vector<2x6x6x16xf32>
    %236 = vector.broadcast %234 : vector<1x1x1x16xf32> to vector<2x6x6x16xf32>
    %237 = arith.mulf %235, %236 : vector<2x6x6x16xf32>
    %238 = arith.addf %232, %237 : vector<2x6x6x16xf32>
    %239 = vector.extract_strided_slice %1 {offsets = [5, 0], sizes = [1, 16], strides = [1, 1]} : vector<25x16xf32> to vector<1x16xf32>
    %240 = vector.shape_cast %239 : vector<1x16xf32> to vector<1x1x1x16xf32>
    %241 = vector.broadcast %12 : vector<2x6x6x1xf32> to vector<2x6x6x16xf32>
    %242 = vector.broadcast %240 : vector<1x1x1x16xf32> to vector<2x6x6x16xf32>
    %243 = arith.mulf %241, %242 : vector<2x6x6x16xf32>
    %244 = arith.addf %238, %243 : vector<2x6x6x16xf32>
    %245 = vector.extract_strided_slice %1 {offsets = [6, 0], sizes = [1, 16], strides = [1, 1]} : vector<25x16xf32> to vector<1x16xf32>
    %246 = vector.shape_cast %245 : vector<1x16xf32> to vector<1x1x1x16xf32>
    %247 = vector.broadcast %13 : vector<2x6x6x1xf32> to vector<2x6x6x16xf32>
    %248 = vector.broadcast %246 : vector<1x1x1x16xf32> to vector<2x6x6x16xf32>
    %249 = arith.mulf %247, %248 : vector<2x6x6x16xf32>
    %250 = arith.addf %244, %249 : vector<2x6x6x16xf32>
    %251 = vector.extract_strided_slice %1 {offsets = [7, 0], sizes = [1, 16], strides = [1, 1]} : vector<25x16xf32> to vector<1x16xf32>
    %252 = vector.shape_cast %251 : vector<1x16xf32> to vector<1x1x1x16xf32>
    %253 = vector.broadcast %14 : vector<2x6x6x1xf32> to vector<2x6x6x16xf32>
    %254 = vector.broadcast %252 : vector<1x1x1x16xf32> to vector<2x6x6x16xf32>
    %255 = arith.mulf %253, %254 : vector<2x6x6x16xf32>
    %256 = arith.addf %250, %255 : vector<2x6x6x16xf32>
    %257 = vector.extract_strided_slice %1 {offsets = [8, 0], sizes = [1, 16], strides = [1, 1]} : vector<25x16xf32> to vector<1x16xf32>
    %258 = vector.shape_cast %257 : vector<1x16xf32> to vector<1x1x1x16xf32>
    %259 = vector.broadcast %15 : vector<2x6x6x1xf32> to vector<2x6x6x16xf32>
    %260 = vector.broadcast %258 : vector<1x1x1x16xf32> to vector<2x6x6x16xf32>
    %261 = arith.mulf %259, %260 : vector<2x6x6x16xf32>
    %262 = arith.addf %256, %261 : vector<2x6x6x16xf32>
    %263 = vector.extract_strided_slice %1 {offsets = [9, 0], sizes = [1, 16], strides = [1, 1]} : vector<25x16xf32> to vector<1x16xf32>
    %264 = vector.shape_cast %263 : vector<1x16xf32> to vector<1x1x1x16xf32>
    %265 = vector.broadcast %16 : vector<2x6x6x1xf32> to vector<2x6x6x16xf32>
    %266 = vector.broadcast %264 : vector<1x1x1x16xf32> to vector<2x6x6x16xf32>
    %267 = arith.mulf %265, %266 : vector<2x6x6x16xf32>
    %268 = arith.addf %262, %267 : vector<2x6x6x16xf32>
    %269 = vector.extract_strided_slice %1 {offsets = [10, 0], sizes = [1, 16], strides = [1, 1]} : vector<25x16xf32> to vector<1x16xf32>
    %270 = vector.shape_cast %269 : vector<1x16xf32> to vector<1x1x1x16xf32>
    %271 = vector.broadcast %19 : vector<2x6x6x1xf32> to vector<2x6x6x16xf32>
    %272 = vector.broadcast %270 : vector<1x1x1x16xf32> to vector<2x6x6x16xf32>
    %273 = arith.mulf %271, %272 : vector<2x6x6x16xf32>
    %274 = arith.addf %268, %273 : vector<2x6x6x16xf32>
    %275 = vector.extract_strided_slice %1 {offsets = [11, 0], sizes = [1, 16], strides = [1, 1]} : vector<25x16xf32> to vector<1x16xf32>
    %276 = vector.shape_cast %275 : vector<1x16xf32> to vector<1x1x1x16xf32>
    %277 = vector.broadcast %20 : vector<2x6x6x1xf32> to vector<2x6x6x16xf32>
    %278 = vector.broadcast %276 : vector<1x1x1x16xf32> to vector<2x6x6x16xf32>
    %279 = arith.mulf %277, %278 : vector<2x6x6x16xf32>
    %280 = arith.addf %274, %279 : vector<2x6x6x16xf32>
    %281 = vector.extract_strided_slice %1 {offsets = [12, 0], sizes = [1, 16], strides = [1, 1]} : vector<25x16xf32> to vector<1x16xf32>
    %282 = vector.shape_cast %281 : vector<1x16xf32> to vector<1x1x1x16xf32>
    %283 = vector.broadcast %21 : vector<2x6x6x1xf32> to vector<2x6x6x16xf32>
    %284 = vector.broadcast %282 : vector<1x1x1x16xf32> to vector<2x6x6x16xf32>
    %285 = arith.mulf %283, %284 : vector<2x6x6x16xf32>
    %286 = arith.addf %280, %285 : vector<2x6x6x16xf32>
    %287 = vector.extract_strided_slice %1 {offsets = [13, 0], sizes = [1, 16], strides = [1, 1]} : vector<25x16xf32> to vector<1x16xf32>
    %288 = vector.shape_cast %287 : vector<1x16xf32> to vector<1x1x1x16xf32>
    %289 = vector.broadcast %22 : vector<2x6x6x1xf32> to vector<2x6x6x16xf32>
    %290 = vector.broadcast %288 : vector<1x1x1x16xf32> to vector<2x6x6x16xf32>
    %291 = arith.mulf %289, %290 : vector<2x6x6x16xf32>
    %292 = arith.addf %286, %291 : vector<2x6x6x16xf32>
    %293 = vector.extract_strided_slice %1 {offsets = [14, 0], sizes = [1, 16], strides = [1, 1]} : vector<25x16xf32> to vector<1x16xf32>
    %294 = vector.shape_cast %293 : vector<1x16xf32> to vector<1x1x1x16xf32>
    %295 = vector.broadcast %23 : vector<2x6x6x1xf32> to vector<2x6x6x16xf32>
    %296 = vector.broadcast %294 : vector<1x1x1x16xf32> to vector<2x6x6x16xf32>
    %297 = arith.mulf %295, %296 : vector<2x6x6x16xf32>
    %298 = arith.addf %292, %297 : vector<2x6x6x16xf32>
    %299 = vector.extract_strided_slice %1 {offsets = [15, 0], sizes = [1, 16], strides = [1, 1]} : vector<25x16xf32> to vector<1x16xf32>
    %300 = vector.shape_cast %299 : vector<1x16xf32> to vector<1x1x1x16xf32>
    %301 = vector.broadcast %26 : vector<2x6x6x1xf32> to vector<2x6x6x16xf32>
    %302 = vector.broadcast %300 : vector<1x1x1x16xf32> to vector<2x6x6x16xf32>
    %303 = arith.mulf %301, %302 : vector<2x6x6x16xf32>
    %304 = arith.addf %298, %303 : vector<2x6x6x16xf32>
    %305 = vector.extract_strided_slice %1 {offsets = [16, 0], sizes = [1, 16], strides = [1, 1]} : vector<25x16xf32> to vector<1x16xf32>
    %306 = vector.shape_cast %305 : vector<1x16xf32> to vector<1x1x1x16xf32>
    %307 = vector.broadcast %27 : vector<2x6x6x1xf32> to vector<2x6x6x16xf32>
    %308 = vector.broadcast %306 : vector<1x1x1x16xf32> to vector<2x6x6x16xf32>
    %309 = arith.mulf %307, %308 : vector<2x6x6x16xf32>
    %310 = arith.addf %304, %309 : vector<2x6x6x16xf32>
    %311 = vector.extract_strided_slice %1 {offsets = [17, 0], sizes = [1, 16], strides = [1, 1]} : vector<25x16xf32> to vector<1x16xf32>
    %312 = vector.shape_cast %311 : vector<1x16xf32> to vector<1x1x1x16xf32>
    %313 = vector.broadcast %28 : vector<2x6x6x1xf32> to vector<2x6x6x16xf32>
    %314 = vector.broadcast %312 : vector<1x1x1x16xf32> to vector<2x6x6x16xf32>
    %315 = arith.mulf %313, %314 : vector<2x6x6x16xf32>
    %316 = arith.addf %310, %315 : vector<2x6x6x16xf32>
    %317 = vector.extract_strided_slice %1 {offsets = [18, 0], sizes = [1, 16], strides = [1, 1]} : vector<25x16xf32> to vector<1x16xf32>
    %318 = vector.shape_cast %317 : vector<1x16xf32> to vector<1x1x1x16xf32>
    %319 = vector.broadcast %29 : vector<2x6x6x1xf32> to vector<2x6x6x16xf32>
    %320 = vector.broadcast %318 : vector<1x1x1x16xf32> to vector<2x6x6x16xf32>
    %321 = arith.mulf %319, %320 : vector<2x6x6x16xf32>
    %322 = arith.addf %316, %321 : vector<2x6x6x16xf32>
    %323 = vector.extract_strided_slice %1 {offsets = [19, 0], sizes = [1, 16], strides = [1, 1]} : vector<25x16xf32> to vector<1x16xf32>
    %324 = vector.shape_cast %323 : vector<1x16xf32> to vector<1x1x1x16xf32>
    %325 = vector.broadcast %30 : vector<2x6x6x1xf32> to vector<2x6x6x16xf32>
    %326 = vector.broadcast %324 : vector<1x1x1x16xf32> to vector<2x6x6x16xf32>
    %327 = arith.mulf %325, %326 : vector<2x6x6x16xf32>
    %328 = arith.addf %322, %327 : vector<2x6x6x16xf32>
    %329 = vector.extract_strided_slice %1 {offsets = [20, 0], sizes = [1, 16], strides = [1, 1]} : vector<25x16xf32> to vector<1x16xf32>
    %330 = vector.shape_cast %329 : vector<1x16xf32> to vector<1x1x1x16xf32>
    %331 = vector.broadcast %33 : vector<2x6x6x1xf32> to vector<2x6x6x16xf32>
    %332 = vector.broadcast %330 : vector<1x1x1x16xf32> to vector<2x6x6x16xf32>
    %333 = arith.mulf %331, %332 : vector<2x6x6x16xf32>
    %334 = arith.addf %328, %333 : vector<2x6x6x16xf32>
    %335 = vector.extract_strided_slice %1 {offsets = [21, 0], sizes = [1, 16], strides = [1, 1]} : vector<25x16xf32> to vector<1x16xf32>
    %336 = vector.shape_cast %335 : vector<1x16xf32> to vector<1x1x1x16xf32>
    %337 = vector.broadcast %34 : vector<2x6x6x1xf32> to vector<2x6x6x16xf32>
    %338 = vector.broadcast %336 : vector<1x1x1x16xf32> to vector<2x6x6x16xf32>
    %339 = arith.mulf %337, %338 : vector<2x6x6x16xf32>
    %340 = arith.addf %334, %339 : vector<2x6x6x16xf32>
    %341 = vector.extract_strided_slice %1 {offsets = [22, 0], sizes = [1, 16], strides = [1, 1]} : vector<25x16xf32> to vector<1x16xf32>
    %342 = vector.shape_cast %341 : vector<1x16xf32> to vector<1x1x1x16xf32>
    %343 = vector.broadcast %35 : vector<2x6x6x1xf32> to vector<2x6x6x16xf32>
    %344 = vector.broadcast %342 : vector<1x1x1x16xf32> to vector<2x6x6x16xf32>
    %345 = arith.mulf %343, %344 : vector<2x6x6x16xf32>
    %346 = arith.addf %340, %345 : vector<2x6x6x16xf32>
    %347 = vector.extract_strided_slice %1 {offsets = [23, 0], sizes = [1, 16], strides = [1, 1]} : vector<25x16xf32> to vector<1x16xf32>
    %348 = vector.shape_cast %347 : vector<1x16xf32> to vector<1x1x1x16xf32>
    %349 = vector.broadcast %36 : vector<2x6x6x1xf32> to vector<2x6x6x16xf32>
    %350 = vector.broadcast %348 : vector<1x1x1x16xf32> to vector<2x6x6x16xf32>
    %351 = arith.mulf %349, %350 : vector<2x6x6x16xf32>
    %352 = arith.addf %346, %351 : vector<2x6x6x16xf32>
    %353 = vector.extract_strided_slice %1 {offsets = [24, 0], sizes = [1, 16], strides = [1, 1]} : vector<25x16xf32> to vector<1x16xf32>
    %354 = vector.shape_cast %353 : vector<1x16xf32> to vector<1x1x1x16xf32>
    %355 = vector.broadcast %37 : vector<2x6x6x1xf32> to vector<2x6x6x16xf32>
    %356 = vector.broadcast %354 : vector<1x1x1x16xf32> to vector<2x6x6x16xf32>
    %357 = arith.mulf %355, %356 : vector<2x6x6x16xf32>
    %358 = arith.addf %352, %357 : vector<2x6x6x16xf32>
    %359 = vector.shape_cast %2 : vector<1x16xf32> to vector<1x1x1x16xf32>
    %360 = vector.broadcast %359 : vector<1x1x1x16xf32> to vector<2x6x6x16xf32>
    %361 = arith.addf %358, %360 : vector<2x6x6x16xf32>
    %cst_9 = arith.constant 0.000000e+00 : f32
    %362 = vector.broadcast %cst_9 : f32 to vector<2x6x6x16xf32>
    %363 = arith.maximumf %361, %362 : vector<2x6x6x16xf32>
    %cst_10 = arith.constant 0.000000e+00 : f32
    %364 = vector.broadcast %cst_10 : f32 to vector<2x6x6x16xf32>
    %365 = vector.extract_strided_slice %1 {offsets = [0, 0], sizes = [1, 16], strides = [1, 1]} : vector<25x16xf32> to vector<1x16xf32>
    %366 = vector.shape_cast %365 : vector<1x16xf32> to vector<1x1x1x16xf32>
    %367 = vector.broadcast %17 : vector<2x6x6x1xf32> to vector<2x6x6x16xf32>
    %368 = vector.broadcast %366 : vector<1x1x1x16xf32> to vector<2x6x6x16xf32>
    %369 = arith.mulf %367, %368 : vector<2x6x6x16xf32>
    %370 = arith.addf %364, %369 : vector<2x6x6x16xf32>
    %371 = vector.extract_strided_slice %1 {offsets = [1, 0], sizes = [1, 16], strides = [1, 1]} : vector<25x16xf32> to vector<1x16xf32>
    %372 = vector.shape_cast %371 : vector<1x16xf32> to vector<1x1x1x16xf32>
    %373 = vector.broadcast %18 : vector<2x6x6x1xf32> to vector<2x6x6x16xf32>
    %374 = vector.broadcast %372 : vector<1x1x1x16xf32> to vector<2x6x6x16xf32>
    %375 = arith.mulf %373, %374 : vector<2x6x6x16xf32>
    %376 = arith.addf %370, %375 : vector<2x6x6x16xf32>
    %377 = vector.extract_strided_slice %1 {offsets = [2, 0], sizes = [1, 16], strides = [1, 1]} : vector<25x16xf32> to vector<1x16xf32>
    %378 = vector.shape_cast %377 : vector<1x16xf32> to vector<1x1x1x16xf32>
    %379 = vector.broadcast %19 : vector<2x6x6x1xf32> to vector<2x6x6x16xf32>
    %380 = vector.broadcast %378 : vector<1x1x1x16xf32> to vector<2x6x6x16xf32>
    %381 = arith.mulf %379, %380 : vector<2x6x6x16xf32>
    %382 = arith.addf %376, %381 : vector<2x6x6x16xf32>
    %383 = vector.extract_strided_slice %1 {offsets = [3, 0], sizes = [1, 16], strides = [1, 1]} : vector<25x16xf32> to vector<1x16xf32>
    %384 = vector.shape_cast %383 : vector<1x16xf32> to vector<1x1x1x16xf32>
    %385 = vector.broadcast %20 : vector<2x6x6x1xf32> to vector<2x6x6x16xf32>
    %386 = vector.broadcast %384 : vector<1x1x1x16xf32> to vector<2x6x6x16xf32>
    %387 = arith.mulf %385, %386 : vector<2x6x6x16xf32>
    %388 = arith.addf %382, %387 : vector<2x6x6x16xf32>
    %389 = vector.extract_strided_slice %1 {offsets = [4, 0], sizes = [1, 16], strides = [1, 1]} : vector<25x16xf32> to vector<1x16xf32>
    %390 = vector.shape_cast %389 : vector<1x16xf32> to vector<1x1x1x16xf32>
    %391 = vector.broadcast %21 : vector<2x6x6x1xf32> to vector<2x6x6x16xf32>
    %392 = vector.broadcast %390 : vector<1x1x1x16xf32> to vector<2x6x6x16xf32>
    %393 = arith.mulf %391, %392 : vector<2x6x6x16xf32>
    %394 = arith.addf %388, %393 : vector<2x6x6x16xf32>
    %395 = vector.extract_strided_slice %1 {offsets = [5, 0], sizes = [1, 16], strides = [1, 1]} : vector<25x16xf32> to vector<1x16xf32>
    %396 = vector.shape_cast %395 : vector<1x16xf32> to vector<1x1x1x16xf32>
    %397 = vector.broadcast %24 : vector<2x6x6x1xf32> to vector<2x6x6x16xf32>
    %398 = vector.broadcast %396 : vector<1x1x1x16xf32> to vector<2x6x6x16xf32>
    %399 = arith.mulf %397, %398 : vector<2x6x6x16xf32>
    %400 = arith.addf %394, %399 : vector<2x6x6x16xf32>
    %401 = vector.extract_strided_slice %1 {offsets = [6, 0], sizes = [1, 16], strides = [1, 1]} : vector<25x16xf32> to vector<1x16xf32>
    %402 = vector.shape_cast %401 : vector<1x16xf32> to vector<1x1x1x16xf32>
    %403 = vector.broadcast %25 : vector<2x6x6x1xf32> to vector<2x6x6x16xf32>
    %404 = vector.broadcast %402 : vector<1x1x1x16xf32> to vector<2x6x6x16xf32>
    %405 = arith.mulf %403, %404 : vector<2x6x6x16xf32>
    %406 = arith.addf %400, %405 : vector<2x6x6x16xf32>
    %407 = vector.extract_strided_slice %1 {offsets = [7, 0], sizes = [1, 16], strides = [1, 1]} : vector<25x16xf32> to vector<1x16xf32>
    %408 = vector.shape_cast %407 : vector<1x16xf32> to vector<1x1x1x16xf32>
    %409 = vector.broadcast %26 : vector<2x6x6x1xf32> to vector<2x6x6x16xf32>
    %410 = vector.broadcast %408 : vector<1x1x1x16xf32> to vector<2x6x6x16xf32>
    %411 = arith.mulf %409, %410 : vector<2x6x6x16xf32>
    %412 = arith.addf %406, %411 : vector<2x6x6x16xf32>
    %413 = vector.extract_strided_slice %1 {offsets = [8, 0], sizes = [1, 16], strides = [1, 1]} : vector<25x16xf32> to vector<1x16xf32>
    %414 = vector.shape_cast %413 : vector<1x16xf32> to vector<1x1x1x16xf32>
    %415 = vector.broadcast %27 : vector<2x6x6x1xf32> to vector<2x6x6x16xf32>
    %416 = vector.broadcast %414 : vector<1x1x1x16xf32> to vector<2x6x6x16xf32>
    %417 = arith.mulf %415, %416 : vector<2x6x6x16xf32>
    %418 = arith.addf %412, %417 : vector<2x6x6x16xf32>
    %419 = vector.extract_strided_slice %1 {offsets = [9, 0], sizes = [1, 16], strides = [1, 1]} : vector<25x16xf32> to vector<1x16xf32>
    %420 = vector.shape_cast %419 : vector<1x16xf32> to vector<1x1x1x16xf32>
    %421 = vector.broadcast %28 : vector<2x6x6x1xf32> to vector<2x6x6x16xf32>
    %422 = vector.broadcast %420 : vector<1x1x1x16xf32> to vector<2x6x6x16xf32>
    %423 = arith.mulf %421, %422 : vector<2x6x6x16xf32>
    %424 = arith.addf %418, %423 : vector<2x6x6x16xf32>
    %425 = vector.extract_strided_slice %1 {offsets = [10, 0], sizes = [1, 16], strides = [1, 1]} : vector<25x16xf32> to vector<1x16xf32>
    %426 = vector.shape_cast %425 : vector<1x16xf32> to vector<1x1x1x16xf32>
    %427 = vector.broadcast %31 : vector<2x6x6x1xf32> to vector<2x6x6x16xf32>
    %428 = vector.broadcast %426 : vector<1x1x1x16xf32> to vector<2x6x6x16xf32>
    %429 = arith.mulf %427, %428 : vector<2x6x6x16xf32>
    %430 = arith.addf %424, %429 : vector<2x6x6x16xf32>
    %431 = vector.extract_strided_slice %1 {offsets = [11, 0], sizes = [1, 16], strides = [1, 1]} : vector<25x16xf32> to vector<1x16xf32>
    %432 = vector.shape_cast %431 : vector<1x16xf32> to vector<1x1x1x16xf32>
    %433 = vector.broadcast %32 : vector<2x6x6x1xf32> to vector<2x6x6x16xf32>
    %434 = vector.broadcast %432 : vector<1x1x1x16xf32> to vector<2x6x6x16xf32>
    %435 = arith.mulf %433, %434 : vector<2x6x6x16xf32>
    %436 = arith.addf %430, %435 : vector<2x6x6x16xf32>
    %437 = vector.extract_strided_slice %1 {offsets = [12, 0], sizes = [1, 16], strides = [1, 1]} : vector<25x16xf32> to vector<1x16xf32>
    %438 = vector.shape_cast %437 : vector<1x16xf32> to vector<1x1x1x16xf32>
    %439 = vector.broadcast %33 : vector<2x6x6x1xf32> to vector<2x6x6x16xf32>
    %440 = vector.broadcast %438 : vector<1x1x1x16xf32> to vector<2x6x6x16xf32>
    %441 = arith.mulf %439, %440 : vector<2x6x6x16xf32>
    %442 = arith.addf %436, %441 : vector<2x6x6x16xf32>
    %443 = vector.extract_strided_slice %1 {offsets = [13, 0], sizes = [1, 16], strides = [1, 1]} : vector<25x16xf32> to vector<1x16xf32>
    %444 = vector.shape_cast %443 : vector<1x16xf32> to vector<1x1x1x16xf32>
    %445 = vector.broadcast %34 : vector<2x6x6x1xf32> to vector<2x6x6x16xf32>
    %446 = vector.broadcast %444 : vector<1x1x1x16xf32> to vector<2x6x6x16xf32>
    %447 = arith.mulf %445, %446 : vector<2x6x6x16xf32>
    %448 = arith.addf %442, %447 : vector<2x6x6x16xf32>
    %449 = vector.extract_strided_slice %1 {offsets = [14, 0], sizes = [1, 16], strides = [1, 1]} : vector<25x16xf32> to vector<1x16xf32>
    %450 = vector.shape_cast %449 : vector<1x16xf32> to vector<1x1x1x16xf32>
    %451 = vector.broadcast %35 : vector<2x6x6x1xf32> to vector<2x6x6x16xf32>
    %452 = vector.broadcast %450 : vector<1x1x1x16xf32> to vector<2x6x6x16xf32>
    %453 = arith.mulf %451, %452 : vector<2x6x6x16xf32>
    %454 = arith.addf %448, %453 : vector<2x6x6x16xf32>
    %455 = vector.extract_strided_slice %1 {offsets = [15, 0], sizes = [1, 16], strides = [1, 1]} : vector<25x16xf32> to vector<1x16xf32>
    %456 = vector.shape_cast %455 : vector<1x16xf32> to vector<1x1x1x16xf32>
    %457 = vector.broadcast %38 : vector<2x6x6x1xf32> to vector<2x6x6x16xf32>
    %458 = vector.broadcast %456 : vector<1x1x1x16xf32> to vector<2x6x6x16xf32>
    %459 = arith.mulf %457, %458 : vector<2x6x6x16xf32>
    %460 = arith.addf %454, %459 : vector<2x6x6x16xf32>
    %461 = vector.extract_strided_slice %1 {offsets = [16, 0], sizes = [1, 16], strides = [1, 1]} : vector<25x16xf32> to vector<1x16xf32>
    %462 = vector.shape_cast %461 : vector<1x16xf32> to vector<1x1x1x16xf32>
    %463 = vector.broadcast %39 : vector<2x6x6x1xf32> to vector<2x6x6x16xf32>
    %464 = vector.broadcast %462 : vector<1x1x1x16xf32> to vector<2x6x6x16xf32>
    %465 = arith.mulf %463, %464 : vector<2x6x6x16xf32>
    %466 = arith.addf %460, %465 : vector<2x6x6x16xf32>
    %467 = vector.extract_strided_slice %1 {offsets = [17, 0], sizes = [1, 16], strides = [1, 1]} : vector<25x16xf32> to vector<1x16xf32>
    %468 = vector.shape_cast %467 : vector<1x16xf32> to vector<1x1x1x16xf32>
    %469 = vector.broadcast %40 : vector<2x6x6x1xf32> to vector<2x6x6x16xf32>
    %470 = vector.broadcast %468 : vector<1x1x1x16xf32> to vector<2x6x6x16xf32>
    %471 = arith.mulf %469, %470 : vector<2x6x6x16xf32>
    %472 = arith.addf %466, %471 : vector<2x6x6x16xf32>
    %473 = vector.extract_strided_slice %1 {offsets = [18, 0], sizes = [1, 16], strides = [1, 1]} : vector<25x16xf32> to vector<1x16xf32>
    %474 = vector.shape_cast %473 : vector<1x16xf32> to vector<1x1x1x16xf32>
    %475 = vector.broadcast %41 : vector<2x6x6x1xf32> to vector<2x6x6x16xf32>
    %476 = vector.broadcast %474 : vector<1x1x1x16xf32> to vector<2x6x6x16xf32>
    %477 = arith.mulf %475, %476 : vector<2x6x6x16xf32>
    %478 = arith.addf %472, %477 : vector<2x6x6x16xf32>
    %479 = vector.extract_strided_slice %1 {offsets = [19, 0], sizes = [1, 16], strides = [1, 1]} : vector<25x16xf32> to vector<1x16xf32>
    %480 = vector.shape_cast %479 : vector<1x16xf32> to vector<1x1x1x16xf32>
    %481 = vector.broadcast %42 : vector<2x6x6x1xf32> to vector<2x6x6x16xf32>
    %482 = vector.broadcast %480 : vector<1x1x1x16xf32> to vector<2x6x6x16xf32>
    %483 = arith.mulf %481, %482 : vector<2x6x6x16xf32>
    %484 = arith.addf %478, %483 : vector<2x6x6x16xf32>
    %485 = vector.extract_strided_slice %1 {offsets = [20, 0], sizes = [1, 16], strides = [1, 1]} : vector<25x16xf32> to vector<1x16xf32>
    %486 = vector.shape_cast %485 : vector<1x16xf32> to vector<1x1x1x16xf32>
    %487 = vector.broadcast %45 : vector<2x6x6x1xf32> to vector<2x6x6x16xf32>
    %488 = vector.broadcast %486 : vector<1x1x1x16xf32> to vector<2x6x6x16xf32>
    %489 = arith.mulf %487, %488 : vector<2x6x6x16xf32>
    %490 = arith.addf %484, %489 : vector<2x6x6x16xf32>
    %491 = vector.extract_strided_slice %1 {offsets = [21, 0], sizes = [1, 16], strides = [1, 1]} : vector<25x16xf32> to vector<1x16xf32>
    %492 = vector.shape_cast %491 : vector<1x16xf32> to vector<1x1x1x16xf32>
    %493 = vector.broadcast %46 : vector<2x6x6x1xf32> to vector<2x6x6x16xf32>
    %494 = vector.broadcast %492 : vector<1x1x1x16xf32> to vector<2x6x6x16xf32>
    %495 = arith.mulf %493, %494 : vector<2x6x6x16xf32>
    %496 = arith.addf %490, %495 : vector<2x6x6x16xf32>
    %497 = vector.extract_strided_slice %1 {offsets = [22, 0], sizes = [1, 16], strides = [1, 1]} : vector<25x16xf32> to vector<1x16xf32>
    %498 = vector.shape_cast %497 : vector<1x16xf32> to vector<1x1x1x16xf32>
    %499 = vector.broadcast %47 : vector<2x6x6x1xf32> to vector<2x6x6x16xf32>
    %500 = vector.broadcast %498 : vector<1x1x1x16xf32> to vector<2x6x6x16xf32>
    %501 = arith.mulf %499, %500 : vector<2x6x6x16xf32>
    %502 = arith.addf %496, %501 : vector<2x6x6x16xf32>
    %503 = vector.extract_strided_slice %1 {offsets = [23, 0], sizes = [1, 16], strides = [1, 1]} : vector<25x16xf32> to vector<1x16xf32>
    %504 = vector.shape_cast %503 : vector<1x16xf32> to vector<1x1x1x16xf32>
    %505 = vector.broadcast %48 : vector<2x6x6x1xf32> to vector<2x6x6x16xf32>
    %506 = vector.broadcast %504 : vector<1x1x1x16xf32> to vector<2x6x6x16xf32>
    %507 = arith.mulf %505, %506 : vector<2x6x6x16xf32>
    %508 = arith.addf %502, %507 : vector<2x6x6x16xf32>
    %509 = vector.extract_strided_slice %1 {offsets = [24, 0], sizes = [1, 16], strides = [1, 1]} : vector<25x16xf32> to vector<1x16xf32>
    %510 = vector.shape_cast %509 : vector<1x16xf32> to vector<1x1x1x16xf32>
    %511 = vector.broadcast %49 : vector<2x6x6x1xf32> to vector<2x6x6x16xf32>
    %512 = vector.broadcast %510 : vector<1x1x1x16xf32> to vector<2x6x6x16xf32>
    %513 = arith.mulf %511, %512 : vector<2x6x6x16xf32>
    %514 = arith.addf %508, %513 : vector<2x6x6x16xf32>
    %515 = vector.shape_cast %2 : vector<1x16xf32> to vector<1x1x1x16xf32>
    %516 = vector.broadcast %515 : vector<1x1x1x16xf32> to vector<2x6x6x16xf32>
    %517 = arith.addf %514, %516 : vector<2x6x6x16xf32>
    %cst_11 = arith.constant 0.000000e+00 : f32
    %518 = vector.broadcast %cst_11 : f32 to vector<2x6x6x16xf32>
    %519 = arith.maximumf %517, %518 : vector<2x6x6x16xf32>
    %cst_12 = arith.constant 0.000000e+00 : f32
    %520 = vector.broadcast %cst_12 : f32 to vector<2x6x6x16xf32>
    %521 = vector.extract_strided_slice %1 {offsets = [0, 0], sizes = [1, 16], strides = [1, 1]} : vector<25x16xf32> to vector<1x16xf32>
    %522 = vector.shape_cast %521 : vector<1x16xf32> to vector<1x1x1x16xf32>
    %523 = vector.broadcast %19 : vector<2x6x6x1xf32> to vector<2x6x6x16xf32>
    %524 = vector.broadcast %522 : vector<1x1x1x16xf32> to vector<2x6x6x16xf32>
    %525 = arith.mulf %523, %524 : vector<2x6x6x16xf32>
    %526 = arith.addf %520, %525 : vector<2x6x6x16xf32>
    %527 = vector.extract_strided_slice %1 {offsets = [1, 0], sizes = [1, 16], strides = [1, 1]} : vector<25x16xf32> to vector<1x16xf32>
    %528 = vector.shape_cast %527 : vector<1x16xf32> to vector<1x1x1x16xf32>
    %529 = vector.broadcast %20 : vector<2x6x6x1xf32> to vector<2x6x6x16xf32>
    %530 = vector.broadcast %528 : vector<1x1x1x16xf32> to vector<2x6x6x16xf32>
    %531 = arith.mulf %529, %530 : vector<2x6x6x16xf32>
    %532 = arith.addf %526, %531 : vector<2x6x6x16xf32>
    %533 = vector.extract_strided_slice %1 {offsets = [2, 0], sizes = [1, 16], strides = [1, 1]} : vector<25x16xf32> to vector<1x16xf32>
    %534 = vector.shape_cast %533 : vector<1x16xf32> to vector<1x1x1x16xf32>
    %535 = vector.broadcast %21 : vector<2x6x6x1xf32> to vector<2x6x6x16xf32>
    %536 = vector.broadcast %534 : vector<1x1x1x16xf32> to vector<2x6x6x16xf32>
    %537 = arith.mulf %535, %536 : vector<2x6x6x16xf32>
    %538 = arith.addf %532, %537 : vector<2x6x6x16xf32>
    %539 = vector.extract_strided_slice %1 {offsets = [3, 0], sizes = [1, 16], strides = [1, 1]} : vector<25x16xf32> to vector<1x16xf32>
    %540 = vector.shape_cast %539 : vector<1x16xf32> to vector<1x1x1x16xf32>
    %541 = vector.broadcast %22 : vector<2x6x6x1xf32> to vector<2x6x6x16xf32>
    %542 = vector.broadcast %540 : vector<1x1x1x16xf32> to vector<2x6x6x16xf32>
    %543 = arith.mulf %541, %542 : vector<2x6x6x16xf32>
    %544 = arith.addf %538, %543 : vector<2x6x6x16xf32>
    %545 = vector.extract_strided_slice %1 {offsets = [4, 0], sizes = [1, 16], strides = [1, 1]} : vector<25x16xf32> to vector<1x16xf32>
    %546 = vector.shape_cast %545 : vector<1x16xf32> to vector<1x1x1x16xf32>
    %547 = vector.broadcast %23 : vector<2x6x6x1xf32> to vector<2x6x6x16xf32>
    %548 = vector.broadcast %546 : vector<1x1x1x16xf32> to vector<2x6x6x16xf32>
    %549 = arith.mulf %547, %548 : vector<2x6x6x16xf32>
    %550 = arith.addf %544, %549 : vector<2x6x6x16xf32>
    %551 = vector.extract_strided_slice %1 {offsets = [5, 0], sizes = [1, 16], strides = [1, 1]} : vector<25x16xf32> to vector<1x16xf32>
    %552 = vector.shape_cast %551 : vector<1x16xf32> to vector<1x1x1x16xf32>
    %553 = vector.broadcast %26 : vector<2x6x6x1xf32> to vector<2x6x6x16xf32>
    %554 = vector.broadcast %552 : vector<1x1x1x16xf32> to vector<2x6x6x16xf32>
    %555 = arith.mulf %553, %554 : vector<2x6x6x16xf32>
    %556 = arith.addf %550, %555 : vector<2x6x6x16xf32>
    %557 = vector.extract_strided_slice %1 {offsets = [6, 0], sizes = [1, 16], strides = [1, 1]} : vector<25x16xf32> to vector<1x16xf32>
    %558 = vector.shape_cast %557 : vector<1x16xf32> to vector<1x1x1x16xf32>
    %559 = vector.broadcast %27 : vector<2x6x6x1xf32> to vector<2x6x6x16xf32>
    %560 = vector.broadcast %558 : vector<1x1x1x16xf32> to vector<2x6x6x16xf32>
    %561 = arith.mulf %559, %560 : vector<2x6x6x16xf32>
    %562 = arith.addf %556, %561 : vector<2x6x6x16xf32>
    %563 = vector.extract_strided_slice %1 {offsets = [7, 0], sizes = [1, 16], strides = [1, 1]} : vector<25x16xf32> to vector<1x16xf32>
    %564 = vector.shape_cast %563 : vector<1x16xf32> to vector<1x1x1x16xf32>
    %565 = vector.broadcast %28 : vector<2x6x6x1xf32> to vector<2x6x6x16xf32>
    %566 = vector.broadcast %564 : vector<1x1x1x16xf32> to vector<2x6x6x16xf32>
    %567 = arith.mulf %565, %566 : vector<2x6x6x16xf32>
    %568 = arith.addf %562, %567 : vector<2x6x6x16xf32>
    %569 = vector.extract_strided_slice %1 {offsets = [8, 0], sizes = [1, 16], strides = [1, 1]} : vector<25x16xf32> to vector<1x16xf32>
    %570 = vector.shape_cast %569 : vector<1x16xf32> to vector<1x1x1x16xf32>
    %571 = vector.broadcast %29 : vector<2x6x6x1xf32> to vector<2x6x6x16xf32>
    %572 = vector.broadcast %570 : vector<1x1x1x16xf32> to vector<2x6x6x16xf32>
    %573 = arith.mulf %571, %572 : vector<2x6x6x16xf32>
    %574 = arith.addf %568, %573 : vector<2x6x6x16xf32>
    %575 = vector.extract_strided_slice %1 {offsets = [9, 0], sizes = [1, 16], strides = [1, 1]} : vector<25x16xf32> to vector<1x16xf32>
    %576 = vector.shape_cast %575 : vector<1x16xf32> to vector<1x1x1x16xf32>
    %577 = vector.broadcast %30 : vector<2x6x6x1xf32> to vector<2x6x6x16xf32>
    %578 = vector.broadcast %576 : vector<1x1x1x16xf32> to vector<2x6x6x16xf32>
    %579 = arith.mulf %577, %578 : vector<2x6x6x16xf32>
    %580 = arith.addf %574, %579 : vector<2x6x6x16xf32>
    %581 = vector.extract_strided_slice %1 {offsets = [10, 0], sizes = [1, 16], strides = [1, 1]} : vector<25x16xf32> to vector<1x16xf32>
    %582 = vector.shape_cast %581 : vector<1x16xf32> to vector<1x1x1x16xf32>
    %583 = vector.broadcast %33 : vector<2x6x6x1xf32> to vector<2x6x6x16xf32>
    %584 = vector.broadcast %582 : vector<1x1x1x16xf32> to vector<2x6x6x16xf32>
    %585 = arith.mulf %583, %584 : vector<2x6x6x16xf32>
    %586 = arith.addf %580, %585 : vector<2x6x6x16xf32>
    %587 = vector.extract_strided_slice %1 {offsets = [11, 0], sizes = [1, 16], strides = [1, 1]} : vector<25x16xf32> to vector<1x16xf32>
    %588 = vector.shape_cast %587 : vector<1x16xf32> to vector<1x1x1x16xf32>
    %589 = vector.broadcast %34 : vector<2x6x6x1xf32> to vector<2x6x6x16xf32>
    %590 = vector.broadcast %588 : vector<1x1x1x16xf32> to vector<2x6x6x16xf32>
    %591 = arith.mulf %589, %590 : vector<2x6x6x16xf32>
    %592 = arith.addf %586, %591 : vector<2x6x6x16xf32>
    %593 = vector.extract_strided_slice %1 {offsets = [12, 0], sizes = [1, 16], strides = [1, 1]} : vector<25x16xf32> to vector<1x16xf32>
    %594 = vector.shape_cast %593 : vector<1x16xf32> to vector<1x1x1x16xf32>
    %595 = vector.broadcast %35 : vector<2x6x6x1xf32> to vector<2x6x6x16xf32>
    %596 = vector.broadcast %594 : vector<1x1x1x16xf32> to vector<2x6x6x16xf32>
    %597 = arith.mulf %595, %596 : vector<2x6x6x16xf32>
    %598 = arith.addf %592, %597 : vector<2x6x6x16xf32>
    %599 = vector.extract_strided_slice %1 {offsets = [13, 0], sizes = [1, 16], strides = [1, 1]} : vector<25x16xf32> to vector<1x16xf32>
    %600 = vector.shape_cast %599 : vector<1x16xf32> to vector<1x1x1x16xf32>
    %601 = vector.broadcast %36 : vector<2x6x6x1xf32> to vector<2x6x6x16xf32>
    %602 = vector.broadcast %600 : vector<1x1x1x16xf32> to vector<2x6x6x16xf32>
    %603 = arith.mulf %601, %602 : vector<2x6x6x16xf32>
    %604 = arith.addf %598, %603 : vector<2x6x6x16xf32>
    %605 = vector.extract_strided_slice %1 {offsets = [14, 0], sizes = [1, 16], strides = [1, 1]} : vector<25x16xf32> to vector<1x16xf32>
    %606 = vector.shape_cast %605 : vector<1x16xf32> to vector<1x1x1x16xf32>
    %607 = vector.broadcast %37 : vector<2x6x6x1xf32> to vector<2x6x6x16xf32>
    %608 = vector.broadcast %606 : vector<1x1x1x16xf32> to vector<2x6x6x16xf32>
    %609 = arith.mulf %607, %608 : vector<2x6x6x16xf32>
    %610 = arith.addf %604, %609 : vector<2x6x6x16xf32>
    %611 = vector.extract_strided_slice %1 {offsets = [15, 0], sizes = [1, 16], strides = [1, 1]} : vector<25x16xf32> to vector<1x16xf32>
    %612 = vector.shape_cast %611 : vector<1x16xf32> to vector<1x1x1x16xf32>
    %613 = vector.broadcast %40 : vector<2x6x6x1xf32> to vector<2x6x6x16xf32>
    %614 = vector.broadcast %612 : vector<1x1x1x16xf32> to vector<2x6x6x16xf32>
    %615 = arith.mulf %613, %614 : vector<2x6x6x16xf32>
    %616 = arith.addf %610, %615 : vector<2x6x6x16xf32>
    %617 = vector.extract_strided_slice %1 {offsets = [16, 0], sizes = [1, 16], strides = [1, 1]} : vector<25x16xf32> to vector<1x16xf32>
    %618 = vector.shape_cast %617 : vector<1x16xf32> to vector<1x1x1x16xf32>
    %619 = vector.broadcast %41 : vector<2x6x6x1xf32> to vector<2x6x6x16xf32>
    %620 = vector.broadcast %618 : vector<1x1x1x16xf32> to vector<2x6x6x16xf32>
    %621 = arith.mulf %619, %620 : vector<2x6x6x16xf32>
    %622 = arith.addf %616, %621 : vector<2x6x6x16xf32>
    %623 = vector.extract_strided_slice %1 {offsets = [17, 0], sizes = [1, 16], strides = [1, 1]} : vector<25x16xf32> to vector<1x16xf32>
    %624 = vector.shape_cast %623 : vector<1x16xf32> to vector<1x1x1x16xf32>
    %625 = vector.broadcast %42 : vector<2x6x6x1xf32> to vector<2x6x6x16xf32>
    %626 = vector.broadcast %624 : vector<1x1x1x16xf32> to vector<2x6x6x16xf32>
    %627 = arith.mulf %625, %626 : vector<2x6x6x16xf32>
    %628 = arith.addf %622, %627 : vector<2x6x6x16xf32>
    %629 = vector.extract_strided_slice %1 {offsets = [18, 0], sizes = [1, 16], strides = [1, 1]} : vector<25x16xf32> to vector<1x16xf32>
    %630 = vector.shape_cast %629 : vector<1x16xf32> to vector<1x1x1x16xf32>
    %631 = vector.broadcast %43 : vector<2x6x6x1xf32> to vector<2x6x6x16xf32>
    %632 = vector.broadcast %630 : vector<1x1x1x16xf32> to vector<2x6x6x16xf32>
    %633 = arith.mulf %631, %632 : vector<2x6x6x16xf32>
    %634 = arith.addf %628, %633 : vector<2x6x6x16xf32>
    %635 = vector.extract_strided_slice %1 {offsets = [19, 0], sizes = [1, 16], strides = [1, 1]} : vector<25x16xf32> to vector<1x16xf32>
    %636 = vector.shape_cast %635 : vector<1x16xf32> to vector<1x1x1x16xf32>
    %637 = vector.broadcast %44 : vector<2x6x6x1xf32> to vector<2x6x6x16xf32>
    %638 = vector.broadcast %636 : vector<1x1x1x16xf32> to vector<2x6x6x16xf32>
    %639 = arith.mulf %637, %638 : vector<2x6x6x16xf32>
    %640 = arith.addf %634, %639 : vector<2x6x6x16xf32>
    %641 = vector.extract_strided_slice %1 {offsets = [20, 0], sizes = [1, 16], strides = [1, 1]} : vector<25x16xf32> to vector<1x16xf32>
    %642 = vector.shape_cast %641 : vector<1x16xf32> to vector<1x1x1x16xf32>
    %643 = vector.broadcast %47 : vector<2x6x6x1xf32> to vector<2x6x6x16xf32>
    %644 = vector.broadcast %642 : vector<1x1x1x16xf32> to vector<2x6x6x16xf32>
    %645 = arith.mulf %643, %644 : vector<2x6x6x16xf32>
    %646 = arith.addf %640, %645 : vector<2x6x6x16xf32>
    %647 = vector.extract_strided_slice %1 {offsets = [21, 0], sizes = [1, 16], strides = [1, 1]} : vector<25x16xf32> to vector<1x16xf32>
    %648 = vector.shape_cast %647 : vector<1x16xf32> to vector<1x1x1x16xf32>
    %649 = vector.broadcast %48 : vector<2x6x6x1xf32> to vector<2x6x6x16xf32>
    %650 = vector.broadcast %648 : vector<1x1x1x16xf32> to vector<2x6x6x16xf32>
    %651 = arith.mulf %649, %650 : vector<2x6x6x16xf32>
    %652 = arith.addf %646, %651 : vector<2x6x6x16xf32>
    %653 = vector.extract_strided_slice %1 {offsets = [22, 0], sizes = [1, 16], strides = [1, 1]} : vector<25x16xf32> to vector<1x16xf32>
    %654 = vector.shape_cast %653 : vector<1x16xf32> to vector<1x1x1x16xf32>
    %655 = vector.broadcast %49 : vector<2x6x6x1xf32> to vector<2x6x6x16xf32>
    %656 = vector.broadcast %654 : vector<1x1x1x16xf32> to vector<2x6x6x16xf32>
    %657 = arith.mulf %655, %656 : vector<2x6x6x16xf32>
    %658 = arith.addf %652, %657 : vector<2x6x6x16xf32>
    %659 = vector.extract_strided_slice %1 {offsets = [23, 0], sizes = [1, 16], strides = [1, 1]} : vector<25x16xf32> to vector<1x16xf32>
    %660 = vector.shape_cast %659 : vector<1x16xf32> to vector<1x1x1x16xf32>
    %661 = vector.broadcast %50 : vector<2x6x6x1xf32> to vector<2x6x6x16xf32>
    %662 = vector.broadcast %660 : vector<1x1x1x16xf32> to vector<2x6x6x16xf32>
    %663 = arith.mulf %661, %662 : vector<2x6x6x16xf32>
    %664 = arith.addf %658, %663 : vector<2x6x6x16xf32>
    %665 = vector.extract_strided_slice %1 {offsets = [24, 0], sizes = [1, 16], strides = [1, 1]} : vector<25x16xf32> to vector<1x16xf32>
    %666 = vector.shape_cast %665 : vector<1x16xf32> to vector<1x1x1x16xf32>
    %667 = vector.broadcast %51 : vector<2x6x6x1xf32> to vector<2x6x6x16xf32>
    %668 = vector.broadcast %666 : vector<1x1x1x16xf32> to vector<2x6x6x16xf32>
    %669 = arith.mulf %667, %668 : vector<2x6x6x16xf32>
    %670 = arith.addf %664, %669 : vector<2x6x6x16xf32>
    %671 = vector.shape_cast %2 : vector<1x16xf32> to vector<1x1x1x16xf32>
    %672 = vector.broadcast %671 : vector<1x1x1x16xf32> to vector<2x6x6x16xf32>
    %673 = arith.addf %670, %672 : vector<2x6x6x16xf32>
    %cst_13 = arith.constant 0.000000e+00 : f32
    %674 = vector.broadcast %cst_13 : f32 to vector<2x6x6x16xf32>
    %675 = arith.maximumf %673, %674 : vector<2x6x6x16xf32>
    %676 = vector.extract_strided_slice %207 {offsets = [0, 0, 0, 0], sizes = [2, 4, 4, 16], strides = [1, 1, 1, 1]} : vector<2x6x6x16xf32> to vector<2x4x4x16xf32>
    %677 = vector.extract_strided_slice %363 {offsets = [0, 0, 0, 0], sizes = [2, 4, 4, 16], strides = [1, 1, 1, 1]} : vector<2x6x6x16xf32> to vector<2x4x4x16xf32>
    %678 = vector.extract_strided_slice %207 {offsets = [0, 0, 1, 0], sizes = [2, 4, 4, 16], strides = [1, 1, 1, 1]} : vector<2x6x6x16xf32> to vector<2x4x4x16xf32>
    %679 = vector.extract_strided_slice %363 {offsets = [0, 0, 1, 0], sizes = [2, 4, 4, 16], strides = [1, 1, 1, 1]} : vector<2x6x6x16xf32> to vector<2x4x4x16xf32>
    %680 = vector.extract_strided_slice %207 {offsets = [0, 0, 2, 0], sizes = [2, 4, 4, 16], strides = [1, 1, 1, 1]} : vector<2x6x6x16xf32> to vector<2x4x4x16xf32>
    %681 = vector.extract_strided_slice %519 {offsets = [0, 0, 0, 0], sizes = [2, 4, 4, 16], strides = [1, 1, 1, 1]} : vector<2x6x6x16xf32> to vector<2x4x4x16xf32>
    %682 = vector.extract_strided_slice %675 {offsets = [0, 0, 0, 0], sizes = [2, 4, 4, 16], strides = [1, 1, 1, 1]} : vector<2x6x6x16xf32> to vector<2x4x4x16xf32>
    %683 = vector.extract_strided_slice %519 {offsets = [0, 0, 1, 0], sizes = [2, 4, 4, 16], strides = [1, 1, 1, 1]} : vector<2x6x6x16xf32> to vector<2x4x4x16xf32>
    %684 = vector.extract_strided_slice %675 {offsets = [0, 0, 1, 0], sizes = [2, 4, 4, 16], strides = [1, 1, 1, 1]} : vector<2x6x6x16xf32> to vector<2x4x4x16xf32>
    %685 = vector.extract_strided_slice %519 {offsets = [0, 0, 2, 0], sizes = [2, 4, 4, 16], strides = [1, 1, 1, 1]} : vector<2x6x6x16xf32> to vector<2x4x4x16xf32>
    %686 = vector.extract_strided_slice %207 {offsets = [0, 1, 0, 0], sizes = [2, 4, 4, 16], strides = [1, 1, 1, 1]} : vector<2x6x6x16xf32> to vector<2x4x4x16xf32>
    %687 = vector.extract_strided_slice %363 {offsets = [0, 1, 0, 0], sizes = [2, 4, 4, 16], strides = [1, 1, 1, 1]} : vector<2x6x6x16xf32> to vector<2x4x4x16xf32>
    %688 = vector.extract_strided_slice %207 {offsets = [0, 1, 1, 0], sizes = [2, 4, 4, 16], strides = [1, 1, 1, 1]} : vector<2x6x6x16xf32> to vector<2x4x4x16xf32>
    %689 = vector.extract_strided_slice %363 {offsets = [0, 1, 1, 0], sizes = [2, 4, 4, 16], strides = [1, 1, 1, 1]} : vector<2x6x6x16xf32> to vector<2x4x4x16xf32>
    %690 = vector.extract_strided_slice %207 {offsets = [0, 1, 2, 0], sizes = [2, 4, 4, 16], strides = [1, 1, 1, 1]} : vector<2x6x6x16xf32> to vector<2x4x4x16xf32>
    %691 = vector.extract_strided_slice %519 {offsets = [0, 1, 0, 0], sizes = [2, 4, 4, 16], strides = [1, 1, 1, 1]} : vector<2x6x6x16xf32> to vector<2x4x4x16xf32>
    %692 = vector.extract_strided_slice %675 {offsets = [0, 1, 0, 0], sizes = [2, 4, 4, 16], strides = [1, 1, 1, 1]} : vector<2x6x6x16xf32> to vector<2x4x4x16xf32>
    %693 = vector.extract_strided_slice %519 {offsets = [0, 1, 1, 0], sizes = [2, 4, 4, 16], strides = [1, 1, 1, 1]} : vector<2x6x6x16xf32> to vector<2x4x4x16xf32>
    %694 = vector.extract_strided_slice %675 {offsets = [0, 1, 1, 0], sizes = [2, 4, 4, 16], strides = [1, 1, 1, 1]} : vector<2x6x6x16xf32> to vector<2x4x4x16xf32>
    %695 = vector.extract_strided_slice %519 {offsets = [0, 1, 2, 0], sizes = [2, 4, 4, 16], strides = [1, 1, 1, 1]} : vector<2x6x6x16xf32> to vector<2x4x4x16xf32>
    %696 = vector.extract_strided_slice %207 {offsets = [0, 2, 0, 0], sizes = [2, 4, 4, 16], strides = [1, 1, 1, 1]} : vector<2x6x6x16xf32> to vector<2x4x4x16xf32>
    %697 = vector.extract_strided_slice %363 {offsets = [0, 2, 0, 0], sizes = [2, 4, 4, 16], strides = [1, 1, 1, 1]} : vector<2x6x6x16xf32> to vector<2x4x4x16xf32>
    %698 = vector.extract_strided_slice %207 {offsets = [0, 2, 1, 0], sizes = [2, 4, 4, 16], strides = [1, 1, 1, 1]} : vector<2x6x6x16xf32> to vector<2x4x4x16xf32>
    %699 = vector.extract_strided_slice %363 {offsets = [0, 2, 1, 0], sizes = [2, 4, 4, 16], strides = [1, 1, 1, 1]} : vector<2x6x6x16xf32> to vector<2x4x4x16xf32>
    %700 = vector.extract_strided_slice %207 {offsets = [0, 2, 2, 0], sizes = [2, 4, 4, 16], strides = [1, 1, 1, 1]} : vector<2x6x6x16xf32> to vector<2x4x4x16xf32>
    %701 = tpu.concatenate %676, %677, %678, %679, %680, %681, %682, %683, %684, %685, %686, %687, %688, %689, %690, %691 in 3 : vector<2x4x4x16xf32>, vector<2x4x4x16xf32>, vector<2x4x4x16xf32>, vector<2x4x4x16xf32>, vector<2x4x4x16xf32>, vector<2x4x4x16xf32>, vector<2x4x4x16xf32>, vector<2x4x4x16xf32>, vector<2x4x4x16xf32>, vector<2x4x4x16xf32>, vector<2x4x4x16xf32>, vector<2x4x4x16xf32>, vector<2x4x4x16xf32>, vector<2x4x4x16xf32>, vector<2x4x4x16xf32>, vector<2x4x4x16xf32> -> vector<2x4x4x256xf32>
    %702 = tpu.concatenate %692, %693, %694, %695, %696, %697, %698, %699, %700 in 3 : vector<2x4x4x16xf32>, vector<2x4x4x16xf32>, vector<2x4x4x16xf32>, vector<2x4x4x16xf32>, vector<2x4x4x16xf32>, vector<2x4x4x16xf32>, vector<2x4x4x16xf32>, vector<2x4x4x16xf32>, vector<2x4x4x16xf32> -> vector<2x4x4x144xf32>
    %703 = tpu.concatenate %701, %702 in 3 : vector<2x4x4x256xf32>, vector<2x4x4x144xf32> -> vector<2x4x4x400xf32>
    %704 = vector.shape_cast %703 : vector<2x4x4x400xf32> to vector<32x400xf32>
    %705 = arith.truncf %704 : vector<32x400xf32> to vector<32x400xbf16>
    %c0_14 = arith.constant 0 : index
    %c0_15 = arith.constant 0 : index
    %706 = vector.load %arg4[%c0_14, %c0_15] : memref<400x32xbf16, #tpu.memory_space<vmem>>, vector<400x32xbf16>
    %cst_16 = arith.constant dense<0.000000e+00> : vector<32x32xf32>
    %707 = tpu.matmul %705, %706, %cst_16 {dimension_numbers = #tpu.dot_dimension_numbers<[1], [0], [0], [1], [0, 0, 1, 1], [], []>} : vector<32x400xbf16>, vector<400x32xbf16>, vector<32x32xf32> -> vector<32x32xf32>
    %c0_17 = arith.constant 0 : index
    %c0_18 = arith.constant 0 : index
    %708 = vector.load %arg5[%c0_17, %c0_18] : memref<1x32xf32, #tpu.memory_space<vmem>>, vector<1x32xf32>
    %709 = vector.broadcast %708 : vector<1x32xf32> to vector<32x32xf32>
    %710 = arith.addf %707, %709 : vector<32x32xf32>
    %cst_19 = arith.constant 0.000000e+00 : f32
    %711 = vector.broadcast %cst_19 : f32 to vector<32x32xf32>
    %712 = arith.maximumf %710, %711 : vector<32x32xf32>
    %713 = vector.shape_cast %712 : vector<32x32xf32> to vector<2x16x32xf32>
    %cst_20 = arith.constant dense<0.000000e+00> : vector<2x32xf32>
    %714 = vector.multi_reduction <add>, %713, %cst_20 [1] : vector<2x16x32xf32> to vector<2x32xf32>
    %cst_21 = arith.constant 6.250000e-02 : f32
    %715 = vector.broadcast %cst_21 : f32 to vector<2x32xf32>
    %716 = arith.mulf %714, %715 : vector<2x32xf32>
    %c0_22 = arith.constant 0 : index
    %c0_23 = arith.constant 0 : index
    %717 = vector.load %arg6[%c0_22, %c0_23] : memref<32x128xf32, #tpu.memory_space<vmem>>, vector<32x128xf32>
    %cst_24 = arith.constant dense<0.000000e+00> : vector<2x128xf32>
    %718 = tpu.matmul %716, %717, %cst_24 {dimension_numbers = #tpu.dot_dimension_numbers<[1], [0], [0], [1], [0, 0, 1, 1], [], []>} : vector<2x32xf32>, vector<32x128xf32>, vector<2x128xf32> -> vector<2x128xf32>
    %c0_25 = arith.constant 0 : index
    %c0_26 = arith.constant 0 : index
    %719 = vector.load %arg7[%c0_25, %c0_26] : memref<1x128xf32, #tpu.memory_space<vmem>>, vector<1x128xf32>
    %720 = vector.broadcast %719 : vector<1x128xf32> to vector<2x128xf32>
    %721 = arith.addf %718, %720 : vector<2x128xf32>
    %c0_27 = arith.constant 0 : index
    %c0_28 = arith.constant 0 : index
    %722 = vector.load %arg8[%c0_27, %c0_28] : memref<2x128xf32, #tpu.memory_space<vmem>>, vector<2x128xf32>
    tpu.vector_store %arg8[%c0_27, %c0_28], %721 {strides = array<i32>} : memref<2x128xf32, #tpu.memory_space<vmem>>, vector<2x128xf32>,
    return
  }
  func.func @transform_0(%arg0: i32) -> (i32, i32, i32, i32) {
    %c0_i32 = arith.constant 0 : i32
    %c0_i32_0 = arith.constant 0 : i32
    %c0_i32_1 = arith.constant 0 : i32
    %c0_i32_2 = arith.constant 0 : i32
    return %arg0, %c0_i32, %c0_i32_0, %c0_i32_1 : i32, i32, i32, i32
  }
  func.func @transform_1(%arg0: i32) -> (i32, i32) {
    %c0_i32 = arith.constant 0 : i32
    %c0_i32_0 = arith.constant 0 : i32
    %c0_i32_1 = arith.constant 0 : i32
    return %c0_i32, %c0_i32_0 : i32, i32
  }
  func.func @transform_2(%arg0: i32) -> (i32, i32) {
    %c0_i32 = arith.constant 0 : i32
    %c0_i32_0 = arith.constant 0 : i32
    %c0_i32_1 = arith.constant 0 : i32
    return %c0_i32, %c0_i32_0 : i32, i32
  }
  func.func @transform_3(%arg0: i32) -> (i32, i32) {
    %c0_i32 = arith.constant 0 : i32
    %c0_i32_0 = arith.constant 0 : i32
    %c0_i32_1 = arith.constant 0 : i32
    return %c0_i32, %c0_i32_0 : i32, i32
  }
  func.func @transform_4(%arg0: i32) -> (i32, i32) {
    %c0_i32 = arith.constant 0 : i32
    %c0_i32_0 = arith.constant 0 : i32
    %c0_i32_1 = arith.constant 0 : i32
    return %c0_i32, %c0_i32_0 : i32, i32
  }
  func.func @transform_5(%arg0: i32) -> (i32, i32) {
    %c0_i32 = arith.constant 0 : i32
    %c0_i32_0 = arith.constant 0 : i32
    %c0_i32_1 = arith.constant 0 : i32
    return %c0_i32, %c0_i32_0 : i32, i32
  }
  func.func @transform_6(%arg0: i32) -> (i32, i32) {
    %c0_i32 = arith.constant 0 : i32
    %c0_i32_0 = arith.constant 0 : i32
    %c0_i32_1 = arith.constant 0 : i32
    return %c0_i32, %c0_i32_0 : i32, i32
  }
  func.func @transform_7(%arg0: i32) -> (i32, i32) {
    %c0_i32 = arith.constant 0 : i32
    %c0_i32_0 = arith.constant 0 : i32
    return %arg0, %c0_i32 : i32, i32
  }
}

</mosaic_0001>

<llo_original>
// kernel: squeeze.2
$region0: #{squeeze.2}
  %s0 = inlined_call_operand.vmem [shape: f32[2,1,28,28], index: 0, kind: input, shape index: {}]
  %s1 = inlined_call_operand.vmem [shape: f32[2,7,4,7,4], index: 1, kind: output, shape index: {}]
  $region1: #{squeeze.2} parent=0
    #allocation0 [shape = 'u8[114688]{0}', space=vmem, size = 0x1c000, scoped, tag = 'scoped mem for input reshape']
    %s3 = sshllo.u32 0, 2
    %s4 = smul.addr 2, 27
    %s5 = scalar_lea.vmem %s0, %s4
    %v6 = vld [vmem:[%s5] sm:%s3]
    %s7 = scalar_lea.vmem [#allocation0], 216
    %8 = vst [vmem:[%s7] sm:%s3] %v6
    %s9 = smul.addr 2, 26
    %s10 = scalar_lea.vmem %s0, %s9
    %v11 = vld [vmem:[%s10] sm:%s3]
    %s12 = scalar_lea.vmem [#allocation0], 208
    %13 = vst [vmem:[%s12] sm:%s3] %v11
    %s14 = smul.addr 2, 25
    %s15 = scalar_lea.vmem %s0, %s14
    %v16 = vld [vmem:[%s15] sm:%s3]
    %s17 = scalar_lea.vmem [#allocation0], 200
    %18 = vst [vmem:[%s17] sm:%s3] %v16
    %s19 = smul.addr 2, 24
    %s20 = scalar_lea.vmem %s0, %s19
    %v21 = vld [vmem:[%s20] sm:%s3]
    %s22 = scalar_lea.vmem [#allocation0], 192
    %23 = vst [vmem:[%s22] sm:%s3] %v21
    %s24 = smul.addr 2, 23
    %s25 = scalar_lea.vmem %s0, %s24
    %v26 = vld [vmem:[%s25] sm:%s3]
    %s27 = scalar_lea.vmem [#allocation0], 184
    %28 = vst [vmem:[%s27] sm:%s3] %v26
    %s29 = smul.addr 2, 22
    %s30 = scalar_lea.vmem %s0, %s29
    %v31 = vld [vmem:[%s30] sm:%s3]
    %s32 = scalar_lea.vmem [#allocation0], 176
    %33 = vst [vmem:[%s32] sm:%s3] %v31
    %s34 = smul.addr 2, 21
    %s35 = scalar_lea.vmem %s0, %s34
    %v36 = vld [vmem:[%s35] sm:%s3]
    %s37 = scalar_lea.vmem [#allocation0], 168
    %38 = vst [vmem:[%s37] sm:%s3] %v36
    %s39 = smul.addr 2, 20
    %s40 = scalar_lea.vmem %s0, %s39
    %v41 = vld [vmem:[%s40] sm:%s3]
    %s42 = scalar_lea.vmem [#allocation0], 160
    %43 = vst [vmem:[%s42] sm:%s3] %v41
    %s44 = smul.addr 2, 19
    %s45 = scalar_lea.vmem %s0, %s44
    %v46 = vld [vmem:[%s45] sm:%s3]
    %s47 = scalar_lea.vmem [#allocation0], 152
    %48 = vst [vmem:[%s47] sm:%s3] %v46
    %s49 = smul.addr 2, 18
    %s50 = scalar_lea.vmem %s0, %s49
    %v51 = vld [vmem:[%s50] sm:%s3]
    %s52 = scalar_lea.vmem [#allocation0], 144
    %53 = vst [vmem:[%s52] sm:%s3] %v51
    %s54 = smul.addr 2, 17
    %s55 = scalar_lea.vmem %s0, %s54
    %v56 = vld [vmem:[%s55] sm:%s3]
    %s57 = scalar_lea.vmem [#allocation0], 136
    %58 = vst [vmem:[%s57] sm:%s3] %v56
    %s59 = smul.addr 2, 16
    %s60 = scalar_lea.vmem %s0, %s59
    %v61 = vld [vmem:[%s60] sm:%s3]
    %s62 = scalar_lea.vmem [#allocation0], 128
    %63 = vst [vmem:[%s62] sm:%s3] %v61
    %s64 = smul.addr 2, 15
    %s65 = scalar_lea.vmem %s0, %s64
    %v66 = vld [vmem:[%s65] sm:%s3]
    %s67 = scalar_lea.vmem [#allocation0], 120
    %68 = vst [vmem:[%s67] sm:%s3] %v66
    %s69 = smul.addr 2, 14
    %s70 = scalar_lea.vmem %s0, %s69
    %v71 = vld [vmem:[%s70] sm:%s3]
    %s72 = scalar_lea.vmem [#allocation0], 112
    %73 = vst [vmem:[%s72] sm:%s3] %v71
    %s74 = smul.addr 2, 13
    %s75 = scalar_lea.vmem %s0, %s74
    %v76 = vld [vmem:[%s75] sm:%s3]
    %s77 = scalar_lea.vmem [#allocation0], 104
    %78 = vst [vmem:[%s77] sm:%s3] %v76
    %s79 = smul.addr 2, 12
    %s80 = scalar_lea.vmem %s0, %s79
    %v81 = vld [vmem:[%s80] sm:%s3]
    %s82 = scalar_lea.vmem [#allocation0], 96
    %83 = vst [vmem:[%s82] sm:%s3] %v81
    %s84 = smul.addr 2, 11
    %s85 = scalar_lea.vmem %s0, %s84
    %v86 = vld [vmem:[%s85] sm:%s3]
    %s87 = scalar_lea.vmem [#allocation0], 88
    %88 = vst [vmem:[%s87] sm:%s3] %v86
    %s89 = smul.addr 2, 10
    %s90 = scalar_lea.vmem %s0, %s89
    %v91 = vld [vmem:[%s90] sm:%s3]
    %s92 = scalar_lea.vmem [#allocation0], 80
    %93 = vst [vmem:[%s92] sm:%s3] %v91
    %s94 = smul.addr 2, 9
    %s95 = scalar_lea.vmem %s0, %s94
    %v96 = vld [vmem:[%s95] sm:%s3]
    %s97 = scalar_lea.vmem [#allocation0], 72
    %98 = vst [vmem:[%s97] sm:%s3] %v96
    %s99 = smul.addr 2, 8
    %s100 = scalar_lea.vmem %s0, %s99
    %v101 = vld [vmem:[%s100] sm:%s3]
    %s102 = scalar_lea.vmem [#allocation0], 64
    %103 = vst [vmem:[%s102] sm:%s3] %v101
    %s104 = smul.addr 2, 7
    %s105 = scalar_lea.vmem %s0, %s104
    %v106 = vld [vmem:[%s105] sm:%s3]
    %s107 = scalar_lea.vmem [#allocation0], 56
    %108 = vst [vmem:[%s107] sm:%s3] %v106
    %s109 = smul.addr 2, 6
    %s110 = scalar_lea.vmem %s0, %s109
    %v111 = vld [vmem:[%s110] sm:%s3]
    %s112 = scalar_lea.vmem [#allocation0], 48
    %113 = vst [vmem:[%s112] sm:%s3] %v111
    %s114 = smul.addr 2, 5
    %s115 = scalar_lea.vmem %s0, %s114
    %v116 = vld [vmem:[%s115] sm:%s3]
    %s117 = scalar_lea.vmem [#allocation0], 40
    %118 = vst [vmem:[%s117] sm:%s3] %v116
    %s119 = smul.addr 2, 4
    %s120 = scalar_lea.vmem %s0, %s119
    %v121 = vld [vmem:[%s120] sm:%s3]
    %s122 = scalar_lea.vmem [#allocation0], 32
    %123 = vst [vmem:[%s122] sm:%s3] %v121
    %s124 = smul.addr 2, 3
    %s125 = scalar_lea.vmem %s0, %s124
    %v126 = vld [vmem:[%s125] sm:%s3]
    %s127 = scalar_lea.vmem [#allocation0], 24
    %128 = vst [vmem:[%s127] sm:%s3] %v126
    %s129 = smul.addr 2, 2
    %s130 = scalar_lea.vmem %s0, %s129
    %v131 = vld [vmem:[%s130] sm:%s3]
    %s132 = scalar_lea.vmem [#allocation0], 16
    %133 = vst [vmem:[%s132] sm:%s3] %v131
    %s134 = scalar_lea.vmem %s0, 2
    %v135 = vld [vmem:[%s134] sm:%s3]
    %s136 = scalar_lea.vmem [#allocation0], 8
    %137 = vst [vmem:[%s136] sm:%s3] %v135
    %v138 = vld [vmem:[%s0] sm:%s3]
    %139 = vst [vmem:[#allocation0] sm:%s3] %v138
    %v140 = vld [vmem:[#allocation0] sm:$0x3]
    %vm141 = vcmask 31744
    %142 = vst.msk [vmem:[%s1] ss:$8 sm:$0x3] %vm141, %v140
    %s143 = scalar_lea.vmem [#allocation0], 8
    %v144 = vld [vmem:[%s143] sm:$0x3]
    %vm145 = vcmask 31744
    %s146 = scalar_lea.vmem %s1, 16
    %147 = vst.msk [vmem:[%s146] ss:$8 sm:$0x3] %vm145, %v144
    %s148 = scalar_lea.vmem [#allocation0], 16
    %v149 = vld [vmem:[%s148] sm:$0x3]
    %vm150 = vcmask 31744
    %s151 = scalar_lea.vmem %s1, 32
    %152 = vst.msk [vmem:[%s151] ss:$8 sm:$0x3] %vm150, %v149
    %s153 = scalar_lea.vmem [#allocation0], 24
    %v154 = vld [vmem:[%s153] sm:$0x3]
    %vm155 = vcmask 31744
    %s156 = scalar_lea.vmem %s1, 48
    %157 = vst.msk [vmem:[%s156] ss:$8 sm:$0x3] %vm155, %v154
    %s158 = scalar_lea.vmem [#allocation0], 32
    %v159 = vld [vmem:[%s158] sm:$0x3]
    %vm160 = vcmask 31744
    %s161 = scalar_lea.vmem %s1, 64
    %162 = vst.msk [vmem:[%s161] ss:$8 sm:$0x3] %vm160, %v159
    %s163 = scalar_lea.vmem [#allocation0], 40
    %v164 = vld [vmem:[%s163] sm:$0x3]
    %vm165 = vcmask 31744
    %s166 = scalar_lea.vmem %s1, 80
    %167 = vst.msk [vmem:[%s166] ss:$8 sm:$0x3] %vm165, %v164
    %s168 = scalar_lea.vmem [#allocation0], 48
    %v169 = vld [vmem:[%s168] sm:$0x3]
    %vm170 = vcmask 31744
    %s171 = scalar_lea.vmem %s1, 96
    %172 = vst.msk [vmem:[%s171] ss:$8 sm:$0x3] %vm170, %v169
    %s173 = scalar_lea.vmem [#allocation0], 56
    %v174 = vld [vmem:[%s173] sm:$0x3]
    %vm175 = vcmask 31744
    %s176 = scalar_lea.vmem %s1, 112
    %177 = vst.msk [vmem:[%s176] ss:$8 sm:$0x3] %vm175, %v174
    %s178 = scalar_lea.vmem [#allocation0], 64
    %v179 = vld [vmem:[%s178] sm:$0x3]
    %vm180 = vcmask 31744
    %s181 = scalar_lea.vmem %s1, 128
    %182 = vst.msk [vmem:[%s181] ss:$8 sm:$0x3] %vm180, %v179
    %s183 = scalar_lea.vmem [#allocation0], 72
    %v184 = vld [vmem:[%s183] sm:$0x3]
    %vm185 = vcmask 31744
    %s186 = scalar_lea.vmem %s1, 144
    %187 = vst.msk [vmem:[%s186] ss:$8 sm:$0x3] %vm185, %v184
    %s188 = scalar_lea.vmem [#allocation0], 80
    %v189 = vld [vmem:[%s188] sm:$0x3]
    %vm190 = vcmask 31744
    %s191 = scalar_lea.vmem %s1, 160
    %192 = vst.msk [vmem:[%s191] ss:$8 sm:$0x3] %vm190, %v189
    %s193 = scalar_lea.vmem [#allocation0], 88
    %v194 = vld [vmem:[%s193] sm:$0x3]
    %vm195 = vcmask 31744
    %s196 = scalar_lea.vmem %s1, 176
    %197 = vst.msk [vmem:[%s196] ss:$8 sm:$0x3] %vm195, %v194
    %s198 = scalar_lea.vmem [#allocation0], 96
    %v199 = vld [vmem:[%s198] sm:$0x3]
    %vm200 = vcmask 31744
    %s201 = scalar_lea.vmem %s1, 192
    %202 = vst.msk [vmem:[%s201] ss:$8 sm:$0x3] %vm200, %v199
    %s203 = scalar_lea.vmem [#allocation0], 104
    %v204 = vld [vmem:[%s203] sm:$0x3]
    %vm205 = vcmask 31744
    %s206 = scalar_lea.vmem %s1, 208
    %207 = vst.msk [vmem:[%s206] ss:$8 sm:$0x3] %vm205, %v204
    %s208 = scalar_lea.vmem [#allocation0], 112
    %v209 = vld [vmem:[%s208] sm:$0x3]
    %vm210 = vcmask 31744
    %s211 = scalar_lea.vmem %s1, 224
    %212 = vst.msk [vmem:[%s211] ss:$8 sm:$0x3] %vm210, %v209
    %s213 = scalar_lea.vmem [#allocation0], 120
    %v214 = vld [vmem:[%s213] sm:$0x3]
    %vm215 = vcmask 31744
    %s216 = scalar_lea.vmem %s1, 240
    %217 = vst.msk [vmem:[%s216] ss:$8 sm:$0x3] %vm215, %v214
    %s218 = scalar_lea.vmem [#allocation0], 128
    %v219 = vld [vmem:[%s218] sm:$0x3]
    %vm220 = vcmask 31744
    %s221 = scalar_lea.vmem %s1, 256
    %222 = vst.msk [vmem:[%s221] ss:$8 sm:$0x3] %vm220, %v219
    %s223 = scalar_lea.vmem [#allocation0], 136
    %v224 = vld [vmem:[%s223] sm:$0x3]
    %vm225 = vcmask 31744
    %s226 = scalar_lea.vmem %s1, 272
    %227 = vst.msk [vmem:[%s226] ss:$8 sm:$0x3] %vm225, %v224
    %s228 = scalar_lea.vmem [#allocation0], 144
    %v229 = vld [vmem:[%s228] sm:$0x3]
    %vm230 = vcmask 31744
    %s231 = scalar_lea.vmem %s1, 288
    %232 = vst.msk [vmem:[%s231] ss:$8 sm:$0x3] %vm230, %v229
    %s233 = scalar_lea.vmem [#allocation0], 152
    %v234 = vld [vmem:[%s233] sm:$0x3]
    %vm235 = vcmask 31744
    %s236 = scalar_lea.vmem %s1, 304
    %237 = vst.msk [vmem:[%s236] ss:$8 sm:$0x3] %vm235, %v234
    %s238 = scalar_lea.vmem [#allocation0], 160
    %v239 = vld [vmem:[%s238] sm:$0x3]
    %vm240 = vcmask 31744
    %s241 = scalar_lea.vmem %s1, 320
    %242 = vst.msk [vmem:[%s241] ss:$8 sm:$0x3] %vm240, %v239
    %s243 = scalar_lea.vmem [#allocation0], 168
    %v244 = vld [vmem:[%s243] sm:$0x3]
    %vm245 = vcmask 31744
    %s246 = scalar_lea.vmem %s1, 336
    %247 = vst.msk [vmem:[%s246] ss:$8 sm:$0x3] %vm245, %v244
    %s248 = scalar_lea.vmem [#allocation0], 176
    %v249 = vld [vmem:[%s248] sm:$0x3]
    %vm250 = vcmask 31744
    %s251 = scalar_lea.vmem %s1, 352
    %252 = vst.msk [vmem:[%s251] ss:$8 sm:$0x3] %vm250, %v249
    %s253 = scalar_lea.vmem [#allocation0], 184
    %v254 = vld [vmem:[%s253] sm:$0x3]
    %vm255 = vcmask 31744
    %s256 = scalar_lea.vmem %s1, 368
    %257 = vst.msk [vmem:[%s256] ss:$8 sm:$0x3] %vm255, %v254
    %s258 = scalar_lea.vmem [#allocation0], 192
    %v259 = vld [vmem:[%s258] sm:$0x3]
    %vm260 = vcmask 31744
    %s261 = scalar_lea.vmem %s1, 384
    %262 = vst.msk [vmem:[%s261] ss:$8 sm:$0x3] %vm260, %v259
    %s263 = scalar_lea.vmem [#allocation0], 200
    %v264 = vld [vmem:[%s263] sm:$0x3]
    %vm265 = vcmask 31744
    %s266 = scalar_lea.vmem %s1, 400
    %267 = vst.msk [vmem:[%s266] ss:$8 sm:$0x3] %vm265, %v264
    %s268 = scalar_lea.vmem [#allocation0], 208
    %v269 = vld [vmem:[%s268] sm:$0x3]
    %vm270 = vcmask 31744
    %s271 = scalar_lea.vmem %s1, 416
    %272 = vst.msk [vmem:[%s271] ss:$8 sm:$0x3] %vm270, %v269
    %s273 = scalar_lea.vmem [#allocation0], 216
    %v274 = vld [vmem:[%s273] sm:$0x3]
    %vm275 = vcmask 31744
    %s276 = scalar_lea.vmem %s1, 432
    %277 = vst.msk [vmem:[%s276] ss:$8 sm:$0x3] %vm275, %v274
    %v278 = vld.sshfl [vmem:[#allocation0] sm:$0xff pattern:$0x99999810]
    %s279 = scalar_lea.vmem [#allocation0], 16
    %v280 = vld.sshfl [vmem:[%s279] sm:$0xff pattern:$0x98100000]
    %vm281 = vcmask 1047556
    %v282 = vsel %vm281, %v280, %v278
    %283 = vrot.lane.b32.xlu0 %v282, 124
    %v284 = vpop.permute.xlu0 %283
    %vm285 = vcmask 31744
    %s286 = scalar_lea.vmem %s1, 1
    %287 = vst.msk [vmem:[%s286] ss:$8 sm:$0xf] %vm285, %v284
    %s288 = scalar_lea.vmem %s1, 1
    %289 = vst.msk [vmem:[%s288] ss:$8 sm:$0xf0] %vm285, %v284
    %s290 = scalar_lea.vmem [#allocation0], 32
    %v291 = vld.sshfl [vmem:[%s290] sm:$0xff pattern:$0x99999810]
    %s292 = scalar_lea.vmem [#allocation0], 48
    %v293 = vld.sshfl [vmem:[%s292] sm:$0xff pattern:$0x98100000]
    %vm294 = vcmask 1047556
    %v295 = vsel %vm294, %v293, %v291
    %296 = vrot.lane.b32.xlu0 %v295, 124
    %v297 = vpop.permute.xlu0 %296
    %vm298 = vcmask 31744
    %s299 = scalar_lea.vmem %s1, 65
    %300 = vst.msk [vmem:[%s299] ss:$8 sm:$0xf] %vm298, %v297
    %s301 = scalar_lea.vmem %s1, 65
    %302 = vst.msk [vmem:[%s301] ss:$8 sm:$0xf0] %vm298, %v297
    %s303 = scalar_lea.vmem [#allocation0], 64
    %v304 = vld.sshfl [vmem:[%s303] sm:$0xff pattern:$0x99999810]
    %s305 = scalar_lea.vmem [#allocation0], 80
    %v306 = vld.sshfl [vmem:[%s305] sm:$0xff pattern:$0x98100000]
    %vm307 = vcmask 1047556
    %v308 = vsel %vm307, %v306, %v304
    %309 = vrot.lane.b32.xlu0 %v308, 124
    %v310 = vpop.permute.xlu0 %309
    %vm311 = vcmask 31744
    %s312 = scalar_lea.vmem %s1, 129
    %313 = vst.msk [vmem:[%s312] ss:$8 sm:$0xf] %vm311, %v310
    %s314 = scalar_lea.vmem %s1, 129
    %315 = vst.msk [vmem:[%s314] ss:$8 sm:$0xf0] %vm311, %v310
    %s316 = scalar_lea.vmem [#allocation0], 96
    %v317 = vld.sshfl [vmem:[%s316] sm:$0xff pattern:$0x99999810]
    %s318 = scalar_lea.vmem [#allocation0], 112
    %v319 = vld.sshfl [vmem:[%s318] sm:$0xff pattern:$0x98100000]
    %vm320 = vcmask 1047556
    %v321 = vsel %vm320, %v319, %v317
    %322 = vrot.lane.b32.xlu0 %v321, 124
    %v323 = vpop.permute.xlu0 %322
    %vm324 = vcmask 31744
    %s325 = scalar_lea.vmem %s1, 193
    %326 = vst.msk [vmem:[%s325] ss:$8 sm:$0xf] %vm324, %v323
    %s327 = scalar_lea.vmem %s1, 193
    %328 = vst.msk [vmem:[%s327] ss:$8 sm:$0xf0] %vm324, %v323
    %s329 = scalar_lea.vmem [#allocation0], 128
    %v330 = vld.sshfl [vmem:[%s329] sm:$0xff pattern:$0x99999810]
    %s331 = scalar_lea.vmem [#allocation0], 144
    %v332 = vld.sshfl [vmem:[%s331] sm:$0xff pattern:$0x98100000]
    %vm333 = vcmask 1047556
    %v334 = vsel %vm333, %v332, %v330
    %335 = vrot.lane.b32.xlu0 %v334, 124
    %v336 = vpop.permute.xlu0 %335
    %vm337 = vcmask 31744
    %s338 = scalar_lea.vmem %s1, 257
    %339 = vst.msk [vmem:[%s338] ss:$8 sm:$0xf] %vm337, %v336
    %s340 = scalar_lea.vmem %s1, 257
    %341 = vst.msk [vmem:[%s340] ss:$8 sm:$0xf0] %vm337, %v336
    %s342 = scalar_lea.vmem [#allocation0], 160
    %v343 = vld.sshfl [vmem:[%s342] sm:$0xff pattern:$0x99999810]
    %s344 = scalar_lea.vmem [#allocation0], 176
    %v345 = vld.sshfl [vmem:[%s344] sm:$0xff pattern:$0x98100000]
    %vm346 = vcmask 1047556
    %v347 = vsel %vm346, %v345, %v343
    %348 = vrot.lane.b32.xlu0 %v347, 124
    %v349 = vpop.permute.xlu0 %348
    %vm350 = vcmask 31744
    %s351 = scalar_lea.vmem %s1, 321
    %352 = vst.msk [vmem:[%s351] ss:$8 sm:$0xf] %vm350, %v349
    %s353 = scalar_lea.vmem %s1, 321
    %354 = vst.msk [vmem:[%s353] ss:$8 sm:$0xf0] %vm350, %v349
    %s355 = scalar_lea.vmem [#allocation0], 192
    %v356 = vld.sshfl [vmem:[%s355] sm:$0xff pattern:$0x99999810]
    %s357 = scalar_lea.vmem [#allocation0], 208
    %v358 = vld.sshfl [vmem:[%s357] sm:$0xff pattern:$0x98100000]
    %vm359 = vcmask 1047556
    %v360 = vsel %vm359, %v358, %v356
    %361 = vrot.lane.b32.xlu0 %v360, 124
    %v362 = vpop.permute.xlu0 %361
    %vm363 = vcmask 31744
    %s364 = scalar_lea.vmem %s1, 385
    %365 = vst.msk [vmem:[%s364] ss:$8 sm:$0xf] %vm363, %v362
    %s366 = scalar_lea.vmem %s1, 385
    %367 = vst.msk [vmem:[%s366] ss:$8 sm:$0xf0] %vm363, %v362
    %v368 = vld.sshfl [vmem:[#allocation0] sm:$0xff pattern:$0x99999810]
    %s369 = scalar_lea.vmem [#allocation0], 16
    %v370 = vld.sshfl [vmem:[%s369] sm:$0xff pattern:$0x98100000]
    %vm371 = vcmask 1047556
    %v372 = vsel %vm371, %v370, %v368
    %373 = vrot.lane.b32.xlu0 %v372, 120
    %v374 = vpop.permute.xlu0 %373
    %vm375 = vcmask 31744
    %s376 = scalar_lea.vmem %s1, 2
    %377 = vst.msk [vmem:[%s376] ss:$8 sm:$0xf] %vm375, %v374
    %s378 = scalar_lea.vmem %s1, 2
    %379 = vst.msk [vmem:[%s378] ss:$8 sm:$0xf0] %vm375, %v374
    %s380 = scalar_lea.vmem [#allocation0], 32
    %v381 = vld.sshfl [vmem:[%s380] sm:$0xff pattern:$0x99999810]
    %s382 = scalar_lea.vmem [#allocation0], 48
    %v383 = vld.sshfl [vmem:[%s382] sm:$0xff pattern:$0x98100000]
    %vm384 = vcmask 1047556
    %v385 = vsel %vm384, %v383, %v381
    %386 = vrot.lane.b32.xlu0 %v385, 120
    %v387 = vpop.permute.xlu0 %386
    %vm388 = vcmask 31744
    %s389 = scalar_lea.vmem %s1, 66
    %390 = vst.msk [vmem:[%s389] ss:$8 sm:$0xf] %vm388, %v387
    %s391 = scalar_lea.vmem %s1, 66
    %392 = vst.msk [vmem:[%s391] ss:$8 sm:$0xf0] %vm388, %v387
    %s393 = scalar_lea.vmem [#allocation0], 64
    %v394 = vld.sshfl [vmem:[%s393] sm:$0xff pattern:$0x99999810]
    %s395 = scalar_lea.vmem [#allocation0], 80
    %v396 = vld.sshfl [vmem:[%s395] sm:$0xff pattern:$0x98100000]
    %vm397 = vcmask 1047556
    %v398 = vsel %vm397, %v396, %v394
    %399 = vrot.lane.b32.xlu0 %v398, 120
    %v400 = vpop.permute.xlu0 %399
    %vm401 = vcmask 31744
    %s402 = scalar_lea.vmem %s1, 130
    %403 = vst.msk [vmem:[%s402] ss:$8 sm:$0xf] %vm401, %v400
    %s404 = scalar_lea.vmem %s1, 130
    %405 = vst.msk [vmem:[%s404] ss:$8 sm:$0xf0] %vm401, %v400
    %s406 = scalar_lea.vmem [#allocation0], 96
    %v407 = vld.sshfl [vmem:[%s406] sm:$0xff pattern:$0x99999810]
    %s408 = scalar_lea.vmem [#allocation0], 112
    %v409 = vld.sshfl [vmem:[%s408] sm:$0xff pattern:$0x98100000]
    %vm410 = vcmask 1047556
    %v411 = vsel %vm410, %v409, %v407
    %412 = vrot.lane.b32.xlu0 %v411, 120
    %v413 = vpop.permute.xlu0 %412
    %vm414 = vcmask 31744
    %s415 = scalar_lea.vmem %s1, 194
    %416 = vst.msk [vmem:[%s415] ss:$8 sm:$0xf] %vm414, %v413
    %s417 = scalar_lea.vmem %s1, 194
    %418 = vst.msk [vmem:[%s417] ss:$8 sm:$0xf0] %vm414, %v413
    %s419 = scalar_lea.vmem [#allocation0], 128
    %v420 = vld.sshfl [vmem:[%s419] sm:$0xff pattern:$0x99999810]
    %s421 = scalar_lea.vmem [#allocation0], 144
    %v422 = vld.sshfl [vmem:[%s421] sm:$0xff pattern:$0x98100000]
    %vm423 = vcmask 1047556
    %v424 = vsel %vm423, %v422, %v420
    %425 = vrot.lane.b32.xlu0 %v424, 120
    %v426 = vpop.permute.xlu0 %425
    %vm427 = vcmask 31744
    %s428 = scalar_lea.vmem %s1, 258
    %429 = vst.msk [vmem:[%s428] ss:$8 sm:$0xf] %vm427, %v426
    %s430 = scalar_lea.vmem %s1, 258
    %431 = vst.msk [vmem:[%s430] ss:$8 sm:$0xf0] %vm427, %v426
    %s432 = scalar_lea.vmem [#allocation0], 160
    %v433 = vld.sshfl [vmem:[%s432] sm:$0xff pattern:$0x99999810]
    %s434 = scalar_lea.vmem [#allocation0], 176
    %v435 = vld.sshfl [vmem:[%s434] sm:$0xff pattern:$0x98100000]
    %vm436 = vcmask 1047556
    %v437 = vsel %vm436, %v435, %v433
    %438 = vrot.lane.b32.xlu0 %v437, 120
    %v439 = vpop.permute.xlu0 %438
    %vm440 = vcmask 31744
    %s441 = scalar_lea.vmem %s1, 322
    %442 = vst.msk [vmem:[%s441] ss:$8 sm:$0xf] %vm440, %v439
    %s443 = scalar_lea.vmem %s1, 322
    %444 = vst.msk [vmem:[%s443] ss:$8 sm:$0xf0] %vm440, %v439
    %s445 = scalar_lea.vmem [#allocation0], 192
    %v446 = vld.sshfl [vmem:[%s445] sm:$0xff pattern:$0x99999810]
    %s447 = scalar_lea.vmem [#allocation0], 208
    %v448 = vld.sshfl [vmem:[%s447] sm:$0xff pattern:$0x98100000]
    %vm449 = vcmask 1047556
    %v450 = vsel %vm449, %v448, %v446
    %451 = vrot.lane.b32.xlu0 %v450, 120
    %v452 = vpop.permute.xlu0 %451
    %vm453 = vcmask 31744
    %s454 = scalar_lea.vmem %s1, 386
    %455 = vst.msk [vmem:[%s454] ss:$8 sm:$0xf] %vm453, %v452
    %s456 = scalar_lea.vmem %s1, 386
    %457 = vst.msk [vmem:[%s456] ss:$8 sm:$0xf0] %vm453, %v452
    %v458 = vld.sshfl [vmem:[#allocation0] sm:$0xff pattern:$0x99999810]
    %s459 = scalar_lea.vmem [#allocation0], 16
    %v460 = vld.sshfl [vmem:[%s459] sm:$0xff pattern:$0x98100000]
    %vm461 = vcmask 1047556
    %v462 = vsel %vm461, %v460, %v458
    %463 = vrot.lane.b32.xlu0 %v462, 116
    %v464 = vpop.permute.xlu0 %463
    %vm465 = vcmask 31744
    %s466 = scalar_lea.vmem %s1, 3
    %467 = vst.msk [vmem:[%s466] ss:$8 sm:$0xf] %vm465, %v464
    %s468 = scalar_lea.vmem %s1, 3
    %469 = vst.msk [vmem:[%s468] ss:$8 sm:$0xf0] %vm465, %v464
    %s470 = scalar_lea.vmem [#allocation0], 32
    %v471 = vld.sshfl [vmem:[%s470] sm:$0xff pattern:$0x99999810]
    %s472 = scalar_lea.vmem [#allocation0], 48
    %v473 = vld.sshfl [vmem:[%s472] sm:$0xff pattern:$0x98100000]
    %vm474 = vcmask 1047556
    %v475 = vsel %vm474, %v473, %v471
    %476 = vrot.lane.b32.xlu0 %v475, 116
    %v477 = vpop.permute.xlu0 %476
    %vm478 = vcmask 31744
    %s479 = scalar_lea.vmem %s1, 67
    %480 = vst.msk [vmem:[%s479] ss:$8 sm:$0xf] %vm478, %v477
    %s481 = scalar_lea.vmem %s1, 67
    %482 = vst.msk [vmem:[%s481] ss:$8 sm:$0xf0] %vm478, %v477
    %s483 = scalar_lea.vmem [#allocation0], 64
    %v484 = vld.sshfl [vmem:[%s483] sm:$0xff pattern:$0x99999810]
    %s485 = scalar_lea.vmem [#allocation0], 80
    %v486 = vld.sshfl [vmem:[%s485] sm:$0xff pattern:$0x98100000]
    %vm487 = vcmask 1047556
    %v488 = vsel %vm487, %v486, %v484
    %489 = vrot.lane.b32.xlu0 %v488, 116
    %v490 = vpop.permute.xlu0 %489
    %vm491 = vcmask 31744
    %s492 = scalar_lea.vmem %s1, 131
    %493 = vst.msk [vmem:[%s492] ss:$8 sm:$0xf] %vm491, %v490
    %s494 = scalar_lea.vmem %s1, 131
    %495 = vst.msk [vmem:[%s494] ss:$8 sm:$0xf0] %vm491, %v490
    %s496 = scalar_lea.vmem [#allocation0], 96
    %v497 = vld.sshfl [vmem:[%s496] sm:$0xff pattern:$0x99999810]
    %s498 = scalar_lea.vmem [#allocation0], 112
    %v499 = vld.sshfl [vmem:[%s498] sm:$0xff pattern:$0x98100000]
    %vm500 = vcmask 1047556
    %v501 = vsel %vm500, %v499, %v497
    %502 = vrot.lane.b32.xlu0 %v501, 116
    %v503 = vpop.permute.xlu0 %502
    %vm504 = vcmask 31744
    %s505 = scalar_lea.vmem %s1, 195
    %506 = vst.msk [vmem:[%s505] ss:$8 sm:$0xf] %vm504, %v503
    %s507 = scalar_lea.vmem %s1, 195
    %508 = vst.msk [vmem:[%s507] ss:$8 sm:$0xf0] %vm504, %v503
    %s509 = scalar_lea.vmem [#allocation0], 128
    %v510 = vld.sshfl [vmem:[%s509] sm:$0xff pattern:$0x99999810]
    %s511 = scalar_lea.vmem [#allocation0], 144
    %v512 = vld.sshfl [vmem:[%s511] sm:$0xff pattern:$0x98100000]
    %vm513 = vcmask 1047556
    %v514 = vsel %vm513, %v512, %v510
    %515 = vrot.lane.b32.xlu0 %v514, 116
    %v516 = vpop.permute.xlu0 %515
    %vm517 = vcmask 31744
    %s518 = scalar_lea.vmem %s1, 259
    %519 = vst.msk [vmem:[%s518] ss:$8 sm:$0xf] %vm517, %v516
    %s520 = scalar_lea.vmem %s1, 259
    %521 = vst.msk [vmem:[%s520] ss:$8 sm:$0xf0] %vm517, %v516
    %s522 = scalar_lea.vmem [#allocation0], 160
    %v523 = vld.sshfl [vmem:[%s522] sm:$0xff pattern:$0x99999810]
    %s524 = scalar_lea.vmem [#allocation0], 176
    %v525 = vld.sshfl [vmem:[%s524] sm:$0xff pattern:$0x98100000]
    %vm526 = vcmask 1047556
    %v527 = vsel %vm526, %v525, %v523
    %528 = vrot.lane.b32.xlu0 %v527, 116
    %v529 = vpop.permute.xlu0 %528
    %vm530 = vcmask 31744
    %s531 = scalar_lea.vmem %s1, 323
    %532 = vst.msk [vmem:[%s531] ss:$8 sm:$0xf] %vm530, %v529
    %s533 = scalar_lea.vmem %s1, 323
    %534 = vst.msk [vmem:[%s533] ss:$8 sm:$0xf0] %vm530, %v529
    %s535 = scalar_lea.vmem [#allocation0], 192
    %v536 = vld.sshfl [vmem:[%s535] sm:$0xff pattern:$0x99999810]
    %s537 = scalar_lea.vmem [#allocation0], 208
    %v538 = vld.sshfl [vmem:[%s537] sm:$0xff pattern:$0x98100000]
    %vm539 = vcmask 1047556
    %v540 = vsel %vm539, %v538, %v536
    %541 = vrot.lane.b32.xlu0 %v540, 116
    %v542 = vpop.permute.xlu0 %541
    %vm543 = vcmask 31744
    %s544 = scalar_lea.vmem %s1, 387
    %545 = vst.msk [vmem:[%s544] ss:$8 sm:$0xf] %vm543, %v542
    %s546 = scalar_lea.vmem %s1, 387
    %547 = vst.msk [vmem:[%s546] ss:$8 sm:$0xf0] %vm543, %v542
    %v548 = vld.sshfl [vmem:[#allocation0] sm:$0xff pattern:$0x99999810]
    %s549 = scalar_lea.vmem [#allocation0], 16
    %v550 = vld.sshfl [vmem:[%s549] sm:$0xff pattern:$0x98100000]
    %vm551 = vcmask 1047556
    %v552 = vsel %vm551, %v550, %v548
    %553 = vrot.lane.b32.xlu0 %v552, 112
    %v554 = vpop.permute.xlu0 %553
    %vm555 = vcmask 31744
    %s556 = scalar_lea.vmem %s1, 4
    %557 = vst.msk [vmem:[%s556] ss:$8 sm:$0xf] %vm555, %v554
    %s558 = scalar_lea.vmem %s1, 4
    %559 = vst.msk [vmem:[%s558] ss:$8 sm:$0xf0] %vm555, %v554
    %s560 = scalar_lea.vmem [#allocation0], 32
    %v561 = vld.sshfl [vmem:[%s560] sm:$0xff pattern:$0x99999810]
    %s562 = scalar_lea.vmem [#allocation0], 48
    %v563 = vld.sshfl [vmem:[%s562] sm:$0xff pattern:$0x98100000]
    %vm564 = vcmask 1047556
    %v565 = vsel %vm564, %v563, %v561
    %566 = vrot.lane.b32.xlu0 %v565, 112
    %v567 = vpop.permute.xlu0 %566
    %vm568 = vcmask 31744
    %s569 = scalar_lea.vmem %s1, 68
    %570 = vst.msk [vmem:[%s569] ss:$8 sm:$0xf] %vm568, %v567
    %s571 = scalar_lea.vmem %s1, 68
    %572 = vst.msk [vmem:[%s571] ss:$8 sm:$0xf0] %vm568, %v567
    %s573 = scalar_lea.vmem [#allocation0], 64
    %v574 = vld.sshfl [vmem:[%s573] sm:$0xff pattern:$0x99999810]
    %s575 = scalar_lea.vmem [#allocation0], 80
    %v576 = vld.sshfl [vmem:[%s575] sm:$0xff pattern:$0x98100000]
    %vm577 = vcmask 1047556
    %v578 = vsel %vm577, %v576, %v574
    %579 = vrot.lane.b32.xlu0 %v578, 112
    %v580 = vpop.permute.xlu0 %579
    %vm581 = vcmask 31744
    %s582 = scalar_lea.vmem %s1, 132
    %583 = vst.msk [vmem:[%s582] ss:$8 sm:$0xf] %vm581, %v580
    %s584 = scalar_lea.vmem %s1, 132
    %585 = vst.msk [vmem:[%s584] ss:$8 sm:$0xf0] %vm581, %v580
    %s586 = scalar_lea.vmem [#allocation0], 96
    %v587 = vld.sshfl [vmem:[%s586] sm:$0xff pattern:$0x99999810]
    %s588 = scalar_lea.vmem [#allocation0], 112
    %v589 = vld.sshfl [vmem:[%s588] sm:$0xff pattern:$0x98100000]
    %vm590 = vcmask 1047556
    %v591 = vsel %vm590, %v589, %v587
    %592 = vrot.lane.b32.xlu0 %v591, 112
    %v593 = vpop.permute.xlu0 %592
    %vm594 = vcmask 31744
    %s595 = scalar_lea.vmem %s1, 196
    %596 = vst.msk [vmem:[%s595] ss:$8 sm:$0xf] %vm594, %v593
    %s597 = scalar_lea.vmem %s1, 196
    %598 = vst.msk [vmem:[%s597] ss:$8 sm:$0xf0] %vm594, %v593
    %s599 = scalar_lea.vmem [#allocation0], 128
    %v600 = vld.sshfl [vmem:[%s599] sm:$0xff pattern:$0x99999810]
    %s601 = scalar_lea.vmem [#allocation0], 144
    %v602 = vld.sshfl [vmem:[%s601] sm:$0xff pattern:$0x98100000]
    %vm603 = vcmask 1047556
    %v604 = vsel %vm603, %v602, %v600
    %605 = vrot.lane.b32.xlu0 %v604, 112
    %v606 = vpop.permute.xlu0 %605
    %vm607 = vcmask 31744
    %s608 = scalar_lea.vmem %s1, 260
    %609 = vst.msk [vmem:[%s608] ss:$8 sm:$0xf] %vm607, %v606
    %s610 = scalar_lea.vmem %s1, 260
    %611 = vst.msk [vmem:[%s610] ss:$8 sm:$0xf0] %vm607, %v606
    %s612 = scalar_lea.vmem [#allocation0], 160
    %v613 = vld.sshfl [vmem:[%s612] sm:$0xff pattern:$0x99999810]
    %s614 = scalar_lea.vmem [#allocation0], 176
    %v615 = vld.sshfl [vmem:[%s614] sm:$0xff pattern:$0x98100000]
    %vm616 = vcmask 1047556
    %v617 = vsel %vm616, %v615, %v613
    %618 = vrot.lane.b32.xlu0 %v617, 112
    %v619 = vpop.permute.xlu0 %618
    %vm620 = vcmask 31744
    %s621 = scalar_lea.vmem %s1, 324
    %622 = vst.msk [vmem:[%s621] ss:$8 sm:$0xf] %vm620, %v619
    %s623 = scalar_lea.vmem %s1, 324
    %624 = vst.msk [vmem:[%s623] ss:$8 sm:$0xf0] %vm620, %v619
    %s625 = scalar_lea.vmem [#allocation0], 192
    %v626 = vld.sshfl [vmem:[%s625] sm:$0xff pattern:$0x99999810]
    %s627 = scalar_lea.vmem [#allocation0], 208
    %v628 = vld.sshfl [vmem:[%s627] sm:$0xff pattern:$0x98100000]
    %vm629 = vcmask 1047556
    %v630 = vsel %vm629, %v628, %v626
    %631 = vrot.lane.b32.xlu0 %v630, 112
    %v632 = vpop.permute.xlu0 %631
    %vm633 = vcmask 31744
    %s634 = scalar_lea.vmem %s1, 388
    %635 = vst.msk [vmem:[%s634] ss:$8 sm:$0xf] %vm633, %v632
    %s636 = scalar_lea.vmem %s1, 388
    %637 = vst.msk [vmem:[%s636] ss:$8 sm:$0xf0] %vm633, %v632
    %v638 = vld.sshfl [vmem:[#allocation0] sm:$0xff pattern:$0x99999810]
    %s639 = scalar_lea.vmem [#allocation0], 16
    %v640 = vld.sshfl [vmem:[%s639] sm:$0xff pattern:$0x98100000]
    %vm641 = vcmask 1047556
    %v642 = vsel %vm641, %v640, %v638
    %643 = vrot.lane.b32.xlu0 %v642, 108
    %v644 = vpop.permute.xlu0 %643
    %vm645 = vcmask 31744
    %s646 = scalar_lea.vmem %s1, 5
    %647 = vst.msk [vmem:[%s646] ss:$8 sm:$0xf] %vm645, %v644
    %s648 = scalar_lea.vmem %s1, 5
    %649 = vst.msk [vmem:[%s648] ss:$8 sm:$0xf0] %vm645, %v644
    %s650 = scalar_lea.vmem [#allocation0], 32
    %v651 = vld.sshfl [vmem:[%s650] sm:$0xff pattern:$0x99999810]
    %s652 = scalar_lea.vmem [#allocation0], 48
    %v653 = vld.sshfl [vmem:[%s652] sm:$0xff pattern:$0x98100000]
    %vm654 = vcmask 1047556
    %v655 = vsel %vm654, %v653, %v651
    %656 = vrot.lane.b32.xlu0 %v655, 108
    %v657 = vpop.permute.xlu0 %656
    %vm658 = vcmask 31744
    %s659 = scalar_lea.vmem %s1, 69
    %660 = vst.msk [vmem:[%s659] ss:$8 sm:$0xf] %vm658, %v657
    %s661 = scalar_lea.vmem %s1, 69
    %662 = vst.msk [vmem:[%s661] ss:$8 sm:$0xf0] %vm658, %v657
    %s663 = scalar_lea.vmem [#allocation0], 64
    %v664 = vld.sshfl [vmem:[%s663] sm:$0xff pattern:$0x99999810]
    %s665 = scalar_lea.vmem [#allocation0], 80
    %v666 = vld.sshfl [vmem:[%s665] sm:$0xff pattern:$0x98100000]
    %vm667 = vcmask 1047556
    %v668 = vsel %vm667, %v666, %v664
    %669 = vrot.lane.b32.xlu0 %v668, 108
    %v670 = vpop.permute.xlu0 %669
    %vm671 = vcmask 31744
    %s672 = scalar_lea.vmem %s1, 133
    %673 = vst.msk [vmem:[%s672] ss:$8 sm:$0xf] %vm671, %v670
    %s674 = scalar_lea.vmem %s1, 133
    %675 = vst.msk [vmem:[%s674] ss:$8 sm:$0xf0] %vm671, %v670
    %s676 = scalar_lea.vmem [#allocation0], 96
    %v677 = vld.sshfl [vmem:[%s676] sm:$0xff pattern:$0x99999810]
    %s678 = scalar_lea.vmem [#allocation0], 112
    %v679 = vld.sshfl [vmem:[%s678] sm:$0xff pattern:$0x98100000]
    %vm680 = vcmask 1047556
    %v681 = vsel %vm680, %v679, %v677
    %682 = vrot.lane.b32.xlu0 %v681, 108
    %v683 = vpop.permute.xlu0 %682
    %vm684 = vcmask 31744
    %s685 = scalar_lea.vmem %s1, 197
    %686 = vst.msk [vmem:[%s685] ss:$8 sm:$0xf] %vm684, %v683
    %s687 = scalar_lea.vmem %s1, 197
    %688 = vst.msk [vmem:[%s687] ss:$8 sm:$0xf0] %vm684, %v683
    %s689 = scalar_lea.vmem [#allocation0], 128
    %v690 = vld.sshfl [vmem:[%s689] sm:$0xff pattern:$0x99999810]
    %s691 = scalar_lea.vmem [#allocation0], 144
    %v692 = vld.sshfl [vmem:[%s691] sm:$0xff pattern:$0x98100000]
    %vm693 = vcmask 1047556
    %v694 = vsel %vm693, %v692, %v690
    %695 = vrot.lane.b32.xlu0 %v694, 108
    %v696 = vpop.permute.xlu0 %695
    %vm697 = vcmask 31744
    %s698 = scalar_lea.vmem %s1, 261
    %699 = vst.msk [vmem:[%s698] ss:$8 sm:$0xf] %vm697, %v696
    %s700 = scalar_lea.vmem %s1, 261
    %701 = vst.msk [vmem:[%s700] ss:$8 sm:$0xf0] %vm697, %v696
    %s702 = scalar_lea.vmem [#allocation0], 160
    %v703 = vld.sshfl [vmem:[%s702] sm:$0xff pattern:$0x99999810]
    %s704 = scalar_lea.vmem [#allocation0], 176
    %v705 = vld.sshfl [vmem:[%s704] sm:$0xff pattern:$0x98100000]
    %vm706 = vcmask 1047556
    %v707 = vsel %vm706, %v705, %v703
    %708 = vrot.lane.b32.xlu0 %v707, 108
    %v709 = vpop.permute.xlu0 %708
    %vm710 = vcmask 31744
    %s711 = scalar_lea.vmem %s1, 325
    %712 = vst.msk [vmem:[%s711] ss:$8 sm:$0xf] %vm710, %v709
    %s713 = scalar_lea.vmem %s1, 325
    %714 = vst.msk [vmem:[%s713] ss:$8 sm:$0xf0] %vm710, %v709
    %s715 = scalar_lea.vmem [#allocation0], 192
    %v716 = vld.sshfl [vmem:[%s715] sm:$0xff pattern:$0x99999810]
    %s717 = scalar_lea.vmem [#allocation0], 208
    %v718 = vld.sshfl [vmem:[%s717] sm:$0xff pattern:$0x98100000]
    %vm719 = vcmask 1047556
    %v720 = vsel %vm719, %v718, %v716
    %721 = vrot.lane.b32.xlu0 %v720, 108
    %v722 = vpop.permute.xlu0 %721
    %vm723 = vcmask 31744
    %s724 = scalar_lea.vmem %s1, 389
    %725 = vst.msk [vmem:[%s724] ss:$8 sm:$0xf] %vm723, %v722
    %s726 = scalar_lea.vmem %s1, 389
    %727 = vst.msk [vmem:[%s726] ss:$8 sm:$0xf0] %vm723, %v722
    %v728 = vld.sshfl [vmem:[#allocation0] sm:$0xff pattern:$0x99999810]
    %s729 = scalar_lea.vmem [#allocation0], 16
    %v730 = vld.sshfl [vmem:[%s729] sm:$0xff pattern:$0x98100000]
    %vm731 = vcmask 1047556
    %v732 = vsel %vm731, %v730, %v728
    %733 = vrot.lane.b32.xlu0 %v732, 104
    %v734 = vpop.permute.xlu0 %733
    %vm735 = vcmask 31744
    %s736 = scalar_lea.vmem %s1, 6
    %737 = vst.msk [vmem:[%s736] ss:$8 sm:$0xf] %vm735, %v734
    %s738 = scalar_lea.vmem %s1, 6
    %739 = vst.msk [vmem:[%s738] ss:$8 sm:$0xf0] %vm735, %v734
    %s740 = scalar_lea.vmem [#allocation0], 32
    %v741 = vld.sshfl [vmem:[%s740] sm:$0xff pattern:$0x99999810]
    %s742 = scalar_lea.vmem [#allocation0], 48
    %v743 = vld.sshfl [vmem:[%s742] sm:$0xff pattern:$0x98100000]
    %vm744 = vcmask 1047556
    %v745 = vsel %vm744, %v743, %v741
    %746 = vrot.lane.b32.xlu0 %v745, 104
    %v747 = vpop.permute.xlu0 %746
    %vm748 = vcmask 31744
    %s749 = scalar_lea.vmem %s1, 70
    %750 = vst.msk [vmem:[%s749] ss:$8 sm:$0xf] %vm748, %v747
    %s751 = scalar_lea.vmem %s1, 70
    %752 = vst.msk [vmem:[%s751] ss:$8 sm:$0xf0] %vm748, %v747
    %s753 = scalar_lea.vmem [#allocation0], 64
    %v754 = vld.sshfl [vmem:[%s753] sm:$0xff pattern:$0x99999810]
    %s755 = scalar_lea.vmem [#allocation0], 80
    %v756 = vld.sshfl [vmem:[%s755] sm:$0xff pattern:$0x98100000]
    %vm757 = vcmask 1047556
    %v758 = vsel %vm757, %v756, %v754
    %759 = vrot.lane.b32.xlu0 %v758, 104
    %v760 = vpop.permute.xlu0 %759
    %vm761 = vcmask 31744
    %s762 = scalar_lea.vmem %s1, 134
    %763 = vst.msk [vmem:[%s762] ss:$8 sm:$0xf] %vm761, %v760
    %s764 = scalar_lea.vmem %s1, 134
    %765 = vst.msk [vmem:[%s764] ss:$8 sm:$0xf0] %vm761, %v760
    %s766 = scalar_lea.vmem [#allocation0], 96
    %v767 = vld.sshfl [vmem:[%s766] sm:$0xff pattern:$0x99999810]
    %s768 = scalar_lea.vmem [#allocation0], 112
    %v769 = vld.sshfl [vmem:[%s768] sm:$0xff pattern:$0x98100000]
    %vm770 = vcmask 1047556
    %v771 = vsel %vm770, %v769, %v767
    %772 = vrot.lane.b32.xlu0 %v771, 104
    %v773 = vpop.permute.xlu0 %772
    %vm774 = vcmask 31744
    %s775 = scalar_lea.vmem %s1, 198
    %776 = vst.msk [vmem:[%s775] ss:$8 sm:$0xf] %vm774, %v773
    %s777 = scalar_lea.vmem %s1, 198
    %778 = vst.msk [vmem:[%s777] ss:$8 sm:$0xf0] %vm774, %v773
    %s779 = scalar_lea.vmem [#allocation0], 128
    %v780 = vld.sshfl [vmem:[%s779] sm:$0xff pattern:$0x99999810]
    %s781 = scalar_lea.vmem [#allocation0], 144
    %v782 = vld.sshfl [vmem:[%s781] sm:$0xff pattern:$0x98100000]
    %vm783 = vcmask 1047556
    %v784 = vsel %vm783, %v782, %v780
    %785 = vrot.lane.b32.xlu0 %v784, 104
    %v786 = vpop.permute.xlu0 %785
    %vm787 = vcmask 31744
    %s788 = scalar_lea.vmem %s1, 262
    %789 = vst.msk [vmem:[%s788] ss:$8 sm:$0xf] %vm787, %v786
    %s790 = scalar_lea.vmem %s1, 262
    %791 = vst.msk [vmem:[%s790] ss:$8 sm:$0xf0] %vm787, %v786
    %s792 = scalar_lea.vmem [#allocation0], 160
    %v793 = vld.sshfl [vmem:[%s792] sm:$0xff pattern:$0x99999810]
    %s794 = scalar_lea.vmem [#allocation0], 176
    %v795 = vld.sshfl [vmem:[%s794] sm:$0xff pattern:$0x98100000]
    %vm796 = vcmask 1047556
    %v797 = vsel %vm796, %v795, %v793
    %798 = vrot.lane.b32.xlu0 %v797, 104
    %v799 = vpop.permute.xlu0 %798
    %vm800 = vcmask 31744
    %s801 = scalar_lea.vmem %s1, 326
    %802 = vst.msk [vmem:[%s801] ss:$8 sm:$0xf] %vm800, %v799
    %s803 = scalar_lea.vmem %s1, 326
    %804 = vst.msk [vmem:[%s803] ss:$8 sm:$0xf0] %vm800, %v799
    %s805 = scalar_lea.vmem [#allocation0], 192
    %v806 = vld.sshfl [vmem:[%s805] sm:$0xff pattern:$0x99999810]
    %s807 = scalar_lea.vmem [#allocation0], 208
    %v808 = vld.sshfl [vmem:[%s807] sm:$0xff pattern:$0x98100000]
    %vm809 = vcmask 1047556
    %v810 = vsel %vm809, %v808, %v806
    %811 = vrot.lane.b32.xlu0 %v810, 104
    %v812 = vpop.permute.xlu0 %811
    %vm813 = vcmask 31744
    %s814 = scalar_lea.vmem %s1, 390
    %815 = vst.msk [vmem:[%s814] ss:$8 sm:$0xf] %vm813, %v812
    %s816 = scalar_lea.vmem %s1, 390
    %817 = vst.msk [vmem:[%s816] ss:$8 sm:$0xf0] %vm813, %v812

// kernel: snet_mnist_forward.1
$region0: #{snet_mnist_forward.1}
  #allocation0 [shape = 'u32[]', space=smem, size = 0x4, offset = 0x4, fixed_abs, tag = 'smem constant byte address 0x4 - core index']
  #allocation1 [shape = 'u32[144,128]{1,0:T(1,128)}', space=vmem, size = 0x12000, scoped, tag = 'internal scratch']
  %s0 = inlined_call_operand.vmem [shape: f32[2,7,7,16], index: 0, kind: input, shape index: {}]
  %s1 = inlined_call_operand.vmem [shape: f32[25,16], index: 1, kind: input, shape index: {}]
  %s2 = inlined_call_operand.vmem [shape: f32[1,16], index: 2, kind: input, shape index: {}]
  %s3 = inlined_call_operand.vmem [shape: bf16[400,32], index: 3, kind: input, shape index: {}]
  %s4 = inlined_call_operand.vmem [shape: f32[1,32], index: 4, kind: input, shape index: {}]
  %s5 = inlined_call_operand.vmem [shape: f32[32,128], index: 5, kind: input, shape index: {}]
  %s6 = inlined_call_operand.vmem [shape: f32[1,128], index: 6, kind: input, shape index: {}]
  %s7 = inlined_call_operand.hbm [shape: f32[2,128], index: 7, kind: output, shape index: {}]
  %s8 = sld [smem:[#allocation0]]
  $region38: #{snet_mnist_forward.1} parent=0
    _
  %s10 = ssub.s32 1, %s8
  %s11 = scalar_select 0, %s10, %s8
  $region1: #{snet_mnist_forward.1} parent=0
    #allocation2 [shape = 'u8[1024]{0}', space=vmem, size = 0x400, scoped, tag = 'output window, operand 0, single buffered']
    #allocation3 [shape = 's32[1]{0}', space=sflag, size = 0x4, scoped, tag = 'scoped memory for snet_mnist_forward.1']
    %12 = vsyncpa [#allocation3], 0
    // Predicated region
    $region2: #{snet_mnist_forward.1} parent=1 // pred_check
      _
    $region3: #{snet_mnist_forward.1} parent=1 // pred_check_branch
      %14 = sbr.rel (0) target = $region5
    $region4: #{snet_mnist_forward.1} parent=1 // pred_region
      _
    $region5: #{snet_mnist_forward.1} parent=1 // pred_fallthru
      _
    // Predicated region
    $region6: #{snet_mnist_forward.1} parent=1 // pred_check
      _
    $region7: #{snet_mnist_forward.1} parent=1 // pred_check_branch
      %16 = sbr.rel (0) target = $region9
    $region8: #{snet_mnist_forward.1} parent=1 // pred_region
      _
    $region9: #{snet_mnist_forward.1} parent=1 // pred_fallthru
      _
    // Predicated region
    $region10: #{snet_mnist_forward.1} parent=1 // pred_check
      _
    $region11: #{snet_mnist_forward.1} parent=1 // pred_check_branch
      %18 = sbr.rel (0) target = $region13
    $region12: #{snet_mnist_forward.1} parent=1 // pred_region
      _
    $region13: #{snet_mnist_forward.1} parent=1 // pred_fallthru
      _
    // Predicated region
    $region14: #{snet_mnist_forward.1} parent=1 // pred_check
      _
    $region15: #{snet_mnist_forward.1} parent=1 // pred_check_branch
      %20 = sbr.rel (0) target = $region17
    $region16: #{snet_mnist_forward.1} parent=1 // pred_region
      _
    $region17: #{snet_mnist_forward.1} parent=1 // pred_fallthru
      _
    // Predicated region
    $region18: #{snet_mnist_forward.1} parent=1 // pred_check
      _
    $region19: #{snet_mnist_forward.1} parent=1 // pred_check_branch
      %22 = sbr.rel (0) target = $region21
    $region20: #{snet_mnist_forward.1} parent=1 // pred_region
      _
    $region21: #{snet_mnist_forward.1} parent=1 // pred_fallthru
      _
    // Predicated region
    $region22: #{snet_mnist_forward.1} parent=1 // pred_check
      _
    $region23: #{snet_mnist_forward.1} parent=1 // pred_check_branch
      %24 = sbr.rel (0) target = $region25
    $region24: #{snet_mnist_forward.1} parent=1 // pred_region
      _
    $region25: #{snet_mnist_forward.1} parent=1 // pred_fallthru
      _
    // Predicated region
    $region26: #{snet_mnist_forward.1} parent=1 // pred_check
      _
    $region27: #{snet_mnist_forward.1} parent=1 // pred_check_branch
      %26 = sbr.rel (0) target = $region29
    $region28: #{snet_mnist_forward.1} parent=1 // pred_region
      _
    $region29: #{snet_mnist_forward.1} parent=1 // pred_fallthru
      _
    %v28 = vld [vmem:[%s0] sm:$0x7f]
    %v29 = vld [vmem:[%s0 + $0x8] sm:$0x7f]
    %v30 = vld [vmem:[%s0 + $0x10] sm:$0x7f]
    %v31 = vld [vmem:[%s0 + $0x18] sm:$0x7f]
    %v32 = vld [vmem:[%s0 + $0x20] sm:$0x7f]
    %v33 = vld [vmem:[%s0 + $0x28] sm:$0x7f]
    %v34 = vld [vmem:[%s0 + $0x30] sm:$0x7f]
    %v35 = vld [vmem:[%s0 + $0x38] sm:$0x7f]
    %v36 = vld [vmem:[%s0 + $0x40] sm:$0x7f]
    %v37 = vld [vmem:[%s0 + $0x48] sm:$0x7f]
    %v38 = vld [vmem:[%s0 + $0x50] sm:$0x7f]
    %v39 = vld [vmem:[%s0 + $0x58] sm:$0x7f]
    %v40 = vld [vmem:[%s0 + $0x60] sm:$0x7f]
    %v41 = vld [vmem:[%s0 + $0x68] sm:$0x7f]
    %v42 = vld [vmem:[%s1] sm:$0xff]
    %v43 = vld [vmem:[%s1 + $0x8] sm:$0xff]
    %v44 = vld [vmem:[%s1 + $0x10] sm:$0xff]
    %v45 = vld [vmem:[%s1 + $0x18] sm:$0x1]
    %v46 = vld [vmem:[%s2] sm:$0x1]
    %48 = vset.pattern.permute.xlu0 0
    %49 = vperm.xlu0 %48, %v28
    %v50 = vpop.permute.xlu0 %49
    %53 = vset.pattern.permute.xlu0 0
    %54 = vperm.xlu0 %53, %v29
    %v55 = vpop.permute.xlu0 %54
    %58 = vset.pattern.permute.xlu0 0
    %59 = vperm.xlu0 %58, %v30
    %v60 = vpop.permute.xlu0 %59
    %63 = vset.pattern.permute.xlu0 0
    %64 = vperm.xlu0 %63, %v31
    %v65 = vpop.permute.xlu0 %64
    %68 = vset.pattern.permute.xlu0 0
    %69 = vperm.xlu0 %68, %v32
    %v70 = vpop.permute.xlu0 %69
    %73 = vset.pattern.permute.xlu0 0
    %74 = vperm.xlu0 %73, %v33
    %v75 = vpop.permute.xlu0 %74
    %78 = vset.pattern.permute.xlu0 0
    %79 = vperm.xlu0 %78, %v35
    %v80 = vpop.permute.xlu0 %79
    %83 = vset.pattern.permute.xlu0 0
    %84 = vperm.xlu0 %83, %v36
    %v85 = vpop.permute.xlu0 %84
    %88 = vset.pattern.permute.xlu0 0
    %89 = vperm.xlu0 %88, %v37
    %v90 = vpop.permute.xlu0 %89
    %93 = vset.pattern.permute.xlu0 0
    %94 = vperm.xlu0 %93, %v38
    %v95 = vpop.permute.xlu0 %94
    %98 = vset.pattern.permute.xlu0 0
    %99 = vperm.xlu0 %98, %v39
    %v100 = vpop.permute.xlu0 %99
    %103 = vset.pattern.permute.xlu0 0
    %104 = vperm.xlu0 %103, %v40
    %v105 = vpop.permute.xlu0 %104
    %v107 = vlaneseq
    %v108 = vshrl.u32 %v107, 7
    %v109 = vsub.s32 0, %v108
    %v110 = vrot.slane %v42, %v109
    %v111 = vmul.f32 %v50, %v110
    %v112 = vmul.f32 %v55, %v110
    %v113 = vmul.f32 %v60, %v110
    %v114 = vmul.f32 %v65, %v110
    %v115 = vmul.f32 %v70, %v110
    %v116 = vmul.f32 %v75, %v110
    %v117 = vmul.f32 %v80, %v110
    %v118 = vmul.f32 %v85, %v110
    %v119 = vmul.f32 %v90, %v110
    %v120 = vmul.f32 %v95, %v110
    %v121 = vmul.f32 %v100, %v110
    %v122 = vmul.f32 %v105, %v110
    %v123 = vadd.f32 %v111, 0.0
    %v124 = vadd.f32 %v112, 0.0
    %v125 = vadd.f32 %v113, 0.0
    %v126 = vadd.f32 %v114, 0.0
    %v127 = vadd.f32 %v115, 0.0
    %v128 = vadd.f32 %v116, 0.0
    %v129 = vadd.f32 %v117, 0.0
    %v130 = vadd.f32 %v118, 0.0
    %v131 = vadd.f32 %v119, 0.0
    %v132 = vadd.f32 %v120, 0.0
    %v133 = vadd.f32 %v121, 0.0
    %v134 = vadd.f32 %v122, 0.0
    %135 = vset.pattern.permute.xlu0 1
    %136 = vperm.xlu0 %135, %v28
    %v137 = vpop.permute.xlu0 %136
    %139 = vset.pattern.permute.xlu0 1
    %140 = vperm.xlu0 %139, %v29
    %v141 = vpop.permute.xlu0 %140
    %143 = vset.pattern.permute.xlu0 1
    %144 = vperm.xlu0 %143, %v30
    %v145 = vpop.permute.xlu0 %144
    %147 = vset.pattern.permute.xlu0 1
    %148 = vperm.xlu0 %147, %v31
    %v149 = vpop.permute.xlu0 %148
    %151 = vset.pattern.permute.xlu0 1
    %152 = vperm.xlu0 %151, %v32
    %v153 = vpop.permute.xlu0 %152
    %155 = vset.pattern.permute.xlu0 1
    %156 = vperm.xlu0 %155, %v33
    %v157 = vpop.permute.xlu0 %156
    %159 = vset.pattern.permute.xlu0 1
    %160 = vperm.xlu0 %159, %v35
    %v161 = vpop.permute.xlu0 %160
    %163 = vset.pattern.permute.xlu0 1
    %164 = vperm.xlu0 %163, %v36
    %v165 = vpop.permute.xlu0 %164
    %167 = vset.pattern.permute.xlu0 1
    %168 = vperm.xlu0 %167, %v37
    %v169 = vpop.permute.xlu0 %168
    %171 = vset.pattern.permute.xlu0 1
    %172 = vperm.xlu0 %171, %v38
    %v173 = vpop.permute.xlu0 %172
    %175 = vset.pattern.permute.xlu0 1
    %176 = vperm.xlu0 %175, %v39
    %v177 = vpop.permute.xlu0 %176
    %179 = vset.pattern.permute.xlu0 1
    %180 = vperm.xlu0 %179, %v40
    %v181 = vpop.permute.xlu0 %180
    %v183 = vlaneseq
    %v184 = vshrl.u32 %v183, 7
    %v185 = vsub.s32 1, %v184
    %v186 = vrot.slane %v42, %v185
    %v187 = vmul.f32 %v137, %v186
    %v188 = vmul.f32 %v141, %v186
    %v189 = vmul.f32 %v145, %v186
    %v190 = vmul.f32 %v149, %v186
    %v191 = vmul.f32 %v153, %v186
    %v192 = vmul.f32 %v157, %v186
    %v193 = vmul.f32 %v161, %v186
    %v194 = vmul.f32 %v165, %v186
    %v195 = vmul.f32 %v169, %v186
    %v196 = vmul.f32 %v173, %v186
    %v197 = vmul.f32 %v177, %v186
    %v198 = vmul.f32 %v181, %v186
    %v199 = vadd.f32 %v123, %v187
    %v200 = vadd.f32 %v124, %v188
    %v201 = vadd.f32 %v125, %v189
    %v202 = vadd.f32 %v126, %v190
    %v203 = vadd.f32 %v127, %v191
    %v204 = vadd.f32 %v128, %v192
    %v205 = vadd.f32 %v129, %v193
    %v206 = vadd.f32 %v130, %v194
    %v207 = vadd.f32 %v131, %v195
    %v208 = vadd.f32 %v132, %v196
    %v209 = vadd.f32 %v133, %v197
    %v210 = vadd.f32 %v134, %v198
    %211 = vset.pattern.permute.xlu0 2
    %212 = vperm.xlu0 %211, %v28
    %v213 = vpop.permute.xlu0 %212
    %215 = vset.pattern.permute.xlu0 2
    %216 = vperm.xlu0 %215, %v29
    %v217 = vpop.permute.xlu0 %216
    %219 = vset.pattern.permute.xlu0 2
    %220 = vperm.xlu0 %219, %v30
    %v221 = vpop.permute.xlu0 %220
    %223 = vset.pattern.permute.xlu0 2
    %224 = vperm.xlu0 %223, %v31
    %v225 = vpop.permute.xlu0 %224
    %227 = vset.pattern.permute.xlu0 2
    %228 = vperm.xlu0 %227, %v32
    %v229 = vpop.permute.xlu0 %228
    %231 = vset.pattern.permute.xlu0 2
    %232 = vperm.xlu0 %231, %v33
    %v233 = vpop.permute.xlu0 %232
    %235 = vset.pattern.permute.xlu0 2
    %236 = vperm.xlu0 %235, %v35
    %v237 = vpop.permute.xlu0 %236
    %239 = vset.pattern.permute.xlu0 2
    %240 = vperm.xlu0 %239, %v36
    %v241 = vpop.permute.xlu0 %240
    %243 = vset.pattern.permute.xlu0 2
    %244 = vperm.xlu0 %243, %v37
    %v245 = vpop.permute.xlu0 %244
    %247 = vset.pattern.permute.xlu0 2
    %248 = vperm.xlu0 %247, %v38
    %v249 = vpop.permute.xlu0 %248
    %251 = vset.pattern.permute.xlu0 2
    %252 = vperm.xlu0 %251, %v39
    %v253 = vpop.permute.xlu0 %252
    %255 = vset.pattern.permute.xlu0 2
    %256 = vperm.xlu0 %255, %v40
    %v257 = vpop.permute.xlu0 %256
    %v259 = vlaneseq
    %v260 = vshrl.u32 %v259, 7
    %v261 = vsub.s32 2, %v260
    %v262 = vrot.slane %v42, %v261
    %v263 = vmul.f32 %v213, %v262
    %v264 = vmul.f32 %v217, %v262
    %v265 = vmul.f32 %v221, %v262
    %v266 = vmul.f32 %v225, %v262
    %v267 = vmul.f32 %v229, %v262
    %v268 = vmul.f32 %v233, %v262
    %v269 = vmul.f32 %v237, %v262
    %v270 = vmul.f32 %v241, %v262
    %v271 = vmul.f32 %v245, %v262
    %v272 = vmul.f32 %v249, %v262
    %v273 = vmul.f32 %v253, %v262
    %v274 = vmul.f32 %v257, %v262
    %v275 = vadd.f32 %v199, %v263
    %v276 = vadd.f32 %v200, %v264
    %v277 = vadd.f32 %v201, %v265
    %v278 = vadd.f32 %v202, %v266
    %v279 = vadd.f32 %v203, %v267
    %v280 = vadd.f32 %v204, %v268
    %v281 = vadd.f32 %v205, %v269
    %v282 = vadd.f32 %v206, %v270
    %v283 = vadd.f32 %v207, %v271
    %v284 = vadd.f32 %v208, %v272
    %v285 = vadd.f32 %v209, %v273
    %v286 = vadd.f32 %v210, %v274
    %287 = vset.pattern.permute.xlu0 3
    %288 = vperm.xlu0 %287, %v28
    %v289 = vpop.permute.xlu0 %288
    %291 = vset.pattern.permute.xlu0 3
    %292 = vperm.xlu0 %291, %v29
    %v293 = vpop.permute.xlu0 %292
    %295 = vset.pattern.permute.xlu0 3
    %296 = vperm.xlu0 %295, %v30
    %v297 = vpop.permute.xlu0 %296
    %299 = vset.pattern.permute.xlu0 3
    %300 = vperm.xlu0 %299, %v31
    %v301 = vpop.permute.xlu0 %300
    %303 = vset.pattern.permute.xlu0 3
    %304 = vperm.xlu0 %303, %v32
    %v305 = vpop.permute.xlu0 %304
    %307 = vset.pattern.permute.xlu0 3
    %308 = vperm.xlu0 %307, %v33
    %v309 = vpop.permute.xlu0 %308
    %311 = vset.pattern.permute.xlu0 3
    %312 = vperm.xlu0 %311, %v35
    %v313 = vpop.permute.xlu0 %312
    %315 = vset.pattern.permute.xlu0 3
    %316 = vperm.xlu0 %315, %v36
    %v317 = vpop.permute.xlu0 %316
    %319 = vset.pattern.permute.xlu0 3
    %320 = vperm.xlu0 %319, %v37
    %v321 = vpop.permute.xlu0 %320
    %323 = vset.pattern.permute.xlu0 3
    %324 = vperm.xlu0 %323, %v38
    %v325 = vpop.permute.xlu0 %324
    %327 = vset.pattern.permute.xlu0 3
    %328 = vperm.xlu0 %327, %v39
    %v329 = vpop.permute.xlu0 %328
    %331 = vset.pattern.permute.xlu0 3
    %332 = vperm.xlu0 %331, %v40
    %v333 = vpop.permute.xlu0 %332
    %v335 = vlaneseq
    %v336 = vshrl.u32 %v335, 7
    %v337 = vsub.s32 3, %v336
    %v338 = vrot.slane %v42, %v337
    %v339 = vmul.f32 %v289, %v338
    %v340 = vmul.f32 %v293, %v338
    %v341 = vmul.f32 %v297, %v338
    %v342 = vmul.f32 %v301, %v338
    %v343 = vmul.f32 %v305, %v338
    %v344 = vmul.f32 %v309, %v338
    %v345 = vmul.f32 %v313, %v338
    %v346 = vmul.f32 %v317, %v338
    %v347 = vmul.f32 %v321, %v338
    %v348 = vmul.f32 %v325, %v338
    %v349 = vmul.f32 %v329, %v338
    %v350 = vmul.f32 %v333, %v338
    %v351 = vadd.f32 %v275, %v339
    %v352 = vadd.f32 %v276, %v340
    %v353 = vadd.f32 %v277, %v341
    %v354 = vadd.f32 %v278, %v342
    %v355 = vadd.f32 %v279, %v343
    %v356 = vadd.f32 %v280, %v344
    %v357 = vadd.f32 %v281, %v345
    %v358 = vadd.f32 %v282, %v346
    %v359 = vadd.f32 %v283, %v347
    %v360 = vadd.f32 %v284, %v348
    %v361 = vadd.f32 %v285, %v349
    %v362 = vadd.f32 %v286, %v350
    %v363 = vlaneseq
    %v364 = vshrl.u32 %v363, 7
    %v365 = vsub.s32 4, %v364
    %v366 = vrot.slane %v42, %v365
    %v367 = vmul.f32 %v50, %v366
    %v368 = vmul.f32 %v55, %v366
    %v369 = vmul.f32 %v60, %v366
    %v370 = vmul.f32 %v65, %v366
    %v371 = vmul.f32 %v70, %v366
    %v372 = vmul.f32 %v75, %v366
    %v373 = vmul.f32 %v80, %v366
    %v374 = vmul.f32 %v85, %v366
    %v375 = vmul.f32 %v90, %v366
    %v376 = vmul.f32 %v95, %v366
    %v377 = vmul.f32 %v100, %v366
    %v378 = vmul.f32 %v105, %v366
    %v391 = vrot.slane %v367, 1
    %v392 = vrot.slane %v368, 1
    %v393 = vrot.slane %v369, 1
    %v394 = vrot.slane %v370, 1
    %v395 = vrot.slane %v371, 1
    %v396 = vrot.slane %v372, 1
    %v397 = vrot.slane %v373, 1
    %v398 = vrot.slane %v374, 1
    %v399 = vrot.slane %v375, 1
    %v400 = vrot.slane %v376, 1
    %v401 = vrot.slane %v377, 1
    %v402 = vrot.slane %v378, 1
    %v415 = vadd.f32 %v351, %v391
    %v416 = vadd.f32 %v352, %v392
    %v417 = vadd.f32 %v353, %v393
    %v418 = vadd.f32 %v354, %v394
    %v419 = vadd.f32 %v355, %v395
    %v420 = vadd.f32 %v356, %v396
    %v421 = vadd.f32 %v357, %v397
    %v422 = vadd.f32 %v358, %v398
    %v423 = vadd.f32 %v359, %v399
    %v424 = vadd.f32 %v360, %v400
    %v425 = vadd.f32 %v361, %v401
    %v426 = vadd.f32 %v362, %v402
    %427 = vset.pattern.permute.xlu0 4
    %428 = vperm.xlu0 %427, %v28
    %v429 = vpop.permute.xlu0 %428
    %431 = vset.pattern.permute.xlu0 4
    %432 = vperm.xlu0 %431, %v29
    %v433 = vpop.permute.xlu0 %432
    %435 = vset.pattern.permute.xlu0 4
    %436 = vperm.xlu0 %435, %v30
    %v437 = vpop.permute.xlu0 %436
    %439 = vset.pattern.permute.xlu0 4
    %440 = vperm.xlu0 %439, %v31
    %v441 = vpop.permute.xlu0 %440
    %443 = vset.pattern.permute.xlu0 4
    %444 = vperm.xlu0 %443, %v32
    %v445 = vpop.permute.xlu0 %444
    %447 = vset.pattern.permute.xlu0 4
    %448 = vperm.xlu0 %447, %v33
    %v449 = vpop.permute.xlu0 %448
    %451 = vset.pattern.permute.xlu0 4
    %452 = vperm.xlu0 %451, %v35
    %v453 = vpop.permute.xlu0 %452
    %455 = vset.pattern.permute.xlu0 4
    %456 = vperm.xlu0 %455, %v36
    %v457 = vpop.permute.xlu0 %456
    %459 = vset.pattern.permute.xlu0 4
    %460 = vperm.xlu0 %459, %v37
    %v461 = vpop.permute.xlu0 %460
    %463 = vset.pattern.permute.xlu0 4
    %464 = vperm.xlu0 %463, %v38
    %v465 = vpop.permute.xlu0 %464
    %467 = vset.pattern.permute.xlu0 4
    %468 = vperm.xlu0 %467, %v39
    %v469 = vpop.permute.xlu0 %468
    %471 = vset.pattern.permute.xlu0 4
    %472 = vperm.xlu0 %471, %v40
    %v473 = vpop.permute.xlu0 %472
    %v475 = vlaneseq
    %v476 = vshrl.u32 %v475, 7
    %v477 = vsub.s32 5, %v476
    %v478 = vrot.slane %v42, %v477
    %v479 = vmul.f32 %v429, %v478
    %v480 = vmul.f32 %v433, %v478
    %v481 = vmul.f32 %v437, %v478
    %v482 = vmul.f32 %v441, %v478
    %v483 = vmul.f32 %v445, %v478
    %v484 = vmul.f32 %v449, %v478
    %v485 = vmul.f32 %v453, %v478
    %v486 = vmul.f32 %v457, %v478
    %v487 = vmul.f32 %v461, %v478
    %v488 = vmul.f32 %v465, %v478
    %v489 = vmul.f32 %v469, %v478
    %v490 = vmul.f32 %v473, %v478
    %v491 = vadd.f32 %v415, %v479
    %v492 = vadd.f32 %v416, %v480
    %v493 = vadd.f32 %v417, %v481
    %v494 = vadd.f32 %v418, %v482
    %v495 = vadd.f32 %v419, %v483
    %v496 = vadd.f32 %v420, %v484
    %v497 = vadd.f32 %v421, %v485
    %v498 = vadd.f32 %v422, %v486
    %v499 = vadd.f32 %v423, %v487
    %v500 = vadd.f32 %v424, %v488
    %v501 = vadd.f32 %v425, %v489
    %v502 = vadd.f32 %v426, %v490
    %503 = vset.pattern.permute.xlu0 5
    %504 = vperm.xlu0 %503, %v28
    %v505 = vpop.permute.xlu0 %504
    %507 = vset.pattern.permute.xlu0 5
    %508 = vperm.xlu0 %507, %v29
    %v509 = vpop.permute.xlu0 %508
    %511 = vset.pattern.permute.xlu0 5
    %512 = vperm.xlu0 %511, %v30
    %v513 = vpop.permute.xlu0 %512
    %515 = vset.pattern.permute.xlu0 5
    %516 = vperm.xlu0 %515, %v31
    %v517 = vpop.permute.xlu0 %516
    %519 = vset.pattern.permute.xlu0 5
    %520 = vperm.xlu0 %519, %v32
    %v521 = vpop.permute.xlu0 %520
    %523 = vset.pattern.permute.xlu0 5
    %524 = vperm.xlu0 %523, %v33
    %v525 = vpop.permute.xlu0 %524
    %527 = vset.pattern.permute.xlu0 5
    %528 = vperm.xlu0 %527, %v35
    %v529 = vpop.permute.xlu0 %528
    %531 = vset.pattern.permute.xlu0 5
    %532 = vperm.xlu0 %531, %v36
    %v533 = vpop.permute.xlu0 %532
    %535 = vset.pattern.permute.xlu0 5
    %536 = vperm.xlu0 %535, %v37
    %v537 = vpop.permute.xlu0 %536
    %539 = vset.pattern.permute.xlu0 5
    %540 = vperm.xlu0 %539, %v38
    %v541 = vpop.permute.xlu0 %540
    %543 = vset.pattern.permute.xlu0 5
    %544 = vperm.xlu0 %543, %v39
    %v545 = vpop.permute.xlu0 %544
    %547 = vset.pattern.permute.xlu0 5
    %548 = vperm.xlu0 %547, %v40
    %v549 = vpop.permute.xlu0 %548
    %v551 = vlaneseq
    %v552 = vshrl.u32 %v551, 7
    %v553 = vsub.s32 6, %v552
    %v554 = vrot.slane %v42, %v553
    %v555 = vmul.f32 %v505, %v554
    %v556 = vmul.f32 %v509, %v554
    %v557 = vmul.f32 %v513, %v554
    %v558 = vmul.f32 %v517, %v554
    %v559 = vmul.f32 %v521, %v554
    %v560 = vmul.f32 %v525, %v554
    %v561 = vmul.f32 %v529, %v554
    %v562 = vmul.f32 %v533, %v554
    %v563 = vmul.f32 %v537, %v554
    %v564 = vmul.f32 %v541, %v554
    %v565 = vmul.f32 %v545, %v554
    %v566 = vmul.f32 %v549, %v554
    %v567 = vadd.f32 %v491, %v555
    %v568 = vadd.f32 %v492, %v556
    %v569 = vadd.f32 %v493, %v557
    %v570 = vadd.f32 %v494, %v558
    %v571 = vadd.f32 %v495, %v559
    %v572 = vadd.f32 %v496, %v560
    %v573 = vadd.f32 %v497, %v561
    %v574 = vadd.f32 %v498, %v562
    %v575 = vadd.f32 %v499, %v563
    %v576 = vadd.f32 %v500, %v564
    %v577 = vadd.f32 %v501, %v565
    %v578 = vadd.f32 %v502, %v566
    %579 = vset.pattern.permute.xlu0 6
    %580 = vperm.xlu0 %579, %v28
    %v581 = vpop.permute.xlu0 %580
    %583 = vset.pattern.permute.xlu0 6
    %584 = vperm.xlu0 %583, %v29
    %v585 = vpop.permute.xlu0 %584
    %587 = vset.pattern.permute.xlu0 6
    %588 = vperm.xlu0 %587, %v30
    %v589 = vpop.permute.xlu0 %588
    %591 = vset.pattern.permute.xlu0 6
    %592 = vperm.xlu0 %591, %v31
    %v593 = vpop.permute.xlu0 %592
    %595 = vset.pattern.permute.xlu0 6
    %596 = vperm.xlu0 %595, %v32
    %v597 = vpop.permute.xlu0 %596
    %599 = vset.pattern.permute.xlu0 6
    %600 = vperm.xlu0 %599, %v33
    %v601 = vpop.permute.xlu0 %600
    %603 = vset.pattern.permute.xlu0 6
    %604 = vperm.xlu0 %603, %v35
    %v605 = vpop.permute.xlu0 %604
    %607 = vset.pattern.permute.xlu0 6
    %608 = vperm.xlu0 %607, %v36
    %v609 = vpop.permute.xlu0 %608
    %611 = vset.pattern.permute.xlu0 6
    %612 = vperm.xlu0 %611, %v37
    %v613 = vpop.permute.xlu0 %612
    %615 = vset.pattern.permute.xlu0 6
    %616 = vperm.xlu0 %615, %v38
    %v617 = vpop.permute.xlu0 %616
    %619 = vset.pattern.permute.xlu0 6
    %620 = vperm.xlu0 %619, %v39
    %v621 = vpop.permute.xlu0 %620
    %623 = vset.pattern.permute.xlu0 6
    %624 = vperm.xlu0 %623, %v40
    %v625 = vpop.permute.xlu0 %624
    %v627 = vlaneseq
    %v628 = vshrl.u32 %v627, 7
    %v629 = vsub.s32 7, %v628
    %v630 = vrot.slane %v42, %v629
    %v631 = vmul.f32 %v581, %v630
    %v632 = vmul.f32 %v585, %v630
    %v633 = vmul.f32 %v589, %v630
    %v634 = vmul.f32 %v593, %v630
    %v635 = vmul.f32 %v597, %v630
    %v636 = vmul.f32 %v601, %v630
    %v637 = vmul.f32 %v605, %v630
    %v638 = vmul.f32 %v609, %v630
    %v639 = vmul.f32 %v613, %v630
    %v640 = vmul.f32 %v617, %v630
    %v641 = vmul.f32 %v621, %v630
    %v642 = vmul.f32 %v625, %v630
    %v643 = vadd.f32 %v567, %v631
    %v644 = vadd.f32 %v568, %v632
    %v645 = vadd.f32 %v569, %v633
    %v646 = vadd.f32 %v570, %v634
    %v647 = vadd.f32 %v571, %v635
    %v648 = vadd.f32 %v572, %v636
    %v649 = vadd.f32 %v573, %v637
    %v650 = vadd.f32 %v574, %v638
    %v651 = vadd.f32 %v575, %v639
    %v652 = vadd.f32 %v576, %v640
    %v653 = vadd.f32 %v577, %v641
    %v654 = vadd.f32 %v578, %v642
    %655 = vset.pattern.permute.xlu0 7
    %656 = vperm.xlu0 %655, %v28
    %v657 = vpop.permute.xlu0 %656
    %659 = vset.pattern.permute.xlu0 7
    %660 = vperm.xlu0 %659, %v29
    %v661 = vpop.permute.xlu0 %660
    %663 = vset.pattern.permute.xlu0 7
    %664 = vperm.xlu0 %663, %v30
    %v665 = vpop.permute.xlu0 %664
    %667 = vset.pattern.permute.xlu0 7
    %668 = vperm.xlu0 %667, %v31
    %v669 = vpop.permute.xlu0 %668
    %671 = vset.pattern.permute.xlu0 7
    %672 = vperm.xlu0 %671, %v32
    %v673 = vpop.permute.xlu0 %672
    %675 = vset.pattern.permute.xlu0 7
    %676 = vperm.xlu0 %675, %v33
    %v677 = vpop.permute.xlu0 %676
    %679 = vset.pattern.permute.xlu0 7
    %680 = vperm.xlu0 %679, %v35
    %v681 = vpop.permute.xlu0 %680
    %683 = vset.pattern.permute.xlu0 7
    %684 = vperm.xlu0 %683, %v36
    %v685 = vpop.permute.xlu0 %684
    %687 = vset.pattern.permute.xlu0 7
    %688 = vperm.xlu0 %687, %v37
    %v689 = vpop.permute.xlu0 %688
    %691 = vset.pattern.permute.xlu0 7
    %692 = vperm.xlu0 %691, %v38
    %v693 = vpop.permute.xlu0 %692
    %695 = vset.pattern.permute.xlu0 7
    %696 = vperm.xlu0 %695, %v39
    %v697 = vpop.permute.xlu0 %696
    %699 = vset.pattern.permute.xlu0 7
    %700 = vperm.xlu0 %699, %v40
    %v701 = vpop.permute.xlu0 %700
    %v703 = vlaneseq
    %v704 = vshrl.u32 %v703, 7
    %v705 = vsub.s32 0, %v704
    %v706 = vrot.slane %v43, %v705
    %v707 = vmul.f32 %v657, %v706
    %v708 = vmul.f32 %v661, %v706
    %v709 = vmul.f32 %v665, %v706
    %v710 = vmul.f32 %v669, %v706
    %v711 = vmul.f32 %v673, %v706
    %v712 = vmul.f32 %v677, %v706
    %v713 = vmul.f32 %v681, %v706
    %v714 = vmul.f32 %v685, %v706
    %v715 = vmul.f32 %v689, %v706
    %v716 = vmul.f32 %v693, %v706
    %v717 = vmul.f32 %v697, %v706
    %v718 = vmul.f32 %v701, %v706
    %v719 = vadd.f32 %v643, %v707
    %v720 = vadd.f32 %v644, %v708
    %v721 = vadd.f32 %v645, %v709
    %v722 = vadd.f32 %v646, %v710
    %v723 = vadd.f32 %v647, %v711
    %v724 = vadd.f32 %v648, %v712
    %v725 = vadd.f32 %v649, %v713
    %v726 = vadd.f32 %v650, %v714
    %v727 = vadd.f32 %v651, %v715
    %v728 = vadd.f32 %v652, %v716
    %v729 = vadd.f32 %v653, %v717
    %v730 = vadd.f32 %v654, %v718
    %v731 = vlaneseq
    %v732 = vshrl.u32 %v731, 7
    %v733 = vsub.s32 1, %v732
    %v734 = vrot.slane %v43, %v733
    %v735 = vmul.f32 %v429, %v734
    %v736 = vmul.f32 %v433, %v734
    %v737 = vmul.f32 %v437, %v734
    %v738 = vmul.f32 %v441, %v734
    %v739 = vmul.f32 %v445, %v734
    %v740 = vmul.f32 %v449, %v734
    %v741 = vmul.f32 %v453, %v734
    %v742 = vmul.f32 %v457, %v734
    %v743 = vmul.f32 %v461, %v734
    %v744 = vmul.f32 %v465, %v734
    %v745 = vmul.f32 %v469, %v734
    %v746 = vmul.f32 %v473, %v734
    %v759 = vrot.slane %v735, 1
    %v760 = vrot.slane %v736, 1
    %v761 = vrot.slane %v737, 1
    %v762 = vrot.slane %v738, 1
    %v763 = vrot.slane %v739, 1
    %v764 = vrot.slane %v740, 1
    %v765 = vrot.slane %v741, 1
    %v766 = vrot.slane %v742, 1
    %v767 = vrot.slane %v743, 1
    %v768 = vrot.slane %v744, 1
    %v769 = vrot.slane %v745, 1
    %v770 = vrot.slane %v746, 1
    %v783 = vadd.f32 %v719, %v759
    %v784 = vadd.f32 %v720, %v760
    %v785 = vadd.f32 %v721, %v761
    %v786 = vadd.f32 %v722, %v762
    %v787 = vadd.f32 %v723, %v763
    %v788 = vadd.f32 %v724, %v764
    %v789 = vadd.f32 %v725, %v765
    %v790 = vadd.f32 %v726, %v766
    %v791 = vadd.f32 %v727, %v767
    %v792 = vadd.f32 %v728, %v768
    %v793 = vadd.f32 %v729, %v769
    %v794 = vadd.f32 %v730, %v770
    %795 = vset.pattern.permute.xlu0 8
    %796 = vperm.xlu0 %795, %v28
    %v797 = vpop.permute.xlu0 %796
    %799 = vset.pattern.permute.xlu0 8
    %800 = vperm.xlu0 %799, %v29
    %v801 = vpop.permute.xlu0 %800
    %803 = vset.pattern.permute.xlu0 8
    %804 = vperm.xlu0 %803, %v30
    %v805 = vpop.permute.xlu0 %804
    %807 = vset.pattern.permute.xlu0 8
    %808 = vperm.xlu0 %807, %v31
    %v809 = vpop.permute.xlu0 %808
    %811 = vset.pattern.permute.xlu0 8
    %812 = vperm.xlu0 %811, %v32
    %v813 = vpop.permute.xlu0 %812
    %815 = vset.pattern.permute.xlu0 8
    %816 = vperm.xlu0 %815, %v33
    %v817 = vpop.permute.xlu0 %816
    %819 = vset.pattern.permute.xlu0 8
    %820 = vperm.xlu0 %819, %v35
    %v821 = vpop.permute.xlu0 %820
    %823 = vset.pattern.permute.xlu0 8
    %824 = vperm.xlu0 %823, %v36
    %v825 = vpop.permute.xlu0 %824
    %827 = vset.pattern.permute.xlu0 8
    %828 = vperm.xlu0 %827, %v37
    %v829 = vpop.permute.xlu0 %828
    %831 = vset.pattern.permute.xlu0 8
    %832 = vperm.xlu0 %831, %v38
    %v833 = vpop.permute.xlu0 %832
    %835 = vset.pattern.permute.xlu0 8
    %836 = vperm.xlu0 %835, %v39
    %v837 = vpop.permute.xlu0 %836
    %839 = vset.pattern.permute.xlu0 8
    %840 = vperm.xlu0 %839, %v40
    %v841 = vpop.permute.xlu0 %840
    %v843 = vlaneseq
    %v844 = vshrl.u32 %v843, 7
    %v845 = vsub.s32 2, %v844
    %v846 = vrot.slane %v43, %v845
    %v847 = vmul.f32 %v797, %v846
    %v848 = vmul.f32 %v801, %v846
    %v849 = vmul.f32 %v805, %v846
    %v850 = vmul.f32 %v809, %v846
    %v851 = vmul.f32 %v813, %v846
    %v852 = vmul.f32 %v817, %v846
    %v853 = vmul.f32 %v821, %v846
    %v854 = vmul.f32 %v825, %v846
    %v855 = vmul.f32 %v829, %v846
    %v856 = vmul.f32 %v833, %v846
    %v857 = vmul.f32 %v837, %v846
    %v858 = vmul.f32 %v841, %v846
    %v859 = vadd.f32 %v783, %v847
    %v860 = vadd.f32 %v784, %v848
    %v861 = vadd.f32 %v785, %v849
    %v862 = vadd.f32 %v786, %v850
    %v863 = vadd.f32 %v787, %v851
    %v864 = vadd.f32 %v788, %v852
    %v865 = vadd.f32 %v789, %v853
    %v866 = vadd.f32 %v790, %v854
    %v867 = vadd.f32 %v791, %v855
    %v868 = vadd.f32 %v792, %v856
    %v869 = vadd.f32 %v793, %v857
    %v870 = vadd.f32 %v794, %v858
    %871 = vset.pattern.permute.xlu0 9
    %872 = vperm.xlu0 %871, %v28
    %v873 = vpop.permute.xlu0 %872
    %875 = vset.pattern.permute.xlu0 9
    %876 = vperm.xlu0 %875, %v29
    %v877 = vpop.permute.xlu0 %876
    %879 = vset.pattern.permute.xlu0 9
    %880 = vperm.xlu0 %879, %v30
    %v881 = vpop.permute.xlu0 %880
    %883 = vset.pattern.permute.xlu0 9
    %884 = vperm.xlu0 %883, %v31
    %v885 = vpop.permute.xlu0 %884
    %887 = vset.pattern.permute.xlu0 9
    %888 = vperm.xlu0 %887, %v32
    %v889 = vpop.permute.xlu0 %888
    %891 = vset.pattern.permute.xlu0 9
    %892 = vperm.xlu0 %891, %v33
    %v893 = vpop.permute.xlu0 %892
    %895 = vset.pattern.permute.xlu0 9
    %896 = vperm.xlu0 %895, %v35
    %v897 = vpop.permute.xlu0 %896
    %899 = vset.pattern.permute.xlu0 9
    %900 = vperm.xlu0 %899, %v36
    %v901 = vpop.permute.xlu0 %900
    %903 = vset.pattern.permute.xlu0 9
    %904 = vperm.xlu0 %903, %v37
    %v905 = vpop.permute.xlu0 %904
    %907 = vset.pattern.permute.xlu0 9
    %908 = vperm.xlu0 %907, %v38
    %v909 = vpop.permute.xlu0 %908
    %911 = vset.pattern.permute.xlu0 9
    %912 = vperm.xlu0 %911, %v39
    %v913 = vpop.permute.xlu0 %912
    %915 = vset.pattern.permute.xlu0 9
    %916 = vperm.xlu0 %915, %v40
    %v917 = vpop.permute.xlu0 %916
    %v919 = vlaneseq
    %v920 = vshrl.u32 %v919, 7
    %v921 = vsub.s32 3, %v920
    %v922 = vrot.slane %v43, %v921
    %v923 = vmul.f32 %v873, %v922
    %v924 = vmul.f32 %v877, %v922
    %v925 = vmul.f32 %v881, %v922
    %v926 = vmul.f32 %v885, %v922
    %v927 = vmul.f32 %v889, %v922
    %v928 = vmul.f32 %v893, %v922
    %v929 = vmul.f32 %v897, %v922
    %v930 = vmul.f32 %v901, %v922
    %v931 = vmul.f32 %v905, %v922
    %v932 = vmul.f32 %v909, %v922
    %v933 = vmul.f32 %v913, %v922
    %v934 = vmul.f32 %v917, %v922
    %v935 = vadd.f32 %v859, %v923
    %v936 = vadd.f32 %v860, %v924
    %v937 = vadd.f32 %v861, %v925
    %v938 = vadd.f32 %v862, %v926
    %v939 = vadd.f32 %v863, %v927
    %v940 = vadd.f32 %v864, %v928
    %v941 = vadd.f32 %v865, %v929
    %v942 = vadd.f32 %v866, %v930
    %v943 = vadd.f32 %v867, %v931
    %v944 = vadd.f32 %v868, %v932
    %v945 = vadd.f32 %v869, %v933
    %v946 = vadd.f32 %v870, %v934
    %947 = vset.pattern.permute.xlu0 10
    %948 = vperm.xlu0 %947, %v28
    %v949 = vpop.permute.xlu0 %948
    %951 = vset.pattern.permute.xlu0 10
    %952 = vperm.xlu0 %951, %v29
    %v953 = vpop.permute.xlu0 %952
    %955 = vset.pattern.permute.xlu0 10
    %956 = vperm.xlu0 %955, %v30
    %v957 = vpop.permute.xlu0 %956
    %959 = vset.pattern.permute.xlu0 10
    %960 = vperm.xlu0 %959, %v31
    %v961 = vpop.permute.xlu0 %960
    %963 = vset.pattern.permute.xlu0 10
    %964 = vperm.xlu0 %963, %v32
    %v965 = vpop.permute.xlu0 %964
    %967 = vset.pattern.permute.xlu0 10
    %968 = vperm.xlu0 %967, %v33
    %v969 = vpop.permute.xlu0 %968
    %971 = vset.pattern.permute.xlu0 10
    %972 = vperm.xlu0 %971, %v35
    %v973 = vpop.permute.xlu0 %972
    %975 = vset.pattern.permute.xlu0 10
    %976 = vperm.xlu0 %975, %v36
    %v977 = vpop.permute.xlu0 %976
    %979 = vset.pattern.permute.xlu0 10
    %980 = vperm.xlu0 %979, %v37
    %v981 = vpop.permute.xlu0 %980
    %983 = vset.pattern.permute.xlu0 10
    %984 = vperm.xlu0 %983, %v38
    %v985 = vpop.permute.xlu0 %984
    %987 = vset.pattern.permute.xlu0 10
    %988 = vperm.xlu0 %987, %v39
    %v989 = vpop.permute.xlu0 %988
    %991 = vset.pattern.permute.xlu0 10
    %992 = vperm.xlu0 %991, %v40
    %v993 = vpop.permute.xlu0 %992
    %v995 = vlaneseq
    %v996 = vshrl.u32 %v995, 7
    %v997 = vsub.s32 4, %v996
    %v998 = vrot.slane %v43, %v997
    %v999 = vmul.f32 %v949, %v998
    %v1000 = vmul.f32 %v953, %v998
    %v1001 = vmul.f32 %v957, %v998
    %v1002 = vmul.f32 %v961, %v998
    %v1003 = vmul.f32 %v965, %v998
    %v1004 = vmul.f32 %v969, %v998
    %v1005 = vmul.f32 %v973, %v998
    %v1006 = vmul.f32 %v977, %v998
    %v1007 = vmul.f32 %v981, %v998
    %v1008 = vmul.f32 %v985, %v998
    %v1009 = vmul.f32 %v989, %v998
    %v1010 = vmul.f32 %v993, %v998
    %v1011 = vadd.f32 %v935, %v999
    %v1012 = vadd.f32 %v936, %v1000
    %v1013 = vadd.f32 %v937, %v1001
    %v1014 = vadd.f32 %v938, %v1002
    %v1015 = vadd.f32 %v939, %v1003
    %v1016 = vadd.f32 %v940, %v1004
    %v1017 = vadd.f32 %v941, %v1005
    %v1018 = vadd.f32 %v942, %v1006
    %v1019 = vadd.f32 %v943, %v1007
    %v1020 = vadd.f32 %v944, %v1008
    %v1021 = vadd.f32 %v945, %v1009
    %v1022 = vadd.f32 %v946, %v1010
    %1023 = vset.pattern.permute.xlu0 11
    %1024 = vperm.xlu0 %1023, %v28
    %v1025 = vpop.permute.xlu0 %1024
    %1027 = vset.pattern.permute.xlu0 11
    %1028 = vperm.xlu0 %1027, %v29
    %v1029 = vpop.permute.xlu0 %1028
    %1031 = vset.pattern.permute.xlu0 11
    %1032 = vperm.xlu0 %1031, %v30
    %v1033 = vpop.permute.xlu0 %1032
    %1035 = vset.pattern.permute.xlu0 11
    %1036 = vperm.xlu0 %1035, %v31
    %v1037 = vpop.permute.xlu0 %1036
    %1039 = vset.pattern.permute.xlu0 11
    %1040 = vperm.xlu0 %1039, %v32
    %v1041 = vpop.permute.xlu0 %1040
    %1043 = vset.pattern.permute.xlu0 11
    %1044 = vperm.xlu0 %1043, %v33
    %v1045 = vpop.permute.xlu0 %1044
    %1047 = vset.pattern.permute.xlu0 11
    %1048 = vperm.xlu0 %1047, %v35
    %v1049 = vpop.permute.xlu0 %1048
    %1051 = vset.pattern.permute.xlu0 11
    %1052 = vperm.xlu0 %1051, %v36
    %v1053 = vpop.permute.xlu0 %1052
    %1055 = vset.pattern.permute.xlu0 11
    %1056 = vperm.xlu0 %1055, %v37
    %v1057 = vpop.permute.xlu0 %1056
    %1059 = vset.pattern.permute.xlu0 11
    %1060 = vperm.xlu0 %1059, %v38
    %v1061 = vpop.permute.xlu0 %1060
    %1063 = vset.pattern.permute.xlu0 11
    %1064 = vperm.xlu0 %1063, %v39
    %v1065 = vpop.permute.xlu0 %1064
    %1067 = vset.pattern.permute.xlu0 11
    %1068 = vperm.xlu0 %1067, %v40
    %v1069 = vpop.permute.xlu0 %1068
    %v1071 = vlaneseq
    %v1072 = vshrl.u32 %v1071, 7
    %v1073 = vsub.s32 5, %v1072
    %v1074 = vrot.slane %v43, %v1073
    %v1075 = vmul.f32 %v1025, %v1074
    %v1076 = vmul.f32 %v1029, %v1074
    %v1077 = vmul.f32 %v1033, %v1074
    %v1078 = vmul.f32 %v1037, %v1074
    %v1079 = vmul.f32 %v1041, %v1074
    %v1080 = vmul.f32 %v1045, %v1074
    %v1081 = vmul.f32 %v1049, %v1074
    %v1082 = vmul.f32 %v1053, %v1074
    %v1083 = vmul.f32 %v1057, %v1074
    %v1084 = vmul.f32 %v1061, %v1074
    %v1085 = vmul.f32 %v1065, %v1074
    %v1086 = vmul.f32 %v1069, %v1074
    %v1087 = vadd.f32 %v1011, %v1075
    %v1088 = vadd.f32 %v1012, %v1076
    %v1089 = vadd.f32 %v1013, %v1077
    %v1090 = vadd.f32 %v1014, %v1078
    %v1091 = vadd.f32 %v1015, %v1079
    %v1092 = vadd.f32 %v1016, %v1080
    %v1093 = vadd.f32 %v1017, %v1081
    %v1094 = vadd.f32 %v1018, %v1082
    %v1095 = vadd.f32 %v1019, %v1083
    %v1096 = vadd.f32 %v1020, %v1084
    %v1097 = vadd.f32 %v1021, %v1085
    %v1098 = vadd.f32 %v1022, %v1086
    %v1099 = vlaneseq
    %v1100 = vshrl.u32 %v1099, 7
    %v1101 = vsub.s32 6, %v1100
    %v1102 = vrot.slane %v43, %v1101
    %v1103 = vmul.f32 %v797, %v1102
    %v1104 = vmul.f32 %v801, %v1102
    %v1105 = vmul.f32 %v805, %v1102
    %v1106 = vmul.f32 %v809, %v1102
    %v1107 = vmul.f32 %v813, %v1102
    %v1108 = vmul.f32 %v817, %v1102
    %v1109 = vmul.f32 %v821, %v1102
    %v1110 = vmul.f32 %v825, %v1102
    %v1111 = vmul.f32 %v829, %v1102
    %v1112 = vmul.f32 %v833, %v1102
    %v1113 = vmul.f32 %v837, %v1102
    %v1114 = vmul.f32 %v841, %v1102
    %v1127 = vrot.slane %v1103, 1
    %v1128 = vrot.slane %v1104, 1
    %v1129 = vrot.slane %v1105, 1
    %v1130 = vrot.slane %v1106, 1
    %v1131 = vrot.slane %v1107, 1
    %v1132 = vrot.slane %v1108, 1
    %v1133 = vrot.slane %v1109, 1
    %v1134 = vrot.slane %v1110, 1
    %v1135 = vrot.slane %v1111, 1
    %v1136 = vrot.slane %v1112, 1
    %v1137 = vrot.slane %v1113, 1
    %v1138 = vrot.slane %v1114, 1
    %v1151 = vadd.f32 %v1087, %v1127
    %v1152 = vadd.f32 %v1088, %v1128
    %v1153 = vadd.f32 %v1089, %v1129
    %v1154 = vadd.f32 %v1090, %v1130
    %v1155 = vadd.f32 %v1091, %v1131
    %v1156 = vadd.f32 %v1092, %v1132
    %v1157 = vadd.f32 %v1093, %v1133
    %v1158 = vadd.f32 %v1094, %v1134
    %v1159 = vadd.f32 %v1095, %v1135
    %v1160 = vadd.f32 %v1096, %v1136
    %v1161 = vadd.f32 %v1097, %v1137
    %v1162 = vadd.f32 %v1098, %v1138
    %1163 = vset.pattern.permute.xlu0 12
    %1164 = vperm.xlu0 %1163, %v28
    %v1165 = vpop.permute.xlu0 %1164
    %1167 = vset.pattern.permute.xlu0 12
    %1168 = vperm.xlu0 %1167, %v29
    %v1169 = vpop.permute.xlu0 %1168
    %1171 = vset.pattern.permute.xlu0 12
    %1172 = vperm.xlu0 %1171, %v30
    %v1173 = vpop.permute.xlu0 %1172
    %1175 = vset.pattern.permute.xlu0 12
    %1176 = vperm.xlu0 %1175, %v31
    %v1177 = vpop.permute.xlu0 %1176
    %1179 = vset.pattern.permute.xlu0 12
    %1180 = vperm.xlu0 %1179, %v32
    %v1181 = vpop.permute.xlu0 %1180
    %1183 = vset.pattern.permute.xlu0 12
    %1184 = vperm.xlu0 %1183, %v33
    %v1185 = vpop.permute.xlu0 %1184
    %1187 = vset.pattern.permute.xlu0 12
    %1188 = vperm.xlu0 %1187, %v35
    %v1189 = vpop.permute.xlu0 %1188
    %1191 = vset.pattern.permute.xlu0 12
    %1192 = vperm.xlu0 %1191, %v36
    %v1193 = vpop.permute.xlu0 %1192
    %1195 = vset.pattern.permute.xlu0 12
    %1196 = vperm.xlu0 %1195, %v37
    %v1197 = vpop.permute.xlu0 %1196
    %1199 = vset.pattern.permute.xlu0 12
    %1200 = vperm.xlu0 %1199, %v38
    %v1201 = vpop.permute.xlu0 %1200
    %1203 = vset.pattern.permute.xlu0 12
    %1204 = vperm.xlu0 %1203, %v39
    %v1205 = vpop.permute.xlu0 %1204
    %1207 = vset.pattern.permute.xlu0 12
    %1208 = vperm.xlu0 %1207, %v40
    %v1209 = vpop.permute.xlu0 %1208
    %v1211 = vlaneseq
    %v1212 = vshrl.u32 %v1211, 7
    %v1213 = vsub.s32 7, %v1212
    %v1214 = vrot.slane %v43, %v1213
    %v1215 = vmul.f32 %v1165, %v1214
    %v1216 = vmul.f32 %v1169, %v1214
    %v1217 = vmul.f32 %v1173, %v1214
    %v1218 = vmul.f32 %v1177, %v1214
    %v1219 = vmul.f32 %v1181, %v1214
    %v1220 = vmul.f32 %v1185, %v1214
    %v1221 = vmul.f32 %v1189, %v1214
    %v1222 = vmul.f32 %v1193, %v1214
    %v1223 = vmul.f32 %v1197, %v1214
    %v1224 = vmul.f32 %v1201, %v1214
    %v1225 = vmul.f32 %v1205, %v1214
    %v1226 = vmul.f32 %v1209, %v1214
    %v1227 = vadd.f32 %v1151, %v1215
    %v1228 = vadd.f32 %v1152, %v1216
    %v1229 = vadd.f32 %v1153, %v1217
    %v1230 = vadd.f32 %v1154, %v1218
    %v1231 = vadd.f32 %v1155, %v1219
    %v1232 = vadd.f32 %v1156, %v1220
    %v1233 = vadd.f32 %v1157, %v1221
    %v1234 = vadd.f32 %v1158, %v1222
    %v1235 = vadd.f32 %v1159, %v1223
    %v1236 = vadd.f32 %v1160, %v1224
    %v1237 = vadd.f32 %v1161, %v1225
    %v1238 = vadd.f32 %v1162, %v1226
    %1239 = vset.pattern.permute.xlu0 13
    %1240 = vperm.xlu0 %1239, %v28
    %v1241 = vpop.permute.xlu0 %1240
    %1243 = vset.pattern.permute.xlu0 13
    %1244 = vperm.xlu0 %1243, %v29
    %v1245 = vpop.permute.xlu0 %1244
    %1247 = vset.pattern.permute.xlu0 13
    %1248 = vperm.xlu0 %1247, %v30
    %v1249 = vpop.permute.xlu0 %1248
    %1251 = vset.pattern.permute.xlu0 13
    %1252 = vperm.xlu0 %1251, %v31
    %v1253 = vpop.permute.xlu0 %1252
    %1255 = vset.pattern.permute.xlu0 13
    %1256 = vperm.xlu0 %1255, %v32
    %v1257 = vpop.permute.xlu0 %1256
    %1259 = vset.pattern.permute.xlu0 13
    %1260 = vperm.xlu0 %1259, %v33
    %v1261 = vpop.permute.xlu0 %1260
    %1263 = vset.pattern.permute.xlu0 13
    %1264 = vperm.xlu0 %1263, %v35
    %v1265 = vpop.permute.xlu0 %1264
    %1267 = vset.pattern.permute.xlu0 13
    %1268 = vperm.xlu0 %1267, %v36
    %v1269 = vpop.permute.xlu0 %1268
    %1271 = vset.pattern.permute.xlu0 13
    %1272 = vperm.xlu0 %1271, %v37
    %v1273 = vpop.permute.xlu0 %1272
    %1275 = vset.pattern.permute.xlu0 13
    %1276 = vperm.xlu0 %1275, %v38
    %v1277 = vpop.permute.xlu0 %1276
    %1279 = vset.pattern.permute.xlu0 13
    %1280 = vperm.xlu0 %1279, %v39
    %v1281 = vpop.permute.xlu0 %1280
    %1283 = vset.pattern.permute.xlu0 13
    %1284 = vperm.xlu0 %1283, %v40
    %v1285 = vpop.permute.xlu0 %1284
    %v1287 = vlaneseq
    %v1288 = vshrl.u32 %v1287, 7
    %v1289 = vsub.s32 0, %v1288
    %v1290 = vrot.slane %v44, %v1289
    %v1291 = vmul.f32 %v1241, %v1290
    %v1292 = vmul.f32 %v1245, %v1290
    %v1293 = vmul.f32 %v1249, %v1290
    %v1294 = vmul.f32 %v1253, %v1290
    %v1295 = vmul.f32 %v1257, %v1290
    %v1296 = vmul.f32 %v1261, %v1290
    %v1297 = vmul.f32 %v1265, %v1290
    %v1298 = vmul.f32 %v1269, %v1290
    %v1299 = vmul.f32 %v1273, %v1290
    %v1300 = vmul.f32 %v1277, %v1290
    %v1301 = vmul.f32 %v1281, %v1290
    %v1302 = vmul.f32 %v1285, %v1290
    %v1303 = vadd.f32 %v1227, %v1291
    %v1304 = vadd.f32 %v1228, %v1292
    %v1305 = vadd.f32 %v1229, %v1293
    %v1306 = vadd.f32 %v1230, %v1294
    %v1307 = vadd.f32 %v1231, %v1295
    %v1308 = vadd.f32 %v1232, %v1296
    %v1309 = vadd.f32 %v1233, %v1297
    %v1310 = vadd.f32 %v1234, %v1298
    %v1311 = vadd.f32 %v1235, %v1299
    %v1312 = vadd.f32 %v1236, %v1300
    %v1313 = vadd.f32 %v1237, %v1301
    %v1314 = vadd.f32 %v1238, %v1302
    %1315 = vset.pattern.permute.xlu0 14
    %1316 = vperm.xlu0 %1315, %v28
    %v1317 = vpop.permute.xlu0 %1316
    %1319 = vset.pattern.permute.xlu0 14
    %1320 = vperm.xlu0 %1319, %v29
    %v1321 = vpop.permute.xlu0 %1320
    %1323 = vset.pattern.permute.xlu0 14
    %1324 = vperm.xlu0 %1323, %v30
    %v1325 = vpop.permute.xlu0 %1324
    %1327 = vset.pattern.permute.xlu0 14
    %1328 = vperm.xlu0 %1327, %v31
    %v1329 = vpop.permute.xlu0 %1328
    %1331 = vset.pattern.permute.xlu0 14
    %1332 = vperm.xlu0 %1331, %v32
    %v1333 = vpop.permute.xlu0 %1332
    %1335 = vset.pattern.permute.xlu0 14
    %1336 = vperm.xlu0 %1335, %v33
    %v1337 = vpop.permute.xlu0 %1336
    %1339 = vset.pattern.permute.xlu0 14
    %1340 = vperm.xlu0 %1339, %v35
    %v1341 = vpop.permute.xlu0 %1340
    %1343 = vset.pattern.permute.xlu0 14
    %1344 = vperm.xlu0 %1343, %v36
    %v1345 = vpop.permute.xlu0 %1344
    %1347 = vset.pattern.permute.xlu0 14
    %1348 = vperm.xlu0 %1347, %v37
    %v1349 = vpop.permute.xlu0 %1348
    %1351 = vset.pattern.permute.xlu0 14
    %1352 = vperm.xlu0 %1351, %v38
    %v1353 = vpop.permute.xlu0 %1352
    %1355 = vset.pattern.permute.xlu0 14
    %1356 = vperm.xlu0 %1355, %v39
    %v1357 = vpop.permute.xlu0 %1356
    %1359 = vset.pattern.permute.xlu0 14
    %1360 = vperm.xlu0 %1359, %v40
    %v1361 = vpop.permute.xlu0 %1360
    %v1363 = vlaneseq
    %v1364 = vshrl.u32 %v1363, 7
    %v1365 = vsub.s32 1, %v1364
    %v1366 = vrot.slane %v44, %v1365
    %v1367 = vmul.f32 %v1317, %v1366
    %v1368 = vmul.f32 %v1321, %v1366
    %v1369 = vmul.f32 %v1325, %v1366
    %v1370 = vmul.f32 %v1329, %v1366
    %v1371 = vmul.f32 %v1333, %v1366
    %v1372 = vmul.f32 %v1337, %v1366
    %v1373 = vmul.f32 %v1341, %v1366
    %v1374 = vmul.f32 %v1345, %v1366
    %v1375 = vmul.f32 %v1349, %v1366
    %v1376 = vmul.f32 %v1353, %v1366
    %v1377 = vmul.f32 %v1357, %v1366
    %v1378 = vmul.f32 %v1361, %v1366
    %v1379 = vadd.f32 %v1303, %v1367
    %v1380 = vadd.f32 %v1304, %v1368
    %v1381 = vadd.f32 %v1305, %v1369
    %v1382 = vadd.f32 %v1306, %v1370
    %v1383 = vadd.f32 %v1307, %v1371
    %v1384 = vadd.f32 %v1308, %v1372
    %v1385 = vadd.f32 %v1309, %v1373
    %v1386 = vadd.f32 %v1310, %v1374
    %v1387 = vadd.f32 %v1311, %v1375
    %v1388 = vadd.f32 %v1312, %v1376
    %v1389 = vadd.f32 %v1313, %v1377
    %v1390 = vadd.f32 %v1314, %v1378
    %1391 = vset.pattern.permute.xlu0 15
    %1392 = vperm.xlu0 %1391, %v28
    %v1393 = vpop.permute.xlu0 %1392
    %1395 = vset.pattern.permute.xlu0 15
    %1396 = vperm.xlu0 %1395, %v29
    %v1397 = vpop.permute.xlu0 %1396
    %1399 = vset.pattern.permute.xlu0 15
    %1400 = vperm.xlu0 %1399, %v30
    %v1401 = vpop.permute.xlu0 %1400
    %1403 = vset.pattern.permute.xlu0 15
    %1404 = vperm.xlu0 %1403, %v31
    %v1405 = vpop.permute.xlu0 %1404
    %1407 = vset.pattern.permute.xlu0 15
    %1408 = vperm.xlu0 %1407, %v32
    %v1409 = vpop.permute.xlu0 %1408
    %1411 = vset.pattern.permute.xlu0 15
    %1412 = vperm.xlu0 %1411, %v33
    %v1413 = vpop.permute.xlu0 %1412
    %1415 = vset.pattern.permute.xlu0 15
    %1416 = vperm.xlu0 %1415, %v35
    %v1417 = vpop.permute.xlu0 %1416
    %1419 = vset.pattern.permute.xlu0 15
    %1420 = vperm.xlu0 %1419, %v36
    %v1421 = vpop.permute.xlu0 %1420
    %1423 = vset.pattern.permute.xlu0 15
    %1424 = vperm.xlu0 %1423, %v37
    %v1425 = vpop.permute.xlu0 %1424
    %1427 = vset.pattern.permute.xlu0 15
    %1428 = vperm.xlu0 %1427, %v38
    %v1429 = vpop.permute.xlu0 %1428
    %1431 = vset.pattern.permute.xlu0 15
    %1432 = vperm.xlu0 %1431, %v39
    %v1433 = vpop.permute.xlu0 %1432
    %1435 = vset.pattern.permute.xlu0 15
    %1436 = vperm.xlu0 %1435, %v40
    %v1437 = vpop.permute.xlu0 %1436
    %v1439 = vlaneseq
    %v1440 = vshrl.u32 %v1439, 7
    %v1441 = vsub.s32 2, %v1440
    %v1442 = vrot.slane %v44, %v1441
    %v1443 = vmul.f32 %v1393, %v1442
    %v1444 = vmul.f32 %v1397, %v1442
    %v1445 = vmul.f32 %v1401, %v1442
    %v1446 = vmul.f32 %v1405, %v1442
    %v1447 = vmul.f32 %v1409, %v1442
    %v1448 = vmul.f32 %v1413, %v1442
    %v1449 = vmul.f32 %v1417, %v1442
    %v1450 = vmul.f32 %v1421, %v1442
    %v1451 = vmul.f32 %v1425, %v1442
    %v1452 = vmul.f32 %v1429, %v1442
    %v1453 = vmul.f32 %v1433, %v1442
    %v1454 = vmul.f32 %v1437, %v1442
    %v1455 = vadd.f32 %v1379, %v1443
    %v1456 = vadd.f32 %v1380, %v1444
    %v1457 = vadd.f32 %v1381, %v1445
    %v1458 = vadd.f32 %v1382, %v1446
    %v1459 = vadd.f32 %v1383, %v1447
    %v1460 = vadd.f32 %v1384, %v1448
    %v1461 = vadd.f32 %v1385, %v1449
    %v1462 = vadd.f32 %v1386, %v1450
    %v1463 = vadd.f32 %v1387, %v1451
    %v1464 = vadd.f32 %v1388, %v1452
    %v1465 = vadd.f32 %v1389, %v1453
    %v1466 = vadd.f32 %v1390, %v1454
    %v1467 = vlaneseq
    %v1468 = vshrl.u32 %v1467, 7
    %v1469 = vsub.s32 3, %v1468
    %v1470 = vrot.slane %v44, %v1469
    %v1471 = vmul.f32 %v1165, %v1470
    %v1472 = vmul.f32 %v1169, %v1470
    %v1473 = vmul.f32 %v1173, %v1470
    %v1474 = vmul.f32 %v1177, %v1470
    %v1475 = vmul.f32 %v1181, %v1470
    %v1476 = vmul.f32 %v1185, %v1470
    %v1477 = vmul.f32 %v1189, %v1470
    %v1478 = vmul.f32 %v1193, %v1470
    %v1479 = vmul.f32 %v1197, %v1470
    %v1480 = vmul.f32 %v1201, %v1470
    %v1481 = vmul.f32 %v1205, %v1470
    %v1482 = vmul.f32 %v1209, %v1470
    %v1495 = vrot.slane %v1471, 1
    %v1496 = vrot.slane %v1472, 1
    %v1497 = vrot.slane %v1473, 1
    %v1498 = vrot.slane %v1474, 1
    %v1499 = vrot.slane %v1475, 1
    %v1500 = vrot.slane %v1476, 1
    %v1501 = vrot.slane %v1477, 1
    %v1502 = vrot.slane %v1478, 1
    %v1503 = vrot.slane %v1479, 1
    %v1504 = vrot.slane %v1480, 1
    %v1505 = vrot.slane %v1481, 1
    %v1506 = vrot.slane %v1482, 1
    %v1519 = vadd.f32 %v1455, %v1495
    %v1520 = vadd.f32 %v1456, %v1496
    %v1521 = vadd.f32 %v1457, %v1497
    %v1522 = vadd.f32 %v1458, %v1498
    %v1523 = vadd.f32 %v1459, %v1499
    %v1524 = vadd.f32 %v1460, %v1500
    %v1525 = vadd.f32 %v1461, %v1501
    %v1526 = vadd.f32 %v1462, %v1502
    %v1527 = vadd.f32 %v1463, %v1503
    %v1528 = vadd.f32 %v1464, %v1504
    %v1529 = vadd.f32 %v1465, %v1505
    %v1530 = vadd.f32 %v1466, %v1506
    %1532 = vset.pattern.permute.xlu0 0
    %1533 = vperm.xlu0 %1532, %v34
    %v1534 = vpop.permute.xlu0 %1533
    %1537 = vset.pattern.permute.xlu0 0
    %1538 = vperm.xlu0 %1537, %v41
    %v1539 = vpop.permute.xlu0 %1538
    %v1541 = vlaneseq
    %v1542 = vshrl.u32 %v1541, 7
    %v1543 = vsub.s32 4, %v1542
    %v1544 = vrot.slane %v44, %v1543
    %v1545 = vmul.f32 %v55, %v1544
    %v1546 = vmul.f32 %v60, %v1544
    %v1547 = vmul.f32 %v65, %v1544
    %v1548 = vmul.f32 %v70, %v1544
    %v1549 = vmul.f32 %v75, %v1544
    %v1550 = vmul.f32 %v1534, %v1544
    %v1551 = vmul.f32 %v85, %v1544
    %v1552 = vmul.f32 %v90, %v1544
    %v1553 = vmul.f32 %v95, %v1544
    %v1554 = vmul.f32 %v100, %v1544
    %v1555 = vmul.f32 %v105, %v1544
    %v1556 = vmul.f32 %v1539, %v1544
    %v1557 = vadd.f32 %v1519, %v1545
    %v1558 = vadd.f32 %v1520, %v1546
    %v1559 = vadd.f32 %v1521, %v1547
    %v1560 = vadd.f32 %v1522, %v1548
    %v1561 = vadd.f32 %v1523, %v1549
    %v1562 = vadd.f32 %v1524, %v1550
    %v1563 = vadd.f32 %v1525, %v1551
    %v1564 = vadd.f32 %v1526, %v1552
    %v1565 = vadd.f32 %v1527, %v1553
    %v1566 = vadd.f32 %v1528, %v1554
    %v1567 = vadd.f32 %v1529, %v1555
    %v1568 = vadd.f32 %v1530, %v1556
    %1569 = vset.pattern.permute.xlu0 1
    %1570 = vperm.xlu0 %1569, %v34
    %v1571 = vpop.permute.xlu0 %1570
    %1573 = vset.pattern.permute.xlu0 1
    %1574 = vperm.xlu0 %1573, %v41
    %v1575 = vpop.permute.xlu0 %1574
    %v1577 = vlaneseq
    %v1578 = vshrl.u32 %v1577, 7
    %v1579 = vsub.s32 5, %v1578
    %v1580 = vrot.slane %v44, %v1579
    %v1581 = vmul.f32 %v141, %v1580
    %v1582 = vmul.f32 %v145, %v1580
    %v1583 = vmul.f32 %v149, %v1580
    %v1584 = vmul.f32 %v153, %v1580
    %v1585 = vmul.f32 %v157, %v1580
    %v1586 = vmul.f32 %v1571, %v1580
    %v1587 = vmul.f32 %v165, %v1580
    %v1588 = vmul.f32 %v169, %v1580
    %v1589 = vmul.f32 %v173, %v1580
    %v1590 = vmul.f32 %v177, %v1580
    %v1591 = vmul.f32 %v181, %v1580
    %v1592 = vmul.f32 %v1575, %v1580
    %v1593 = vadd.f32 %v1557, %v1581
    %v1594 = vadd.f32 %v1558, %v1582
    %v1595 = vadd.f32 %v1559, %v1583
    %v1596 = vadd.f32 %v1560, %v1584
    %v1597 = vadd.f32 %v1561, %v1585
    %v1598 = vadd.f32 %v1562, %v1586
    %v1599 = vadd.f32 %v1563, %v1587
    %v1600 = vadd.f32 %v1564, %v1588
    %v1601 = vadd.f32 %v1565, %v1589
    %v1602 = vadd.f32 %v1566, %v1590
    %v1603 = vadd.f32 %v1567, %v1591
    %v1604 = vadd.f32 %v1568, %v1592
    %1605 = vset.pattern.permute.xlu0 2
    %1606 = vperm.xlu0 %1605, %v34
    %v1607 = vpop.permute.xlu0 %1606
    %1609 = vset.pattern.permute.xlu0 2
    %1610 = vperm.xlu0 %1609, %v41
    %v1611 = vpop.permute.xlu0 %1610
    %v1613 = vlaneseq
    %v1614 = vshrl.u32 %v1613, 7
    %v1615 = vsub.s32 6, %v1614
    %v1616 = vrot.slane %v44, %v1615
    %v1617 = vmul.f32 %v217, %v1616
    %v1618 = vmul.f32 %v221, %v1616
    %v1619 = vmul.f32 %v225, %v1616
    %v1620 = vmul.f32 %v229, %v1616
    %v1621 = vmul.f32 %v233, %v1616
    %v1622 = vmul.f32 %v1607, %v1616
    %v1623 = vmul.f32 %v241, %v1616
    %v1624 = vmul.f32 %v245, %v1616
    %v1625 = vmul.f32 %v249, %v1616
    %v1626 = vmul.f32 %v253, %v1616
    %v1627 = vmul.f32 %v257, %v1616
    %v1628 = vmul.f32 %v1611, %v1616
    %v1629 = vadd.f32 %v1593, %v1617
    %v1630 = vadd.f32 %v1594, %v1618
    %v1631 = vadd.f32 %v1595, %v1619
    %v1632 = vadd.f32 %v1596, %v1620
    %v1633 = vadd.f32 %v1597, %v1621
    %v1634 = vadd.f32 %v1598, %v1622
    %v1635 = vadd.f32 %v1599, %v1623
    %v1636 = vadd.f32 %v1600, %v1624
    %v1637 = vadd.f32 %v1601, %v1625
    %v1638 = vadd.f32 %v1602, %v1626
    %v1639 = vadd.f32 %v1603, %v1627
    %v1640 = vadd.f32 %v1604, %v1628
    %1641 = vset.pattern.permute.xlu0 3
    %1642 = vperm.xlu0 %1641, %v34
    %v1643 = vpop.permute.xlu0 %1642
    %1645 = vset.pattern.permute.xlu0 3
    %1646 = vperm.xlu0 %1645, %v41
    %v1647 = vpop.permute.xlu0 %1646
    %v1649 = vlaneseq
    %v1650 = vshrl.u32 %v1649, 7
    %v1651 = vsub.s32 7, %v1650
    %v1652 = vrot.slane %v44, %v1651
    %v1653 = vmul.f32 %v293, %v1652
    %v1654 = vmul.f32 %v297, %v1652
    %v1655 = vmul.f32 %v301, %v1652
    %v1656 = vmul.f32 %v305, %v1652
    %v1657 = vmul.f32 %v309, %v1652
    %v1658 = vmul.f32 %v1643, %v1652
    %v1659 = vmul.f32 %v317, %v1652
    %v1660 = vmul.f32 %v321, %v1652
    %v1661 = vmul.f32 %v325, %v1652
    %v1662 = vmul.f32 %v329, %v1652
    %v1663 = vmul.f32 %v333, %v1652
    %v1664 = vmul.f32 %v1647, %v1652
    %v1665 = vadd.f32 %v1629, %v1653
    %v1666 = vadd.f32 %v1630, %v1654
    %v1667 = vadd.f32 %v1631, %v1655
    %v1668 = vadd.f32 %v1632, %v1656
    %v1669 = vadd.f32 %v1633, %v1657
    %v1670 = vadd.f32 %v1634, %v1658
    %v1671 = vadd.f32 %v1635, %v1659
    %v1672 = vadd.f32 %v1636, %v1660
    %v1673 = vadd.f32 %v1637, %v1661
    %v1674 = vadd.f32 %v1638, %v1662
    %v1675 = vadd.f32 %v1639, %v1663
    %v1676 = vadd.f32 %v1640, %v1664
    %v1677 = vlaneseq
    %v1678 = vshrl.u32 %v1677, 7
    %v1679 = vsub.s32 0, %v1678
    %v1680 = vrot.slane %v45, %v1679
    %v1681 = vmul.f32 %v55, %v1680
    %v1682 = vmul.f32 %v60, %v1680
    %v1683 = vmul.f32 %v65, %v1680
    %v1684 = vmul.f32 %v70, %v1680
    %v1685 = vmul.f32 %v75, %v1680
    %v1686 = vmul.f32 %v1534, %v1680
    %v1687 = vmul.f32 %v85, %v1680
    %v1688 = vmul.f32 %v90, %v1680
    %v1689 = vmul.f32 %v95, %v1680
    %v1690 = vmul.f32 %v100, %v1680
    %v1691 = vmul.f32 %v105, %v1680
    %v1692 = vmul.f32 %v1539, %v1680
    %v1705 = vrot.slane %v1681, 1
    %v1706 = vrot.slane %v1682, 1
    %v1707 = vrot.slane %v1683, 1
    %v1708 = vrot.slane %v1684, 1
    %v1709 = vrot.slane %v1685, 1
    %v1710 = vrot.slane %v1686, 1
    %v1711 = vrot.slane %v1687, 1
    %v1712 = vrot.slane %v1688, 1
    %v1713 = vrot.slane %v1689, 1
    %v1714 = vrot.slane %v1690, 1
    %v1715 = vrot.slane %v1691, 1
    %v1716 = vrot.slane %v1692, 1
    %v1729 = vadd.f32 %v1665, %v1705
    %v1730 = vadd.f32 %v1666, %v1706
    %v1731 = vadd.f32 %v1667, %v1707
    %v1732 = vadd.f32 %v1668, %v1708
    %v1733 = vadd.f32 %v1669, %v1709
    %v1734 = vadd.f32 %v1670, %v1710
    %v1735 = vadd.f32 %v1671, %v1711
    %v1736 = vadd.f32 %v1672, %v1712
    %v1737 = vadd.f32 %v1673, %v1713
    %v1738 = vadd.f32 %v1674, %v1714
    %v1739 = vadd.f32 %v1675, %v1715
    %v1740 = vadd.f32 %v1676, %v1716
    %v1742 = vlaneseq
    %v1743 = vshrl.u32 %v1742, 7
    %v1744 = vsub.s32 0, %v1743
    %v1745 = vrot.slane %v46, %v1744
    %v1747 = vadd.f32 %v1729, %v1745
    %v1748 = vadd.f32 %v1730, %v1745
    %v1749 = vadd.f32 %v1731, %v1745
    %v1750 = vadd.f32 %v1732, %v1745
    %v1751 = vadd.f32 %v1733, %v1745
    %v1752 = vadd.f32 %v1734, %v1745
    %v1753 = vadd.f32 %v1735, %v1745
    %v1754 = vadd.f32 %v1736, %v1745
    %v1755 = vadd.f32 %v1737, %v1745
    %v1756 = vadd.f32 %v1738, %v1745
    %v1757 = vadd.f32 %v1739, %v1745
    %v1758 = vadd.f32 %v1740, %v1745
    %v1759 = vmax.f32 %v1747, 0.0
    %v1760 = vmax.f32 %v1748, 0.0
    %v1761 = vmax.f32 %v1749, 0.0
    %v1762 = vmax.f32 %v1750, 0.0
    %v1763 = vmax.f32 %v1751, 0.0
    %v1764 = vmax.f32 %v1752, 0.0
    %v1765 = vmax.f32 %v1753, 0.0
    %v1766 = vmax.f32 %v1754, 0.0
    %v1767 = vmax.f32 %v1755, 0.0
    %v1768 = vmax.f32 %v1756, 0.0
    %v1769 = vmax.f32 %v1757, 0.0
    %v1770 = vmax.f32 %v1758, 0.0
    %v1771 = vmul.f32 %v213, %v110
    %v1772 = vmul.f32 %v217, %v110
    %v1773 = vmul.f32 %v221, %v110
    %v1774 = vmul.f32 %v225, %v110
    %v1775 = vmul.f32 %v229, %v110
    %v1776 = vmul.f32 %v233, %v110
    %v1777 = vmul.f32 %v237, %v110
    %v1778 = vmul.f32 %v241, %v110
    %v1779 = vmul.f32 %v245, %v110
    %v1780 = vmul.f32 %v249, %v110
    %v1781 = vmul.f32 %v253, %v110
    %v1782 = vmul.f32 %v257, %v110
    %v1783 = vadd.f32 %v1771, 0.0
    %v1784 = vadd.f32 %v1772, 0.0
    %v1785 = vadd.f32 %v1773, 0.0
    %v1786 = vadd.f32 %v1774, 0.0
    %v1787 = vadd.f32 %v1775, 0.0
    %v1788 = vadd.f32 %v1776, 0.0
    %v1789 = vadd.f32 %v1777, 0.0
    %v1790 = vadd.f32 %v1778, 0.0
    %v1791 = vadd.f32 %v1779, 0.0
    %v1792 = vadd.f32 %v1780, 0.0
    %v1793 = vadd.f32 %v1781, 0.0
    %v1794 = vadd.f32 %v1782, 0.0
    %v1795 = vmul.f32 %v289, %v186
    %v1796 = vmul.f32 %v293, %v186
    %v1797 = vmul.f32 %v297, %v186
    %v1798 = vmul.f32 %v301, %v186
    %v1799 = vmul.f32 %v305, %v186
    %v1800 = vmul.f32 %v309, %v186
    %v1801 = vmul.f32 %v313, %v186
    %v1802 = vmul.f32 %v317, %v186
    %v1803 = vmul.f32 %v321, %v186
    %v1804 = vmul.f32 %v325, %v186
    %v1805 = vmul.f32 %v329, %v186
    %v1806 = vmul.f32 %v333, %v186
    %v1807 = vadd.f32 %v1783, %v1795
    %v1808 = vadd.f32 %v1784, %v1796
    %v1809 = vadd.f32 %v1785, %v1797
    %v1810 = vadd.f32 %v1786, %v1798
    %v1811 = vadd.f32 %v1787, %v1799
    %v1812 = vadd.f32 %v1788, %v1800
    %v1813 = vadd.f32 %v1789, %v1801
    %v1814 = vadd.f32 %v1790, %v1802
    %v1815 = vadd.f32 %v1791, %v1803
    %v1816 = vadd.f32 %v1792, %v1804
    %v1817 = vadd.f32 %v1793, %v1805
    %v1818 = vadd.f32 %v1794, %v1806
    %v1819 = vmul.f32 %v50, %v262
    %v1820 = vmul.f32 %v55, %v262
    %v1821 = vmul.f32 %v60, %v262
    %v1822 = vmul.f32 %v65, %v262
    %v1823 = vmul.f32 %v70, %v262
    %v1824 = vmul.f32 %v75, %v262
    %v1825 = vmul.f32 %v80, %v262
    %v1826 = vmul.f32 %v85, %v262
    %v1827 = vmul.f32 %v90, %v262
    %v1828 = vmul.f32 %v95, %v262
    %v1829 = vmul.f32 %v100, %v262
    %v1830 = vmul.f32 %v105, %v262
    %v1843 = vrot.slane %v1819, 1
    %v1844 = vrot.slane %v1820, 1
    %v1845 = vrot.slane %v1821, 1
    %v1846 = vrot.slane %v1822, 1
    %v1847 = vrot.slane %v1823, 1
    %v1848 = vrot.slane %v1824, 1
    %v1849 = vrot.slane %v1825, 1
    %v1850 = vrot.slane %v1826, 1
    %v1851 = vrot.slane %v1827, 1
    %v1852 = vrot.slane %v1828, 1
    %v1853 = vrot.slane %v1829, 1
    %v1854 = vrot.slane %v1830, 1
    %v1867 = vadd.f32 %v1807, %v1843
    %v1868 = vadd.f32 %v1808, %v1844
    %v1869 = vadd.f32 %v1809, %v1845
    %v1870 = vadd.f32 %v1810, %v1846
    %v1871 = vadd.f32 %v1811, %v1847
    %v1872 = vadd.f32 %v1812, %v1848
    %v1873 = vadd.f32 %v1813, %v1849
    %v1874 = vadd.f32 %v1814, %v1850
    %v1875 = vadd.f32 %v1815, %v1851
    %v1876 = vadd.f32 %v1816, %v1852
    %v1877 = vadd.f32 %v1817, %v1853
    %v1878 = vadd.f32 %v1818, %v1854
    %v1879 = vmul.f32 %v137, %v338
    %v1880 = vmul.f32 %v141, %v338
    %v1881 = vmul.f32 %v145, %v338
    %v1882 = vmul.f32 %v149, %v338
    %v1883 = vmul.f32 %v153, %v338
    %v1884 = vmul.f32 %v157, %v338
    %v1885 = vmul.f32 %v161, %v338
    %v1886 = vmul.f32 %v165, %v338
    %v1887 = vmul.f32 %v169, %v338
    %v1888 = vmul.f32 %v173, %v338
    %v1889 = vmul.f32 %v177, %v338
    %v1890 = vmul.f32 %v181, %v338
    %v1903 = vrot.slane %v1879, 1
    %v1904 = vrot.slane %v1880, 1
    %v1905 = vrot.slane %v1881, 1
    %v1906 = vrot.slane %v1882, 1
    %v1907 = vrot.slane %v1883, 1
    %v1908 = vrot.slane %v1884, 1
    %v1909 = vrot.slane %v1885, 1
    %v1910 = vrot.slane %v1886, 1
    %v1911 = vrot.slane %v1887, 1
    %v1912 = vrot.slane %v1888, 1
    %v1913 = vrot.slane %v1889, 1
    %v1914 = vrot.slane %v1890, 1
    %v1927 = vadd.f32 %v1867, %v1903
    %v1928 = vadd.f32 %v1868, %v1904
    %v1929 = vadd.f32 %v1869, %v1905
    %v1930 = vadd.f32 %v1870, %v1906
    %v1931 = vadd.f32 %v1871, %v1907
    %v1932 = vadd.f32 %v1872, %v1908
    %v1933 = vadd.f32 %v1873, %v1909
    %v1934 = vadd.f32 %v1874, %v1910
    %v1935 = vadd.f32 %v1875, %v1911
    %v1936 = vadd.f32 %v1876, %v1912
    %v1937 = vadd.f32 %v1877, %v1913
    %v1938 = vadd.f32 %v1878, %v1914
    %v1939 = vmul.f32 %v213, %v366
    %v1940 = vmul.f32 %v217, %v366
    %v1941 = vmul.f32 %v221, %v366
    %v1942 = vmul.f32 %v225, %v366
    %v1943 = vmul.f32 %v229, %v366
    %v1944 = vmul.f32 %v233, %v366
    %v1945 = vmul.f32 %v237, %v366
    %v1946 = vmul.f32 %v241, %v366
    %v1947 = vmul.f32 %v245, %v366
    %v1948 = vmul.f32 %v249, %v366
    %v1949 = vmul.f32 %v253, %v366
    %v1950 = vmul.f32 %v257, %v366
    %v1963 = vrot.slane %v1939, 1
    %v1964 = vrot.slane %v1940, 1
    %v1965 = vrot.slane %v1941, 1
    %v1966 = vrot.slane %v1942, 1
    %v1967 = vrot.slane %v1943, 1
    %v1968 = vrot.slane %v1944, 1
    %v1969 = vrot.slane %v1945, 1
    %v1970 = vrot.slane %v1946, 1
    %v1971 = vrot.slane %v1947, 1
    %v1972 = vrot.slane %v1948, 1
    %v1973 = vrot.slane %v1949, 1
    %v1974 = vrot.slane %v1950, 1
    %v1987 = vadd.f32 %v1927, %v1963
    %v1988 = vadd.f32 %v1928, %v1964
    %v1989 = vadd.f32 %v1929, %v1965
    %v1990 = vadd.f32 %v1930, %v1966
    %v1991 = vadd.f32 %v1931, %v1967
    %v1992 = vadd.f32 %v1932, %v1968
    %v1993 = vadd.f32 %v1933, %v1969
    %v1994 = vadd.f32 %v1934, %v1970
    %v1995 = vadd.f32 %v1935, %v1971
    %v1996 = vadd.f32 %v1936, %v1972
    %v1997 = vadd.f32 %v1937, %v1973
    %v1998 = vadd.f32 %v1938, %v1974
    %v1999 = vmul.f32 %v581, %v478
    %v2000 = vmul.f32 %v585, %v478
    %v2001 = vmul.f32 %v589, %v478
    %v2002 = vmul.f32 %v593, %v478
    %v2003 = vmul.f32 %v597, %v478
    %v2004 = vmul.f32 %v601, %v478
    %v2005 = vmul.f32 %v605, %v478
    %v2006 = vmul.f32 %v609, %v478
    %v2007 = vmul.f32 %v613, %v478
    %v2008 = vmul.f32 %v617, %v478
    %v2009 = vmul.f32 %v621, %v478
    %v2010 = vmul.f32 %v625, %v478
    %v2011 = vadd.f32 %v1987, %v1999
    %v2012 = vadd.f32 %v1988, %v2000
    %v2013 = vadd.f32 %v1989, %v2001
    %v2014 = vadd.f32 %v1990, %v2002
    %v2015 = vadd.f32 %v1991, %v2003
    %v2016 = vadd.f32 %v1992, %v2004
    %v2017 = vadd.f32 %v1993, %v2005
    %v2018 = vadd.f32 %v1994, %v2006
    %v2019 = vadd.f32 %v1995, %v2007
    %v2020 = vadd.f32 %v1996, %v2008
    %v2021 = vadd.f32 %v1997, %v2009
    %v2022 = vadd.f32 %v1998, %v2010
    %v2023 = vmul.f32 %v657, %v554
    %v2024 = vmul.f32 %v661, %v554
    %v2025 = vmul.f32 %v665, %v554
    %v2026 = vmul.f32 %v669, %v554
    %v2027 = vmul.f32 %v673, %v554
    %v2028 = vmul.f32 %v677, %v554
    %v2029 = vmul.f32 %v681, %v554
    %v2030 = vmul.f32 %v685, %v554
    %v2031 = vmul.f32 %v689, %v554
    %v2032 = vmul.f32 %v693, %v554
    %v2033 = vmul.f32 %v697, %v554
    %v2034 = vmul.f32 %v701, %v554
    %v2035 = vadd.f32 %v2011, %v2023
    %v2036 = vadd.f32 %v2012, %v2024
    %v2037 = vadd.f32 %v2013, %v2025
    %v2038 = vadd.f32 %v2014, %v2026
    %v2039 = vadd.f32 %v2015, %v2027
    %v2040 = vadd.f32 %v2016, %v2028
    %v2041 = vadd.f32 %v2017, %v2029
    %v2042 = vadd.f32 %v2018, %v2030
    %v2043 = vadd.f32 %v2019, %v2031
    %v2044 = vadd.f32 %v2020, %v2032
    %v2045 = vadd.f32 %v2021, %v2033
    %v2046 = vadd.f32 %v2022, %v2034
    %v2047 = vmul.f32 %v429, %v630
    %v2048 = vmul.f32 %v433, %v630
    %v2049 = vmul.f32 %v437, %v630
    %v2050 = vmul.f32 %v441, %v630
    %v2051 = vmul.f32 %v445, %v630
    %v2052 = vmul.f32 %v449, %v630
    %v2053 = vmul.f32 %v453, %v630
    %v2054 = vmul.f32 %v457, %v630
    %v2055 = vmul.f32 %v461, %v630
    %v2056 = vmul.f32 %v465, %v630
    %v2057 = vmul.f32 %v469, %v630
    %v2058 = vmul.f32 %v473, %v630
    %v2071 = vrot.slane %v2047, 1
    %v2072 = vrot.slane %v2048, 1
    %v2073 = vrot.slane %v2049, 1
    %v2074 = vrot.slane %v2050, 1
    %v2075 = vrot.slane %v2051, 1
    %v2076 = vrot.slane %v2052, 1
    %v2077 = vrot.slane %v2053, 1
    %v2078 = vrot.slane %v2054, 1
    %v2079 = vrot.slane %v2055, 1
    %v2080 = vrot.slane %v2056, 1
    %v2081 = vrot.slane %v2057, 1
    %v2082 = vrot.slane %v2058, 1
    %v2095 = vadd.f32 %v2035, %v2071
    %v2096 = vadd.f32 %v2036, %v2072
    %v2097 = vadd.f32 %v2037, %v2073
    %v2098 = vadd.f32 %v2038, %v2074
    %v2099 = vadd.f32 %v2039, %v2075
    %v2100 = vadd.f32 %v2040, %v2076
    %v2101 = vadd.f32 %v2041, %v2077
    %v2102 = vadd.f32 %v2042, %v2078
    %v2103 = vadd.f32 %v2043, %v2079
    %v2104 = vadd.f32 %v2044, %v2080
    %v2105 = vadd.f32 %v2045, %v2081
    %v2106 = vadd.f32 %v2046, %v2082
    %v2107 = vmul.f32 %v505, %v706
    %v2108 = vmul.f32 %v509, %v706
    %v2109 = vmul.f32 %v513, %v706
    %v2110 = vmul.f32 %v517, %v706
    %v2111 = vmul.f32 %v521, %v706
    %v2112 = vmul.f32 %v525, %v706
    %v2113 = vmul.f32 %v529, %v706
    %v2114 = vmul.f32 %v533, %v706
    %v2115 = vmul.f32 %v537, %v706
    %v2116 = vmul.f32 %v541, %v706
    %v2117 = vmul.f32 %v545, %v706
    %v2118 = vmul.f32 %v549, %v706
    %v2131 = vrot.slane %v2107, 1
    %v2132 = vrot.slane %v2108, 1
    %v2133 = vrot.slane %v2109, 1
    %v2134 = vrot.slane %v2110, 1
    %v2135 = vrot.slane %v2111, 1
    %v2136 = vrot.slane %v2112, 1
    %v2137 = vrot.slane %v2113, 1
    %v2138 = vrot.slane %v2114, 1
    %v2139 = vrot.slane %v2115, 1
    %v2140 = vrot.slane %v2116, 1
    %v2141 = vrot.slane %v2117, 1
    %v2142 = vrot.slane %v2118, 1
    %v2155 = vadd.f32 %v2095, %v2131
    %v2156 = vadd.f32 %v2096, %v2132
    %v2157 = vadd.f32 %v2097, %v2133
    %v2158 = vadd.f32 %v2098, %v2134
    %v2159 = vadd.f32 %v2099, %v2135
    %v2160 = vadd.f32 %v2100, %v2136
    %v2161 = vadd.f32 %v2101, %v2137
    %v2162 = vadd.f32 %v2102, %v2138
    %v2163 = vadd.f32 %v2103, %v2139
    %v2164 = vadd.f32 %v2104, %v2140
    %v2165 = vadd.f32 %v2105, %v2141
    %v2166 = vadd.f32 %v2106, %v2142
    %v2167 = vmul.f32 %v581, %v734
    %v2168 = vmul.f32 %v585, %v734
    %v2169 = vmul.f32 %v589, %v734
    %v2170 = vmul.f32 %v593, %v734
    %v2171 = vmul.f32 %v597, %v734
    %v2172 = vmul.f32 %v601, %v734
    %v2173 = vmul.f32 %v605, %v734
    %v2174 = vmul.f32 %v609, %v734
    %v2175 = vmul.f32 %v613, %v734
    %v2176 = vmul.f32 %v617, %v734
    %v2177 = vmul.f32 %v621, %v734
    %v2178 = vmul.f32 %v625, %v734
    %v2191 = vrot.slane %v2167, 1
    %v2192 = vrot.slane %v2168, 1
    %v2193 = vrot.slane %v2169, 1
    %v2194 = vrot.slane %v2170, 1
    %v2195 = vrot.slane %v2171, 1
    %v2196 = vrot.slane %v2172, 1
    %v2197 = vrot.slane %v2173, 1
    %v2198 = vrot.slane %v2174, 1
    %v2199 = vrot.slane %v2175, 1
    %v2200 = vrot.slane %v2176, 1
    %v2201 = vrot.slane %v2177, 1
    %v2202 = vrot.slane %v2178, 1
    %v2215 = vadd.f32 %v2155, %v2191
    %v2216 = vadd.f32 %v2156, %v2192
    %v2217 = vadd.f32 %v2157, %v2193
    %v2218 = vadd.f32 %v2158, %v2194
    %v2219 = vadd.f32 %v2159, %v2195
    %v2220 = vadd.f32 %v2160, %v2196
    %v2221 = vadd.f32 %v2161, %v2197
    %v2222 = vadd.f32 %v2162, %v2198
    %v2223 = vadd.f32 %v2163, %v2199
    %v2224 = vadd.f32 %v2164, %v2200
    %v2225 = vadd.f32 %v2165, %v2201
    %v2226 = vadd.f32 %v2166, %v2202
    %v2227 = vmul.f32 %v949, %v846
    %v2228 = vmul.f32 %v953, %v846
    %v2229 = vmul.f32 %v957, %v846
    %v2230 = vmul.f32 %v961, %v846
    %v2231 = vmul.f32 %v965, %v846
    %v2232 = vmul.f32 %v969, %v846
    %v2233 = vmul.f32 %v973, %v846
    %v2234 = vmul.f32 %v977, %v846
    %v2235 = vmul.f32 %v981, %v846
    %v2236 = vmul.f32 %v985, %v846
    %v2237 = vmul.f32 %v989, %v846
    %v2238 = vmul.f32 %v993, %v846
    %v2239 = vadd.f32 %v2215, %v2227
    %v2240 = vadd.f32 %v2216, %v2228
    %v2241 = vadd.f32 %v2217, %v2229
    %v2242 = vadd.f32 %v2218, %v2230
    %v2243 = vadd.f32 %v2219, %v2231
    %v2244 = vadd.f32 %v2220, %v2232
    %v2245 = vadd.f32 %v2221, %v2233
    %v2246 = vadd.f32 %v2222, %v2234
    %v2247 = vadd.f32 %v2223, %v2235
    %v2248 = vadd.f32 %v2224, %v2236
    %v2249 = vadd.f32 %v2225, %v2237
    %v2250 = vadd.f32 %v2226, %v2238
    %v2251 = vmul.f32 %v1025, %v922
    %v2252 = vmul.f32 %v1029, %v922
    %v2253 = vmul.f32 %v1033, %v922
    %v2254 = vmul.f32 %v1037, %v922
    %v2255 = vmul.f32 %v1041, %v922
    %v2256 = vmul.f32 %v1045, %v922
    %v2257 = vmul.f32 %v1049, %v922
    %v2258 = vmul.f32 %v1053, %v922
    %v2259 = vmul.f32 %v1057, %v922
    %v2260 = vmul.f32 %v1061, %v922
    %v2261 = vmul.f32 %v1065, %v922
    %v2262 = vmul.f32 %v1069, %v922
    %v2263 = vadd.f32 %v2239, %v2251
    %v2264 = vadd.f32 %v2240, %v2252
    %v2265 = vadd.f32 %v2241, %v2253
    %v2266 = vadd.f32 %v2242, %v2254
    %v2267 = vadd.f32 %v2243, %v2255
    %v2268 = vadd.f32 %v2244, %v2256
    %v2269 = vadd.f32 %v2245, %v2257
    %v2270 = vadd.f32 %v2246, %v2258
    %v2271 = vadd.f32 %v2247, %v2259
    %v2272 = vadd.f32 %v2248, %v2260
    %v2273 = vadd.f32 %v2249, %v2261
    %v2274 = vadd.f32 %v2250, %v2262
    %v2275 = vmul.f32 %v797, %v998
    %v2276 = vmul.f32 %v801, %v998
    %v2277 = vmul.f32 %v805, %v998
    %v2278 = vmul.f32 %v809, %v998
    %v2279 = vmul.f32 %v813, %v998
    %v2280 = vmul.f32 %v817, %v998
    %v2281 = vmul.f32 %v821, %v998
    %v2282 = vmul.f32 %v825, %v998
    %v2283 = vmul.f32 %v829, %v998
    %v2284 = vmul.f32 %v833, %v998
    %v2285 = vmul.f32 %v837, %v998
    %v2286 = vmul.f32 %v841, %v998
    %v2299 = vrot.slane %v2275, 1
    %v2300 = vrot.slane %v2276, 1
    %v2301 = vrot.slane %v2277, 1
    %v2302 = vrot.slane %v2278, 1
    %v2303 = vrot.slane %v2279, 1
    %v2304 = vrot.slane %v2280, 1
    %v2305 = vrot.slane %v2281, 1
    %v2306 = vrot.slane %v2282, 1
    %v2307 = vrot.slane %v2283, 1
    %v2308 = vrot.slane %v2284, 1
    %v2309 = vrot.slane %v2285, 1
    %v2310 = vrot.slane %v2286, 1
    %v2323 = vadd.f32 %v2263, %v2299
    %v2324 = vadd.f32 %v2264, %v2300
    %v2325 = vadd.f32 %v2265, %v2301
    %v2326 = vadd.f32 %v2266, %v2302
    %v2327 = vadd.f32 %v2267, %v2303
    %v2328 = vadd.f32 %v2268, %v2304
    %v2329 = vadd.f32 %v2269, %v2305
    %v2330 = vadd.f32 %v2270, %v2306
    %v2331 = vadd.f32 %v2271, %v2307
    %v2332 = vadd.f32 %v2272, %v2308
    %v2333 = vadd.f32 %v2273, %v2309
    %v2334 = vadd.f32 %v2274, %v2310
    %v2335 = vmul.f32 %v873, %v1074
    %v2336 = vmul.f32 %v877, %v1074
    %v2337 = vmul.f32 %v881, %v1074
    %v2338 = vmul.f32 %v885, %v1074
    %v2339 = vmul.f32 %v889, %v1074
    %v2340 = vmul.f32 %v893, %v1074
    %v2341 = vmul.f32 %v897, %v1074
    %v2342 = vmul.f32 %v901, %v1074
    %v2343 = vmul.f32 %v905, %v1074
    %v2344 = vmul.f32 %v909, %v1074
    %v2345 = vmul.f32 %v913, %v1074
    %v2346 = vmul.f32 %v917, %v1074
    %v2359 = vrot.slane %v2335, 1
    %v2360 = vrot.slane %v2336, 1
    %v2361 = vrot.slane %v2337, 1
    %v2362 = vrot.slane %v2338, 1
    %v2363 = vrot.slane %v2339, 1
    %v2364 = vrot.slane %v2340, 1
    %v2365 = vrot.slane %v2341, 1
    %v2366 = vrot.slane %v2342, 1
    %v2367 = vrot.slane %v2343, 1
    %v2368 = vrot.slane %v2344, 1
    %v2369 = vrot.slane %v2345, 1
    %v2370 = vrot.slane %v2346, 1
    %v2383 = vadd.f32 %v2323, %v2359
    %v2384 = vadd.f32 %v2324, %v2360
    %v2385 = vadd.f32 %v2325, %v2361
    %v2386 = vadd.f32 %v2326, %v2362
    %v2387 = vadd.f32 %v2327, %v2363
    %v2388 = vadd.f32 %v2328, %v2364
    %v2389 = vadd.f32 %v2329, %v2365
    %v2390 = vadd.f32 %v2330, %v2366
    %v2391 = vadd.f32 %v2331, %v2367
    %v2392 = vadd.f32 %v2332, %v2368
    %v2393 = vadd.f32 %v2333, %v2369
    %v2394 = vadd.f32 %v2334, %v2370
    %v2395 = vmul.f32 %v949, %v1102
    %v2396 = vmul.f32 %v953, %v1102
    %v2397 = vmul.f32 %v957, %v1102
    %v2398 = vmul.f32 %v961, %v1102
    %v2399 = vmul.f32 %v965, %v1102
    %v2400 = vmul.f32 %v969, %v1102
    %v2401 = vmul.f32 %v973, %v1102
    %v2402 = vmul.f32 %v977, %v1102
    %v2403 = vmul.f32 %v981, %v1102
    %v2404 = vmul.f32 %v985, %v1102
    %v2405 = vmul.f32 %v989, %v1102
    %v2406 = vmul.f32 %v993, %v1102
    %v2419 = vrot.slane %v2395, 1
    %v2420 = vrot.slane %v2396, 1
    %v2421 = vrot.slane %v2397, 1
    %v2422 = vrot.slane %v2398, 1
    %v2423 = vrot.slane %v2399, 1
    %v2424 = vrot.slane %v2400, 1
    %v2425 = vrot.slane %v2401, 1
    %v2426 = vrot.slane %v2402, 1
    %v2427 = vrot.slane %v2403, 1
    %v2428 = vrot.slane %v2404, 1
    %v2429 = vrot.slane %v2405, 1
    %v2430 = vrot.slane %v2406, 1
    %v2443 = vadd.f32 %v2383, %v2419
    %v2444 = vadd.f32 %v2384, %v2420
    %v2445 = vadd.f32 %v2385, %v2421
    %v2446 = vadd.f32 %v2386, %v2422
    %v2447 = vadd.f32 %v2387, %v2423
    %v2448 = vadd.f32 %v2388, %v2424
    %v2449 = vadd.f32 %v2389, %v2425
    %v2450 = vadd.f32 %v2390, %v2426
    %v2451 = vadd.f32 %v2391, %v2427
    %v2452 = vadd.f32 %v2392, %v2428
    %v2453 = vadd.f32 %v2393, %v2429
    %v2454 = vadd.f32 %v2394, %v2430
    %v2455 = vmul.f32 %v1317, %v1214
    %v2456 = vmul.f32 %v1321, %v1214
    %v2457 = vmul.f32 %v1325, %v1214
    %v2458 = vmul.f32 %v1329, %v1214
    %v2459 = vmul.f32 %v1333, %v1214
    %v2460 = vmul.f32 %v1337, %v1214
    %v2461 = vmul.f32 %v1341, %v1214
    %v2462 = vmul.f32 %v1345, %v1214
    %v2463 = vmul.f32 %v1349, %v1214
    %v2464 = vmul.f32 %v1353, %v1214
    %v2465 = vmul.f32 %v1357, %v1214
    %v2466 = vmul.f32 %v1361, %v1214
    %v2467 = vadd.f32 %v2443, %v2455
    %v2468 = vadd.f32 %v2444, %v2456
    %v2469 = vadd.f32 %v2445, %v2457
    %v2470 = vadd.f32 %v2446, %v2458
    %v2471 = vadd.f32 %v2447, %v2459
    %v2472 = vadd.f32 %v2448, %v2460
    %v2473 = vadd.f32 %v2449, %v2461
    %v2474 = vadd.f32 %v2450, %v2462
    %v2475 = vadd.f32 %v2451, %v2463
    %v2476 = vadd.f32 %v2452, %v2464
    %v2477 = vadd.f32 %v2453, %v2465
    %v2478 = vadd.f32 %v2454, %v2466
    %v2479 = vmul.f32 %v1393, %v1290
    %v2480 = vmul.f32 %v1397, %v1290
    %v2481 = vmul.f32 %v1401, %v1290
    %v2482 = vmul.f32 %v1405, %v1290
    %v2483 = vmul.f32 %v1409, %v1290
    %v2484 = vmul.f32 %v1413, %v1290
    %v2485 = vmul.f32 %v1417, %v1290
    %v2486 = vmul.f32 %v1421, %v1290
    %v2487 = vmul.f32 %v1425, %v1290
    %v2488 = vmul.f32 %v1429, %v1290
    %v2489 = vmul.f32 %v1433, %v1290
    %v2490 = vmul.f32 %v1437, %v1290
    %v2491 = vadd.f32 %v2467, %v2479
    %v2492 = vadd.f32 %v2468, %v2480
    %v2493 = vadd.f32 %v2469, %v2481
    %v2494 = vadd.f32 %v2470, %v2482
    %v2495 = vadd.f32 %v2471, %v2483
    %v2496 = vadd.f32 %v2472, %v2484
    %v2497 = vadd.f32 %v2473, %v2485
    %v2498 = vadd.f32 %v2474, %v2486
    %v2499 = vadd.f32 %v2475, %v2487
    %v2500 = vadd.f32 %v2476, %v2488
    %v2501 = vadd.f32 %v2477, %v2489
    %v2502 = vadd.f32 %v2478, %v2490
    %v2503 = vmul.f32 %v1165, %v1366
    %v2504 = vmul.f32 %v1169, %v1366
    %v2505 = vmul.f32 %v1173, %v1366
    %v2506 = vmul.f32 %v1177, %v1366
    %v2507 = vmul.f32 %v1181, %v1366
    %v2508 = vmul.f32 %v1185, %v1366
    %v2509 = vmul.f32 %v1189, %v1366
    %v2510 = vmul.f32 %v1193, %v1366
    %v2511 = vmul.f32 %v1197, %v1366
    %v2512 = vmul.f32 %v1201, %v1366
    %v2513 = vmul.f32 %v1205, %v1366
    %v2514 = vmul.f32 %v1209, %v1366
    %v2527 = vrot.slane %v2503, 1
    %v2528 = vrot.slane %v2504, 1
    %v2529 = vrot.slane %v2505, 1
    %v2530 = vrot.slane %v2506, 1
    %v2531 = vrot.slane %v2507, 1
    %v2532 = vrot.slane %v2508, 1
    %v2533 = vrot.slane %v2509, 1
    %v2534 = vrot.slane %v2510, 1
    %v2535 = vrot.slane %v2511, 1
    %v2536 = vrot.slane %v2512, 1
    %v2537 = vrot.slane %v2513, 1
    %v2538 = vrot.slane %v2514, 1
    %v2551 = vadd.f32 %v2491, %v2527
    %v2552 = vadd.f32 %v2492, %v2528
    %v2553 = vadd.f32 %v2493, %v2529
    %v2554 = vadd.f32 %v2494, %v2530
    %v2555 = vadd.f32 %v2495, %v2531
    %v2556 = vadd.f32 %v2496, %v2532
    %v2557 = vadd.f32 %v2497, %v2533
    %v2558 = vadd.f32 %v2498, %v2534
    %v2559 = vadd.f32 %v2499, %v2535
    %v2560 = vadd.f32 %v2500, %v2536
    %v2561 = vadd.f32 %v2501, %v2537
    %v2562 = vadd.f32 %v2502, %v2538
    %v2563 = vmul.f32 %v1241, %v1442
    %v2564 = vmul.f32 %v1245, %v1442
    %v2565 = vmul.f32 %v1249, %v1442
    %v2566 = vmul.f32 %v1253, %v1442
    %v2567 = vmul.f32 %v1257, %v1442
    %v2568 = vmul.f32 %v1261, %v1442
    %v2569 = vmul.f32 %v1265, %v1442
    %v2570 = vmul.f32 %v1269, %v1442
    %v2571 = vmul.f32 %v1273, %v1442
    %v2572 = vmul.f32 %v1277, %v1442
    %v2573 = vmul.f32 %v1281, %v1442
    %v2574 = vmul.f32 %v1285, %v1442
    %v2587 = vrot.slane %v2563, 1
    %v2588 = vrot.slane %v2564, 1
    %v2589 = vrot.slane %v2565, 1
    %v2590 = vrot.slane %v2566, 1
    %v2591 = vrot.slane %v2567, 1
    %v2592 = vrot.slane %v2568, 1
    %v2593 = vrot.slane %v2569, 1
    %v2594 = vrot.slane %v2570, 1
    %v2595 = vrot.slane %v2571, 1
    %v2596 = vrot.slane %v2572, 1
    %v2597 = vrot.slane %v2573, 1
    %v2598 = vrot.slane %v2574, 1
    %v2611 = vadd.f32 %v2551, %v2587
    %v2612 = vadd.f32 %v2552, %v2588
    %v2613 = vadd.f32 %v2553, %v2589
    %v2614 = vadd.f32 %v2554, %v2590
    %v2615 = vadd.f32 %v2555, %v2591
    %v2616 = vadd.f32 %v2556, %v2592
    %v2617 = vadd.f32 %v2557, %v2593
    %v2618 = vadd.f32 %v2558, %v2594
    %v2619 = vadd.f32 %v2559, %v2595
    %v2620 = vadd.f32 %v2560, %v2596
    %v2621 = vadd.f32 %v2561, %v2597
    %v2622 = vadd.f32 %v2562, %v2598
    %v2623 = vmul.f32 %v1317, %v1470
    %v2624 = vmul.f32 %v1321, %v1470
    %v2625 = vmul.f32 %v1325, %v1470
    %v2626 = vmul.f32 %v1329, %v1470
    %v2627 = vmul.f32 %v1333, %v1470
    %v2628 = vmul.f32 %v1337, %v1470
    %v2629 = vmul.f32 %v1341, %v1470
    %v2630 = vmul.f32 %v1345, %v1470
    %v2631 = vmul.f32 %v1349, %v1470
    %v2632 = vmul.f32 %v1353, %v1470
    %v2633 = vmul.f32 %v1357, %v1470
    %v2634 = vmul.f32 %v1361, %v1470
    %v2647 = vrot.slane %v2623, 1
    %v2648 = vrot.slane %v2624, 1
    %v2649 = vrot.slane %v2625, 1
    %v2650 = vrot.slane %v2626, 1
    %v2651 = vrot.slane %v2627, 1
    %v2652 = vrot.slane %v2628, 1
    %v2653 = vrot.slane %v2629, 1
    %v2654 = vrot.slane %v2630, 1
    %v2655 = vrot.slane %v2631, 1
    %v2656 = vrot.slane %v2632, 1
    %v2657 = vrot.slane %v2633, 1
    %v2658 = vrot.slane %v2634, 1
    %v2671 = vadd.f32 %v2611, %v2647
    %v2672 = vadd.f32 %v2612, %v2648
    %v2673 = vadd.f32 %v2613, %v2649
    %v2674 = vadd.f32 %v2614, %v2650
    %v2675 = vadd.f32 %v2615, %v2651
    %v2676 = vadd.f32 %v2616, %v2652
    %v2677 = vadd.f32 %v2617, %v2653
    %v2678 = vadd.f32 %v2618, %v2654
    %v2679 = vadd.f32 %v2619, %v2655
    %v2680 = vadd.f32 %v2620, %v2656
    %v2681 = vadd.f32 %v2621, %v2657
    %v2682 = vadd.f32 %v2622, %v2658
    %v2683 = vmul.f32 %v217, %v1544
    %v2684 = vmul.f32 %v221, %v1544
    %v2685 = vmul.f32 %v225, %v1544
    %v2686 = vmul.f32 %v229, %v1544
    %v2687 = vmul.f32 %v233, %v1544
    %v2688 = vmul.f32 %v1607, %v1544
    %v2689 = vmul.f32 %v241, %v1544
    %v2690 = vmul.f32 %v245, %v1544
    %v2691 = vmul.f32 %v249, %v1544
    %v2692 = vmul.f32 %v253, %v1544
    %v2693 = vmul.f32 %v257, %v1544
    %v2694 = vmul.f32 %v1611, %v1544
    %v2695 = vadd.f32 %v2671, %v2683
    %v2696 = vadd.f32 %v2672, %v2684
    %v2697 = vadd.f32 %v2673, %v2685
    %v2698 = vadd.f32 %v2674, %v2686
    %v2699 = vadd.f32 %v2675, %v2687
    %v2700 = vadd.f32 %v2676, %v2688
    %v2701 = vadd.f32 %v2677, %v2689
    %v2702 = vadd.f32 %v2678, %v2690
    %v2703 = vadd.f32 %v2679, %v2691
    %v2704 = vadd.f32 %v2680, %v2692
    %v2705 = vadd.f32 %v2681, %v2693
    %v2706 = vadd.f32 %v2682, %v2694
    %v2707 = vmul.f32 %v293, %v1580
    %v2708 = vmul.f32 %v297, %v1580
    %v2709 = vmul.f32 %v301, %v1580
    %v2710 = vmul.f32 %v305, %v1580
    %v2711 = vmul.f32 %v309, %v1580
    %v2712 = vmul.f32 %v1643, %v1580
    %v2713 = vmul.f32 %v317, %v1580
    %v2714 = vmul.f32 %v321, %v1580
    %v2715 = vmul.f32 %v325, %v1580
    %v2716 = vmul.f32 %v329, %v1580
    %v2717 = vmul.f32 %v333, %v1580
    %v2718 = vmul.f32 %v1647, %v1580
    %v2719 = vadd.f32 %v2695, %v2707
    %v2720 = vadd.f32 %v2696, %v2708
    %v2721 = vadd.f32 %v2697, %v2709
    %v2722 = vadd.f32 %v2698, %v2710
    %v2723 = vadd.f32 %v2699, %v2711
    %v2724 = vadd.f32 %v2700, %v2712
    %v2725 = vadd.f32 %v2701, %v2713
    %v2726 = vadd.f32 %v2702, %v2714
    %v2727 = vadd.f32 %v2703, %v2715
    %v2728 = vadd.f32 %v2704, %v2716
    %v2729 = vadd.f32 %v2705, %v2717
    %v2730 = vadd.f32 %v2706, %v2718
    %v2731 = vmul.f32 %v55, %v1616
    %v2732 = vmul.f32 %v60, %v1616
    %v2733 = vmul.f32 %v65, %v1616
    %v2734 = vmul.f32 %v70, %v1616
    %v2735 = vmul.f32 %v75, %v1616
    %v2736 = vmul.f32 %v1534, %v1616
    %v2737 = vmul.f32 %v85, %v1616
    %v2738 = vmul.f32 %v90, %v1616
    %v2739 = vmul.f32 %v95, %v1616
    %v2740 = vmul.f32 %v100, %v1616
    %v2741 = vmul.f32 %v105, %v1616
    %v2742 = vmul.f32 %v1539, %v1616
    %v2755 = vrot.slane %v2731, 1
    %v2756 = vrot.slane %v2732, 1
    %v2757 = vrot.slane %v2733, 1
    %v2758 = vrot.slane %v2734, 1
    %v2759 = vrot.slane %v2735, 1
    %v2760 = vrot.slane %v2736, 1
    %v2761 = vrot.slane %v2737, 1
    %v2762 = vrot.slane %v2738, 1
    %v2763 = vrot.slane %v2739, 1
    %v2764 = vrot.slane %v2740, 1
    %v2765 = vrot.slane %v2741, 1
    %v2766 = vrot.slane %v2742, 1
    %v2779 = vadd.f32 %v2719, %v2755
    %v2780 = vadd.f32 %v2720, %v2756
    %v2781 = vadd.f32 %v2721, %v2757
    %v2782 = vadd.f32 %v2722, %v2758
    %v2783 = vadd.f32 %v2723, %v2759
    %v2784 = vadd.f32 %v2724, %v2760
    %v2785 = vadd.f32 %v2725, %v2761
    %v2786 = vadd.f32 %v2726, %v2762
    %v2787 = vadd.f32 %v2727, %v2763
    %v2788 = vadd.f32 %v2728, %v2764
    %v2789 = vadd.f32 %v2729, %v2765
    %v2790 = vadd.f32 %v2730, %v2766
    %v2791 = vmul.f32 %v141, %v1652
    %v2792 = vmul.f32 %v145, %v1652
    %v2793 = vmul.f32 %v149, %v1652
    %v2794 = vmul.f32 %v153, %v1652
    %v2795 = vmul.f32 %v157, %v1652
    %v2796 = vmul.f32 %v1571, %v1652
    %v2797 = vmul.f32 %v165, %v1652
    %v2798 = vmul.f32 %v169, %v1652
    %v2799 = vmul.f32 %v173, %v1652
    %v2800 = vmul.f32 %v177, %v1652
    %v2801 = vmul.f32 %v181, %v1652
    %v2802 = vmul.f32 %v1575, %v1652
    %v2815 = vrot.slane %v2791, 1
    %v2816 = vrot.slane %v2792, 1
    %v2817 = vrot.slane %v2793, 1
    %v2818 = vrot.slane %v2794, 1
    %v2819 = vrot.slane %v2795, 1
    %v2820 = vrot.slane %v2796, 1
    %v2821 = vrot.slane %v2797, 1
    %v2822 = vrot.slane %v2798, 1
    %v2823 = vrot.slane %v2799, 1
    %v2824 = vrot.slane %v2800, 1
    %v2825 = vrot.slane %v2801, 1
    %v2826 = vrot.slane %v2802, 1
    %v2839 = vadd.f32 %v2779, %v2815
    %v2840 = vadd.f32 %v2780, %v2816
    %v2841 = vadd.f32 %v2781, %v2817
    %v2842 = vadd.f32 %v2782, %v2818
    %v2843 = vadd.f32 %v2783, %v2819
    %v2844 = vadd.f32 %v2784, %v2820
    %v2845 = vadd.f32 %v2785, %v2821
    %v2846 = vadd.f32 %v2786, %v2822
    %v2847 = vadd.f32 %v2787, %v2823
    %v2848 = vadd.f32 %v2788, %v2824
    %v2849 = vadd.f32 %v2789, %v2825
    %v2850 = vadd.f32 %v2790, %v2826
    %v2851 = vmul.f32 %v217, %v1680
    %v2852 = vmul.f32 %v221, %v1680
    %v2853 = vmul.f32 %v225, %v1680
    %v2854 = vmul.f32 %v229, %v1680
    %v2855 = vmul.f32 %v233, %v1680
    %v2856 = vmul.f32 %v1607, %v1680
    %v2857 = vmul.f32 %v241, %v1680
    %v2858 = vmul.f32 %v245, %v1680
    %v2859 = vmul.f32 %v249, %v1680
    %v2860 = vmul.f32 %v253, %v1680
    %v2861 = vmul.f32 %v257, %v1680
    %v2862 = vmul.f32 %v1611, %v1680
    %v2875 = vrot.slane %v2851, 1
    %v2876 = vrot.slane %v2852, 1
    %v2877 = vrot.slane %v2853, 1
    %v2878 = vrot.slane %v2854, 1
    %v2879 = vrot.slane %v2855, 1
    %v2880 = vrot.slane %v2856, 1
    %v2881 = vrot.slane %v2857, 1
    %v2882 = vrot.slane %v2858, 1
    %v2883 = vrot.slane %v2859, 1
    %v2884 = vrot.slane %v2860, 1
    %v2885 = vrot.slane %v2861, 1
    %v2886 = vrot.slane %v2862, 1
    %v2899 = vadd.f32 %v2839, %v2875
    %v2900 = vadd.f32 %v2840, %v2876
    %v2901 = vadd.f32 %v2841, %v2877
    %v2902 = vadd.f32 %v2842, %v2878
    %v2903 = vadd.f32 %v2843, %v2879
    %v2904 = vadd.f32 %v2844, %v2880
    %v2905 = vadd.f32 %v2845, %v2881
    %v2906 = vadd.f32 %v2846, %v2882
    %v2907 = vadd.f32 %v2847, %v2883
    %v2908 = vadd.f32 %v2848, %v2884
    %v2909 = vadd.f32 %v2849, %v2885
    %v2910 = vadd.f32 %v2850, %v2886
    %v2911 = vadd.f32 %v2899, %v1745
    %v2912 = vadd.f32 %v2900, %v1745
    %v2913 = vadd.f32 %v2901, %v1745
    %v2914 = vadd.f32 %v2902, %v1745
    %v2915 = vadd.f32 %v2903, %v1745
    %v2916 = vadd.f32 %v2904, %v1745
    %v2917 = vadd.f32 %v2905, %v1745
    %v2918 = vadd.f32 %v2906, %v1745
    %v2919 = vadd.f32 %v2907, %v1745
    %v2920 = vadd.f32 %v2908, %v1745
    %v2921 = vadd.f32 %v2909, %v1745
    %v2922 = vadd.f32 %v2910, %v1745
    %v2923 = vmax.f32 %v2911, 0.0
    %v2924 = vmax.f32 %v2912, 0.0
    %v2925 = vmax.f32 %v2913, 0.0
    %v2926 = vmax.f32 %v2914, 0.0
    %v2927 = vmax.f32 %v2915, 0.0
    %v2928 = vmax.f32 %v2916, 0.0
    %v2929 = vmax.f32 %v2917, 0.0
    %v2930 = vmax.f32 %v2918, 0.0
    %v2931 = vmax.f32 %v2919, 0.0
    %v2932 = vmax.f32 %v2920, 0.0
    %v2933 = vmax.f32 %v2921, 0.0
    %v2934 = vmax.f32 %v2922, 0.0
    %v2935 = vmul.f32 %v797, %v110
    %v2936 = vmul.f32 %v801, %v110
    %v2937 = vmul.f32 %v805, %v110
    %v2938 = vmul.f32 %v809, %v110
    %v2939 = vmul.f32 %v813, %v110
    %v2940 = vmul.f32 %v821, %v110
    %v2941 = vmul.f32 %v825, %v110
    %v2942 = vmul.f32 %v829, %v110
    %v2943 = vmul.f32 %v833, %v110
    %v2944 = vmul.f32 %v837, %v110
    %v2945 = vadd.f32 %v2935, 0.0
    %v2946 = vadd.f32 %v2936, 0.0
    %v2947 = vadd.f32 %v2937, 0.0
    %v2948 = vadd.f32 %v2938, 0.0
    %v2949 = vadd.f32 %v2939, 0.0
    %v2950 = vadd.f32 %v2940, 0.0
    %v2951 = vadd.f32 %v2941, 0.0
    %v2952 = vadd.f32 %v2942, 0.0
    %v2953 = vadd.f32 %v2943, 0.0
    %v2954 = vadd.f32 %v2944, 0.0
    %v2955 = vmul.f32 %v873, %v186
    %v2956 = vmul.f32 %v877, %v186
    %v2957 = vmul.f32 %v881, %v186
    %v2958 = vmul.f32 %v885, %v186
    %v2959 = vmul.f32 %v889, %v186
    %v2960 = vmul.f32 %v897, %v186
    %v2961 = vmul.f32 %v901, %v186
    %v2962 = vmul.f32 %v905, %v186
    %v2963 = vmul.f32 %v909, %v186
    %v2964 = vmul.f32 %v913, %v186
    %v2965 = vadd.f32 %v2945, %v2955
    %v2966 = vadd.f32 %v2946, %v2956
    %v2967 = vadd.f32 %v2947, %v2957
    %v2968 = vadd.f32 %v2948, %v2958
    %v2969 = vadd.f32 %v2949, %v2959
    %v2970 = vadd.f32 %v2950, %v2960
    %v2971 = vadd.f32 %v2951, %v2961
    %v2972 = vadd.f32 %v2952, %v2962
    %v2973 = vadd.f32 %v2953, %v2963
    %v2974 = vadd.f32 %v2954, %v2964
    %v2975 = vmul.f32 %v949, %v262
    %v2976 = vmul.f32 %v953, %v262
    %v2977 = vmul.f32 %v957, %v262
    %v2978 = vmul.f32 %v961, %v262
    %v2979 = vmul.f32 %v965, %v262
    %v2980 = vmul.f32 %v973, %v262
    %v2981 = vmul.f32 %v977, %v262
    %v2982 = vmul.f32 %v981, %v262
    %v2983 = vmul.f32 %v985, %v262
    %v2984 = vmul.f32 %v989, %v262
    %v2985 = vadd.f32 %v2965, %v2975
    %v2986 = vadd.f32 %v2966, %v2976
    %v2987 = vadd.f32 %v2967, %v2977
    %v2988 = vadd.f32 %v2968, %v2978
    %v2989 = vadd.f32 %v2969, %v2979
    %v2990 = vadd.f32 %v2970, %v2980
    %v2991 = vadd.f32 %v2971, %v2981
    %v2992 = vadd.f32 %v2972, %v2982
    %v2993 = vadd.f32 %v2973, %v2983
    %v2994 = vadd.f32 %v2974, %v2984
    %v2995 = vmul.f32 %v1025, %v338
    %v2996 = vmul.f32 %v1029, %v338
    %v2997 = vmul.f32 %v1033, %v338
    %v2998 = vmul.f32 %v1037, %v338
    %v2999 = vmul.f32 %v1041, %v338
    %v3000 = vmul.f32 %v1049, %v338
    %v3001 = vmul.f32 %v1053, %v338
    %v3002 = vmul.f32 %v1057, %v338
    %v3003 = vmul.f32 %v1061, %v338
    %v3004 = vmul.f32 %v1065, %v338
    %v3005 = vadd.f32 %v2985, %v2995
    %v3006 = vadd.f32 %v2986, %v2996
    %v3007 = vadd.f32 %v2987, %v2997
    %v3008 = vadd.f32 %v2988, %v2998
    %v3009 = vadd.f32 %v2989, %v2999
    %v3010 = vadd.f32 %v2990, %v3000
    %v3011 = vadd.f32 %v2991, %v3001
    %v3012 = vadd.f32 %v2992, %v3002
    %v3013 = vadd.f32 %v2993, %v3003
    %v3014 = vadd.f32 %v2994, %v3004
    %v3015 = vmul.f32 %v797, %v366
    %v3016 = vmul.f32 %v801, %v366
    %v3017 = vmul.f32 %v805, %v366
    %v3018 = vmul.f32 %v809, %v366
    %v3019 = vmul.f32 %v813, %v366
    %v3020 = vmul.f32 %v821, %v366
    %v3021 = vmul.f32 %v825, %v366
    %v3022 = vmul.f32 %v829, %v366
    %v3023 = vmul.f32 %v833, %v366
    %v3024 = vmul.f32 %v837, %v366
    %v3035 = vrot.slane %v3015, 1
    %v3036 = vrot.slane %v3016, 1
    %v3037 = vrot.slane %v3017, 1
    %v3038 = vrot.slane %v3018, 1
    %v3039 = vrot.slane %v3019, 1
    %v3040 = vrot.slane %v3020, 1
    %v3041 = vrot.slane %v3021, 1
    %v3042 = vrot.slane %v3022, 1
    %v3043 = vrot.slane %v3023, 1
    %v3044 = vrot.slane %v3024, 1
    %v3055 = vadd.f32 %v3005, %v3035
    %v3056 = vadd.f32 %v3006, %v3036
    %v3057 = vadd.f32 %v3007, %v3037
    %v3058 = vadd.f32 %v3008, %v3038
    %v3059 = vadd.f32 %v3009, %v3039
    %v3060 = vadd.f32 %v3010, %v3040
    %v3061 = vadd.f32 %v3011, %v3041
    %v3062 = vadd.f32 %v3012, %v3042
    %v3063 = vadd.f32 %v3013, %v3043
    %v3064 = vadd.f32 %v3014, %v3044
    %v3065 = vmul.f32 %v1165, %v478
    %v3066 = vmul.f32 %v1169, %v478
    %v3067 = vmul.f32 %v1173, %v478
    %v3068 = vmul.f32 %v1177, %v478
    %v3069 = vmul.f32 %v1181, %v478
    %v3070 = vmul.f32 %v1189, %v478
    %v3071 = vmul.f32 %v1193, %v478
    %v3072 = vmul.f32 %v1197, %v478
    %v3073 = vmul.f32 %v1201, %v478
    %v3074 = vmul.f32 %v1205, %v478
    %v3075 = vadd.f32 %v3055, %v3065
    %v3076 = vadd.f32 %v3056, %v3066
    %v3077 = vadd.f32 %v3057, %v3067
    %v3078 = vadd.f32 %v3058, %v3068
    %v3079 = vadd.f32 %v3059, %v3069
    %v3080 = vadd.f32 %v3060, %v3070
    %v3081 = vadd.f32 %v3061, %v3071
    %v3082 = vadd.f32 %v3062, %v3072
    %v3083 = vadd.f32 %v3063, %v3073
    %v3084 = vadd.f32 %v3064, %v3074
    %v3085 = vmul.f32 %v1241, %v554
    %v3086 = vmul.f32 %v1245, %v554
    %v3087 = vmul.f32 %v1249, %v554
    %v3088 = vmul.f32 %v1253, %v554
    %v3089 = vmul.f32 %v1257, %v554
    %v3090 = vmul.f32 %v1265, %v554
    %v3091 = vmul.f32 %v1269, %v554
    %v3092 = vmul.f32 %v1273, %v554
    %v3093 = vmul.f32 %v1277, %v554
    %v3094 = vmul.f32 %v1281, %v554
    %v3095 = vadd.f32 %v3075, %v3085
    %v3096 = vadd.f32 %v3076, %v3086
    %v3097 = vadd.f32 %v3077, %v3087
    %v3098 = vadd.f32 %v3078, %v3088
    %v3099 = vadd.f32 %v3079, %v3089
    %v3100 = vadd.f32 %v3080, %v3090
    %v3101 = vadd.f32 %v3081, %v3091
    %v3102 = vadd.f32 %v3082, %v3092
    %v3103 = vadd.f32 %v3083, %v3093
    %v3104 = vadd.f32 %v3084, %v3094
    %v3105 = vmul.f32 %v1317, %v630
    %v3106 = vmul.f32 %v1321, %v630
    %v3107 = vmul.f32 %v1325, %v630
    %v3108 = vmul.f32 %v1329, %v630
    %v3109 = vmul.f32 %v1333, %v630
    %v3110 = vmul.f32 %v1341, %v630
    %v3111 = vmul.f32 %v1345, %v630
    %v3112 = vmul.f32 %v1349, %v630
    %v3113 = vmul.f32 %v1353, %v630
    %v3114 = vmul.f32 %v1357, %v630
    %v3115 = vadd.f32 %v3095, %v3105
    %v3116 = vadd.f32 %v3096, %v3106
    %v3117 = vadd.f32 %v3097, %v3107
    %v3118 = vadd.f32 %v3098, %v3108
    %v3119 = vadd.f32 %v3099, %v3109
    %v3120 = vadd.f32 %v3100, %v3110
    %v3121 = vadd.f32 %v3101, %v3111
    %v3122 = vadd.f32 %v3102, %v3112
    %v3123 = vadd.f32 %v3103, %v3113
    %v3124 = vadd.f32 %v3104, %v3114
    %v3125 = vmul.f32 %v1393, %v706
    %v3126 = vmul.f32 %v1397, %v706
    %v3127 = vmul.f32 %v1401, %v706
    %v3128 = vmul.f32 %v1405, %v706
    %v3129 = vmul.f32 %v1409, %v706
    %v3130 = vmul.f32 %v1417, %v706
    %v3131 = vmul.f32 %v1421, %v706
    %v3132 = vmul.f32 %v1425, %v706
    %v3133 = vmul.f32 %v1429, %v706
    %v3134 = vmul.f32 %v1433, %v706
    %v3135 = vadd.f32 %v3115, %v3125
    %v3136 = vadd.f32 %v3116, %v3126
    %v3137 = vadd.f32 %v3117, %v3127
    %v3138 = vadd.f32 %v3118, %v3128
    %v3139 = vadd.f32 %v3119, %v3129
    %v3140 = vadd.f32 %v3120, %v3130
    %v3141 = vadd.f32 %v3121, %v3131
    %v3142 = vadd.f32 %v3122, %v3132
    %v3143 = vadd.f32 %v3123, %v3133
    %v3144 = vadd.f32 %v3124, %v3134
    %v3145 = vmul.f32 %v1165, %v734
    %v3146 = vmul.f32 %v1169, %v734
    %v3147 = vmul.f32 %v1173, %v734
    %v3148 = vmul.f32 %v1177, %v734
    %v3149 = vmul.f32 %v1181, %v734
    %v3150 = vmul.f32 %v1189, %v734
    %v3151 = vmul.f32 %v1193, %v734
    %v3152 = vmul.f32 %v1197, %v734
    %v3153 = vmul.f32 %v1201, %v734
    %v3154 = vmul.f32 %v1205, %v734
    %v3165 = vrot.slane %v3145, 1
    %v3166 = vrot.slane %v3146, 1
    %v3167 = vrot.slane %v3147, 1
    %v3168 = vrot.slane %v3148, 1
    %v3169 = vrot.slane %v3149, 1
    %v3170 = vrot.slane %v3150, 1
    %v3171 = vrot.slane %v3151, 1
    %v3172 = vrot.slane %v3152, 1
    %v3173 = vrot.slane %v3153, 1
    %v3174 = vrot.slane %v3154, 1
    %v3185 = vadd.f32 %v3135, %v3165
    %v3186 = vadd.f32 %v3136, %v3166
    %v3187 = vadd.f32 %v3137, %v3167
    %v3188 = vadd.f32 %v3138, %v3168
    %v3189 = vadd.f32 %v3139, %v3169
    %v3190 = vadd.f32 %v3140, %v3170
    %v3191 = vadd.f32 %v3141, %v3171
    %v3192 = vadd.f32 %v3142, %v3172
    %v3193 = vadd.f32 %v3143, %v3173
    %v3194 = vadd.f32 %v3144, %v3174
    %v3195 = vmul.f32 %v55, %v846
    %v3196 = vmul.f32 %v60, %v846
    %v3197 = vmul.f32 %v65, %v846
    %v3198 = vmul.f32 %v70, %v846
    %v3199 = vmul.f32 %v75, %v846
    %v3200 = vmul.f32 %v85, %v846
    %v3201 = vmul.f32 %v90, %v846
    %v3202 = vmul.f32 %v95, %v846
    %v3203 = vmul.f32 %v100, %v846
    %v3204 = vmul.f32 %v105, %v846
    %v3205 = vadd.f32 %v3185, %v3195
    %v3206 = vadd.f32 %v3186, %v3196
    %v3207 = vadd.f32 %v3187, %v3197
    %v3208 = vadd.f32 %v3188, %v3198
    %v3209 = vadd.f32 %v3189, %v3199
    %v3210 = vadd.f32 %v3190, %v3200
    %v3211 = vadd.f32 %v3191, %v3201
    %v3212 = vadd.f32 %v3192, %v3202
    %v3213 = vadd.f32 %v3193, %v3203
    %v3214 = vadd.f32 %v3194, %v3204
    %v3215 = vmul.f32 %v141, %v922
    %v3216 = vmul.f32 %v145, %v922
    %v3217 = vmul.f32 %v149, %v922
    %v3218 = vmul.f32 %v153, %v922
    %v3219 = vmul.f32 %v157, %v922
    %v3220 = vmul.f32 %v165, %v922
    %v3221 = vmul.f32 %v169, %v922
    %v3222 = vmul.f32 %v173, %v922
    %v3223 = vmul.f32 %v177, %v922
    %v3224 = vmul.f32 %v181, %v922
    %v3225 = vadd.f32 %v3205, %v3215
    %v3226 = vadd.f32 %v3206, %v3216
    %v3227 = vadd.f32 %v3207, %v3217
    %v3228 = vadd.f32 %v3208, %v3218
    %v3229 = vadd.f32 %v3209, %v3219
    %v3230 = vadd.f32 %v3210, %v3220
    %v3231 = vadd.f32 %v3211, %v3221
    %v3232 = vadd.f32 %v3212, %v3222
    %v3233 = vadd.f32 %v3213, %v3223
    %v3234 = vadd.f32 %v3214, %v3224
    %v3235 = vmul.f32 %v217, %v998
    %v3236 = vmul.f32 %v221, %v998
    %v3237 = vmul.f32 %v225, %v998
    %v3238 = vmul.f32 %v229, %v998
    %v3239 = vmul.f32 %v233, %v998
    %v3240 = vmul.f32 %v241, %v998
    %v3241 = vmul.f32 %v245, %v998
    %v3242 = vmul.f32 %v249, %v998
    %v3243 = vmul.f32 %v253, %v998
    %v3244 = vmul.f32 %v257, %v998
    %v3245 = vadd.f32 %v3225, %v3235
    %v3246 = vadd.f32 %v3226, %v3236
    %v3247 = vadd.f32 %v3227, %v3237
    %v3248 = vadd.f32 %v3228, %v3238
    %v3249 = vadd.f32 %v3229, %v3239
    %v3250 = vadd.f32 %v3230, %v3240
    %v3251 = vadd.f32 %v3231, %v3241
    %v3252 = vadd.f32 %v3232, %v3242
    %v3253 = vadd.f32 %v3233, %v3243
    %v3254 = vadd.f32 %v3234, %v3244
    %v3255 = vmul.f32 %v293, %v1074
    %v3256 = vmul.f32 %v297, %v1074
    %v3257 = vmul.f32 %v301, %v1074
    %v3258 = vmul.f32 %v305, %v1074
    %v3259 = vmul.f32 %v309, %v1074
    %v3260 = vmul.f32 %v317, %v1074
    %v3261 = vmul.f32 %v321, %v1074
    %v3262 = vmul.f32 %v325, %v1074
    %v3263 = vmul.f32 %v329, %v1074
    %v3264 = vmul.f32 %v333, %v1074
    %v3265 = vadd.f32 %v3245, %v3255
    %v3266 = vadd.f32 %v3246, %v3256
    %v3267 = vadd.f32 %v3247, %v3257
    %v3268 = vadd.f32 %v3248, %v3258
    %v3269 = vadd.f32 %v3249, %v3259
    %v3270 = vadd.f32 %v3250, %v3260
    %v3271 = vadd.f32 %v3251, %v3261
    %v3272 = vadd.f32 %v3252, %v3262
    %v3273 = vadd.f32 %v3253, %v3263
    %v3274 = vadd.f32 %v3254, %v3264
    %v3275 = vmul.f32 %v55, %v1102
    %v3276 = vmul.f32 %v60, %v1102
    %v3277 = vmul.f32 %v65, %v1102
    %v3278 = vmul.f32 %v70, %v1102
    %v3279 = vmul.f32 %v75, %v1102
    %v3280 = vmul.f32 %v85, %v1102
    %v3281 = vmul.f32 %v90, %v1102
    %v3282 = vmul.f32 %v95, %v1102
    %v3283 = vmul.f32 %v100, %v1102
    %v3284 = vmul.f32 %v105, %v1102
    %v3295 = vrot.slane %v3275, 1
    %v3296 = vrot.slane %v3276, 1
    %v3297 = vrot.slane %v3277, 1
    %v3298 = vrot.slane %v3278, 1
    %v3299 = vrot.slane %v3279, 1
    %v3300 = vrot.slane %v3280, 1
    %v3301 = vrot.slane %v3281, 1
    %v3302 = vrot.slane %v3282, 1
    %v3303 = vrot.slane %v3283, 1
    %v3304 = vrot.slane %v3284, 1
    %v3315 = vadd.f32 %v3265, %v3295
    %v3316 = vadd.f32 %v3266, %v3296
    %v3317 = vadd.f32 %v3267, %v3297
    %v3318 = vadd.f32 %v3268, %v3298
    %v3319 = vadd.f32 %v3269, %v3299
    %v3320 = vadd.f32 %v3270, %v3300
    %v3321 = vadd.f32 %v3271, %v3301
    %v3322 = vadd.f32 %v3272, %v3302
    %v3323 = vadd.f32 %v3273, %v3303
    %v3324 = vadd.f32 %v3274, %v3304
    %v3325 = vmul.f32 %v433, %v1214
    %v3326 = vmul.f32 %v437, %v1214
    %v3327 = vmul.f32 %v441, %v1214
    %v3328 = vmul.f32 %v445, %v1214
    %v3329 = vmul.f32 %v449, %v1214
    %v3330 = vmul.f32 %v457, %v1214
    %v3331 = vmul.f32 %v461, %v1214
    %v3332 = vmul.f32 %v465, %v1214
    %v3333 = vmul.f32 %v469, %v1214
    %v3334 = vmul.f32 %v473, %v1214
    %v3335 = vadd.f32 %v3315, %v3325
    %v3336 = vadd.f32 %v3316, %v3326
    %v3337 = vadd.f32 %v3317, %v3327
    %v3338 = vadd.f32 %v3318, %v3328
    %v3339 = vadd.f32 %v3319, %v3329
    %v3340 = vadd.f32 %v3320, %v3330
    %v3341 = vadd.f32 %v3321, %v3331
    %v3342 = vadd.f32 %v3322, %v3332
    %v3343 = vadd.f32 %v3323, %v3333
    %v3344 = vadd.f32 %v3324, %v3334
    %v3345 = vmul.f32 %v509, %v1290
    %v3346 = vmul.f32 %v513, %v1290
    %v3347 = vmul.f32 %v517, %v1290
    %v3348 = vmul.f32 %v521, %v1290
    %v3349 = vmul.f32 %v525, %v1290
    %v3350 = vmul.f32 %v533, %v1290
    %v3351 = vmul.f32 %v537, %v1290
    %v3352 = vmul.f32 %v541, %v1290
    %v3353 = vmul.f32 %v545, %v1290
    %v3354 = vmul.f32 %v549, %v1290
    %v3355 = vadd.f32 %v3335, %v3345
    %v3356 = vadd.f32 %v3336, %v3346
    %v3357 = vadd.f32 %v3337, %v3347
    %v3358 = vadd.f32 %v3338, %v3348
    %v3359 = vadd.f32 %v3339, %v3349
    %v3360 = vadd.f32 %v3340, %v3350
    %v3361 = vadd.f32 %v3341, %v3351
    %v3362 = vadd.f32 %v3342, %v3352
    %v3363 = vadd.f32 %v3343, %v3353
    %v3364 = vadd.f32 %v3344, %v3354
    %v3365 = vmul.f32 %v585, %v1366
    %v3366 = vmul.f32 %v589, %v1366
    %v3367 = vmul.f32 %v593, %v1366
    %v3368 = vmul.f32 %v597, %v1366
    %v3369 = vmul.f32 %v601, %v1366
    %v3370 = vmul.f32 %v609, %v1366
    %v3371 = vmul.f32 %v613, %v1366
    %v3372 = vmul.f32 %v617, %v1366
    %v3373 = vmul.f32 %v621, %v1366
    %v3374 = vmul.f32 %v625, %v1366
    %v3375 = vadd.f32 %v3355, %v3365
    %v3376 = vadd.f32 %v3356, %v3366
    %v3377 = vadd.f32 %v3357, %v3367
    %v3378 = vadd.f32 %v3358, %v3368
    %v3379 = vadd.f32 %v3359, %v3369
    %v3380 = vadd.f32 %v3360, %v3370
    %v3381 = vadd.f32 %v3361, %v3371
    %v3382 = vadd.f32 %v3362, %v3372
    %v3383 = vadd.f32 %v3363, %v3373
    %v3384 = vadd.f32 %v3364, %v3374
    %v3385 = vmul.f32 %v661, %v1442
    %v3386 = vmul.f32 %v665, %v1442
    %v3387 = vmul.f32 %v669, %v1442
    %v3388 = vmul.f32 %v673, %v1442
    %v3389 = vmul.f32 %v677, %v1442
    %v3390 = vmul.f32 %v685, %v1442
    %v3391 = vmul.f32 %v689, %v1442
    %v3392 = vmul.f32 %v693, %v1442
    %v3393 = vmul.f32 %v697, %v1442
    %v3394 = vmul.f32 %v701, %v1442
    %v3395 = vadd.f32 %v3375, %v3385
    %v3396 = vadd.f32 %v3376, %v3386
    %v3397 = vadd.f32 %v3377, %v3387
    %v3398 = vadd.f32 %v3378, %v3388
    %v3399 = vadd.f32 %v3379, %v3389
    %v3400 = vadd.f32 %v3380, %v3390
    %v3401 = vadd.f32 %v3381, %v3391
    %v3402 = vadd.f32 %v3382, %v3392
    %v3403 = vadd.f32 %v3383, %v3393
    %v3404 = vadd.f32 %v3384, %v3394
    %v3405 = vmul.f32 %v433, %v1470
    %v3406 = vmul.f32 %v437, %v1470
    %v3407 = vmul.f32 %v441, %v1470
    %v3408 = vmul.f32 %v445, %v1470
    %v3409 = vmul.f32 %v449, %v1470
    %v3410 = vmul.f32 %v457, %v1470
    %v3411 = vmul.f32 %v461, %v1470
    %v3412 = vmul.f32 %v465, %v1470
    %v3413 = vmul.f32 %v469, %v1470
    %v3414 = vmul.f32 %v473, %v1470
    %v3425 = vrot.slane %v3405, 1
    %v3426 = vrot.slane %v3406, 1
    %v3427 = vrot.slane %v3407, 1
    %v3428 = vrot.slane %v3408, 1
    %v3429 = vrot.slane %v3409, 1
    %v3430 = vrot.slane %v3410, 1
    %v3431 = vrot.slane %v3411, 1
    %v3432 = vrot.slane %v3412, 1
    %v3433 = vrot.slane %v3413, 1
    %v3434 = vrot.slane %v3414, 1
    %v3445 = vadd.f32 %v3395, %v3425
    %v3446 = vadd.f32 %v3396, %v3426
    %v3447 = vadd.f32 %v3397, %v3427
    %v3448 = vadd.f32 %v3398, %v3428
    %v3449 = vadd.f32 %v3399, %v3429
    %v3450 = vadd.f32 %v3400, %v3430
    %v3451 = vadd.f32 %v3401, %v3431
    %v3452 = vadd.f32 %v3402, %v3432
    %v3453 = vadd.f32 %v3403, %v3433
    %v3454 = vadd.f32 %v3404, %v3434
    %v3455 = vmul.f32 %v801, %v1544
    %v3456 = vmul.f32 %v805, %v1544
    %v3457 = vmul.f32 %v809, %v1544
    %v3458 = vmul.f32 %v813, %v1544
    %v3459 = vmul.f32 %v817, %v1544
    %v3460 = vmul.f32 %v825, %v1544
    %v3461 = vmul.f32 %v829, %v1544
    %v3462 = vmul.f32 %v833, %v1544
    %v3463 = vmul.f32 %v837, %v1544
    %v3464 = vmul.f32 %v841, %v1544
    %v3465 = vadd.f32 %v3445, %v3455
    %v3466 = vadd.f32 %v3446, %v3456
    %v3467 = vadd.f32 %v3447, %v3457
    %v3468 = vadd.f32 %v3448, %v3458
    %v3469 = vadd.f32 %v3449, %v3459
    %v3470 = vadd.f32 %v3450, %v3460
    %v3471 = vadd.f32 %v3451, %v3461
    %v3472 = vadd.f32 %v3452, %v3462
    %v3473 = vadd.f32 %v3453, %v3463
    %v3474 = vadd.f32 %v3454, %v3464
    %v3475 = vmul.f32 %v877, %v1580
    %v3476 = vmul.f32 %v881, %v1580
    %v3477 = vmul.f32 %v885, %v1580
    %v3478 = vmul.f32 %v889, %v1580
    %v3479 = vmul.f32 %v893, %v1580
    %v3480 = vmul.f32 %v901, %v1580
    %v3481 = vmul.f32 %v905, %v1580
    %v3482 = vmul.f32 %v909, %v1580
    %v3483 = vmul.f32 %v913, %v1580
    %v3484 = vmul.f32 %v917, %v1580
    %v3485 = vadd.f32 %v3465, %v3475
    %v3486 = vadd.f32 %v3466, %v3476
    %v3487 = vadd.f32 %v3467, %v3477
    %v3488 = vadd.f32 %v3468, %v3478
    %v3489 = vadd.f32 %v3469, %v3479
    %v3490 = vadd.f32 %v3470, %v3480
    %v3491 = vadd.f32 %v3471, %v3481
    %v3492 = vadd.f32 %v3472, %v3482
    %v3493 = vadd.f32 %v3473, %v3483
    %v3494 = vadd.f32 %v3474, %v3484
    %v3495 = vmul.f32 %v953, %v1616
    %v3496 = vmul.f32 %v957, %v1616
    %v3497 = vmul.f32 %v961, %v1616
    %v3498 = vmul.f32 %v965, %v1616
    %v3499 = vmul.f32 %v969, %v1616
    %v3500 = vmul.f32 %v977, %v1616
    %v3501 = vmul.f32 %v981, %v1616
    %v3502 = vmul.f32 %v985, %v1616
    %v3503 = vmul.f32 %v989, %v1616
    %v3504 = vmul.f32 %v993, %v1616
    %v3505 = vadd.f32 %v3485, %v3495
    %v3506 = vadd.f32 %v3486, %v3496
    %v3507 = vadd.f32 %v3487, %v3497
    %v3508 = vadd.f32 %v3488, %v3498
    %v3509 = vadd.f32 %v3489, %v3499
    %v3510 = vadd.f32 %v3490, %v3500
    %v3511 = vadd.f32 %v3491, %v3501
    %v3512 = vadd.f32 %v3492, %v3502
    %v3513 = vadd.f32 %v3493, %v3503
    %v3514 = vadd.f32 %v3494, %v3504
    %v3515 = vmul.f32 %v1029, %v1652
    %v3516 = vmul.f32 %v1033, %v1652
    %v3517 = vmul.f32 %v1037, %v1652
    %v3518 = vmul.f32 %v1041, %v1652
    %v3519 = vmul.f32 %v1045, %v1652
    %v3520 = vmul.f32 %v1053, %v1652
    %v3521 = vmul.f32 %v1057, %v1652
    %v3522 = vmul.f32 %v1061, %v1652
    %v3523 = vmul.f32 %v1065, %v1652
    %v3524 = vmul.f32 %v1069, %v1652
    %v3525 = vadd.f32 %v3505, %v3515
    %v3526 = vadd.f32 %v3506, %v3516
    %v3527 = vadd.f32 %v3507, %v3517
    %v3528 = vadd.f32 %v3508, %v3518
    %v3529 = vadd.f32 %v3509, %v3519
    %v3530 = vadd.f32 %v3510, %v3520
    %v3531 = vadd.f32 %v3511, %v3521
    %v3532 = vadd.f32 %v3512, %v3522
    %v3533 = vadd.f32 %v3513, %v3523
    %v3534 = vadd.f32 %v3514, %v3524
    %v3535 = vmul.f32 %v801, %v1680
    %v3536 = vmul.f32 %v805, %v1680
    %v3537 = vmul.f32 %v809, %v1680
    %v3538 = vmul.f32 %v813, %v1680
    %v3539 = vmul.f32 %v817, %v1680
    %v3540 = vmul.f32 %v825, %v1680
    %v3541 = vmul.f32 %v829, %v1680
    %v3542 = vmul.f32 %v833, %v1680
    %v3543 = vmul.f32 %v837, %v1680
    %v3544 = vmul.f32 %v841, %v1680
    %v3555 = vrot.slane %v3535, 1
    %v3556 = vrot.slane %v3536, 1
    %v3557 = vrot.slane %v3537, 1
    %v3558 = vrot.slane %v3538, 1
    %v3559 = vrot.slane %v3539, 1
    %v3560 = vrot.slane %v3540, 1
    %v3561 = vrot.slane %v3541, 1
    %v3562 = vrot.slane %v3542, 1
    %v3563 = vrot.slane %v3543, 1
    %v3564 = vrot.slane %v3544, 1
    %v3575 = vadd.f32 %v3525, %v3555
    %v3576 = vadd.f32 %v3526, %v3556
    %v3577 = vadd.f32 %v3527, %v3557
    %v3578 = vadd.f32 %v3528, %v3558
    %v3579 = vadd.f32 %v3529, %v3559
    %v3580 = vadd.f32 %v3530, %v3560
    %v3581 = vadd.f32 %v3531, %v3561
    %v3582 = vadd.f32 %v3532, %v3562
    %v3583 = vadd.f32 %v3533, %v3563
    %v3584 = vadd.f32 %v3534, %v3564
    %v3585 = vadd.f32 %v3575, %v1745
    %v3586 = vadd.f32 %v3576, %v1745
    %v3587 = vadd.f32 %v3577, %v1745
    %v3588 = vadd.f32 %v3578, %v1745
    %v3589 = vadd.f32 %v3579, %v1745
    %v3590 = vadd.f32 %v3580, %v1745
    %v3591 = vadd.f32 %v3581, %v1745
    %v3592 = vadd.f32 %v3582, %v1745
    %v3593 = vadd.f32 %v3583, %v1745
    %v3594 = vadd.f32 %v3584, %v1745
    %v3595 = vmax.f32 %v3585, 0.0
    %v3596 = vmax.f32 %v3586, 0.0
    %v3597 = vmax.f32 %v3587, 0.0
    %v3598 = vmax.f32 %v3588, 0.0
    %v3599 = vmax.f32 %v3589, 0.0
    %v3600 = vmax.f32 %v3590, 0.0
    %v3601 = vmax.f32 %v3591, 0.0
    %v3602 = vmax.f32 %v3592, 0.0
    %v3603 = vmax.f32 %v3593, 0.0
    %v3604 = vmax.f32 %v3594, 0.0
    %v3605 = vmul.f32 %v949, %v110
    %v3606 = vmul.f32 %v953, %v110
    %v3607 = vmul.f32 %v957, %v110
    %v3608 = vmul.f32 %v961, %v110
    %v3609 = vmul.f32 %v965, %v110
    %v3610 = vmul.f32 %v973, %v110
    %v3611 = vmul.f32 %v977, %v110
    %v3612 = vmul.f32 %v981, %v110
    %v3613 = vmul.f32 %v985, %v110
    %v3614 = vmul.f32 %v989, %v110
    %v3615 = vadd.f32 %v3605, 0.0
    %v3616 = vadd.f32 %v3606, 0.0
    %v3617 = vadd.f32 %v3607, 0.0
    %v3618 = vadd.f32 %v3608, 0.0
    %v3619 = vadd.f32 %v3609, 0.0
    %v3620 = vadd.f32 %v3610, 0.0
    %v3621 = vadd.f32 %v3611, 0.0
    %v3622 = vadd.f32 %v3612, 0.0
    %v3623 = vadd.f32 %v3613, 0.0
    %v3624 = vadd.f32 %v3614, 0.0
    %v3625 = vmul.f32 %v1025, %v186
    %v3626 = vmul.f32 %v1029, %v186
    %v3627 = vmul.f32 %v1033, %v186
    %v3628 = vmul.f32 %v1037, %v186
    %v3629 = vmul.f32 %v1041, %v186
    %v3630 = vmul.f32 %v1049, %v186
    %v3631 = vmul.f32 %v1053, %v186
    %v3632 = vmul.f32 %v1057, %v186
    %v3633 = vmul.f32 %v1061, %v186
    %v3634 = vmul.f32 %v1065, %v186
    %v3635 = vadd.f32 %v3615, %v3625
    %v3636 = vadd.f32 %v3616, %v3626
    %v3637 = vadd.f32 %v3617, %v3627
    %v3638 = vadd.f32 %v3618, %v3628
    %v3639 = vadd.f32 %v3619, %v3629
    %v3640 = vadd.f32 %v3620, %v3630
    %v3641 = vadd.f32 %v3621, %v3631
    %v3642 = vadd.f32 %v3622, %v3632
    %v3643 = vadd.f32 %v3623, %v3633
    %v3644 = vadd.f32 %v3624, %v3634
    %v3645 = vmul.f32 %v797, %v262
    %v3646 = vmul.f32 %v801, %v262
    %v3647 = vmul.f32 %v805, %v262
    %v3648 = vmul.f32 %v809, %v262
    %v3649 = vmul.f32 %v813, %v262
    %v3650 = vmul.f32 %v821, %v262
    %v3651 = vmul.f32 %v825, %v262
    %v3652 = vmul.f32 %v829, %v262
    %v3653 = vmul.f32 %v833, %v262
    %v3654 = vmul.f32 %v837, %v262
    %v3665 = vrot.slane %v3645, 1
    %v3666 = vrot.slane %v3646, 1
    %v3667 = vrot.slane %v3647, 1
    %v3668 = vrot.slane %v3648, 1
    %v3669 = vrot.slane %v3649, 1
    %v3670 = vrot.slane %v3650, 1
    %v3671 = vrot.slane %v3651, 1
    %v3672 = vrot.slane %v3652, 1
    %v3673 = vrot.slane %v3653, 1
    %v3674 = vrot.slane %v3654, 1
    %v3685 = vadd.f32 %v3635, %v3665
    %v3686 = vadd.f32 %v3636, %v3666
    %v3687 = vadd.f32 %v3637, %v3667
    %v3688 = vadd.f32 %v3638, %v3668
    %v3689 = vadd.f32 %v3639, %v3669
    %v3690 = vadd.f32 %v3640, %v3670
    %v3691 = vadd.f32 %v3641, %v3671
    %v3692 = vadd.f32 %v3642, %v3672
    %v3693 = vadd.f32 %v3643, %v3673
    %v3694 = vadd.f32 %v3644, %v3674
    %v3695 = vmul.f32 %v873, %v338
    %v3696 = vmul.f32 %v877, %v338
    %v3697 = vmul.f32 %v881, %v338
    %v3698 = vmul.f32 %v885, %v338
    %v3699 = vmul.f32 %v889, %v338
    %v3700 = vmul.f32 %v897, %v338
    %v3701 = vmul.f32 %v901, %v338
    %v3702 = vmul.f32 %v905, %v338
    %v3703 = vmul.f32 %v909, %v338
    %v3704 = vmul.f32 %v913, %v338
    %v3715 = vrot.slane %v3695, 1
    %v3716 = vrot.slane %v3696, 1
    %v3717 = vrot.slane %v3697, 1
    %v3718 = vrot.slane %v3698, 1
    %v3719 = vrot.slane %v3699, 1
    %v3720 = vrot.slane %v3700, 1
    %v3721 = vrot.slane %v3701, 1
    %v3722 = vrot.slane %v3702, 1
    %v3723 = vrot.slane %v3703, 1
    %v3724 = vrot.slane %v3704, 1
    %v3735 = vadd.f32 %v3685, %v3715
    %v3736 = vadd.f32 %v3686, %v3716
    %v3737 = vadd.f32 %v3687, %v3717
    %v3738 = vadd.f32 %v3688, %v3718
    %v3739 = vadd.f32 %v3689, %v3719
    %v3740 = vadd.f32 %v3690, %v3720
    %v3741 = vadd.f32 %v3691, %v3721
    %v3742 = vadd.f32 %v3692, %v3722
    %v3743 = vadd.f32 %v3693, %v3723
    %v3744 = vadd.f32 %v3694, %v3724
    %v3745 = vmul.f32 %v949, %v366
    %v3746 = vmul.f32 %v953, %v366
    %v3747 = vmul.f32 %v957, %v366
    %v3748 = vmul.f32 %v961, %v366
    %v3749 = vmul.f32 %v965, %v366
    %v3750 = vmul.f32 %v973, %v366
    %v3751 = vmul.f32 %v977, %v366
    %v3752 = vmul.f32 %v981, %v366
    %v3753 = vmul.f32 %v985, %v366
    %v3754 = vmul.f32 %v989, %v366
    %v3765 = vrot.slane %v3745, 1
    %v3766 = vrot.slane %v3746, 1
    %v3767 = vrot.slane %v3747, 1
    %v3768 = vrot.slane %v3748, 1
    %v3769 = vrot.slane %v3749, 1
    %v3770 = vrot.slane %v3750, 1
    %v3771 = vrot.slane %v3751, 1
    %v3772 = vrot.slane %v3752, 1
    %v3773 = vrot.slane %v3753, 1
    %v3774 = vrot.slane %v3754, 1
    %v3785 = vadd.f32 %v3735, %v3765
    %v3786 = vadd.f32 %v3736, %v3766
    %v3787 = vadd.f32 %v3737, %v3767
    %v3788 = vadd.f32 %v3738, %v3768
    %v3789 = vadd.f32 %v3739, %v3769
    %v3790 = vadd.f32 %v3740, %v3770
    %v3791 = vadd.f32 %v3741, %v3771
    %v3792 = vadd.f32 %v3742, %v3772
    %v3793 = vadd.f32 %v3743, %v3773
    %v3794 = vadd.f32 %v3744, %v3774
    %v3795 = vmul.f32 %v1317, %v478
    %v3796 = vmul.f32 %v1321, %v478
    %v3797 = vmul.f32 %v1325, %v478
    %v3798 = vmul.f32 %v1329, %v478
    %v3799 = vmul.f32 %v1333, %v478
    %v3800 = vmul.f32 %v1341, %v478
    %v3801 = vmul.f32 %v1345, %v478
    %v3802 = vmul.f32 %v1349, %v478
    %v3803 = vmul.f32 %v1353, %v478
    %v3804 = vmul.f32 %v1357, %v478
    %v3805 = vadd.f32 %v3785, %v3795
    %v3806 = vadd.f32 %v3786, %v3796
    %v3807 = vadd.f32 %v3787, %v3797
    %v3808 = vadd.f32 %v3788, %v3798
    %v3809 = vadd.f32 %v3789, %v3799
    %v3810 = vadd.f32 %v3790, %v3800
    %v3811 = vadd.f32 %v3791, %v3801
    %v3812 = vadd.f32 %v3792, %v3802
    %v3813 = vadd.f32 %v3793, %v3803
    %v3814 = vadd.f32 %v3794, %v3804
    %v3815 = vmul.f32 %v1393, %v554
    %v3816 = vmul.f32 %v1397, %v554
    %v3817 = vmul.f32 %v1401, %v554
    %v3818 = vmul.f32 %v1405, %v554
    %v3819 = vmul.f32 %v1409, %v554
    %v3820 = vmul.f32 %v1417, %v554
    %v3821 = vmul.f32 %v1421, %v554
    %v3822 = vmul.f32 %v1425, %v554
    %v3823 = vmul.f32 %v1429, %v554
    %v3824 = vmul.f32 %v1433, %v554
    %v3825 = vadd.f32 %v3805, %v3815
    %v3826 = vadd.f32 %v3806, %v3816
    %v3827 = vadd.f32 %v3807, %v3817
    %v3828 = vadd.f32 %v3808, %v3818
    %v3829 = vadd.f32 %v3809, %v3819
    %v3830 = vadd.f32 %v3810, %v3820
    %v3831 = vadd.f32 %v3811, %v3821
    %v3832 = vadd.f32 %v3812, %v3822
    %v3833 = vadd.f32 %v3813, %v3823
    %v3834 = vadd.f32 %v3814, %v3824
    %v3835 = vmul.f32 %v1165, %v630
    %v3836 = vmul.f32 %v1169, %v630
    %v3837 = vmul.f32 %v1173, %v630
    %v3838 = vmul.f32 %v1177, %v630
    %v3839 = vmul.f32 %v1181, %v630
    %v3840 = vmul.f32 %v1189, %v630
    %v3841 = vmul.f32 %v1193, %v630
    %v3842 = vmul.f32 %v1197, %v630
    %v3843 = vmul.f32 %v1201, %v630
    %v3844 = vmul.f32 %v1205, %v630
    %v3855 = vrot.slane %v3835, 1
    %v3856 = vrot.slane %v3836, 1
    %v3857 = vrot.slane %v3837, 1
    %v3858 = vrot.slane %v3838, 1
    %v3859 = vrot.slane %v3839, 1
    %v3860 = vrot.slane %v3840, 1
    %v3861 = vrot.slane %v3841, 1
    %v3862 = vrot.slane %v3842, 1
    %v3863 = vrot.slane %v3843, 1
    %v3864 = vrot.slane %v3844, 1
    %v3875 = vadd.f32 %v3825, %v3855
    %v3876 = vadd.f32 %v3826, %v3856
    %v3877 = vadd.f32 %v3827, %v3857
    %v3878 = vadd.f32 %v3828, %v3858
    %v3879 = vadd.f32 %v3829, %v3859
    %v3880 = vadd.f32 %v3830, %v3860
    %v3881 = vadd.f32 %v3831, %v3861
    %v3882 = vadd.f32 %v3832, %v3862
    %v3883 = vadd.f32 %v3833, %v3863
    %v3884 = vadd.f32 %v3834, %v3864
    %v3885 = vmul.f32 %v1241, %v706
    %v3886 = vmul.f32 %v1245, %v706
    %v3887 = vmul.f32 %v1249, %v706
    %v3888 = vmul.f32 %v1253, %v706
    %v3889 = vmul.f32 %v1257, %v706
    %v3890 = vmul.f32 %v1265, %v706
    %v3891 = vmul.f32 %v1269, %v706
    %v3892 = vmul.f32 %v1273, %v706
    %v3893 = vmul.f32 %v1277, %v706
    %v3894 = vmul.f32 %v1281, %v706
    %v3905 = vrot.slane %v3885, 1
    %v3906 = vrot.slane %v3886, 1
    %v3907 = vrot.slane %v3887, 1
    %v3908 = vrot.slane %v3888, 1
    %v3909 = vrot.slane %v3889, 1
    %v3910 = vrot.slane %v3890, 1
    %v3911 = vrot.slane %v3891, 1
    %v3912 = vrot.slane %v3892, 1
    %v3913 = vrot.slane %v3893, 1
    %v3914 = vrot.slane %v3894, 1
    %v3925 = vadd.f32 %v3875, %v3905
    %v3926 = vadd.f32 %v3876, %v3906
    %v3927 = vadd.f32 %v3877, %v3907
    %v3928 = vadd.f32 %v3878, %v3908
    %v3929 = vadd.f32 %v3879, %v3909
    %v3930 = vadd.f32 %v3880, %v3910
    %v3931 = vadd.f32 %v3881, %v3911
    %v3932 = vadd.f32 %v3882, %v3912
    %v3933 = vadd.f32 %v3883, %v3913
    %v3934 = vadd.f32 %v3884, %v3914
    %v3935 = vmul.f32 %v1317, %v734
    %v3936 = vmul.f32 %v1321, %v734
    %v3937 = vmul.f32 %v1325, %v734
    %v3938 = vmul.f32 %v1329, %v734
    %v3939 = vmul.f32 %v1333, %v734
    %v3940 = vmul.f32 %v1341, %v734
    %v3941 = vmul.f32 %v1345, %v734
    %v3942 = vmul.f32 %v1349, %v734
    %v3943 = vmul.f32 %v1353, %v734
    %v3944 = vmul.f32 %v1357, %v734
    %v3955 = vrot.slane %v3935, 1
    %v3956 = vrot.slane %v3936, 1
    %v3957 = vrot.slane %v3937, 1
    %v3958 = vrot.slane %v3938, 1
    %v3959 = vrot.slane %v3939, 1
    %v3960 = vrot.slane %v3940, 1
    %v3961 = vrot.slane %v3941, 1
    %v3962 = vrot.slane %v3942, 1
    %v3963 = vrot.slane %v3943, 1
    %v3964 = vrot.slane %v3944, 1
    %v3975 = vadd.f32 %v3925, %v3955
    %v3976 = vadd.f32 %v3926, %v3956
    %v3977 = vadd.f32 %v3927, %v3957
    %v3978 = vadd.f32 %v3928, %v3958
    %v3979 = vadd.f32 %v3929, %v3959
    %v3980 = vadd.f32 %v3930, %v3960
    %v3981 = vadd.f32 %v3931, %v3961
    %v3982 = vadd.f32 %v3932, %v3962
    %v3983 = vadd.f32 %v3933, %v3963
    %v3984 = vadd.f32 %v3934, %v3964
    %v3985 = vmul.f32 %v217, %v846
    %v3986 = vmul.f32 %v221, %v846
    %v3987 = vmul.f32 %v225, %v846
    %v3988 = vmul.f32 %v229, %v846
    %v3989 = vmul.f32 %v233, %v846
    %v3990 = vmul.f32 %v241, %v846
    %v3991 = vmul.f32 %v245, %v846
    %v3992 = vmul.f32 %v249, %v846
    %v3993 = vmul.f32 %v253, %v846
    %v3994 = vmul.f32 %v257, %v846
    %v3995 = vadd.f32 %v3975, %v3985
    %v3996 = vadd.f32 %v3976, %v3986
    %v3997 = vadd.f32 %v3977, %v3987
    %v3998 = vadd.f32 %v3978, %v3988
    %v3999 = vadd.f32 %v3979, %v3989
    %v4000 = vadd.f32 %v3980, %v3990
    %v4001 = vadd.f32 %v3981, %v3991
    %v4002 = vadd.f32 %v3982, %v3992
    %v4003 = vadd.f32 %v3983, %v3993
    %v4004 = vadd.f32 %v3984, %v3994
    %v4005 = vmul.f32 %v293, %v922
    %v4006 = vmul.f32 %v297, %v922
    %v4007 = vmul.f32 %v301, %v922
    %v4008 = vmul.f32 %v305, %v922
    %v4009 = vmul.f32 %v309, %v922
    %v4010 = vmul.f32 %v317, %v922
    %v4011 = vmul.f32 %v321, %v922
    %v4012 = vmul.f32 %v325, %v922
    %v4013 = vmul.f32 %v329, %v922
    %v4014 = vmul.f32 %v333, %v922
    %v4015 = vadd.f32 %v3995, %v4005
    %v4016 = vadd.f32 %v3996, %v4006
    %v4017 = vadd.f32 %v3997, %v4007
    %v4018 = vadd.f32 %v3998, %v4008
    %v4019 = vadd.f32 %v3999, %v4009
    %v4020 = vadd.f32 %v4000, %v4010
    %v4021 = vadd.f32 %v4001, %v4011
    %v4022 = vadd.f32 %v4002, %v4012
    %v4023 = vadd.f32 %v4003, %v4013
    %v4024 = vadd.f32 %v4004, %v4014
    %v4025 = vmul.f32 %v55, %v998
    %v4026 = vmul.f32 %v60, %v998
    %v4027 = vmul.f32 %v65, %v998
    %v4028 = vmul.f32 %v70, %v998
    %v4029 = vmul.f32 %v75, %v998
    %v4030 = vmul.f32 %v85, %v998
    %v4031 = vmul.f32 %v90, %v998
    %v4032 = vmul.f32 %v95, %v998
    %v4033 = vmul.f32 %v100, %v998
    %v4034 = vmul.f32 %v105, %v998
    %v4045 = vrot.slane %v4025, 1
    %v4046 = vrot.slane %v4026, 1
    %v4047 = vrot.slane %v4027, 1
    %v4048 = vrot.slane %v4028, 1
    %v4049 = vrot.slane %v4029, 1
    %v4050 = vrot.slane %v4030, 1
    %v4051 = vrot.slane %v4031, 1
    %v4052 = vrot.slane %v4032, 1
    %v4053 = vrot.slane %v4033, 1
    %v4054 = vrot.slane %v4034, 1
    %v4065 = vadd.f32 %v4015, %v4045
    %v4066 = vadd.f32 %v4016, %v4046
    %v4067 = vadd.f32 %v4017, %v4047
    %v4068 = vadd.f32 %v4018, %v4048
    %v4069 = vadd.f32 %v4019, %v4049
    %v4070 = vadd.f32 %v4020, %v4050
    %v4071 = vadd.f32 %v4021, %v4051
    %v4072 = vadd.f32 %v4022, %v4052
    %v4073 = vadd.f32 %v4023, %v4053
    %v4074 = vadd.f32 %v4024, %v4054
    %v4075 = vmul.f32 %v141, %v1074
    %v4076 = vmul.f32 %v145, %v1074
    %v4077 = vmul.f32 %v149, %v1074
    %v4078 = vmul.f32 %v153, %v1074
    %v4079 = vmul.f32 %v157, %v1074
    %v4080 = vmul.f32 %v165, %v1074
    %v4081 = vmul.f32 %v169, %v1074
    %v4082 = vmul.f32 %v173, %v1074
    %v4083 = vmul.f32 %v177, %v1074
    %v4084 = vmul.f32 %v181, %v1074
    %v4095 = vrot.slane %v4075, 1
    %v4096 = vrot.slane %v4076, 1
    %v4097 = vrot.slane %v4077, 1
    %v4098 = vrot.slane %v4078, 1
    %v4099 = vrot.slane %v4079, 1
    %v4100 = vrot.slane %v4080, 1
    %v4101 = vrot.slane %v4081, 1
    %v4102 = vrot.slane %v4082, 1
    %v4103 = vrot.slane %v4083, 1
    %v4104 = vrot.slane %v4084, 1
    %v4115 = vadd.f32 %v4065, %v4095
    %v4116 = vadd.f32 %v4066, %v4096
    %v4117 = vadd.f32 %v4067, %v4097
    %v4118 = vadd.f32 %v4068, %v4098
    %v4119 = vadd.f32 %v4069, %v4099
    %v4120 = vadd.f32 %v4070, %v4100
    %v4121 = vadd.f32 %v4071, %v4101
    %v4122 = vadd.f32 %v4072, %v4102
    %v4123 = vadd.f32 %v4073, %v4103
    %v4124 = vadd.f32 %v4074, %v4104
    %v4125 = vmul.f32 %v217, %v1102
    %v4126 = vmul.f32 %v221, %v1102
    %v4127 = vmul.f32 %v225, %v1102
    %v4128 = vmul.f32 %v229, %v1102
    %v4129 = vmul.f32 %v233, %v1102
    %v4130 = vmul.f32 %v241, %v1102
    %v4131 = vmul.f32 %v245, %v1102
    %v4132 = vmul.f32 %v249, %v1102
    %v4133 = vmul.f32 %v253, %v1102
    %v4134 = vmul.f32 %v257, %v1102
    %v4145 = vrot.slane %v4125, 1
    %v4146 = vrot.slane %v4126, 1
    %v4147 = vrot.slane %v4127, 1
    %v4148 = vrot.slane %v4128, 1
    %v4149 = vrot.slane %v4129, 1
    %v4150 = vrot.slane %v4130, 1
    %v4151 = vrot.slane %v4131, 1
    %v4152 = vrot.slane %v4132, 1
    %v4153 = vrot.slane %v4133, 1
    %v4154 = vrot.slane %v4134, 1
    %v4165 = vadd.f32 %v4115, %v4145
    %v4166 = vadd.f32 %v4116, %v4146
    %v4167 = vadd.f32 %v4117, %v4147
    %v4168 = vadd.f32 %v4118, %v4148
    %v4169 = vadd.f32 %v4119, %v4149
    %v4170 = vadd.f32 %v4120, %v4150
    %v4171 = vadd.f32 %v4121, %v4151
    %v4172 = vadd.f32 %v4122, %v4152
    %v4173 = vadd.f32 %v4123, %v4153
    %v4174 = vadd.f32 %v4124, %v4154
    %v4175 = vmul.f32 %v585, %v1214
    %v4176 = vmul.f32 %v589, %v1214
    %v4177 = vmul.f32 %v593, %v1214
    %v4178 = vmul.f32 %v597, %v1214
    %v4179 = vmul.f32 %v601, %v1214
    %v4180 = vmul.f32 %v609, %v1214
    %v4181 = vmul.f32 %v613, %v1214
    %v4182 = vmul.f32 %v617, %v1214
    %v4183 = vmul.f32 %v621, %v1214
    %v4184 = vmul.f32 %v625, %v1214
    %v4185 = vadd.f32 %v4165, %v4175
    %v4186 = vadd.f32 %v4166, %v4176
    %v4187 = vadd.f32 %v4167, %v4177
    %v4188 = vadd.f32 %v4168, %v4178
    %v4189 = vadd.f32 %v4169, %v4179
    %v4190 = vadd.f32 %v4170, %v4180
    %v4191 = vadd.f32 %v4171, %v4181
    %v4192 = vadd.f32 %v4172, %v4182
    %v4193 = vadd.f32 %v4173, %v4183
    %v4194 = vadd.f32 %v4174, %v4184
    %v4195 = vmul.f32 %v661, %v1290
    %v4196 = vmul.f32 %v665, %v1290
    %v4197 = vmul.f32 %v669, %v1290
    %v4198 = vmul.f32 %v673, %v1290
    %v4199 = vmul.f32 %v677, %v1290
    %v4200 = vmul.f32 %v685, %v1290
    %v4201 = vmul.f32 %v689, %v1290
    %v4202 = vmul.f32 %v693, %v1290
    %v4203 = vmul.f32 %v697, %v1290
    %v4204 = vmul.f32 %v701, %v1290
    %v4205 = vadd.f32 %v4185, %v4195
    %v4206 = vadd.f32 %v4186, %v4196
    %v4207 = vadd.f32 %v4187, %v4197
    %v4208 = vadd.f32 %v4188, %v4198
    %v4209 = vadd.f32 %v4189, %v4199
    %v4210 = vadd.f32 %v4190, %v4200
    %v4211 = vadd.f32 %v4191, %v4201
    %v4212 = vadd.f32 %v4192, %v4202
    %v4213 = vadd.f32 %v4193, %v4203
    %v4214 = vadd.f32 %v4194, %v4204
    %v4215 = vmul.f32 %v433, %v1366
    %v4216 = vmul.f32 %v437, %v1366
    %v4217 = vmul.f32 %v441, %v1366
    %v4218 = vmul.f32 %v445, %v1366
    %v4219 = vmul.f32 %v449, %v1366
    %v4220 = vmul.f32 %v457, %v1366
    %v4221 = vmul.f32 %v461, %v1366
    %v4222 = vmul.f32 %v465, %v1366
    %v4223 = vmul.f32 %v469, %v1366
    %v4224 = vmul.f32 %v473, %v1366
    %v4235 = vrot.slane %v4215, 1
    %v4236 = vrot.slane %v4216, 1
    %v4237 = vrot.slane %v4217, 1
    %v4238 = vrot.slane %v4218, 1
    %v4239 = vrot.slane %v4219, 1
    %v4240 = vrot.slane %v4220, 1
    %v4241 = vrot.slane %v4221, 1
    %v4242 = vrot.slane %v4222, 1
    %v4243 = vrot.slane %v4223, 1
    %v4244 = vrot.slane %v4224, 1
    %v4255 = vadd.f32 %v4205, %v4235
    %v4256 = vadd.f32 %v4206, %v4236
    %v4257 = vadd.f32 %v4207, %v4237
    %v4258 = vadd.f32 %v4208, %v4238
    %v4259 = vadd.f32 %v4209, %v4239
    %v4260 = vadd.f32 %v4210, %v4240
    %v4261 = vadd.f32 %v4211, %v4241
    %v4262 = vadd.f32 %v4212, %v4242
    %v4263 = vadd.f32 %v4213, %v4243
    %v4264 = vadd.f32 %v4214, %v4244
    %v4265 = vmul.f32 %v509, %v1442
    %v4266 = vmul.f32 %v513, %v1442
    %v4267 = vmul.f32 %v517, %v1442
    %v4268 = vmul.f32 %v521, %v1442
    %v4269 = vmul.f32 %v525, %v1442
    %v4270 = vmul.f32 %v533, %v1442
    %v4271 = vmul.f32 %v537, %v1442
    %v4272 = vmul.f32 %v541, %v1442
    %v4273 = vmul.f32 %v545, %v1442
    %v4274 = vmul.f32 %v549, %v1442
    %v4285 = vrot.slane %v4265, 1
    %v4286 = vrot.slane %v4266, 1
    %v4287 = vrot.slane %v4267, 1
    %v4288 = vrot.slane %v4268, 1
    %v4289 = vrot.slane %v4269, 1
    %v4290 = vrot.slane %v4270, 1
    %v4291 = vrot.slane %v4271, 1
    %v4292 = vrot.slane %v4272, 1
    %v4293 = vrot.slane %v4273, 1
    %v4294 = vrot.slane %v4274, 1
    %v4305 = vadd.f32 %v4255, %v4285
    %v4306 = vadd.f32 %v4256, %v4286
    %v4307 = vadd.f32 %v4257, %v4287
    %v4308 = vadd.f32 %v4258, %v4288
    %v4309 = vadd.f32 %v4259, %v4289
    %v4310 = vadd.f32 %v4260, %v4290
    %v4311 = vadd.f32 %v4261, %v4291
    %v4312 = vadd.f32 %v4262, %v4292
    %v4313 = vadd.f32 %v4263, %v4293
    %v4314 = vadd.f32 %v4264, %v4294
    %v4315 = vmul.f32 %v585, %v1470
    %v4316 = vmul.f32 %v589, %v1470
    %v4317 = vmul.f32 %v593, %v1470
    %v4318 = vmul.f32 %v597, %v1470
    %v4319 = vmul.f32 %v601, %v1470
    %v4320 = vmul.f32 %v609, %v1470
    %v4321 = vmul.f32 %v613, %v1470
    %v4322 = vmul.f32 %v617, %v1470
    %v4323 = vmul.f32 %v621, %v1470
    %v4324 = vmul.f32 %v625, %v1470
    %v4335 = vrot.slane %v4315, 1
    %v4336 = vrot.slane %v4316, 1
    %v4337 = vrot.slane %v4317, 1
    %v4338 = vrot.slane %v4318, 1
    %v4339 = vrot.slane %v4319, 1
    %v4340 = vrot.slane %v4320, 1
    %v4341 = vrot.slane %v4321, 1
    %v4342 = vrot.slane %v4322, 1
    %v4343 = vrot.slane %v4323, 1
    %v4344 = vrot.slane %v4324, 1
    %v4355 = vadd.f32 %v4305, %v4335
    %v4356 = vadd.f32 %v4306, %v4336
    %v4357 = vadd.f32 %v4307, %v4337
    %v4358 = vadd.f32 %v4308, %v4338
    %v4359 = vadd.f32 %v4309, %v4339
    %v4360 = vadd.f32 %v4310, %v4340
    %v4361 = vadd.f32 %v4311, %v4341
    %v4362 = vadd.f32 %v4312, %v4342
    %v4363 = vadd.f32 %v4313, %v4343
    %v4364 = vadd.f32 %v4314, %v4344
    %v4365 = vmul.f32 %v953, %v1544
    %v4366 = vmul.f32 %v957, %v1544
    %v4367 = vmul.f32 %v961, %v1544
    %v4368 = vmul.f32 %v965, %v1544
    %v4369 = vmul.f32 %v969, %v1544
    %v4370 = vmul.f32 %v977, %v1544
    %v4371 = vmul.f32 %v981, %v1544
    %v4372 = vmul.f32 %v985, %v1544
    %v4373 = vmul.f32 %v989, %v1544
    %v4374 = vmul.f32 %v993, %v1544
    %v4375 = vadd.f32 %v4355, %v4365
    %v4376 = vadd.f32 %v4356, %v4366
    %v4377 = vadd.f32 %v4357, %v4367
    %v4378 = vadd.f32 %v4358, %v4368
    %v4379 = vadd.f32 %v4359, %v4369
    %v4380 = vadd.f32 %v4360, %v4370
    %v4381 = vadd.f32 %v4361, %v4371
    %v4382 = vadd.f32 %v4362, %v4372
    %v4383 = vadd.f32 %v4363, %v4373
    %v4384 = vadd.f32 %v4364, %v4374
    %v4385 = vmul.f32 %v1029, %v1580
    %v4386 = vmul.f32 %v1033, %v1580
    %v4387 = vmul.f32 %v1037, %v1580
    %v4388 = vmul.f32 %v1041, %v1580
    %v4389 = vmul.f32 %v1045, %v1580
    %v4390 = vmul.f32 %v1053, %v1580
    %v4391 = vmul.f32 %v1057, %v1580
    %v4392 = vmul.f32 %v1061, %v1580
    %v4393 = vmul.f32 %v1065, %v1580
    %v4394 = vmul.f32 %v1069, %v1580
    %v4395 = vadd.f32 %v4375, %v4385
    %v4396 = vadd.f32 %v4376, %v4386
    %v4397 = vadd.f32 %v4377, %v4387
    %v4398 = vadd.f32 %v4378, %v4388
    %v4399 = vadd.f32 %v4379, %v4389
    %v4400 = vadd.f32 %v4380, %v4390
    %v4401 = vadd.f32 %v4381, %v4391
    %v4402 = vadd.f32 %v4382, %v4392
    %v4403 = vadd.f32 %v4383, %v4393
    %v4404 = vadd.f32 %v4384, %v4394
    %v4405 = vmul.f32 %v801, %v1616
    %v4406 = vmul.f32 %v805, %v1616
    %v4407 = vmul.f32 %v809, %v1616
    %v4408 = vmul.f32 %v813, %v1616
    %v4409 = vmul.f32 %v817, %v1616
    %v4410 = vmul.f32 %v825, %v1616
    %v4411 = vmul.f32 %v829, %v1616
    %v4412 = vmul.f32 %v833, %v1616
    %v4413 = vmul.f32 %v837, %v1616
    %v4414 = vmul.f32 %v841, %v1616
    %v4425 = vrot.slane %v4405, 1
    %v4426 = vrot.slane %v4406, 1
    %v4427 = vrot.slane %v4407, 1
    %v4428 = vrot.slane %v4408, 1
    %v4429 = vrot.slane %v4409, 1
    %v4430 = vrot.slane %v4410, 1
    %v4431 = vrot.slane %v4411, 1
    %v4432 = vrot.slane %v4412, 1
    %v4433 = vrot.slane %v4413, 1
    %v4434 = vrot.slane %v4414, 1
    %v4445 = vadd.f32 %v4395, %v4425
    %v4446 = vadd.f32 %v4396, %v4426
    %v4447 = vadd.f32 %v4397, %v4427
    %v4448 = vadd.f32 %v4398, %v4428
    %v4449 = vadd.f32 %v4399, %v4429
    %v4450 = vadd.f32 %v4400, %v4430
    %v4451 = vadd.f32 %v4401, %v4431
    %v4452 = vadd.f32 %v4402, %v4432
    %v4453 = vadd.f32 %v4403, %v4433
    %v4454 = vadd.f32 %v4404, %v4434
    %v4455 = vmul.f32 %v877, %v1652
    %v4456 = vmul.f32 %v881, %v1652
    %v4457 = vmul.f32 %v885, %v1652
    %v4458 = vmul.f32 %v889, %v1652
    %v4459 = vmul.f32 %v893, %v1652
    %v4460 = vmul.f32 %v901, %v1652
    %v4461 = vmul.f32 %v905, %v1652
    %v4462 = vmul.f32 %v909, %v1652
    %v4463 = vmul.f32 %v913, %v1652
    %v4464 = vmul.f32 %v917, %v1652
    %v4475 = vrot.slane %v4455, 1
    %v4476 = vrot.slane %v4456, 1
    %v4477 = vrot.slane %v4457, 1
    %v4478 = vrot.slane %v4458, 1
    %v4479 = vrot.slane %v4459, 1
    %v4480 = vrot.slane %v4460, 1
    %v4481 = vrot.slane %v4461, 1
    %v4482 = vrot.slane %v4462, 1
    %v4483 = vrot.slane %v4463, 1
    %v4484 = vrot.slane %v4464, 1
    %v4495 = vadd.f32 %v4445, %v4475
    %v4496 = vadd.f32 %v4446, %v4476
    %v4497 = vadd.f32 %v4447, %v4477
    %v4498 = vadd.f32 %v4448, %v4478
    %v4499 = vadd.f32 %v4449, %v4479
    %v4500 = vadd.f32 %v4450, %v4480
    %v4501 = vadd.f32 %v4451, %v4481
    %v4502 = vadd.f32 %v4452, %v4482
    %v4503 = vadd.f32 %v4453, %v4483
    %v4504 = vadd.f32 %v4454, %v4484
    %v4505 = vmul.f32 %v953, %v1680
    %v4506 = vmul.f32 %v957, %v1680
    %v4507 = vmul.f32 %v961, %v1680
    %v4508 = vmul.f32 %v965, %v1680
    %v4509 = vmul.f32 %v969, %v1680
    %v4510 = vmul.f32 %v977, %v1680
    %v4511 = vmul.f32 %v981, %v1680
    %v4512 = vmul.f32 %v985, %v1680
    %v4513 = vmul.f32 %v989, %v1680
    %v4514 = vmul.f32 %v993, %v1680
    %v4525 = vrot.slane %v4505, 1
    %v4526 = vrot.slane %v4506, 1
    %v4527 = vrot.slane %v4507, 1
    %v4528 = vrot.slane %v4508, 1
    %v4529 = vrot.slane %v4509, 1
    %v4530 = vrot.slane %v4510, 1
    %v4531 = vrot.slane %v4511, 1
    %v4532 = vrot.slane %v4512, 1
    %v4533 = vrot.slane %v4513, 1
    %v4534 = vrot.slane %v4514, 1
    %v4545 = vadd.f32 %v4495, %v4525
    %v4546 = vadd.f32 %v4496, %v4526
    %v4547 = vadd.f32 %v4497, %v4527
    %v4548 = vadd.f32 %v4498, %v4528
    %v4549 = vadd.f32 %v4499, %v4529
    %v4550 = vadd.f32 %v4500, %v4530
    %v4551 = vadd.f32 %v4501, %v4531
    %v4552 = vadd.f32 %v4502, %v4532
    %v4553 = vadd.f32 %v4503, %v4533
    %v4554 = vadd.f32 %v4504, %v4534
    %v4555 = vadd.f32 %v4545, %v1745
    %v4556 = vadd.f32 %v4546, %v1745
    %v4557 = vadd.f32 %v4547, %v1745
    %v4558 = vadd.f32 %v4548, %v1745
    %v4559 = vadd.f32 %v4549, %v1745
    %v4560 = vadd.f32 %v4550, %v1745
    %v4561 = vadd.f32 %v4551, %v1745
    %v4562 = vadd.f32 %v4552, %v1745
    %v4563 = vadd.f32 %v4553, %v1745
    %v4564 = vadd.f32 %v4554, %v1745
    %v4565 = vmax.f32 %v4555, 0.0
    %v4566 = vmax.f32 %v4556, 0.0
    %v4567 = vmax.f32 %v4557, 0.0
    %v4568 = vmax.f32 %v4558, 0.0
    %v4569 = vmax.f32 %v4559, 0.0
    %v4570 = vmax.f32 %v4560, 0.0
    %v4571 = vmax.f32 %v4561, 0.0
    %v4572 = vmax.f32 %v4562, 0.0
    %v4573 = vmax.f32 %v4563, 0.0
    %v4574 = vmax.f32 %v4564, 0.0
    %4583 = vrot.lane.b32.xlu0 %v2923, 16
    %v4584 = vpop.permute.xlu0 %4583
    %4585 = vrot.lane.b32.xlu0 %v2924, 16
    %v4586 = vpop.permute.xlu0 %4585
    %4587 = vrot.lane.b32.xlu0 %v2925, 16
    %v4588 = vpop.permute.xlu0 %4587
    %4589 = vrot.lane.b32.xlu0 %v2926, 16
    %v4590 = vpop.permute.xlu0 %4589
    %4591 = vrot.lane.b32.xlu0 %v2929, 16
    %v4592 = vpop.permute.xlu0 %4591
    %4593 = vrot.lane.b32.xlu0 %v2930, 16
    %v4594 = vpop.permute.xlu0 %4593
    %4595 = vrot.lane.b32.xlu0 %v2931, 16
    %v4596 = vpop.permute.xlu0 %4595
    %4597 = vrot.lane.b32.xlu0 %v2932, 16
    %v4598 = vpop.permute.xlu0 %4597
    %v4615 = vrot.slane %v1759, 1
    %v4616 = vrot.slane %v1760, 1
    %v4617 = vrot.slane %v1761, 1
    %v4618 = vrot.slane %v1762, 1
    %v4619 = vrot.slane %v1765, 1
    %v4620 = vrot.slane %v1766, 1
    %v4621 = vrot.slane %v1767, 1
    %v4622 = vrot.slane %v1768, 1
    %4623 = vrot.lane.b32.xlu0 %v4615, 32
    %v4624 = vpop.permute.xlu0 %4623
    %4625 = vrot.lane.b32.xlu0 %v4616, 32
    %v4626 = vpop.permute.xlu0 %4625
    %4627 = vrot.lane.b32.xlu0 %v4617, 32
    %v4628 = vpop.permute.xlu0 %4627
    %4629 = vrot.lane.b32.xlu0 %v4618, 32
    %v4630 = vpop.permute.xlu0 %4629
    %4631 = vrot.lane.b32.xlu0 %v4619, 32
    %v4632 = vpop.permute.xlu0 %4631
    %4633 = vrot.lane.b32.xlu0 %v4620, 32
    %v4634 = vpop.permute.xlu0 %4633
    %4635 = vrot.lane.b32.xlu0 %v4621, 32
    %v4636 = vpop.permute.xlu0 %4635
    %4637 = vrot.lane.b32.xlu0 %v4622, 32
    %v4638 = vpop.permute.xlu0 %4637
    %v4647 = vrot.slane %v2923, 1
    %v4648 = vrot.slane %v2924, 1
    %v4649 = vrot.slane %v2925, 1
    %v4650 = vrot.slane %v2926, 1
    %v4651 = vrot.slane %v2929, 1
    %v4652 = vrot.slane %v2930, 1
    %v4653 = vrot.slane %v2931, 1
    %v4654 = vrot.slane %v2932, 1
    %4655 = vrot.lane.b32.xlu0 %v4647, 48
    %v4656 = vpop.permute.xlu0 %4655
    %4657 = vrot.lane.b32.xlu0 %v4648, 48
    %v4658 = vpop.permute.xlu0 %4657
    %4659 = vrot.lane.b32.xlu0 %v4649, 48
    %v4660 = vpop.permute.xlu0 %4659
    %4661 = vrot.lane.b32.xlu0 %v4650, 48
    %v4662 = vpop.permute.xlu0 %4661
    %4663 = vrot.lane.b32.xlu0 %v4651, 48
    %v4664 = vpop.permute.xlu0 %4663
    %4665 = vrot.lane.b32.xlu0 %v4652, 48
    %v4666 = vpop.permute.xlu0 %4665
    %4667 = vrot.lane.b32.xlu0 %v4653, 48
    %v4668 = vpop.permute.xlu0 %4667
    %4669 = vrot.lane.b32.xlu0 %v4654, 48
    %v4670 = vpop.permute.xlu0 %4669
    %v4679 = vrot.slane %v1759, 2
    %v4680 = vrot.slane %v1760, 2
    %v4681 = vrot.slane %v1761, 2
    %v4682 = vrot.slane %v1762, 2
    %v4683 = vrot.slane %v1765, 2
    %v4684 = vrot.slane %v1766, 2
    %v4685 = vrot.slane %v1767, 2
    %v4686 = vrot.slane %v1768, 2
    %4687 = vrot.lane.b32.xlu0 %v4679, 64
    %v4688 = vpop.permute.xlu0 %4687
    %4689 = vrot.lane.b32.xlu0 %v4680, 64
    %v4690 = vpop.permute.xlu0 %4689
    %4691 = vrot.lane.b32.xlu0 %v4681, 64
    %v4692 = vpop.permute.xlu0 %4691
    %4693 = vrot.lane.b32.xlu0 %v4682, 64
    %v4694 = vpop.permute.xlu0 %4693
    %4695 = vrot.lane.b32.xlu0 %v4683, 64
    %v4696 = vpop.permute.xlu0 %4695
    %4697 = vrot.lane.b32.xlu0 %v4684, 64
    %v4698 = vpop.permute.xlu0 %4697
    %4699 = vrot.lane.b32.xlu0 %v4685, 64
    %v4700 = vpop.permute.xlu0 %4699
    %4701 = vrot.lane.b32.xlu0 %v4686, 64
    %v4702 = vpop.permute.xlu0 %4701
    %4719 = vrot.lane.b32.xlu0 %v3595, 80
    %v4720 = vpop.permute.xlu0 %4719
    %4721 = vrot.lane.b32.xlu0 %v3596, 80
    %v4722 = vpop.permute.xlu0 %4721
    %4723 = vrot.lane.b32.xlu0 %v3597, 80
    %v4724 = vpop.permute.xlu0 %4723
    %4725 = vrot.lane.b32.xlu0 %v3598, 80
    %v4726 = vpop.permute.xlu0 %4725
    %4727 = vrot.lane.b32.xlu0 %v3600, 80
    %v4728 = vpop.permute.xlu0 %4727
    %4729 = vrot.lane.b32.xlu0 %v3601, 80
    %v4730 = vpop.permute.xlu0 %4729
    %4731 = vrot.lane.b32.xlu0 %v3602, 80
    %v4732 = vpop.permute.xlu0 %4731
    %4733 = vrot.lane.b32.xlu0 %v3603, 80
    %v4734 = vpop.permute.xlu0 %4733
    %4751 = vrot.lane.b32.xlu0 %v4565, 96
    %v4752 = vpop.permute.xlu0 %4751
    %4753 = vrot.lane.b32.xlu0 %v4566, 96
    %v4754 = vpop.permute.xlu0 %4753
    %4755 = vrot.lane.b32.xlu0 %v4567, 96
    %v4756 = vpop.permute.xlu0 %4755
    %4757 = vrot.lane.b32.xlu0 %v4568, 96
    %v4758 = vpop.permute.xlu0 %4757
    %4759 = vrot.lane.b32.xlu0 %v4570, 96
    %v4760 = vpop.permute.xlu0 %4759
    %4761 = vrot.lane.b32.xlu0 %v4571, 96
    %v4762 = vpop.permute.xlu0 %4761
    %4763 = vrot.lane.b32.xlu0 %v4572, 96
    %v4764 = vpop.permute.xlu0 %4763
    %4765 = vrot.lane.b32.xlu0 %v4573, 96
    %v4766 = vpop.permute.xlu0 %4765
    %v4775 = vrot.slane %v3595, 1
    %v4776 = vrot.slane %v3596, 1
    %v4777 = vrot.slane %v3597, 1
    %v4778 = vrot.slane %v3598, 1
    %v4779 = vrot.slane %v3600, 1
    %v4780 = vrot.slane %v3601, 1
    %v4781 = vrot.slane %v3602, 1
    %v4782 = vrot.slane %v3603, 1
    %4783 = vrot.lane.b32.xlu0 %v4775, 112
    %v4784 = vpop.permute.xlu0 %4783
    %4785 = vrot.lane.b32.xlu0 %v4776, 112
    %v4786 = vpop.permute.xlu0 %4785
    %4787 = vrot.lane.b32.xlu0 %v4777, 112
    %v4788 = vpop.permute.xlu0 %4787
    %4789 = vrot.lane.b32.xlu0 %v4778, 112
    %v4790 = vpop.permute.xlu0 %4789
    %4791 = vrot.lane.b32.xlu0 %v4779, 112
    %v4792 = vpop.permute.xlu0 %4791
    %4793 = vrot.lane.b32.xlu0 %v4780, 112
    %v4794 = vpop.permute.xlu0 %4793
    %4795 = vrot.lane.b32.xlu0 %v4781, 112
    %v4796 = vpop.permute.xlu0 %4795
    %4797 = vrot.lane.b32.xlu0 %v4782, 112
    %v4798 = vpop.permute.xlu0 %4797
    %v4807 = vrot.slane %v4565, 1
    %v4808 = vrot.slane %v4566, 1
    %v4809 = vrot.slane %v4567, 1
    %v4810 = vrot.slane %v4568, 1
    %v4811 = vrot.slane %v4570, 1
    %v4812 = vrot.slane %v4571, 1
    %v4813 = vrot.slane %v4572, 1
    %v4814 = vrot.slane %v4573, 1
    %v4823 = vrot.slane %v3595, 2
    %v4824 = vrot.slane %v3596, 2
    %v4825 = vrot.slane %v3597, 2
    %v4826 = vrot.slane %v3598, 2
    %v4827 = vrot.slane %v3600, 2
    %v4828 = vrot.slane %v3601, 2
    %v4829 = vrot.slane %v3602, 2
    %v4830 = vrot.slane %v3603, 2
    %4831 = vrot.lane.b32.xlu0 %v4823, 16
    %v4832 = vpop.permute.xlu0 %4831
    %4833 = vrot.lane.b32.xlu0 %v4824, 16
    %v4834 = vpop.permute.xlu0 %4833
    %4835 = vrot.lane.b32.xlu0 %v4825, 16
    %v4836 = vpop.permute.xlu0 %4835
    %4837 = vrot.lane.b32.xlu0 %v4826, 16
    %v4838 = vpop.permute.xlu0 %4837
    %4839 = vrot.lane.b32.xlu0 %v4827, 16
    %v4840 = vpop.permute.xlu0 %4839
    %4841 = vrot.lane.b32.xlu0 %v4828, 16
    %v4842 = vpop.permute.xlu0 %4841
    %4843 = vrot.lane.b32.xlu0 %v4829, 16
    %v4844 = vpop.permute.xlu0 %4843
    %4845 = vrot.lane.b32.xlu0 %v4830, 16
    %v4846 = vpop.permute.xlu0 %4845
    %4857 = vrot.lane.b32.xlu0 %v1760, 32
    %v4858 = vpop.permute.xlu0 %4857
    %4859 = vrot.lane.b32.xlu0 %v1761, 32
    %v4860 = vpop.permute.xlu0 %4859
    %4861 = vrot.lane.b32.xlu0 %v1762, 32
    %v4862 = vpop.permute.xlu0 %4861
    %4863 = vrot.lane.b32.xlu0 %v1763, 32
    %v4864 = vpop.permute.xlu0 %4863
    %4865 = vrot.lane.b32.xlu0 %v1766, 32
    %v4866 = vpop.permute.xlu0 %4865
    %4867 = vrot.lane.b32.xlu0 %v1767, 32
    %v4868 = vpop.permute.xlu0 %4867
    %4869 = vrot.lane.b32.xlu0 %v1768, 32
    %v4870 = vpop.permute.xlu0 %4869
    %4871 = vrot.lane.b32.xlu0 %v1769, 32
    %v4872 = vpop.permute.xlu0 %4871
    %4883 = vrot.lane.b32.xlu0 %v2924, 48
    %v4884 = vpop.permute.xlu0 %4883
    %4885 = vrot.lane.b32.xlu0 %v2925, 48
    %v4886 = vpop.permute.xlu0 %4885
    %4887 = vrot.lane.b32.xlu0 %v2926, 48
    %v4888 = vpop.permute.xlu0 %4887
    %4889 = vrot.lane.b32.xlu0 %v2927, 48
    %v4890 = vpop.permute.xlu0 %4889
    %4891 = vrot.lane.b32.xlu0 %v2930, 48
    %v4892 = vpop.permute.xlu0 %4891
    %4893 = vrot.lane.b32.xlu0 %v2931, 48
    %v4894 = vpop.permute.xlu0 %4893
    %4895 = vrot.lane.b32.xlu0 %v2932, 48
    %v4896 = vpop.permute.xlu0 %4895
    %4897 = vrot.lane.b32.xlu0 %v2933, 48
    %v4898 = vpop.permute.xlu0 %4897
    %v4907 = vrot.slane %v1763, 1
    %v4908 = vrot.slane %v1769, 1
    %4909 = vrot.lane.b32.xlu0 %v4616, 64
    %v4910 = vpop.permute.xlu0 %4909
    %4911 = vrot.lane.b32.xlu0 %v4617, 64
    %v4912 = vpop.permute.xlu0 %4911
    %4913 = vrot.lane.b32.xlu0 %v4618, 64
    %v4914 = vpop.permute.xlu0 %4913
    %4915 = vrot.lane.b32.xlu0 %v4907, 64
    %v4916 = vpop.permute.xlu0 %4915
    %4917 = vrot.lane.b32.xlu0 %v4620, 64
    %v4918 = vpop.permute.xlu0 %4917
    %4919 = vrot.lane.b32.xlu0 %v4621, 64
    %v4920 = vpop.permute.xlu0 %4919
    %4921 = vrot.lane.b32.xlu0 %v4622, 64
    %v4922 = vpop.permute.xlu0 %4921
    %4923 = vrot.lane.b32.xlu0 %v4908, 64
    %v4924 = vpop.permute.xlu0 %4923
    %v4933 = vrot.slane %v2927, 1
    %v4934 = vrot.slane %v2933, 1
    %4935 = vrot.lane.b32.xlu0 %v4648, 80
    %v4936 = vpop.permute.xlu0 %4935
    %4937 = vrot.lane.b32.xlu0 %v4649, 80
    %v4938 = vpop.permute.xlu0 %4937
    %4939 = vrot.lane.b32.xlu0 %v4650, 80
    %v4940 = vpop.permute.xlu0 %4939
    %4941 = vrot.lane.b32.xlu0 %v4933, 80
    %v4942 = vpop.permute.xlu0 %4941
    %4943 = vrot.lane.b32.xlu0 %v4652, 80
    %v4944 = vpop.permute.xlu0 %4943
    %4945 = vrot.lane.b32.xlu0 %v4653, 80
    %v4946 = vpop.permute.xlu0 %4945
    %4947 = vrot.lane.b32.xlu0 %v4654, 80
    %v4948 = vpop.permute.xlu0 %4947
    %4949 = vrot.lane.b32.xlu0 %v4934, 80
    %v4950 = vpop.permute.xlu0 %4949
    %v4959 = vrot.slane %v1763, 2
    %v4960 = vrot.slane %v1769, 2
    %4961 = vrot.lane.b32.xlu0 %v4680, 96
    %v4962 = vpop.permute.xlu0 %4961
    %4963 = vrot.lane.b32.xlu0 %v4681, 96
    %v4964 = vpop.permute.xlu0 %4963
    %4965 = vrot.lane.b32.xlu0 %v4682, 96
    %v4966 = vpop.permute.xlu0 %4965
    %4967 = vrot.lane.b32.xlu0 %v4959, 96
    %v4968 = vpop.permute.xlu0 %4967
    %4969 = vrot.lane.b32.xlu0 %v4684, 96
    %v4970 = vpop.permute.xlu0 %4969
    %4971 = vrot.lane.b32.xlu0 %v4685, 96
    %v4972 = vpop.permute.xlu0 %4971
    %4973 = vrot.lane.b32.xlu0 %v4686, 96
    %v4974 = vpop.permute.xlu0 %4973
    %4975 = vrot.lane.b32.xlu0 %v4960, 96
    %v4976 = vpop.permute.xlu0 %4975
    %4987 = vrot.lane.b32.xlu0 %v3596, 112
    %v4988 = vpop.permute.xlu0 %4987
    %4989 = vrot.lane.b32.xlu0 %v3597, 112
    %v4990 = vpop.permute.xlu0 %4989
    %4991 = vrot.lane.b32.xlu0 %v3598, 112
    %v4992 = vpop.permute.xlu0 %4991
    %4993 = vrot.lane.b32.xlu0 %v3599, 112
    %v4994 = vpop.permute.xlu0 %4993
    %4995 = vrot.lane.b32.xlu0 %v3601, 112
    %v4996 = vpop.permute.xlu0 %4995
    %4997 = vrot.lane.b32.xlu0 %v3602, 112
    %v4998 = vpop.permute.xlu0 %4997
    %4999 = vrot.lane.b32.xlu0 %v3603, 112
    %v5000 = vpop.permute.xlu0 %4999
    %5001 = vrot.lane.b32.xlu0 %v3604, 112
    %v5002 = vpop.permute.xlu0 %5001
    %vm5011 = vcmask 130048
    %v5012 = vsel %vm5011, %v1759, %v4584
    %v5013 = vsel %vm5011, %v1760, %v4586
    %v5014 = vsel %vm5011, %v1761, %v4588
    %v5015 = vsel %vm5011, %v1762, %v4590
    %v5016 = vsel %vm5011, %v1765, %v4592
    %v5017 = vsel %vm5011, %v1766, %v4594
    %v5018 = vsel %vm5011, %v1767, %v4596
    %v5019 = vsel %vm5011, %v1768, %v4598
    %vm5020 = vcmask 261120
    %v5021 = vsel %vm5020, %v5012, %v4624
    %v5022 = vsel %vm5020, %v5013, %v4626
    %v5023 = vsel %vm5020, %v5014, %v4628
    %v5024 = vsel %vm5020, %v5015, %v4630
    %v5025 = vsel %vm5020, %v5016, %v4632
    %v5026 = vsel %vm5020, %v5017, %v4634
    %v5027 = vsel %vm5020, %v5018, %v4636
    %v5028 = vsel %vm5020, %v5019, %v4638
    %vm5029 = vcmask 392192
    %v5030 = vsel %vm5029, %v5021, %v4656
    %v5031 = vsel %vm5029, %v5022, %v4658
    %v5032 = vsel %vm5029, %v5023, %v4660
    %v5033 = vsel %vm5029, %v5024, %v4662
    %v5034 = vsel %vm5029, %v5025, %v4664
    %v5035 = vsel %vm5029, %v5026, %v4666
    %v5036 = vsel %vm5029, %v5027, %v4668
    %v5037 = vsel %vm5029, %v5028, %v4670
    %vm5038 = vcmask 523264
    %v5039 = vsel %vm5038, %v5030, %v4688
    %v5040 = vsel %vm5038, %v5031, %v4690
    %v5041 = vsel %vm5038, %v5032, %v4692
    %v5042 = vsel %vm5038, %v5033, %v4694
    %v5043 = vsel %vm5038, %v5034, %v4696
    %v5044 = vsel %vm5038, %v5035, %v4698
    %v5045 = vsel %vm5038, %v5036, %v4700
    %v5046 = vsel %vm5038, %v5037, %v4702
    %vm5047 = vcmask 654336
    %v5048 = vsel %vm5047, %v5039, %v4720
    %v5049 = vsel %vm5047, %v5040, %v4722
    %v5050 = vsel %vm5047, %v5041, %v4724
    %v5051 = vsel %vm5047, %v5042, %v4726
    %v5052 = vsel %vm5047, %v5043, %v4728
    %v5053 = vsel %vm5047, %v5044, %v4730
    %v5054 = vsel %vm5047, %v5045, %v4732
    %v5055 = vsel %vm5047, %v5046, %v4734
    %vm5056 = vcmask 785408
    %v5057 = vsel %vm5056, %v5048, %v4752
    %v5058 = vsel %vm5056, %v5049, %v4754
    %v5059 = vsel %vm5056, %v5050, %v4756
    %v5060 = vsel %vm5056, %v5051, %v4758
    %v5061 = vsel %vm5056, %v5052, %v4760
    %v5062 = vsel %vm5056, %v5053, %v4762
    %v5063 = vsel %vm5056, %v5054, %v4764
    %v5064 = vsel %vm5056, %v5055, %v4766
    %vm5065 = vcmask 916480
    %v5066 = vsel %vm5065, %v5057, %v4784
    %v5067 = vsel %vm5065, %v5058, %v4786
    %v5068 = vsel %vm5065, %v5059, %v4788
    %v5069 = vsel %vm5065, %v5060, %v4790
    %v5070 = vsel %vm5065, %v5061, %v4792
    %v5071 = vsel %vm5065, %v5062, %v4794
    %v5072 = vsel %vm5065, %v5063, %v4796
    %v5073 = vsel %vm5065, %v5064, %v4798
    %v5074 = vsel %vm5011, %v4807, %v4832
    %v5075 = vsel %vm5011, %v4808, %v4834
    %v5076 = vsel %vm5011, %v4809, %v4836
    %v5077 = vsel %vm5011, %v4810, %v4838
    %v5078 = vsel %vm5011, %v4811, %v4840
    %v5079 = vsel %vm5011, %v4812, %v4842
    %v5080 = vsel %vm5011, %v4813, %v4844
    %v5081 = vsel %vm5011, %v4814, %v4846
    %v5082 = vsel %vm5020, %v5074, %v4858
    %v5083 = vsel %vm5020, %v5075, %v4860
    %v5084 = vsel %vm5020, %v5076, %v4862
    %v5085 = vsel %vm5020, %v5077, %v4864
    %v5086 = vsel %vm5020, %v5078, %v4866
    %v5087 = vsel %vm5020, %v5079, %v4868
    %v5088 = vsel %vm5020, %v5080, %v4870
    %v5089 = vsel %vm5020, %v5081, %v4872
    %v5090 = vsel %vm5029, %v5082, %v4884
    %v5091 = vsel %vm5029, %v5083, %v4886
    %v5092 = vsel %vm5029, %v5084, %v4888
    %v5093 = vsel %vm5029, %v5085, %v4890
    %v5094 = vsel %vm5029, %v5086, %v4892
    %v5095 = vsel %vm5029, %v5087, %v4894
    %v5096 = vsel %vm5029, %v5088, %v4896
    %v5097 = vsel %vm5029, %v5089, %v4898
    %v5098 = vsel %vm5038, %v5090, %v4910
    %v5099 = vsel %vm5038, %v5091, %v4912
    %v5100 = vsel %vm5038, %v5092, %v4914
    %v5101 = vsel %vm5038, %v5093, %v4916
    %v5102 = vsel %vm5038, %v5094, %v4918
    %v5103 = vsel %vm5038, %v5095, %v4920
    %v5104 = vsel %vm5038, %v5096, %v4922
    %v5105 = vsel %vm5038, %v5097, %v4924
    %v5106 = vsel %vm5047, %v5098, %v4936
    %v5107 = vsel %vm5047, %v5099, %v4938
    %v5108 = vsel %vm5047, %v5100, %v4940
    %v5109 = vsel %vm5047, %v5101, %v4942
    %v5110 = vsel %vm5047, %v5102, %v4944
    %v5111 = vsel %vm5047, %v5103, %v4946
    %v5112 = vsel %vm5047, %v5104, %v4948
    %v5113 = vsel %vm5047, %v5105, %v4950
    %v5114 = vsel %vm5056, %v5106, %v4962
    %v5115 = vsel %vm5056, %v5107, %v4964
    %v5116 = vsel %vm5056, %v5108, %v4966
    %v5117 = vsel %vm5056, %v5109, %v4968
    %v5118 = vsel %vm5056, %v5110, %v4970
    %v5119 = vsel %vm5056, %v5111, %v4972
    %v5120 = vsel %vm5056, %v5112, %v4974
    %v5121 = vsel %vm5056, %v5113, %v4976
    %v5122 = vsel %vm5065, %v5114, %v4988
    %v5123 = vsel %vm5065, %v5115, %v4990
    %v5124 = vsel %vm5065, %v5116, %v4992
    %v5125 = vsel %vm5065, %v5117, %v4994
    %v5126 = vsel %vm5065, %v5118, %v4996
    %v5127 = vsel %vm5065, %v5119, %v4998
    %v5128 = vsel %vm5065, %v5120, %v5000
    %v5129 = vsel %vm5065, %v5121, %v5002
    %v5130 = vrot.slane %v3599, 1
    %v5131 = vrot.slane %v3604, 1
    %5132 = vrot.lane.b32.xlu0 %v4776, 16
    %v5133 = vpop.permute.xlu0 %5132
    %5134 = vrot.lane.b32.xlu0 %v4777, 16
    %v5135 = vpop.permute.xlu0 %5134
    %5136 = vrot.lane.b32.xlu0 %v4778, 16
    %v5137 = vpop.permute.xlu0 %5136
    %5138 = vrot.lane.b32.xlu0 %v5130, 16
    %v5139 = vpop.permute.xlu0 %5138
    %5140 = vrot.lane.b32.xlu0 %v4780, 16
    %v5141 = vpop.permute.xlu0 %5140
    %5142 = vrot.lane.b32.xlu0 %v4781, 16
    %v5143 = vpop.permute.xlu0 %5142
    %5144 = vrot.lane.b32.xlu0 %v4782, 16
    %v5145 = vpop.permute.xlu0 %5144
    %5146 = vrot.lane.b32.xlu0 %v5131, 16
    %v5147 = vpop.permute.xlu0 %5146
    %v5158 = vrot.slane %v4569, 1
    %v5159 = vrot.slane %v4574, 1
    %5160 = vrot.lane.b32.xlu0 %v4808, 32
    %v5161 = vpop.permute.xlu0 %5160
    %5162 = vrot.lane.b32.xlu0 %v4809, 32
    %v5163 = vpop.permute.xlu0 %5162
    %5164 = vrot.lane.b32.xlu0 %v4810, 32
    %v5165 = vpop.permute.xlu0 %5164
    %5166 = vrot.lane.b32.xlu0 %v5158, 32
    %v5167 = vpop.permute.xlu0 %5166
    %5168 = vrot.lane.b32.xlu0 %v4812, 32
    %v5169 = vpop.permute.xlu0 %5168
    %5170 = vrot.lane.b32.xlu0 %v4813, 32
    %v5171 = vpop.permute.xlu0 %5170
    %5172 = vrot.lane.b32.xlu0 %v4814, 32
    %v5173 = vpop.permute.xlu0 %5172
    %5174 = vrot.lane.b32.xlu0 %v5159, 32
    %v5175 = vpop.permute.xlu0 %5174
    %v5184 = vrot.slane %v3599, 2
    %v5185 = vrot.slane %v3604, 2
    %5186 = vrot.lane.b32.xlu0 %v4824, 48
    %v5187 = vpop.permute.xlu0 %5186
    %5188 = vrot.lane.b32.xlu0 %v4825, 48
    %v5189 = vpop.permute.xlu0 %5188
    %5190 = vrot.lane.b32.xlu0 %v4826, 48
    %v5191 = vpop.permute.xlu0 %5190
    %5192 = vrot.lane.b32.xlu0 %v5184, 48
    %v5193 = vpop.permute.xlu0 %5192
    %5194 = vrot.lane.b32.xlu0 %v4828, 48
    %v5195 = vpop.permute.xlu0 %5194
    %5196 = vrot.lane.b32.xlu0 %v4829, 48
    %v5197 = vpop.permute.xlu0 %5196
    %5198 = vrot.lane.b32.xlu0 %v4830, 48
    %v5199 = vpop.permute.xlu0 %5198
    %5200 = vrot.lane.b32.xlu0 %v5185, 48
    %v5201 = vpop.permute.xlu0 %5200
    %5212 = vrot.lane.b32.xlu0 %v1761, 64
    %v5213 = vpop.permute.xlu0 %5212
    %5214 = vrot.lane.b32.xlu0 %v1762, 64
    %v5215 = vpop.permute.xlu0 %5214
    %5216 = vrot.lane.b32.xlu0 %v1763, 64
    %v5217 = vpop.permute.xlu0 %5216
    %5218 = vrot.lane.b32.xlu0 %v1764, 64
    %v5219 = vpop.permute.xlu0 %5218
    %5220 = vrot.lane.b32.xlu0 %v1767, 64
    %v5221 = vpop.permute.xlu0 %5220
    %5222 = vrot.lane.b32.xlu0 %v1768, 64
    %v5223 = vpop.permute.xlu0 %5222
    %5224 = vrot.lane.b32.xlu0 %v1769, 64
    %v5225 = vpop.permute.xlu0 %5224
    %5226 = vrot.lane.b32.xlu0 %v1770, 64
    %v5227 = vpop.permute.xlu0 %5226
    %5238 = vrot.lane.b32.xlu0 %v2925, 80
    %v5239 = vpop.permute.xlu0 %5238
    %5240 = vrot.lane.b32.xlu0 %v2926, 80
    %v5241 = vpop.permute.xlu0 %5240
    %5242 = vrot.lane.b32.xlu0 %v2927, 80
    %v5243 = vpop.permute.xlu0 %5242
    %5244 = vrot.lane.b32.xlu0 %v2928, 80
    %v5245 = vpop.permute.xlu0 %5244
    %5246 = vrot.lane.b32.xlu0 %v2931, 80
    %v5247 = vpop.permute.xlu0 %5246
    %5248 = vrot.lane.b32.xlu0 %v2932, 80
    %v5249 = vpop.permute.xlu0 %5248
    %5250 = vrot.lane.b32.xlu0 %v2933, 80
    %v5251 = vpop.permute.xlu0 %5250
    %5252 = vrot.lane.b32.xlu0 %v2934, 80
    %v5253 = vpop.permute.xlu0 %5252
    %v5262 = vrot.slane %v1764, 1
    %v5263 = vrot.slane %v1770, 1
    %5264 = vrot.lane.b32.xlu0 %v4617, 96
    %v5265 = vpop.permute.xlu0 %5264
    %5266 = vrot.lane.b32.xlu0 %v4618, 96
    %v5267 = vpop.permute.xlu0 %5266
    %5268 = vrot.lane.b32.xlu0 %v4907, 96
    %v5269 = vpop.permute.xlu0 %5268
    %5270 = vrot.lane.b32.xlu0 %v5262, 96
    %v5271 = vpop.permute.xlu0 %5270
    %5272 = vrot.lane.b32.xlu0 %v4621, 96
    %v5273 = vpop.permute.xlu0 %5272
    %5274 = vrot.lane.b32.xlu0 %v4622, 96
    %v5275 = vpop.permute.xlu0 %5274
    %5276 = vrot.lane.b32.xlu0 %v4908, 96
    %v5277 = vpop.permute.xlu0 %5276
    %5278 = vrot.lane.b32.xlu0 %v5263, 96
    %v5279 = vpop.permute.xlu0 %5278
    %v5288 = vrot.slane %v2928, 1
    %v5289 = vrot.slane %v2934, 1
    %5290 = vrot.lane.b32.xlu0 %v4649, 112
    %v5291 = vpop.permute.xlu0 %5290
    %5292 = vrot.lane.b32.xlu0 %v4650, 112
    %v5293 = vpop.permute.xlu0 %5292
    %5294 = vrot.lane.b32.xlu0 %v4933, 112
    %v5295 = vpop.permute.xlu0 %5294
    %5296 = vrot.lane.b32.xlu0 %v5288, 112
    %v5297 = vpop.permute.xlu0 %5296
    %5298 = vrot.lane.b32.xlu0 %v4653, 112
    %v5299 = vpop.permute.xlu0 %5298
    %5300 = vrot.lane.b32.xlu0 %v4654, 112
    %v5301 = vpop.permute.xlu0 %5300
    %5302 = vrot.lane.b32.xlu0 %v4934, 112
    %v5303 = vpop.permute.xlu0 %5302
    %5304 = vrot.lane.b32.xlu0 %v5289, 112
    %v5305 = vpop.permute.xlu0 %5304
    %v5314 = vrot.slane %v1764, 2
    %v5315 = vrot.slane %v1770, 2
    %v5316 = vsel %vm5011, %v4566, %v5133
    %v5317 = vsel %vm5011, %v4567, %v5135
    %v5318 = vsel %vm5011, %v4568, %v5137
    %v5319 = vsel %vm5011, %v4569, %v5139
    %v5320 = vsel %vm5011, %v4571, %v5141
    %v5321 = vsel %vm5011, %v4572, %v5143
    %v5322 = vsel %vm5011, %v4573, %v5145
    %v5323 = vsel %vm5011, %v4574, %v5147
    %v5324 = vsel %vm5020, %v5316, %v5161
    %v5325 = vsel %vm5020, %v5317, %v5163
    %v5326 = vsel %vm5020, %v5318, %v5165
    %v5327 = vsel %vm5020, %v5319, %v5167
    %v5328 = vsel %vm5020, %v5320, %v5169
    %v5329 = vsel %vm5020, %v5321, %v5171
    %v5330 = vsel %vm5020, %v5322, %v5173
    %v5331 = vsel %vm5020, %v5323, %v5175
    %v5332 = vsel %vm5029, %v5324, %v5187
    %v5333 = vsel %vm5029, %v5325, %v5189
    %v5334 = vsel %vm5029, %v5326, %v5191
    %v5335 = vsel %vm5029, %v5327, %v5193
    %v5336 = vsel %vm5029, %v5328, %v5195
    %v5337 = vsel %vm5029, %v5329, %v5197
    %v5338 = vsel %vm5029, %v5330, %v5199
    %v5339 = vsel %vm5029, %v5331, %v5201
    %v5340 = vsel %vm5038, %v5332, %v5213
    %v5341 = vsel %vm5038, %v5333, %v5215
    %v5342 = vsel %vm5038, %v5334, %v5217
    %v5343 = vsel %vm5038, %v5335, %v5219
    %v5344 = vsel %vm5038, %v5336, %v5221
    %v5345 = vsel %vm5038, %v5337, %v5223
    %v5346 = vsel %vm5038, %v5338, %v5225
    %v5347 = vsel %vm5038, %v5339, %v5227
    %v5348 = vsel %vm5047, %v5340, %v5239
    %v5349 = vsel %vm5047, %v5341, %v5241
    %v5350 = vsel %vm5047, %v5342, %v5243
    %v5351 = vsel %vm5047, %v5343, %v5245
    %v5352 = vsel %vm5047, %v5344, %v5247
    %v5353 = vsel %vm5047, %v5345, %v5249
    %v5354 = vsel %vm5047, %v5346, %v5251
    %v5355 = vsel %vm5047, %v5347, %v5253
    %v5356 = vsel %vm5056, %v5348, %v5265
    %v5357 = vsel %vm5056, %v5349, %v5267
    %v5358 = vsel %vm5056, %v5350, %v5269
    %v5359 = vsel %vm5056, %v5351, %v5271
    %v5360 = vsel %vm5056, %v5352, %v5273
    %v5361 = vsel %vm5056, %v5353, %v5275
    %v5362 = vsel %vm5056, %v5354, %v5277
    %v5363 = vsel %vm5056, %v5355, %v5279
    %v5364 = vsel %vm5065, %v5356, %v5291
    %v5365 = vsel %vm5065, %v5357, %v5293
    %v5366 = vsel %vm5065, %v5358, %v5295
    %v5367 = vsel %vm5065, %v5359, %v5297
    %v5368 = vsel %vm5065, %v5360, %v5299
    %v5369 = vsel %vm5065, %v5361, %v5301
    %v5370 = vsel %vm5065, %v5362, %v5303
    %v5371 = vsel %vm5065, %v5363, %v5305
    %v5396 = vcombine.low %v5066, %v5122
    %v5397 = vcombine.low %v5364, %v4681
    %v5398 = vcombine.low %v5067, %v5123
    %v5399 = vcombine.low %v5365, %v4682
    %v5400 = vcombine.low %v5068, %v5124
    %v5401 = vcombine.low %v5366, %v4959
    %v5402 = vcombine.low %v5069, %v5125
    %v5403 = vcombine.low %v5367, %v5314
    %v5404 = vcombine.low %v5070, %v5126
    %v5405 = vcombine.low %v5368, %v4685
    %v5406 = vcombine.low %v5071, %v5127
    %v5407 = vcombine.low %v5369, %v4686
    %v5408 = vcombine.low %v5072, %v5128
    %v5409 = vcombine.low %v5370, %v4960
    %v5410 = vcombine.low %v5073, %v5129
    %v5411 = vcombine.low %v5371, %v5315
    %v5412 = vcombine.low %v5396, %v5398
    %v5413 = vcombine.high %v5396, %v5398
    %v5414 = vcombine.low %v5397, %v5399
    %v5415 = vcombine.high %v5397, %v5399
    %v5416 = vcombine.low %v5400, %v5402
    %v5417 = vcombine.high %v5400, %v5402
    %v5418 = vcombine.low %v5401, %v5403
    %v5419 = vcombine.high %v5401, %v5403
    %v5420 = vcombine.low %v5404, %v5406
    %v5421 = vcombine.high %v5404, %v5406
    %v5422 = vcombine.low %v5405, %v5407
    %v5423 = vcombine.high %v5405, %v5407
    %v5424 = vcombine.low %v5408, %v5410
    %v5425 = vcombine.high %v5408, %v5410
    %v5426 = vcombine.low %v5409, %v5411
    %v5427 = vcombine.high %v5409, %v5411
    %v5444 = vpack.c.bf16 %v5416, %v5412
    %v5445 = vpack.c.bf16 %v5417, %v5413
    %v5446 = vpack.c.bf16 %v5418, %v5414
    %v5447 = vpack.c.bf16 %v5419, %v5415
    %v5448 = vpack.c.bf16 %v5424, %v5420
    %v5449 = vpack.c.bf16 %v5425, %v5421
    %v5450 = vpack.c.bf16 %v5426, %v5422
    %v5451 = vpack.c.bf16 %v5427, %v5423
    %v5452 = vld [vmem:[%s3] sm:$0xf]
    %v5453 = vld [vmem:[%s3 + $0x4] sm:$0xf]
    %v5454 = vld [vmem:[%s3 + $0x8] sm:$0xf]
    %v5455 = vld [vmem:[%s3 + $0xc] sm:$0xf]
    %v5456 = vld [vmem:[%s3 + $0x10] sm:$0xf]
    %v5457 = vld [vmem:[%s3 + $0x14] sm:$0xf]
    %v5458 = vld [vmem:[%s3 + $0x18] sm:$0xf]
    %v5459 = vld [vmem:[%s3 + $0x1c] sm:$0xf]
    %v5460 = vld [vmem:[%s3 + $0x20] sm:$0xf]
    %v5461 = vld [vmem:[%s3 + $0x24] sm:$0xf]
    %v5462 = vld [vmem:[%s3 + $0x28] sm:$0xf]
    %v5463 = vld [vmem:[%s3 + $0x2c] sm:$0xf]
    %v5464 = vld [vmem:[%s3 + $0x30] sm:$0xf]
    %v5465 = vld [vmem:[%s3 + $0x34] sm:$0xf]
    %v5466 = vld [vmem:[%s3 + $0x38] sm:$0xf]
    %v5467 = vld [vmem:[%s3 + $0x3c] sm:$0xf]
    %v5468 = vld [vmem:[%s3 + $0x40] sm:$0xf]
    %v5469 = vld [vmem:[%s3 + $0x44] sm:$0xf]
    %v5470 = vld [vmem:[%s3 + $0x48] sm:$0xf]
    %v5471 = vld [vmem:[%s3 + $0x4c] sm:$0xf]
    %v5472 = vld [vmem:[%s3 + $0x50] sm:$0xf]
    %v5473 = vld [vmem:[%s3 + $0x54] sm:$0xf]
    %v5474 = vld [vmem:[%s3 + $0x58] sm:$0xf]
    %v5475 = vld [vmem:[%s3 + $0x5c] sm:$0xf]
    %v5476 = vld [vmem:[%s3 + $0x60] sm:$0xf]
    %v5477 = vld [vmem:[%s3 + $0x64] sm:$0xf]
    %v5478 = vld [vmem:[%s3 + $0x68] sm:$0xf]
    %v5479 = vld [vmem:[%s3 + $0x6c] sm:$0xf]
    %v5480 = vld [vmem:[%s3 + $0x70] sm:$0xf]
    %v5481 = vld [vmem:[%s3 + $0x74] sm:$0xf]
    %v5482 = vld [vmem:[%s3 + $0x78] sm:$0xf]
    %v5483 = vld [vmem:[%s3 + $0x7c] sm:$0xf]
    %v5484 = vld [vmem:[%s3 + $0x80] sm:$0xf]
    %v5485 = vld [vmem:[%s3 + $0x84] sm:$0xf]
    %v5486 = vld [vmem:[%s3 + $0x88] sm:$0xf]
    %v5487 = vld [vmem:[%s3 + $0x8c] sm:$0xf]
    %v5488 = vld [vmem:[%s3 + $0x90] sm:$0xf]
    %v5489 = vld [vmem:[%s3 + $0x94] sm:$0xf]
    %v5490 = vld [vmem:[%s3 + $0x98] sm:$0xf]
    %v5491 = vld [vmem:[%s3 + $0x9c] sm:$0xf]
    %v5492 = vld [vmem:[%s3 + $0xa0] sm:$0xf]
    %v5493 = vld [vmem:[%s3 + $0xa4] sm:$0xf]
    %v5494 = vld [vmem:[%s3 + $0xa8] sm:$0xf]
    %v5495 = vld [vmem:[%s3 + $0xac] sm:$0xf]
    %v5496 = vld [vmem:[%s3 + $0xb0] sm:$0xf]
    %v5497 = vld [vmem:[%s3 + $0xb4] sm:$0xf]
    %v5498 = vld [vmem:[%s3 + $0xb8] sm:$0xf]
    %v5499 = vld [vmem:[%s3 + $0xbc] sm:$0xf]
    %v5500 = vld [vmem:[%s3 + $0xc0] sm:$0xf]
    %v5501 = vld [vmem:[%s3 + $0xc4] sm:$0xf]
    %v5502 = vld [vmem:[%s4] sm:$0x1]
    %v5504 = vlaneseq
    %v5505 = vshrl.u32 %v5504, 7
    %v5506 = vsub.s32 0, %v5505
    %v5507 = vrot.slane %v5502, %v5506
    %v5559 = vunpack.c.l.b16 %v5452
    %v5560 = vunpack.c.l.b16 %v5453
    %v5561 = vunpack.c.l.b16 %v5454
    %v5562 = vunpack.c.l.b16 %v5455
    %v5563 = vunpack.c.l.b16 %v5456
    %v5564 = vunpack.c.l.b16 %v5457
    %v5565 = vunpack.c.l.b16 %v5458
    %v5566 = vunpack.c.l.b16 %v5459
    %v5567 = vunpack.c.l.b16 %v5460
    %v5568 = vunpack.c.l.b16 %v5461
    %v5569 = vunpack.c.l.b16 %v5462
    %v5570 = vunpack.c.l.b16 %v5463
    %v5571 = vunpack.c.l.b16 %v5464
    %v5572 = vunpack.c.l.b16 %v5465
    %v5573 = vunpack.c.l.b16 %v5466
    %v5574 = vunpack.c.l.b16 %v5467
    %v5575 = vunpack.c.l.b16 %v5468
    %v5576 = vunpack.c.l.b16 %v5469
    %v5577 = vunpack.c.l.b16 %v5470
    %v5578 = vunpack.c.l.b16 %v5471
    %v5579 = vunpack.c.l.b16 %v5472
    %v5580 = vunpack.c.l.b16 %v5473
    %v5581 = vunpack.c.l.b16 %v5474
    %v5582 = vunpack.c.l.b16 %v5475
    %v5583 = vunpack.c.l.b16 %v5476
    %v5584 = vunpack.c.l.b16 %v5477
    %v5585 = vunpack.c.l.b16 %v5478
    %v5586 = vunpack.c.l.b16 %v5479
    %v5587 = vunpack.c.l.b16 %v5480
    %v5588 = vunpack.c.l.b16 %v5481
    %v5589 = vunpack.c.l.b16 %v5482
    %v5590 = vunpack.c.l.b16 %v5483
    %v5591 = vunpack.c.l.b16 %v5484
    %v5592 = vunpack.c.l.b16 %v5485
    %v5593 = vunpack.c.l.b16 %v5486
    %v5594 = vunpack.c.l.b16 %v5487
    %v5595 = vunpack.c.l.b16 %v5488
    %v5596 = vunpack.c.l.b16 %v5489
    %v5597 = vunpack.c.l.b16 %v5490
    %v5598 = vunpack.c.l.b16 %v5491
    %v5599 = vunpack.c.l.b16 %v5492
    %v5600 = vunpack.c.l.b16 %v5493
    %v5601 = vunpack.c.l.b16 %v5494
    %v5602 = vunpack.c.l.b16 %v5495
    %v5603 = vunpack.c.l.b16 %v5496
    %v5604 = vunpack.c.l.b16 %v5497
    %v5605 = vunpack.c.l.b16 %v5498
    %v5606 = vunpack.c.l.b16 %v5499
    %v5607 = vunpack.c.l.b16 %v5500
    %v5608 = vunpack.c.l.b16 %v5501
    %v5609 = vpack.c.b16 %v5560, %v5559
    %v5610 = vpack.c.b16 %v5562, %v5561
    %v5611 = vpack.c.b16 %v5564, %v5563
    %v5612 = vpack.c.b16 %v5566, %v5565
    %v5613 = vpack.c.b16 %v5568, %v5567
    %v5614 = vpack.c.b16 %v5570, %v5569
    %v5615 = vpack.c.b16 %v5572, %v5571
    %v5616 = vpack.c.b16 %v5574, %v5573
    %v5617 = vpack.c.b16 %v5576, %v5575
    %v5618 = vpack.c.b16 %v5578, %v5577
    %v5619 = vpack.c.b16 %v5580, %v5579
    %v5620 = vpack.c.b16 %v5582, %v5581
    %v5621 = vpack.c.b16 %v5584, %v5583
    %v5622 = vpack.c.b16 %v5586, %v5585
    %v5623 = vpack.c.b16 %v5588, %v5587
    %v5624 = vpack.c.b16 %v5590, %v5589
    %v5625 = vpack.c.b16 %v5592, %v5591
    %v5626 = vpack.c.b16 %v5594, %v5593
    %v5627 = vpack.c.b16 %v5596, %v5595
    %v5628 = vpack.c.b16 %v5598, %v5597
    %v5629 = vpack.c.b16 %v5600, %v5599
    %v5630 = vpack.c.b16 %v5602, %v5601
    %v5631 = vpack.c.b16 %v5604, %v5603
    %v5632 = vpack.c.b16 %v5606, %v5605
    %v5633 = vpack.c.b16 %v5608, %v5607
    %v5660 = vsel %vm5011, %v5447, 0
    %v5663 = vsel %vm5011, %v5451, 0
    %5665 = vmatprep.subr.bf16.mxu0 0
    %5666 = vmatpush1.bf16.msra.mxu0 %v5609
    %5667 = vmatprep.subr.bf16.mxu0 0
    %5668 = vmatpush1.bf16.msra.mxu0 %v5610
    %5669 = vmatprep.subr.bf16.mxu0 0
    %5670 = vmatpush1.bf16.msra.mxu0 %v5611
    %5671 = vmatprep.subr.bf16.mxu0 0
    %5672 = vmatpush1.bf16.msra.mxu0 %v5612
    %5673 = vmatprep.subr.bf16.mxu0 0
    %5674 = vmatpush1.bf16.msra.mxu0 %v5613
    %5675 = vmatprep.subr.bf16.mxu0 0
    %5676 = vmatpush1.bf16.msra.mxu0 %v5614
    %5677 = vmatprep.subr.bf16.mxu0 0
    %5678 = vmatpush1.bf16.msra.mxu0 %v5615
    %5679 = vmatprep.subr.bf16.mxu0 0
    %5680 = vmatpush1.bf16.msra.mxu0 %v5616
    %5681 = vmatprep.subr.bf16.mxu0 0
    %5682 = vmatpush1.bf16.msra.mxu0 %v5617
    %5683 = vmatprep.subr.bf16.mxu0 0
    %5684 = vmatpush1.bf16.msra.mxu0 %v5618
    %5685 = vmatprep.subr.bf16.mxu0 0
    %5686 = vmatpush1.bf16.msra.mxu0 %v5619
    %5687 = vmatprep.subr.bf16.mxu0 0
    %5688 = vmatpush1.bf16.msra.mxu0 %v5620
    %5689 = vmatprep.subr.bf16.mxu0 0
    %5690 = vmatpush1.bf16.msra.mxu0 %v5621
    %5691 = vmatprep.subr.bf16.mxu0 0
    %5692 = vmatpush1.bf16.msra.mxu0 %v5622
    %5693 = vmatprep.subr.bf16.mxu0 0
    %5694 = vmatpush1.bf16.msra.mxu0 %v5623
    %5695 = vmatprep.subr.bf16.mxu0 0
    %5696 = vmatpush1.bf16.msra.mxu0 %v5624
    %5697 = vmatprep.mubr.bf16.mxu0 %v5445
    %5698 = vmatmul.mubr.bf16.gmra.mrb[0].mxu0 %v5444
    %v5699 = vpop.f32.mrb[0].mxu0
    %v5700 = vadd.f32 %v5507, %v5699
    %v5701 = vpop.f32.mrb[0].mxu0
    %v5702 = vpop.f32.mrb[0].mxu0
    %v5703 = vadd.f32 %v5507, %v5702
    %v5704 = vpop.f32.mrb[0].mxu0
    %5705 = vmatprep.mubr.bf16.mxu0 %v5449
    %5706 = vmatmul.mubr.bf16.gmra.mrb[0].mxu0 %v5448
    %v5707 = vpop.f32.mrb[0].mxu0
    %v5708 = vadd.f32 %v5507, %v5707
    %v5709 = vpop.f32.mrb[0].mxu0
    %v5710 = vpop.f32.mrb[0].mxu0
    %v5711 = vadd.f32 %v5507, %v5710
    %v5712 = vpop.f32.mrb[0].mxu0
    %5713 = vdwg.mxu0
    %5714 = vmatprep.subr.bf16.mxu0 0
    %5715 = vmatpush1.bf16.msra.mxu0 %v5625
    %5716 = vmatprep.subr.bf16.mxu0 0
    %5717 = vmatpush1.bf16.msra.mxu0 %v5626
    %5718 = vmatprep.subr.bf16.mxu0 0
    %5719 = vmatpush1.bf16.msra.mxu0 %v5627
    %5720 = vmatprep.subr.bf16.mxu0 0
    %5721 = vmatpush1.bf16.msra.mxu0 %v5628
    %5722 = vmatprep.subr.bf16.mxu0 0
    %5723 = vmatpush1.bf16.msra.mxu0 %v5629
    %5724 = vmatprep.subr.bf16.mxu0 0
    %5725 = vmatpush1.bf16.msra.mxu0 %v5630
    %5726 = vmatprep.subr.bf16.mxu0 0
    %5727 = vmatpush1.bf16.msra.mxu0 %v5631
    %5728 = vmatprep.subr.bf16.mxu0 0
    %5729 = vmatpush1.bf16.msra.mxu0 %v5632
    %5730 = vmatprep.subr.bf16.mxu0 0
    %5731 = vmatpush1.bf16.msra.mxu0 %v5633
    %5732 = vmatprep.subr.bf16.mxu0 0
    %5733 = vmatpush1.bf16.msra.mxu0 0
    %5734 = vmatprep.subr.bf16.mxu0 0
    %5735 = vmatpush1.bf16.msra.mxu0 0
    %5736 = vmatprep.subr.bf16.mxu0 0
    %5737 = vmatpush1.bf16.msra.mxu0 0
    %5738 = vmatprep.subr.bf16.mxu0 0
    %5739 = vmatpush1.bf16.msra.mxu0 0
    %5740 = vmatprep.subr.bf16.mxu0 0
    %5741 = vmatpush1.bf16.msra.mxu0 0
    %5742 = vmatprep.subr.bf16.mxu0 0
    %5743 = vmatpush1.bf16.msra.mxu0 0
    %5744 = vmatprep.subr.bf16.mxu0 0
    %5745 = vmatpush1.bf16.msra.mxu0 0
    %5746 = vmatprep.mubr.bf16.mxu0 %v5660
    %5747 = vmatmul.mubr.bf16.gmra.mrb[0].mxu0 %v5446
    %v5748 = vpop.f32.mrb[0].mxu0
    %v5749 = vadd.f32 %v5700, %v5748
    %v5750 = vpop.f32.mrb[0].mxu0
    %v5751 = vpop.f32.mrb[0].mxu0
    %v5752 = vadd.f32 %v5703, %v5751
    %v5753 = vpop.f32.mrb[0].mxu0
    %5754 = vmatprep.mubr.bf16.mxu0 %v5663
    %5755 = vmatmul.mubr.bf16.gmra.mrb[0].mxu0 %v5450
    %v5756 = vpop.f32.mrb[0].mxu0
    %v5757 = vadd.f32 %v5708, %v5756
    %v5758 = vpop.f32.mrb[0].mxu0
    %v5759 = vpop.f32.mrb[0].mxu0
    %v5760 = vadd.f32 %v5711, %v5759
    %v5761 = vpop.f32.mrb[0].mxu0
    %5762 = vdwg.mxu0
    %v5763 = vmax.f32 %v5749, 0.0
    %v5764 = vmax.f32 %v5752, 0.0
    %v5765 = vmax.f32 %v5757, 0.0
    %v5766 = vmax.f32 %v5760, 0.0
    %v5767 = vsel %vm5020, %v5763, 0.0
    %v5768 = vsel %vm5020, %v5764, 0.0
    %v5769 = vadd.f32 %v5767, %v5768
    %v5770 = vrot.slane %v5769, 4
    %v5771 = vadd.f32 %v5769, %v5770
    %v5772 = vrot.slane %v5771, 2
    %v5773 = vadd.f32 %v5771, %v5772
    %v5774 = vrot.slane %v5773, 1
    %v5775 = vadd.f32 %v5773, %v5774
    %v5776 = vsel %vm5020, %v5765, 0.0
    %v5777 = vsel %vm5020, %v5766, 0.0
    %v5778 = vadd.f32 %v5776, %v5777
    %v5779 = vrot.slane %v5778, 4
    %v5780 = vadd.f32 %v5778, %v5779
    %v5781 = vrot.slane %v5780, 2
    %v5782 = vadd.f32 %v5780, %v5781
    %v5783 = vrot.slane %v5782, 1
    %v5784 = vadd.f32 %v5782, %v5783
    %v5785 = vmul.f32 %v5775, 0.0625
    %v5786 = vmul.f32 %v5784, 0.0625
    %v5787 = vld [vmem:[%s5] sm:$0xff]
    %v5788 = vld [vmem:[%s5 + $0x8] sm:$0xff]
    %v5789 = vld [vmem:[%s5 + $0x10] sm:$0xff]
    %v5790 = vld [vmem:[%s5 + $0x18] sm:$0xff]
    %v5791 = vld [vmem:[%s6] sm:$0x1]
    %v5793 = vlaneseq
    %v5794 = vshrl.u32 %v5793, 7
    %v5795 = vsub.s32 0, %v5794
    %v5796 = vrot.slane %v5791, %v5795
    %vm5800 = vcmask 1041409
    %v5801 = vsel %vm5800, %v5786, %v5785
    %v5802 = vsel %vm5020, %v5801, 0
    %5804 = vmatprep.subr.mxu0 0.0
    %5805 = vmatpush1.msra.mxu0 %v5787
    %5806 = vmatprep.subr.mxu0 0.0
    %5807 = vmatpush1.msra.mxu0 %v5788
    %5808 = vmatprep.subr.mxu0 0.0
    %5809 = vmatpush1.msra.mxu0 %v5789
    %5810 = vmatprep.subr.mxu0 0.0
    %5811 = vmatpush1.msra.mxu0 %v5790
    %5812 = vmatprep.subr.mxu0 0.0
    %5813 = vmatpush1.msra.mxu0 0.0
    %5814 = vmatprep.subr.mxu0 0.0
    %5815 = vmatpush1.msra.mxu0 0.0
    %5816 = vmatprep.subr.mxu0 0.0
    %5817 = vmatpush1.msra.mxu0 0.0
    %5818 = vmatprep.subr.mxu0 0.0
    %5819 = vmatpush1.msra.mxu0 0.0
    %5820 = vmatprep.subr.mxu0 0.0
    %5821 = vmatpush1.msra.mxu0 0.0
    %5822 = vmatprep.subr.mxu0 0.0
    %5823 = vmatpush1.msra.mxu0 0.0
    %5824 = vmatprep.subr.mxu0 0.0
    %5825 = vmatpush1.msra.mxu0 0.0
    %5826 = vmatprep.subr.mxu0 0.0
    %5827 = vmatpush1.msra.mxu0 0.0
    %5828 = vmatprep.subr.mxu0 0.0
    %5829 = vmatpush1.msra.mxu0 0.0
    %5830 = vmatprep.subr.mxu0 0.0
    %5831 = vmatpush1.msra.mxu0 0.0
    %5832 = vmatprep.subr.mxu0 0.0
    %5833 = vmatpush1.msra.mxu0 0.0
    %5834 = vmatprep.subr.mxu0 0.0
    %5835 = vmatpush1.msra.mxu0 0.0
    %5836 = vmatprep.subr.mxu0 0.0
    %5837 = vmatpush1.msra.mxu0 0.0
    %5838 = vmatprep.subr.mxu0 0.0
    %5839 = vmatpush1.msra.mxu0 0.0
    %5840 = vmatprep.subr.mxu0 0.0
    %5841 = vmatpush1.msra.mxu0 0.0
    %5842 = vmatprep.subr.mxu0 0.0
    %5843 = vmatpush1.msra.mxu0 0.0
    %5844 = vmatprep.subr.mxu0 0.0
    %5845 = vmatpush1.msra.mxu0 0.0
    %5846 = vmatprep.subr.mxu0 0.0
    %5847 = vmatpush1.msra.mxu0 0.0
    %5848 = vmatprep.subr.mxu0 0.0
    %5849 = vmatpush1.msra.mxu0 0.0
    %5850 = vmatprep.subr.mxu0 0.0
    %5851 = vmatpush1.msra.mxu0 0.0
    %5852 = vmatprep.subr.mxu0 0.0
    %5853 = vmatpush1.msra.mxu0 0.0
    %5854 = vmatprep.subr.mxu0 0.0
    %5855 = vmatpush1.msra.mxu0 0.0
    %5856 = vmatprep.subr.mxu0 0.0
    %5857 = vmatpush1.msra.mxu0 0.0
    %5858 = vmatprep.subr.mxu0 0.0
    %5859 = vmatpush1.msra.mxu0 0.0
    %5860 = vmatprep.subr.mxu0 0.0
    %5861 = vmatpush1.msra.mxu0 0.0
    %5862 = vmatprep.subr.mxu0 0.0
    %5863 = vmatpush1.msra.mxu0 0.0
    %5864 = vmatprep.subr.mxu0 0.0
    %5865 = vmatpush1.msra.mxu0 0.0
    %5866 = vmatprep.subr.mxu0 0.0
    %5867 = vmatpush1.msra.mxu0 0.0
    %5868 = vmatprep.mubr.f32.mxu0 0.0
    %5869 = vmatmul.mubr.f32.gmra.mrb[0].mxu0 %v5802
    %v5870 = vpop.f32.mrb[0].mxu0
    %v5871 = vadd.f32 %v5796, %v5870
    %v5872 = vpop.f32.mrb[0].mxu0
    %5873 = vdwg.mxu0
    %5874 = vst [vmem:[#allocation2] sm:$0x3] %v5871
    // Predicated region
    $region30: #{snet_mnist_forward.1} parent=1 // pred_check
      _
    $region31: #{snet_mnist_forward.1} parent=1 // pred_check_branch
      %5876 = sbr.rel (0) target = $region33
    $region32: #{snet_mnist_forward.1} parent=1 // pred_region
      %s5878 = ssub.s32 32, 32
      %5879 = vsyncadd [#allocation3], %s5878
      %s5881 = sshll.u32 [#allocation2], 4
      %s5882 = int_to_ptr.vmem [resolvable:$true] %s5881
      %5884 = dma.vmem_to_hbm [thread:$0]  %s5882, 32, %s7, [#allocation3]
    $region33: #{snet_mnist_forward.1} parent=1 // pred_fallthru
      _
    // Predicated region
    $region34: #{snet_mnist_forward.1} parent=1 // pred_check
      _
    $region35: #{snet_mnist_forward.1} parent=1 // pred_check_branch
      %5886 = sbr.rel (0) target = $region37
    $region36: #{snet_mnist_forward.1} parent=1 // pred_region
      %5887 = dma.done [#allocation3], 32
    $region37: #{snet_mnist_forward.1} parent=1 // pred_fallthru
      _
    %5888 = vsyncpa [#allocation3], 1

</llo_original>
